<compile_context>
chip_gen: v7x
topology: tpu7x:2x2x1
jax: 0.10.0
libtpu: 0.0.40
codegen_flags: <defaults>
</compile_context>

<pallas_src>
import jax
import jax.numpy as jnp
from jax import lax
from jax.experimental import pallas as pl
from jax.experimental.pallas import tpu as pltpu

WINDOW_SIZES = [1, 5, 9, 11]
KMAX = max(WINDOW_SIZES)
NB = len(WINDOW_SIZES)
LEAKY_SLOPE = 0.1


# ------------------------- weight preprocessing ---------------------------- #
def _merged_branch_weight(params, cin, cout, groups):
    """Merge the four grouped causal Conv3d(ws,3,3) weights into one dense
    tensor of shape (KMAX*9, cin, NB*cout).

    Tap axis is lexicographic over (dt, dh, dw) positions of the KMAX-deep
    causal window; branch b occupies output columns [b*cout, (b+1)*cout) and
    only taps dt >= KMAX - ws (causal alignment: smaller windows are exact
    suffix-subsets of the KMAX-wide window)."""
    w_all = jnp.zeros((KMAX, 3, 3, cin, NB * cout), jnp.float32)
    for bi, ws in enumerate(WINDOW_SIZES):
        g = groups if ws != 1 else 1
        w = params[f'embed{ws}_w']                      # (cout, cin//g, ws, 3, 3)
        cin_g, cog = cin // g, cout // g
        dense = jnp.zeros((ws, 3, 3, cin, cout), jnp.float32)
        for grp in range(g):
            blk = jnp.transpose(w[grp * cog:(grp + 1) * cog], (2, 3, 4, 1, 0))
            dense = dense.at[:, :, :, grp * cin_g:(grp + 1) * cin_g,
                             grp * cog:(grp + 1) * cog].set(blk)
        off = KMAX - ws
        w_all = w_all.at[off:off + ws, :, :, :,
                         bi * cout:(bi + 1) * cout].set(dense)
    return w_all.reshape(KMAX * 9, cin, NB * cout)


# ------------------------------ Pallas call -------------------------------- #
def causal_multiscale_block(x, params, groups=8):
    """x: (N, T, H, W, C) channels-last.  Returns (N, T, H-2, W-2, Cout)."""
    N, T, H, W, C = x.shape
    Ho, Wo = H - 2, W - 2
    Cout = params['mapping_b'].shape[0]
    ROWS = Ho * W                      # output rows per time step (w in [0, W))
    T_pad = T + KMAX - 1
    # Flattened (h*W + w) spatial plane padded by 2 rows so every shifted
    # 3x3-tap window of length Ho*W stays in bounds (max start = 2*W + 2).
    HWP = H * W + 2

    # --- host-side prep (O(x) + O(params), no im2col blow-up) -------------- #
    x_bf = x.astype(jnp.bfloat16)
    x_pad = jnp.pad(x_bf, ((0, 0), (KMAX - 1, 0), (0, 0), (0, 0), (0, 0)))
    x_flat = jnp.pad(x_pad.reshape(N, T_pad, H * W, C),
                     ((0, 0), (0, 0), (0, 2), (0, 0)))            # (N,T_pad,HWP,C)

    w_all = _merged_branch_weight(params, C, Cout, groups).astype(jnp.bfloat16)
    b_all = jnp.concatenate([params[f'embed{ws}_b'] for ws in WINDOW_SIZES]
                            ).reshape(1, NB * Cout).astype(jnp.float32)
    wm = params['mapping_w'][:, :, 0, 0, 0].T.astype(jnp.bfloat16)   # (Cout,Cout)
    bm = params['mapping_b'].reshape(1, -1).astype(jnp.float32)
    wp = params['conv1x1_w'][:, :, 0, 0, 0].T.astype(jnp.bfloat16)   # (C, Cout)
    bp = params['conv1x1_b'].reshape(1, -1).astype(jnp.float32)

    def kernel(x_ref, w_ref, ba_ref, wm_ref, bm_ref, wp_ref, bp_ref, o_ref):
        t = pl.program_id(1)
        acc = jnp.zeros((ROWS, NB * Cout), jnp.float32)   # merged 128-wide pre-act
        spat = jnp.zeros((ROWS, C), jnp.float32)          # 3x3 spatial sum of x[t]
        tap = 0
        for dt in range(KMAX):
            for dh in range(3):
                for dw in range(3):
                    # Shifted tap slice straight from the VMEM-resident block:
                    # contiguous rows of the flattened (h*W + w) plane.
                    a = x_ref[t + dt, pl.ds(dh * W + dw, ROWS), :]   # (ROWS,C) bf16
                    acc = acc + jnp.dot(a, w_ref[tap],
                                        preferred_element_type=jnp.float32)
                    if dt == KMAX - 1:      # taps of x[t] -> reuse for avg-pool
                        spat = spat + a.astype(jnp.float32)
                    tap += 1

        # Per-branch bias + LeakyReLU (same slope everywhere, so apply once on
        # the 128-wide block), then sum the four Cout-wide branch slices.
        y = acc + ba_ref[...]
        y = jnp.where(y > 0, y, LEAKY_SLOPE * y)
        ret = (y[:, 0:Cout] + y[:, Cout:2 * Cout]
               + y[:, 2 * Cout:3 * Cout] + y[:, 3 * Cout:4 * Cout])

        # 1x1x1 mapping conv.
        mapped = jnp.dot(ret.astype(jnp.bfloat16), wm_ref[...],
                         preferred_element_type=jnp.float32) + bm_ref[...]

        # Residual: AvgPool3d(1,3,3)(Conv1x1(x)) == (mean of 9 spatial taps of
        # x[t]) @ wp + bp  (pooling commutes with the pointwise conv).
        avg = (spat * (1.0 / 9.0)).astype(jnp.bfloat16)
        pooled = jnp.dot(avg, wp_ref[...],
                         preferred_element_type=jnp.float32) + bp_ref[...]

        o_ref[...] = (mapped + pooled).astype(o_ref.dtype)   # (ROWS, Cout)

    def const_spec(shape):
        return pl.BlockSpec(shape, lambda n, t: (0,) * len(shape))

    out = pl.pallas_call(
        kernel,
        out_shape=jax.ShapeDtypeStruct((N, T, ROWS, Cout), jnp.float32),
        grid_spec=pltpu.PrefetchScalarGridSpec(
            num_scalar_prefetch=0,
            grid=(N, T),
            in_specs=[
                # Whole padded clip of batch n; index_map ignores t so the
                # block stays VMEM-resident across the inner T axis.
                pl.BlockSpec((None, T_pad, HWP, C), lambda n, t: (n, 0, 0, 0)),
                const_spec(w_all.shape),   # (99, C, 4*Cout)  resident weights
                const_spec(b_all.shape),
                const_spec(wm.shape),
                const_spec(bm.shape),
                const_spec(wp.shape),
                const_spec(bp.shape),
            ],
            out_specs=pl.BlockSpec((None, None, ROWS, Cout),
                                   lambda n, t: (n, t, 0, 0)),
        ),
        compiler_params=pltpu.CompilerParams(
            dimension_semantics=("parallel", "parallel"),
            vmem_limit_bytes=32 * 1024 * 1024),
    )(x_flat, w_all, b_all, wm, bm, wp, bp)

    # Drop the w >= Wo columns (they carry the 3x3-window overhang).
    return out.reshape(N, T, Ho, W, Cout)[:, :, :, :Wo, :]


# --------------------------- pure-JAX reference ----------------------------- #
def reference_forward(x_cl, params, groups=8):
    x = jnp.transpose(x_cl, (0, 4, 1, 2, 3))            # NCDHW, like PyTorch
    hp = lax.Precision.HIGHEST

    def pointwise(y, w, b):
        return jnp.einsum('ncthw,oc->nothw', y, w[:, :, 0, 0, 0],
                          precision=hp) + b[None, :, None, None, None]

    ret = 0.0
    for ws in WINDOW_SIZES:
        g = groups if ws != 1 else 1
        w, b = params[f'embed{ws}_w'], params[f'embed{ws}_b']
        xp = jnp.pad(x, ((0, 0), (0, 0), (ws - 1, 0), (0, 0), (0, 0)))
        y = lax.conv_general_dilated(
            xp, w, window_strides=(1, 1, 1), padding='VALID',
            dimension_numbers=('NCDHW', 'OIDHW', 'NCDHW'),
            feature_group_count=g, precision=hp)
        y = y + b[None, :, None, None, None]
        ret = ret + jnp.where(y > 0, y, LEAKY_SLOPE * y)

    ret = pointwise(ret, params['mapping_w'], params['mapping_b'])
    y1 = pointwise(x, params['conv1x1_w'], params['conv1x1_b'])
    pooled = lax.reduce_window(y1, 0.0, lax.add,
                               (1, 1, 1, 3, 3), (1, 1, 1, 1, 1), 'VALID') / 9.0
    out = ret + pooled
    return jnp.transpose(out, (0, 2, 3, 4, 1))          # back to channels-last


# --------------------------------- params ----------------------------------- #
def init_params(key, dim, output_dim, groups):
    params = {}
    keys = iter(jax.random.split(key, 2 * len(WINDOW_SIZES) + 4))
    for ws in WINDOW_SIZES:
        g = groups if ws != 1 else 1
        params[f'embed{ws}_w'] = 0.05 * jax.random.normal(
            next(keys), (output_dim, dim // g, ws, 3, 3), jnp.float32)
        params[f'embed{ws}_b'] = 0.05 * jax.random.normal(
            next(keys), (output_dim,), jnp.float32)
    params['mapping_w'] = 0.05 * jax.random.normal(
        next(keys), (output_dim, output_dim, 1, 1, 1), jnp.float32)
    params['mapping_b'] = 0.05 * jax.random.normal(
        next(keys), (output_dim,), jnp.float32)
    params['conv1x1_w'] = 0.05 * jax.random.normal(
        next(keys), (output_dim, output_dim, 1, 1, 1), jnp.float32)
    params['conv1x1_b'] = 0.05 * jax.random.normal(
        next(keys), (output_dim,), jnp.float32)
    return params


if __name__ == "__main__":
    # NOTE: the module's residual path requires dim == output_dim.
    N, T, H, W = 2, 4, 6, 6
    dim = output_dim = 32
    groups = 8

    key = jax.random.PRNGKey(0)
    kx, kp = jax.random.split(key)
    x = jax.random.normal(kx, (N, T, H, W, dim), jnp.float32)
    params = init_params(kp, dim, output_dim, groups)

    out = jax.block_until_ready(causal_multiscale_block(x, params, groups=groups))
    ref = jax.block_until_ready(reference_forward(x, params, groups=groups))

    assert out.shape == (N, T, H - 2, W - 2, output_dim), out.shape
    max_err = float(jnp.max(jnp.abs(out - ref)))
    # bf16 inputs/weights with f32 accumulation -> looser tolerance than pure f32.
    assert max_err < 5e-2, f"mismatch vs reference: {max_err}"

    print("KERNEL_OK")
</pallas_src>

<mosaic_0001>
module attributes {stable_mosaic.version = 11 : i64} {
  func.func @kernel(%arg0: i32, %arg1: i32, %arg2: memref<1x14x38x32xbf16, #tpu.memory_space<vmem>>, %arg3: memref<99x32x128xbf16, #tpu.memory_space<vmem>>, %arg4: memref<1x128xf32, #tpu.memory_space<vmem>>, %arg5: memref<32x32xbf16, #tpu.memory_space<vmem>>, %arg6: memref<1x32xf32, #tpu.memory_space<vmem>>, %arg7: memref<32x32xbf16, #tpu.memory_space<vmem>>, %arg8: memref<1x32xf32, #tpu.memory_space<vmem>>, %arg9: memref<1x1x24x32xf32, #tpu.memory_space<vmem>>) attributes {dimension_semantics = [#tpu.dimension_semantics<parallel>, #tpu.dimension_semantics<parallel>], iteration_bounds = array<i64: 2, 4>, scalar_prefetch = 0 : i64, scratch_operands = 0 : i64, tpu.core_type = #tpu.core_type<tc>, window_params = [{transform_indices = @transform_0, window_bounds = array<i64: 1, 14, 38, 32>}, {pipeline_mode = #tpu.pipeline_mode<synchronous>, transform_indices = @transform_1, window_bounds = array<i64: 99, 32, 128>}, {pipeline_mode = #tpu.pipeline_mode<synchronous>, transform_indices = @transform_2, window_bounds = array<i64: 1, 128>}, {pipeline_mode = #tpu.pipeline_mode<synchronous>, transform_indices = @transform_3, window_bounds = array<i64: 32, 32>}, {pipeline_mode = #tpu.pipeline_mode<synchronous>, transform_indices = @transform_4, window_bounds = array<i64: 1, 32>}, {pipeline_mode = #tpu.pipeline_mode<synchronous>, transform_indices = @transform_5, window_bounds = array<i64: 32, 32>}, {pipeline_mode = #tpu.pipeline_mode<synchronous>, transform_indices = @transform_6, window_bounds = array<i64: 1, 32>}, {transform_indices = @transform_7, window_bounds = array<i64: 1, 1, 24, 32>}]} {
    %cst = arith.constant 0.000000e+00 : f32
    %0 = vector.broadcast %cst : f32 to vector<24x128xf32>
    %cst_0 = arith.constant 0.000000e+00 : f32
    %1 = vector.broadcast %cst_0 : f32 to vector<24x32xf32>
    %c0_i32 = arith.constant 0 : i32
    %2 = arith.addi %arg1, %c0_i32 : i32
    %c0 = arith.constant 0 : index
    %3 = arith.index_cast %2 : i32 to index
    %c0_1 = arith.constant 0 : index
    %c0_2 = arith.constant 0 : index
    %4 = vector.load %arg2[%c0, %3, %c0_1, %c0_2] : memref<1x14x38x32xbf16, #tpu.memory_space<vmem>>, vector<1x1x24x32xbf16>
    %5 = vector.shape_cast %4 : vector<1x1x24x32xbf16> to vector<24x32xbf16>
    %c0_3 = arith.constant 0 : index
    %c0_4 = arith.constant 0 : index
    %c0_5 = arith.constant 0 : index
    %6 = vector.load %arg3[%c0_3, %c0_4, %c0_5] : memref<99x32x128xbf16, #tpu.memory_space<vmem>>, vector<1x32x128xbf16>
    %7 = vector.shape_cast %6 : vector<1x32x128xbf16> to vector<32x128xbf16>
    %cst_6 = arith.constant dense<0.000000e+00> : vector<24x128xf32>
    %8 = tpu.matmul %5, %7, %cst_6 {dimension_numbers = #tpu.dot_dimension_numbers<[1], [0], [0], [1], [0, 0, 1, 1], [], []>} : vector<24x32xbf16>, vector<32x128xbf16>, vector<24x128xf32> -> vector<24x128xf32>
    %9 = arith.addf %0, %8 : vector<24x128xf32>
    %c0_i32_7 = arith.constant 0 : i32
    %10 = arith.addi %arg1, %c0_i32_7 : i32
    %c0_8 = arith.constant 0 : index
    %11 = arith.index_cast %10 : i32 to index
    %c1 = arith.constant 1 : index
    %c0_9 = arith.constant 0 : index
    %12 = vector.load %arg2[%c0_8, %11, %c1, %c0_9] : memref<1x14x38x32xbf16, #tpu.memory_space<vmem>>, vector<1x1x24x32xbf16>
    %13 = vector.shape_cast %12 : vector<1x1x24x32xbf16> to vector<24x32xbf16>
    %c1_10 = arith.constant 1 : index
    %c0_11 = arith.constant 0 : index
    %c0_12 = arith.constant 0 : index
    %14 = vector.load %arg3[%c1_10, %c0_11, %c0_12] : memref<99x32x128xbf16, #tpu.memory_space<vmem>>, vector<1x32x128xbf16>
    %15 = vector.shape_cast %14 : vector<1x32x128xbf16> to vector<32x128xbf16>
    %cst_13 = arith.constant dense<0.000000e+00> : vector<24x128xf32>
    %16 = tpu.matmul %13, %15, %cst_13 {dimension_numbers = #tpu.dot_dimension_numbers<[1], [0], [0], [1], [0, 0, 1, 1], [], []>} : vector<24x32xbf16>, vector<32x128xbf16>, vector<24x128xf32> -> vector<24x128xf32>
    %17 = arith.addf %9, %16 : vector<24x128xf32>
    %c0_i32_14 = arith.constant 0 : i32
    %18 = arith.addi %arg1, %c0_i32_14 : i32
    %c0_15 = arith.constant 0 : index
    %19 = arith.index_cast %18 : i32 to index
    %c2 = arith.constant 2 : index
    %c0_16 = arith.constant 0 : index
    %20 = vector.load %arg2[%c0_15, %19, %c2, %c0_16] : memref<1x14x38x32xbf16, #tpu.memory_space<vmem>>, vector<1x1x24x32xbf16>
    %21 = vector.shape_cast %20 : vector<1x1x24x32xbf16> to vector<24x32xbf16>
    %c2_17 = arith.constant 2 : index
    %c0_18 = arith.constant 0 : index
    %c0_19 = arith.constant 0 : index
    %22 = vector.load %arg3[%c2_17, %c0_18, %c0_19] : memref<99x32x128xbf16, #tpu.memory_space<vmem>>, vector<1x32x128xbf16>
    %23 = vector.shape_cast %22 : vector<1x32x128xbf16> to vector<32x128xbf16>
    %cst_20 = arith.constant dense<0.000000e+00> : vector<24x128xf32>
    %24 = tpu.matmul %21, %23, %cst_20 {dimension_numbers = #tpu.dot_dimension_numbers<[1], [0], [0], [1], [0, 0, 1, 1], [], []>} : vector<24x32xbf16>, vector<32x128xbf16>, vector<24x128xf32> -> vector<24x128xf32>
    %25 = arith.addf %17, %24 : vector<24x128xf32>
    %c0_i32_21 = arith.constant 0 : i32
    %26 = arith.addi %arg1, %c0_i32_21 : i32
    %c0_22 = arith.constant 0 : index
    %27 = arith.index_cast %26 : i32 to index
    %c6 = arith.constant 6 : index
    %c0_23 = arith.constant 0 : index
    %28 = vector.load %arg2[%c0_22, %27, %c6, %c0_23] : memref<1x14x38x32xbf16, #tpu.memory_space<vmem>>, vector<1x1x24x32xbf16>
    %29 = vector.shape_cast %28 : vector<1x1x24x32xbf16> to vector<24x32xbf16>
    %c3 = arith.constant 3 : index
    %c0_24 = arith.constant 0 : index
    %c0_25 = arith.constant 0 : index
    %30 = vector.load %arg3[%c3, %c0_24, %c0_25] : memref<99x32x128xbf16, #tpu.memory_space<vmem>>, vector<1x32x128xbf16>
    %31 = vector.shape_cast %30 : vector<1x32x128xbf16> to vector<32x128xbf16>
    %cst_26 = arith.constant dense<0.000000e+00> : vector<24x128xf32>
    %32 = tpu.matmul %29, %31, %cst_26 {dimension_numbers = #tpu.dot_dimension_numbers<[1], [0], [0], [1], [0, 0, 1, 1], [], []>} : vector<24x32xbf16>, vector<32x128xbf16>, vector<24x128xf32> -> vector<24x128xf32>
    %33 = arith.addf %25, %32 : vector<24x128xf32>
    %c0_i32_27 = arith.constant 0 : i32
    %34 = arith.addi %arg1, %c0_i32_27 : i32
    %c0_28 = arith.constant 0 : index
    %35 = arith.index_cast %34 : i32 to index
    %c7 = arith.constant 7 : index
    %c0_29 = arith.constant 0 : index
    %36 = vector.load %arg2[%c0_28, %35, %c7, %c0_29] : memref<1x14x38x32xbf16, #tpu.memory_space<vmem>>, vector<1x1x24x32xbf16>
    %37 = vector.shape_cast %36 : vector<1x1x24x32xbf16> to vector<24x32xbf16>
    %c4 = arith.constant 4 : index
    %c0_30 = arith.constant 0 : index
    %c0_31 = arith.constant 0 : index
    %38 = vector.load %arg3[%c4, %c0_30, %c0_31] : memref<99x32x128xbf16, #tpu.memory_space<vmem>>, vector<1x32x128xbf16>
    %39 = vector.shape_cast %38 : vector<1x32x128xbf16> to vector<32x128xbf16>
    %cst_32 = arith.constant dense<0.000000e+00> : vector<24x128xf32>
    %40 = tpu.matmul %37, %39, %cst_32 {dimension_numbers = #tpu.dot_dimension_numbers<[1], [0], [0], [1], [0, 0, 1, 1], [], []>} : vector<24x32xbf16>, vector<32x128xbf16>, vector<24x128xf32> -> vector<24x128xf32>
    %41 = arith.addf %33, %40 : vector<24x128xf32>
    %c0_i32_33 = arith.constant 0 : i32
    %42 = arith.addi %arg1, %c0_i32_33 : i32
    %c0_34 = arith.constant 0 : index
    %43 = arith.index_cast %42 : i32 to index
    %c8 = arith.constant 8 : index
    %c0_35 = arith.constant 0 : index
    %44 = vector.load %arg2[%c0_34, %43, %c8, %c0_35] : memref<1x14x38x32xbf16, #tpu.memory_space<vmem>>, vector<1x1x24x32xbf16>
    %45 = vector.shape_cast %44 : vector<1x1x24x32xbf16> to vector<24x32xbf16>
    %c5 = arith.constant 5 : index
    %c0_36 = arith.constant 0 : index
    %c0_37 = arith.constant 0 : index
    %46 = vector.load %arg3[%c5, %c0_36, %c0_37] : memref<99x32x128xbf16, #tpu.memory_space<vmem>>, vector<1x32x128xbf16>
    %47 = vector.shape_cast %46 : vector<1x32x128xbf16> to vector<32x128xbf16>
    %cst_38 = arith.constant dense<0.000000e+00> : vector<24x128xf32>
    %48 = tpu.matmul %45, %47, %cst_38 {dimension_numbers = #tpu.dot_dimension_numbers<[1], [0], [0], [1], [0, 0, 1, 1], [], []>} : vector<24x32xbf16>, vector<32x128xbf16>, vector<24x128xf32> -> vector<24x128xf32>
    %49 = arith.addf %41, %48 : vector<24x128xf32>
    %c0_i32_39 = arith.constant 0 : i32
    %50 = arith.addi %arg1, %c0_i32_39 : i32
    %c0_40 = arith.constant 0 : index
    %51 = arith.index_cast %50 : i32 to index
    %c12 = arith.constant 12 : index
    %c0_41 = arith.constant 0 : index
    %52 = vector.load %arg2[%c0_40, %51, %c12, %c0_41] : memref<1x14x38x32xbf16, #tpu.memory_space<vmem>>, vector<1x1x24x32xbf16>
    %53 = vector.shape_cast %52 : vector<1x1x24x32xbf16> to vector<24x32xbf16>
    %c6_42 = arith.constant 6 : index
    %c0_43 = arith.constant 0 : index
    %c0_44 = arith.constant 0 : index
    %54 = vector.load %arg3[%c6_42, %c0_43, %c0_44] : memref<99x32x128xbf16, #tpu.memory_space<vmem>>, vector<1x32x128xbf16>
    %55 = vector.shape_cast %54 : vector<1x32x128xbf16> to vector<32x128xbf16>
    %cst_45 = arith.constant dense<0.000000e+00> : vector<24x128xf32>
    %56 = tpu.matmul %53, %55, %cst_45 {dimension_numbers = #tpu.dot_dimension_numbers<[1], [0], [0], [1], [0, 0, 1, 1], [], []>} : vector<24x32xbf16>, vector<32x128xbf16>, vector<24x128xf32> -> vector<24x128xf32>
    %57 = arith.addf %49, %56 : vector<24x128xf32>
    %c0_i32_46 = arith.constant 0 : i32
    %58 = arith.addi %arg1, %c0_i32_46 : i32
    %c0_47 = arith.constant 0 : index
    %59 = arith.index_cast %58 : i32 to index
    %c13 = arith.constant 13 : index
    %c0_48 = arith.constant 0 : index
    %60 = vector.load %arg2[%c0_47, %59, %c13, %c0_48] : memref<1x14x38x32xbf16, #tpu.memory_space<vmem>>, vector<1x1x24x32xbf16>
    %61 = vector.shape_cast %60 : vector<1x1x24x32xbf16> to vector<24x32xbf16>
    %c7_49 = arith.constant 7 : index
    %c0_50 = arith.constant 0 : index
    %c0_51 = arith.constant 0 : index
    %62 = vector.load %arg3[%c7_49, %c0_50, %c0_51] : memref<99x32x128xbf16, #tpu.memory_space<vmem>>, vector<1x32x128xbf16>
    %63 = vector.shape_cast %62 : vector<1x32x128xbf16> to vector<32x128xbf16>
    %cst_52 = arith.constant dense<0.000000e+00> : vector<24x128xf32>
    %64 = tpu.matmul %61, %63, %cst_52 {dimension_numbers = #tpu.dot_dimension_numbers<[1], [0], [0], [1], [0, 0, 1, 1], [], []>} : vector<24x32xbf16>, vector<32x128xbf16>, vector<24x128xf32> -> vector<24x128xf32>
    %65 = arith.addf %57, %64 : vector<24x128xf32>
    %c0_i32_53 = arith.constant 0 : i32
    %66 = arith.addi %arg1, %c0_i32_53 : i32
    %c0_54 = arith.constant 0 : index
    %67 = arith.index_cast %66 : i32 to index
    %c14 = arith.constant 14 : index
    %c0_55 = arith.constant 0 : index
    %68 = vector.load %arg2[%c0_54, %67, %c14, %c0_55] : memref<1x14x38x32xbf16, #tpu.memory_space<vmem>>, vector<1x1x24x32xbf16>
    %69 = vector.shape_cast %68 : vector<1x1x24x32xbf16> to vector<24x32xbf16>
    %c8_56 = arith.constant 8 : index
    %c0_57 = arith.constant 0 : index
    %c0_58 = arith.constant 0 : index
    %70 = vector.load %arg3[%c8_56, %c0_57, %c0_58] : memref<99x32x128xbf16, #tpu.memory_space<vmem>>, vector<1x32x128xbf16>
    %71 = vector.shape_cast %70 : vector<1x32x128xbf16> to vector<32x128xbf16>
    %cst_59 = arith.constant dense<0.000000e+00> : vector<24x128xf32>
    %72 = tpu.matmul %69, %71, %cst_59 {dimension_numbers = #tpu.dot_dimension_numbers<[1], [0], [0], [1], [0, 0, 1, 1], [], []>} : vector<24x32xbf16>, vector<32x128xbf16>, vector<24x128xf32> -> vector<24x128xf32>
    %73 = arith.addf %65, %72 : vector<24x128xf32>
    %c1_i32 = arith.constant 1 : i32
    %74 = arith.addi %arg1, %c1_i32 : i32
    %c0_60 = arith.constant 0 : index
    %75 = arith.index_cast %74 : i32 to index
    %c0_61 = arith.constant 0 : index
    %c0_62 = arith.constant 0 : index
    %76 = vector.load %arg2[%c0_60, %75, %c0_61, %c0_62] : memref<1x14x38x32xbf16, #tpu.memory_space<vmem>>, vector<1x1x24x32xbf16>
    %77 = vector.shape_cast %76 : vector<1x1x24x32xbf16> to vector<24x32xbf16>
    %c9 = arith.constant 9 : index
    %c0_63 = arith.constant 0 : index
    %c0_64 = arith.constant 0 : index
    %78 = vector.load %arg3[%c9, %c0_63, %c0_64] : memref<99x32x128xbf16, #tpu.memory_space<vmem>>, vector<1x32x128xbf16>
    %79 = vector.shape_cast %78 : vector<1x32x128xbf16> to vector<32x128xbf16>
    %cst_65 = arith.constant dense<0.000000e+00> : vector<24x128xf32>
    %80 = tpu.matmul %77, %79, %cst_65 {dimension_numbers = #tpu.dot_dimension_numbers<[1], [0], [0], [1], [0, 0, 1, 1], [], []>} : vector<24x32xbf16>, vector<32x128xbf16>, vector<24x128xf32> -> vector<24x128xf32>
    %81 = arith.addf %73, %80 : vector<24x128xf32>
    %c1_i32_66 = arith.constant 1 : i32
    %82 = arith.addi %arg1, %c1_i32_66 : i32
    %c0_67 = arith.constant 0 : index
    %83 = arith.index_cast %82 : i32 to index
    %c1_68 = arith.constant 1 : index
    %c0_69 = arith.constant 0 : index
    %84 = vector.load %arg2[%c0_67, %83, %c1_68, %c0_69] : memref<1x14x38x32xbf16, #tpu.memory_space<vmem>>, vector<1x1x24x32xbf16>
    %85 = vector.shape_cast %84 : vector<1x1x24x32xbf16> to vector<24x32xbf16>
    %c10 = arith.constant 10 : index
    %c0_70 = arith.constant 0 : index
    %c0_71 = arith.constant 0 : index
    %86 = vector.load %arg3[%c10, %c0_70, %c0_71] : memref<99x32x128xbf16, #tpu.memory_space<vmem>>, vector<1x32x128xbf16>
    %87 = vector.shape_cast %86 : vector<1x32x128xbf16> to vector<32x128xbf16>
    %cst_72 = arith.constant dense<0.000000e+00> : vector<24x128xf32>
    %88 = tpu.matmul %85, %87, %cst_72 {dimension_numbers = #tpu.dot_dimension_numbers<[1], [0], [0], [1], [0, 0, 1, 1], [], []>} : vector<24x32xbf16>, vector<32x128xbf16>, vector<24x128xf32> -> vector<24x128xf32>
    %89 = arith.addf %81, %88 : vector<24x128xf32>
    %c1_i32_73 = arith.constant 1 : i32
    %90 = arith.addi %arg1, %c1_i32_73 : i32
    %c0_74 = arith.constant 0 : index
    %91 = arith.index_cast %90 : i32 to index
    %c2_75 = arith.constant 2 : index
    %c0_76 = arith.constant 0 : index
    %92 = vector.load %arg2[%c0_74, %91, %c2_75, %c0_76] : memref<1x14x38x32xbf16, #tpu.memory_space<vmem>>, vector<1x1x24x32xbf16>
    %93 = vector.shape_cast %92 : vector<1x1x24x32xbf16> to vector<24x32xbf16>
    %c11 = arith.constant 11 : index
    %c0_77 = arith.constant 0 : index
    %c0_78 = arith.constant 0 : index
    %94 = vector.load %arg3[%c11, %c0_77, %c0_78] : memref<99x32x128xbf16, #tpu.memory_space<vmem>>, vector<1x32x128xbf16>
    %95 = vector.shape_cast %94 : vector<1x32x128xbf16> to vector<32x128xbf16>
    %cst_79 = arith.constant dense<0.000000e+00> : vector<24x128xf32>
    %96 = tpu.matmul %93, %95, %cst_79 {dimension_numbers = #tpu.dot_dimension_numbers<[1], [0], [0], [1], [0, 0, 1, 1], [], []>} : vector<24x32xbf16>, vector<32x128xbf16>, vector<24x128xf32> -> vector<24x128xf32>
    %97 = arith.addf %89, %96 : vector<24x128xf32>
    %c1_i32_80 = arith.constant 1 : i32
    %98 = arith.addi %arg1, %c1_i32_80 : i32
    %c0_81 = arith.constant 0 : index
    %99 = arith.index_cast %98 : i32 to index
    %c6_82 = arith.constant 6 : index
    %c0_83 = arith.constant 0 : index
    %100 = vector.load %arg2[%c0_81, %99, %c6_82, %c0_83] : memref<1x14x38x32xbf16, #tpu.memory_space<vmem>>, vector<1x1x24x32xbf16>
    %101 = vector.shape_cast %100 : vector<1x1x24x32xbf16> to vector<24x32xbf16>
    %c12_84 = arith.constant 12 : index
    %c0_85 = arith.constant 0 : index
    %c0_86 = arith.constant 0 : index
    %102 = vector.load %arg3[%c12_84, %c0_85, %c0_86] : memref<99x32x128xbf16, #tpu.memory_space<vmem>>, vector<1x32x128xbf16>
    %103 = vector.shape_cast %102 : vector<1x32x128xbf16> to vector<32x128xbf16>
    %cst_87 = arith.constant dense<0.000000e+00> : vector<24x128xf32>
    %104 = tpu.matmul %101, %103, %cst_87 {dimension_numbers = #tpu.dot_dimension_numbers<[1], [0], [0], [1], [0, 0, 1, 1], [], []>} : vector<24x32xbf16>, vector<32x128xbf16>, vector<24x128xf32> -> vector<24x128xf32>
    %105 = arith.addf %97, %104 : vector<24x128xf32>
    %c1_i32_88 = arith.constant 1 : i32
    %106 = arith.addi %arg1, %c1_i32_88 : i32
    %c0_89 = arith.constant 0 : index
    %107 = arith.index_cast %106 : i32 to index
    %c7_90 = arith.constant 7 : index
    %c0_91 = arith.constant 0 : index
    %108 = vector.load %arg2[%c0_89, %107, %c7_90, %c0_91] : memref<1x14x38x32xbf16, #tpu.memory_space<vmem>>, vector<1x1x24x32xbf16>
    %109 = vector.shape_cast %108 : vector<1x1x24x32xbf16> to vector<24x32xbf16>
    %c13_92 = arith.constant 13 : index
    %c0_93 = arith.constant 0 : index
    %c0_94 = arith.constant 0 : index
    %110 = vector.load %arg3[%c13_92, %c0_93, %c0_94] : memref<99x32x128xbf16, #tpu.memory_space<vmem>>, vector<1x32x128xbf16>
    %111 = vector.shape_cast %110 : vector<1x32x128xbf16> to vector<32x128xbf16>
    %cst_95 = arith.constant dense<0.000000e+00> : vector<24x128xf32>
    %112 = tpu.matmul %109, %111, %cst_95 {dimension_numbers = #tpu.dot_dimension_numbers<[1], [0], [0], [1], [0, 0, 1, 1], [], []>} : vector<24x32xbf16>, vector<32x128xbf16>, vector<24x128xf32> -> vector<24x128xf32>
    %113 = arith.addf %105, %112 : vector<24x128xf32>
    %c1_i32_96 = arith.constant 1 : i32
    %114 = arith.addi %arg1, %c1_i32_96 : i32
    %c0_97 = arith.constant 0 : index
    %115 = arith.index_cast %114 : i32 to index
    %c8_98 = arith.constant 8 : index
    %c0_99 = arith.constant 0 : index
    %116 = vector.load %arg2[%c0_97, %115, %c8_98, %c0_99] : memref<1x14x38x32xbf16, #tpu.memory_space<vmem>>, vector<1x1x24x32xbf16>
    %117 = vector.shape_cast %116 : vector<1x1x24x32xbf16> to vector<24x32xbf16>
    %c14_100 = arith.constant 14 : index
    %c0_101 = arith.constant 0 : index
    %c0_102 = arith.constant 0 : index
    %118 = vector.load %arg3[%c14_100, %c0_101, %c0_102] : memref<99x32x128xbf16, #tpu.memory_space<vmem>>, vector<1x32x128xbf16>
    %119 = vector.shape_cast %118 : vector<1x32x128xbf16> to vector<32x128xbf16>
    %cst_103 = arith.constant dense<0.000000e+00> : vector<24x128xf32>
    %120 = tpu.matmul %117, %119, %cst_103 {dimension_numbers = #tpu.dot_dimension_numbers<[1], [0], [0], [1], [0, 0, 1, 1], [], []>} : vector<24x32xbf16>, vector<32x128xbf16>, vector<24x128xf32> -> vector<24x128xf32>
    %121 = arith.addf %113, %120 : vector<24x128xf32>
    %c1_i32_104 = arith.constant 1 : i32
    %122 = arith.addi %arg1, %c1_i32_104 : i32
    %c0_105 = arith.constant 0 : index
    %123 = arith.index_cast %122 : i32 to index
    %c12_106 = arith.constant 12 : index
    %c0_107 = arith.constant 0 : index
    %124 = vector.load %arg2[%c0_105, %123, %c12_106, %c0_107] : memref<1x14x38x32xbf16, #tpu.memory_space<vmem>>, vector<1x1x24x32xbf16>
    %125 = vector.shape_cast %124 : vector<1x1x24x32xbf16> to vector<24x32xbf16>
    %c15 = arith.constant 15 : index
    %c0_108 = arith.constant 0 : index
    %c0_109 = arith.constant 0 : index
    %126 = vector.load %arg3[%c15, %c0_108, %c0_109] : memref<99x32x128xbf16, #tpu.memory_space<vmem>>, vector<1x32x128xbf16>
    %127 = vector.shape_cast %126 : vector<1x32x128xbf16> to vector<32x128xbf16>
    %cst_110 = arith.constant dense<0.000000e+00> : vector<24x128xf32>
    %128 = tpu.matmul %125, %127, %cst_110 {dimension_numbers = #tpu.dot_dimension_numbers<[1], [0], [0], [1], [0, 0, 1, 1], [], []>} : vector<24x32xbf16>, vector<32x128xbf16>, vector<24x128xf32> -> vector<24x128xf32>
    %129 = arith.addf %121, %128 : vector<24x128xf32>
    %c1_i32_111 = arith.constant 1 : i32
    %130 = arith.addi %arg1, %c1_i32_111 : i32
    %c0_112 = arith.constant 0 : index
    %131 = arith.index_cast %130 : i32 to index
    %c13_113 = arith.constant 13 : index
    %c0_114 = arith.constant 0 : index
    %132 = vector.load %arg2[%c0_112, %131, %c13_113, %c0_114] : memref<1x14x38x32xbf16, #tpu.memory_space<vmem>>, vector<1x1x24x32xbf16>
    %133 = vector.shape_cast %132 : vector<1x1x24x32xbf16> to vector<24x32xbf16>
    %c16 = arith.constant 16 : index
    %c0_115 = arith.constant 0 : index
    %c0_116 = arith.constant 0 : index
    %134 = vector.load %arg3[%c16, %c0_115, %c0_116] : memref<99x32x128xbf16, #tpu.memory_space<vmem>>, vector<1x32x128xbf16>
    %135 = vector.shape_cast %134 : vector<1x32x128xbf16> to vector<32x128xbf16>
    %cst_117 = arith.constant dense<0.000000e+00> : vector<24x128xf32>
    %136 = tpu.matmul %133, %135, %cst_117 {dimension_numbers = #tpu.dot_dimension_numbers<[1], [0], [0], [1], [0, 0, 1, 1], [], []>} : vector<24x32xbf16>, vector<32x128xbf16>, vector<24x128xf32> -> vector<24x128xf32>
    %137 = arith.addf %129, %136 : vector<24x128xf32>
    %c1_i32_118 = arith.constant 1 : i32
    %138 = arith.addi %arg1, %c1_i32_118 : i32
    %c0_119 = arith.constant 0 : index
    %139 = arith.index_cast %138 : i32 to index
    %c14_120 = arith.constant 14 : index
    %c0_121 = arith.constant 0 : index
    %140 = vector.load %arg2[%c0_119, %139, %c14_120, %c0_121] : memref<1x14x38x32xbf16, #tpu.memory_space<vmem>>, vector<1x1x24x32xbf16>
    %141 = vector.shape_cast %140 : vector<1x1x24x32xbf16> to vector<24x32xbf16>
    %c17 = arith.constant 17 : index
    %c0_122 = arith.constant 0 : index
    %c0_123 = arith.constant 0 : index
    %142 = vector.load %arg3[%c17, %c0_122, %c0_123] : memref<99x32x128xbf16, #tpu.memory_space<vmem>>, vector<1x32x128xbf16>
    %143 = vector.shape_cast %142 : vector<1x32x128xbf16> to vector<32x128xbf16>
    %cst_124 = arith.constant dense<0.000000e+00> : vector<24x128xf32>
    %144 = tpu.matmul %141, %143, %cst_124 {dimension_numbers = #tpu.dot_dimension_numbers<[1], [0], [0], [1], [0, 0, 1, 1], [], []>} : vector<24x32xbf16>, vector<32x128xbf16>, vector<24x128xf32> -> vector<24x128xf32>
    %145 = arith.addf %137, %144 : vector<24x128xf32>
    %c2_i32 = arith.constant 2 : i32
    %146 = arith.addi %arg1, %c2_i32 : i32
    %c0_125 = arith.constant 0 : index
    %147 = arith.index_cast %146 : i32 to index
    %c0_126 = arith.constant 0 : index
    %c0_127 = arith.constant 0 : index
    %148 = vector.load %arg2[%c0_125, %147, %c0_126, %c0_127] : memref<1x14x38x32xbf16, #tpu.memory_space<vmem>>, vector<1x1x24x32xbf16>
    %149 = vector.shape_cast %148 : vector<1x1x24x32xbf16> to vector<24x32xbf16>
    %c18 = arith.constant 18 : index
    %c0_128 = arith.constant 0 : index
    %c0_129 = arith.constant 0 : index
    %150 = vector.load %arg3[%c18, %c0_128, %c0_129] : memref<99x32x128xbf16, #tpu.memory_space<vmem>>, vector<1x32x128xbf16>
    %151 = vector.shape_cast %150 : vector<1x32x128xbf16> to vector<32x128xbf16>
    %cst_130 = arith.constant dense<0.000000e+00> : vector<24x128xf32>
    %152 = tpu.matmul %149, %151, %cst_130 {dimension_numbers = #tpu.dot_dimension_numbers<[1], [0], [0], [1], [0, 0, 1, 1], [], []>} : vector<24x32xbf16>, vector<32x128xbf16>, vector<24x128xf32> -> vector<24x128xf32>
    %153 = arith.addf %145, %152 : vector<24x128xf32>
    %c2_i32_131 = arith.constant 2 : i32
    %154 = arith.addi %arg1, %c2_i32_131 : i32
    %c0_132 = arith.constant 0 : index
    %155 = arith.index_cast %154 : i32 to index
    %c1_133 = arith.constant 1 : index
    %c0_134 = arith.constant 0 : index
    %156 = vector.load %arg2[%c0_132, %155, %c1_133, %c0_134] : memref<1x14x38x32xbf16, #tpu.memory_space<vmem>>, vector<1x1x24x32xbf16>
    %157 = vector.shape_cast %156 : vector<1x1x24x32xbf16> to vector<24x32xbf16>
    %c19 = arith.constant 19 : index
    %c0_135 = arith.constant 0 : index
    %c0_136 = arith.constant 0 : index
    %158 = vector.load %arg3[%c19, %c0_135, %c0_136] : memref<99x32x128xbf16, #tpu.memory_space<vmem>>, vector<1x32x128xbf16>
    %159 = vector.shape_cast %158 : vector<1x32x128xbf16> to vector<32x128xbf16>
    %cst_137 = arith.constant dense<0.000000e+00> : vector<24x128xf32>
    %160 = tpu.matmul %157, %159, %cst_137 {dimension_numbers = #tpu.dot_dimension_numbers<[1], [0], [0], [1], [0, 0, 1, 1], [], []>} : vector<24x32xbf16>, vector<32x128xbf16>, vector<24x128xf32> -> vector<24x128xf32>
    %161 = arith.addf %153, %160 : vector<24x128xf32>
    %c2_i32_138 = arith.constant 2 : i32
    %162 = arith.addi %arg1, %c2_i32_138 : i32
    %c0_139 = arith.constant 0 : index
    %163 = arith.index_cast %162 : i32 to index
    %c2_140 = arith.constant 2 : index
    %c0_141 = arith.constant 0 : index
    %164 = vector.load %arg2[%c0_139, %163, %c2_140, %c0_141] : memref<1x14x38x32xbf16, #tpu.memory_space<vmem>>, vector<1x1x24x32xbf16>
    %165 = vector.shape_cast %164 : vector<1x1x24x32xbf16> to vector<24x32xbf16>
    %c20 = arith.constant 20 : index
    %c0_142 = arith.constant 0 : index
    %c0_143 = arith.constant 0 : index
    %166 = vector.load %arg3[%c20, %c0_142, %c0_143] : memref<99x32x128xbf16, #tpu.memory_space<vmem>>, vector<1x32x128xbf16>
    %167 = vector.shape_cast %166 : vector<1x32x128xbf16> to vector<32x128xbf16>
    %cst_144 = arith.constant dense<0.000000e+00> : vector<24x128xf32>
    %168 = tpu.matmul %165, %167, %cst_144 {dimension_numbers = #tpu.dot_dimension_numbers<[1], [0], [0], [1], [0, 0, 1, 1], [], []>} : vector<24x32xbf16>, vector<32x128xbf16>, vector<24x128xf32> -> vector<24x128xf32>
    %169 = arith.addf %161, %168 : vector<24x128xf32>
    %c2_i32_145 = arith.constant 2 : i32
    %170 = arith.addi %arg1, %c2_i32_145 : i32
    %c0_146 = arith.constant 0 : index
    %171 = arith.index_cast %170 : i32 to index
    %c6_147 = arith.constant 6 : index
    %c0_148 = arith.constant 0 : index
    %172 = vector.load %arg2[%c0_146, %171, %c6_147, %c0_148] : memref<1x14x38x32xbf16, #tpu.memory_space<vmem>>, vector<1x1x24x32xbf16>
    %173 = vector.shape_cast %172 : vector<1x1x24x32xbf16> to vector<24x32xbf16>
    %c21 = arith.constant 21 : index
    %c0_149 = arith.constant 0 : index
    %c0_150 = arith.constant 0 : index
    %174 = vector.load %arg3[%c21, %c0_149, %c0_150] : memref<99x32x128xbf16, #tpu.memory_space<vmem>>, vector<1x32x128xbf16>
    %175 = vector.shape_cast %174 : vector<1x32x128xbf16> to vector<32x128xbf16>
    %cst_151 = arith.constant dense<0.000000e+00> : vector<24x128xf32>
    %176 = tpu.matmul %173, %175, %cst_151 {dimension_numbers = #tpu.dot_dimension_numbers<[1], [0], [0], [1], [0, 0, 1, 1], [], []>} : vector<24x32xbf16>, vector<32x128xbf16>, vector<24x128xf32> -> vector<24x128xf32>
    %177 = arith.addf %169, %176 : vector<24x128xf32>
    %c2_i32_152 = arith.constant 2 : i32
    %178 = arith.addi %arg1, %c2_i32_152 : i32
    %c0_153 = arith.constant 0 : index
    %179 = arith.index_cast %178 : i32 to index
    %c7_154 = arith.constant 7 : index
    %c0_155 = arith.constant 0 : index
    %180 = vector.load %arg2[%c0_153, %179, %c7_154, %c0_155] : memref<1x14x38x32xbf16, #tpu.memory_space<vmem>>, vector<1x1x24x32xbf16>
    %181 = vector.shape_cast %180 : vector<1x1x24x32xbf16> to vector<24x32xbf16>
    %c22 = arith.constant 22 : index
    %c0_156 = arith.constant 0 : index
    %c0_157 = arith.constant 0 : index
    %182 = vector.load %arg3[%c22, %c0_156, %c0_157] : memref<99x32x128xbf16, #tpu.memory_space<vmem>>, vector<1x32x128xbf16>
    %183 = vector.shape_cast %182 : vector<1x32x128xbf16> to vector<32x128xbf16>
    %cst_158 = arith.constant dense<0.000000e+00> : vector<24x128xf32>
    %184 = tpu.matmul %181, %183, %cst_158 {dimension_numbers = #tpu.dot_dimension_numbers<[1], [0], [0], [1], [0, 0, 1, 1], [], []>} : vector<24x32xbf16>, vector<32x128xbf16>, vector<24x128xf32> -> vector<24x128xf32>
    %185 = arith.addf %177, %184 : vector<24x128xf32>
    %c2_i32_159 = arith.constant 2 : i32
    %186 = arith.addi %arg1, %c2_i32_159 : i32
    %c0_160 = arith.constant 0 : index
    %187 = arith.index_cast %186 : i32 to index
    %c8_161 = arith.constant 8 : index
    %c0_162 = arith.constant 0 : index
    %188 = vector.load %arg2[%c0_160, %187, %c8_161, %c0_162] : memref<1x14x38x32xbf16, #tpu.memory_space<vmem>>, vector<1x1x24x32xbf16>
    %189 = vector.shape_cast %188 : vector<1x1x24x32xbf16> to vector<24x32xbf16>
    %c23 = arith.constant 23 : index
    %c0_163 = arith.constant 0 : index
    %c0_164 = arith.constant 0 : index
    %190 = vector.load %arg3[%c23, %c0_163, %c0_164] : memref<99x32x128xbf16, #tpu.memory_space<vmem>>, vector<1x32x128xbf16>
    %191 = vector.shape_cast %190 : vector<1x32x128xbf16> to vector<32x128xbf16>
    %cst_165 = arith.constant dense<0.000000e+00> : vector<24x128xf32>
    %192 = tpu.matmul %189, %191, %cst_165 {dimension_numbers = #tpu.dot_dimension_numbers<[1], [0], [0], [1], [0, 0, 1, 1], [], []>} : vector<24x32xbf16>, vector<32x128xbf16>, vector<24x128xf32> -> vector<24x128xf32>
    %193 = arith.addf %185, %192 : vector<24x128xf32>
    %c2_i32_166 = arith.constant 2 : i32
    %194 = arith.addi %arg1, %c2_i32_166 : i32
    %c0_167 = arith.constant 0 : index
    %195 = arith.index_cast %194 : i32 to index
    %c12_168 = arith.constant 12 : index
    %c0_169 = arith.constant 0 : index
    %196 = vector.load %arg2[%c0_167, %195, %c12_168, %c0_169] : memref<1x14x38x32xbf16, #tpu.memory_space<vmem>>, vector<1x1x24x32xbf16>
    %197 = vector.shape_cast %196 : vector<1x1x24x32xbf16> to vector<24x32xbf16>
    %c24 = arith.constant 24 : index
    %c0_170 = arith.constant 0 : index
    %c0_171 = arith.constant 0 : index
    %198 = vector.load %arg3[%c24, %c0_170, %c0_171] : memref<99x32x128xbf16, #tpu.memory_space<vmem>>, vector<1x32x128xbf16>
    %199 = vector.shape_cast %198 : vector<1x32x128xbf16> to vector<32x128xbf16>
    %cst_172 = arith.constant dense<0.000000e+00> : vector<24x128xf32>
    %200 = tpu.matmul %197, %199, %cst_172 {dimension_numbers = #tpu.dot_dimension_numbers<[1], [0], [0], [1], [0, 0, 1, 1], [], []>} : vector<24x32xbf16>, vector<32x128xbf16>, vector<24x128xf32> -> vector<24x128xf32>
    %201 = arith.addf %193, %200 : vector<24x128xf32>
    %c2_i32_173 = arith.constant 2 : i32
    %202 = arith.addi %arg1, %c2_i32_173 : i32
    %c0_174 = arith.constant 0 : index
    %203 = arith.index_cast %202 : i32 to index
    %c13_175 = arith.constant 13 : index
    %c0_176 = arith.constant 0 : index
    %204 = vector.load %arg2[%c0_174, %203, %c13_175, %c0_176] : memref<1x14x38x32xbf16, #tpu.memory_space<vmem>>, vector<1x1x24x32xbf16>
    %205 = vector.shape_cast %204 : vector<1x1x24x32xbf16> to vector<24x32xbf16>
    %c25 = arith.constant 25 : index
    %c0_177 = arith.constant 0 : index
    %c0_178 = arith.constant 0 : index
    %206 = vector.load %arg3[%c25, %c0_177, %c0_178] : memref<99x32x128xbf16, #tpu.memory_space<vmem>>, vector<1x32x128xbf16>
    %207 = vector.shape_cast %206 : vector<1x32x128xbf16> to vector<32x128xbf16>
    %cst_179 = arith.constant dense<0.000000e+00> : vector<24x128xf32>
    %208 = tpu.matmul %205, %207, %cst_179 {dimension_numbers = #tpu.dot_dimension_numbers<[1], [0], [0], [1], [0, 0, 1, 1], [], []>} : vector<24x32xbf16>, vector<32x128xbf16>, vector<24x128xf32> -> vector<24x128xf32>
    %209 = arith.addf %201, %208 : vector<24x128xf32>
    %c2_i32_180 = arith.constant 2 : i32
    %210 = arith.addi %arg1, %c2_i32_180 : i32
    %c0_181 = arith.constant 0 : index
    %211 = arith.index_cast %210 : i32 to index
    %c14_182 = arith.constant 14 : index
    %c0_183 = arith.constant 0 : index
    %212 = vector.load %arg2[%c0_181, %211, %c14_182, %c0_183] : memref<1x14x38x32xbf16, #tpu.memory_space<vmem>>, vector<1x1x24x32xbf16>
    %213 = vector.shape_cast %212 : vector<1x1x24x32xbf16> to vector<24x32xbf16>
    %c26 = arith.constant 26 : index
    %c0_184 = arith.constant 0 : index
    %c0_185 = arith.constant 0 : index
    %214 = vector.load %arg3[%c26, %c0_184, %c0_185] : memref<99x32x128xbf16, #tpu.memory_space<vmem>>, vector<1x32x128xbf16>
    %215 = vector.shape_cast %214 : vector<1x32x128xbf16> to vector<32x128xbf16>
    %cst_186 = arith.constant dense<0.000000e+00> : vector<24x128xf32>
    %216 = tpu.matmul %213, %215, %cst_186 {dimension_numbers = #tpu.dot_dimension_numbers<[1], [0], [0], [1], [0, 0, 1, 1], [], []>} : vector<24x32xbf16>, vector<32x128xbf16>, vector<24x128xf32> -> vector<24x128xf32>
    %217 = arith.addf %209, %216 : vector<24x128xf32>
    %c3_i32 = arith.constant 3 : i32
    %218 = arith.addi %arg1, %c3_i32 : i32
    %c0_187 = arith.constant 0 : index
    %219 = arith.index_cast %218 : i32 to index
    %c0_188 = arith.constant 0 : index
    %c0_189 = arith.constant 0 : index
    %220 = vector.load %arg2[%c0_187, %219, %c0_188, %c0_189] : memref<1x14x38x32xbf16, #tpu.memory_space<vmem>>, vector<1x1x24x32xbf16>
    %221 = vector.shape_cast %220 : vector<1x1x24x32xbf16> to vector<24x32xbf16>
    %c27 = arith.constant 27 : index
    %c0_190 = arith.constant 0 : index
    %c0_191 = arith.constant 0 : index
    %222 = vector.load %arg3[%c27, %c0_190, %c0_191] : memref<99x32x128xbf16, #tpu.memory_space<vmem>>, vector<1x32x128xbf16>
    %223 = vector.shape_cast %222 : vector<1x32x128xbf16> to vector<32x128xbf16>
    %cst_192 = arith.constant dense<0.000000e+00> : vector<24x128xf32>
    %224 = tpu.matmul %221, %223, %cst_192 {dimension_numbers = #tpu.dot_dimension_numbers<[1], [0], [0], [1], [0, 0, 1, 1], [], []>} : vector<24x32xbf16>, vector<32x128xbf16>, vector<24x128xf32> -> vector<24x128xf32>
    %225 = arith.addf %217, %224 : vector<24x128xf32>
    %c3_i32_193 = arith.constant 3 : i32
    %226 = arith.addi %arg1, %c3_i32_193 : i32
    %c0_194 = arith.constant 0 : index
    %227 = arith.index_cast %226 : i32 to index
    %c1_195 = arith.constant 1 : index
    %c0_196 = arith.constant 0 : index
    %228 = vector.load %arg2[%c0_194, %227, %c1_195, %c0_196] : memref<1x14x38x32xbf16, #tpu.memory_space<vmem>>, vector<1x1x24x32xbf16>
    %229 = vector.shape_cast %228 : vector<1x1x24x32xbf16> to vector<24x32xbf16>
    %c28 = arith.constant 28 : index
    %c0_197 = arith.constant 0 : index
    %c0_198 = arith.constant 0 : index
    %230 = vector.load %arg3[%c28, %c0_197, %c0_198] : memref<99x32x128xbf16, #tpu.memory_space<vmem>>, vector<1x32x128xbf16>
    %231 = vector.shape_cast %230 : vector<1x32x128xbf16> to vector<32x128xbf16>
    %cst_199 = arith.constant dense<0.000000e+00> : vector<24x128xf32>
    %232 = tpu.matmul %229, %231, %cst_199 {dimension_numbers = #tpu.dot_dimension_numbers<[1], [0], [0], [1], [0, 0, 1, 1], [], []>} : vector<24x32xbf16>, vector<32x128xbf16>, vector<24x128xf32> -> vector<24x128xf32>
    %233 = arith.addf %225, %232 : vector<24x128xf32>
    %c3_i32_200 = arith.constant 3 : i32
    %234 = arith.addi %arg1, %c3_i32_200 : i32
    %c0_201 = arith.constant 0 : index
    %235 = arith.index_cast %234 : i32 to index
    %c2_202 = arith.constant 2 : index
    %c0_203 = arith.constant 0 : index
    %236 = vector.load %arg2[%c0_201, %235, %c2_202, %c0_203] : memref<1x14x38x32xbf16, #tpu.memory_space<vmem>>, vector<1x1x24x32xbf16>
    %237 = vector.shape_cast %236 : vector<1x1x24x32xbf16> to vector<24x32xbf16>
    %c29 = arith.constant 29 : index
    %c0_204 = arith.constant 0 : index
    %c0_205 = arith.constant 0 : index
    %238 = vector.load %arg3[%c29, %c0_204, %c0_205] : memref<99x32x128xbf16, #tpu.memory_space<vmem>>, vector<1x32x128xbf16>
    %239 = vector.shape_cast %238 : vector<1x32x128xbf16> to vector<32x128xbf16>
    %cst_206 = arith.constant dense<0.000000e+00> : vector<24x128xf32>
    %240 = tpu.matmul %237, %239, %cst_206 {dimension_numbers = #tpu.dot_dimension_numbers<[1], [0], [0], [1], [0, 0, 1, 1], [], []>} : vector<24x32xbf16>, vector<32x128xbf16>, vector<24x128xf32> -> vector<24x128xf32>
    %241 = arith.addf %233, %240 : vector<24x128xf32>
    %c3_i32_207 = arith.constant 3 : i32
    %242 = arith.addi %arg1, %c3_i32_207 : i32
    %c0_208 = arith.constant 0 : index
    %243 = arith.index_cast %242 : i32 to index
    %c6_209 = arith.constant 6 : index
    %c0_210 = arith.constant 0 : index
    %244 = vector.load %arg2[%c0_208, %243, %c6_209, %c0_210] : memref<1x14x38x32xbf16, #tpu.memory_space<vmem>>, vector<1x1x24x32xbf16>
    %245 = vector.shape_cast %244 : vector<1x1x24x32xbf16> to vector<24x32xbf16>
    %c30 = arith.constant 30 : index
    %c0_211 = arith.constant 0 : index
    %c0_212 = arith.constant 0 : index
    %246 = vector.load %arg3[%c30, %c0_211, %c0_212] : memref<99x32x128xbf16, #tpu.memory_space<vmem>>, vector<1x32x128xbf16>
    %247 = vector.shape_cast %246 : vector<1x32x128xbf16> to vector<32x128xbf16>
    %cst_213 = arith.constant dense<0.000000e+00> : vector<24x128xf32>
    %248 = tpu.matmul %245, %247, %cst_213 {dimension_numbers = #tpu.dot_dimension_numbers<[1], [0], [0], [1], [0, 0, 1, 1], [], []>} : vector<24x32xbf16>, vector<32x128xbf16>, vector<24x128xf32> -> vector<24x128xf32>
    %249 = arith.addf %241, %248 : vector<24x128xf32>
    %c3_i32_214 = arith.constant 3 : i32
    %250 = arith.addi %arg1, %c3_i32_214 : i32
    %c0_215 = arith.constant 0 : index
    %251 = arith.index_cast %250 : i32 to index
    %c7_216 = arith.constant 7 : index
    %c0_217 = arith.constant 0 : index
    %252 = vector.load %arg2[%c0_215, %251, %c7_216, %c0_217] : memref<1x14x38x32xbf16, #tpu.memory_space<vmem>>, vector<1x1x24x32xbf16>
    %253 = vector.shape_cast %252 : vector<1x1x24x32xbf16> to vector<24x32xbf16>
    %c31 = arith.constant 31 : index
    %c0_218 = arith.constant 0 : index
    %c0_219 = arith.constant 0 : index
    %254 = vector.load %arg3[%c31, %c0_218, %c0_219] : memref<99x32x128xbf16, #tpu.memory_space<vmem>>, vector<1x32x128xbf16>
    %255 = vector.shape_cast %254 : vector<1x32x128xbf16> to vector<32x128xbf16>
    %cst_220 = arith.constant dense<0.000000e+00> : vector<24x128xf32>
    %256 = tpu.matmul %253, %255, %cst_220 {dimension_numbers = #tpu.dot_dimension_numbers<[1], [0], [0], [1], [0, 0, 1, 1], [], []>} : vector<24x32xbf16>, vector<32x128xbf16>, vector<24x128xf32> -> vector<24x128xf32>
    %257 = arith.addf %249, %256 : vector<24x128xf32>
    %c3_i32_221 = arith.constant 3 : i32
    %258 = arith.addi %arg1, %c3_i32_221 : i32
    %c0_222 = arith.constant 0 : index
    %259 = arith.index_cast %258 : i32 to index
    %c8_223 = arith.constant 8 : index
    %c0_224 = arith.constant 0 : index
    %260 = vector.load %arg2[%c0_222, %259, %c8_223, %c0_224] : memref<1x14x38x32xbf16, #tpu.memory_space<vmem>>, vector<1x1x24x32xbf16>
    %261 = vector.shape_cast %260 : vector<1x1x24x32xbf16> to vector<24x32xbf16>
    %c32 = arith.constant 32 : index
    %c0_225 = arith.constant 0 : index
    %c0_226 = arith.constant 0 : index
    %262 = vector.load %arg3[%c32, %c0_225, %c0_226] : memref<99x32x128xbf16, #tpu.memory_space<vmem>>, vector<1x32x128xbf16>
    %263 = vector.shape_cast %262 : vector<1x32x128xbf16> to vector<32x128xbf16>
    %cst_227 = arith.constant dense<0.000000e+00> : vector<24x128xf32>
    %264 = tpu.matmul %261, %263, %cst_227 {dimension_numbers = #tpu.dot_dimension_numbers<[1], [0], [0], [1], [0, 0, 1, 1], [], []>} : vector<24x32xbf16>, vector<32x128xbf16>, vector<24x128xf32> -> vector<24x128xf32>
    %265 = arith.addf %257, %264 : vector<24x128xf32>
    %c3_i32_228 = arith.constant 3 : i32
    %266 = arith.addi %arg1, %c3_i32_228 : i32
    %c0_229 = arith.constant 0 : index
    %267 = arith.index_cast %266 : i32 to index
    %c12_230 = arith.constant 12 : index
    %c0_231 = arith.constant 0 : index
    %268 = vector.load %arg2[%c0_229, %267, %c12_230, %c0_231] : memref<1x14x38x32xbf16, #tpu.memory_space<vmem>>, vector<1x1x24x32xbf16>
    %269 = vector.shape_cast %268 : vector<1x1x24x32xbf16> to vector<24x32xbf16>
    %c33 = arith.constant 33 : index
    %c0_232 = arith.constant 0 : index
    %c0_233 = arith.constant 0 : index
    %270 = vector.load %arg3[%c33, %c0_232, %c0_233] : memref<99x32x128xbf16, #tpu.memory_space<vmem>>, vector<1x32x128xbf16>
    %271 = vector.shape_cast %270 : vector<1x32x128xbf16> to vector<32x128xbf16>
    %cst_234 = arith.constant dense<0.000000e+00> : vector<24x128xf32>
    %272 = tpu.matmul %269, %271, %cst_234 {dimension_numbers = #tpu.dot_dimension_numbers<[1], [0], [0], [1], [0, 0, 1, 1], [], []>} : vector<24x32xbf16>, vector<32x128xbf16>, vector<24x128xf32> -> vector<24x128xf32>
    %273 = arith.addf %265, %272 : vector<24x128xf32>
    %c3_i32_235 = arith.constant 3 : i32
    %274 = arith.addi %arg1, %c3_i32_235 : i32
    %c0_236 = arith.constant 0 : index
    %275 = arith.index_cast %274 : i32 to index
    %c13_237 = arith.constant 13 : index
    %c0_238 = arith.constant 0 : index
    %276 = vector.load %arg2[%c0_236, %275, %c13_237, %c0_238] : memref<1x14x38x32xbf16, #tpu.memory_space<vmem>>, vector<1x1x24x32xbf16>
    %277 = vector.shape_cast %276 : vector<1x1x24x32xbf16> to vector<24x32xbf16>
    %c34 = arith.constant 34 : index
    %c0_239 = arith.constant 0 : index
    %c0_240 = arith.constant 0 : index
    %278 = vector.load %arg3[%c34, %c0_239, %c0_240] : memref<99x32x128xbf16, #tpu.memory_space<vmem>>, vector<1x32x128xbf16>
    %279 = vector.shape_cast %278 : vector<1x32x128xbf16> to vector<32x128xbf16>
    %cst_241 = arith.constant dense<0.000000e+00> : vector<24x128xf32>
    %280 = tpu.matmul %277, %279, %cst_241 {dimension_numbers = #tpu.dot_dimension_numbers<[1], [0], [0], [1], [0, 0, 1, 1], [], []>} : vector<24x32xbf16>, vector<32x128xbf16>, vector<24x128xf32> -> vector<24x128xf32>
    %281 = arith.addf %273, %280 : vector<24x128xf32>
    %c3_i32_242 = arith.constant 3 : i32
    %282 = arith.addi %arg1, %c3_i32_242 : i32
    %c0_243 = arith.constant 0 : index
    %283 = arith.index_cast %282 : i32 to index
    %c14_244 = arith.constant 14 : index
    %c0_245 = arith.constant 0 : index
    %284 = vector.load %arg2[%c0_243, %283, %c14_244, %c0_245] : memref<1x14x38x32xbf16, #tpu.memory_space<vmem>>, vector<1x1x24x32xbf16>
    %285 = vector.shape_cast %284 : vector<1x1x24x32xbf16> to vector<24x32xbf16>
    %c35 = arith.constant 35 : index
    %c0_246 = arith.constant 0 : index
    %c0_247 = arith.constant 0 : index
    %286 = vector.load %arg3[%c35, %c0_246, %c0_247] : memref<99x32x128xbf16, #tpu.memory_space<vmem>>, vector<1x32x128xbf16>
    %287 = vector.shape_cast %286 : vector<1x32x128xbf16> to vector<32x128xbf16>
    %cst_248 = arith.constant dense<0.000000e+00> : vector<24x128xf32>
    %288 = tpu.matmul %285, %287, %cst_248 {dimension_numbers = #tpu.dot_dimension_numbers<[1], [0], [0], [1], [0, 0, 1, 1], [], []>} : vector<24x32xbf16>, vector<32x128xbf16>, vector<24x128xf32> -> vector<24x128xf32>
    %289 = arith.addf %281, %288 : vector<24x128xf32>
    %c4_i32 = arith.constant 4 : i32
    %290 = arith.addi %arg1, %c4_i32 : i32
    %c0_249 = arith.constant 0 : index
    %291 = arith.index_cast %290 : i32 to index
    %c0_250 = arith.constant 0 : index
    %c0_251 = arith.constant 0 : index
    %292 = vector.load %arg2[%c0_249, %291, %c0_250, %c0_251] : memref<1x14x38x32xbf16, #tpu.memory_space<vmem>>, vector<1x1x24x32xbf16>
    %293 = vector.shape_cast %292 : vector<1x1x24x32xbf16> to vector<24x32xbf16>
    %c36 = arith.constant 36 : index
    %c0_252 = arith.constant 0 : index
    %c0_253 = arith.constant 0 : index
    %294 = vector.load %arg3[%c36, %c0_252, %c0_253] : memref<99x32x128xbf16, #tpu.memory_space<vmem>>, vector<1x32x128xbf16>
    %295 = vector.shape_cast %294 : vector<1x32x128xbf16> to vector<32x128xbf16>
    %cst_254 = arith.constant dense<0.000000e+00> : vector<24x128xf32>
    %296 = tpu.matmul %293, %295, %cst_254 {dimension_numbers = #tpu.dot_dimension_numbers<[1], [0], [0], [1], [0, 0, 1, 1], [], []>} : vector<24x32xbf16>, vector<32x128xbf16>, vector<24x128xf32> -> vector<24x128xf32>
    %297 = arith.addf %289, %296 : vector<24x128xf32>
    %c4_i32_255 = arith.constant 4 : i32
    %298 = arith.addi %arg1, %c4_i32_255 : i32
    %c0_256 = arith.constant 0 : index
    %299 = arith.index_cast %298 : i32 to index
    %c1_257 = arith.constant 1 : index
    %c0_258 = arith.constant 0 : index
    %300 = vector.load %arg2[%c0_256, %299, %c1_257, %c0_258] : memref<1x14x38x32xbf16, #tpu.memory_space<vmem>>, vector<1x1x24x32xbf16>
    %301 = vector.shape_cast %300 : vector<1x1x24x32xbf16> to vector<24x32xbf16>
    %c37 = arith.constant 37 : index
    %c0_259 = arith.constant 0 : index
    %c0_260 = arith.constant 0 : index
    %302 = vector.load %arg3[%c37, %c0_259, %c0_260] : memref<99x32x128xbf16, #tpu.memory_space<vmem>>, vector<1x32x128xbf16>
    %303 = vector.shape_cast %302 : vector<1x32x128xbf16> to vector<32x128xbf16>
    %cst_261 = arith.constant dense<0.000000e+00> : vector<24x128xf32>
    %304 = tpu.matmul %301, %303, %cst_261 {dimension_numbers = #tpu.dot_dimension_numbers<[1], [0], [0], [1], [0, 0, 1, 1], [], []>} : vector<24x32xbf16>, vector<32x128xbf16>, vector<24x128xf32> -> vector<24x128xf32>
    %305 = arith.addf %297, %304 : vector<24x128xf32>
    %c4_i32_262 = arith.constant 4 : i32
    %306 = arith.addi %arg1, %c4_i32_262 : i32
    %c0_263 = arith.constant 0 : index
    %307 = arith.index_cast %306 : i32 to index
    %c2_264 = arith.constant 2 : index
    %c0_265 = arith.constant 0 : index
    %308 = vector.load %arg2[%c0_263, %307, %c2_264, %c0_265] : memref<1x14x38x32xbf16, #tpu.memory_space<vmem>>, vector<1x1x24x32xbf16>
    %309 = vector.shape_cast %308 : vector<1x1x24x32xbf16> to vector<24x32xbf16>
    %c38 = arith.constant 38 : index
    %c0_266 = arith.constant 0 : index
    %c0_267 = arith.constant 0 : index
    %310 = vector.load %arg3[%c38, %c0_266, %c0_267] : memref<99x32x128xbf16, #tpu.memory_space<vmem>>, vector<1x32x128xbf16>
    %311 = vector.shape_cast %310 : vector<1x32x128xbf16> to vector<32x128xbf16>
    %cst_268 = arith.constant dense<0.000000e+00> : vector<24x128xf32>
    %312 = tpu.matmul %309, %311, %cst_268 {dimension_numbers = #tpu.dot_dimension_numbers<[1], [0], [0], [1], [0, 0, 1, 1], [], []>} : vector<24x32xbf16>, vector<32x128xbf16>, vector<24x128xf32> -> vector<24x128xf32>
    %313 = arith.addf %305, %312 : vector<24x128xf32>
    %c4_i32_269 = arith.constant 4 : i32
    %314 = arith.addi %arg1, %c4_i32_269 : i32
    %c0_270 = arith.constant 0 : index
    %315 = arith.index_cast %314 : i32 to index
    %c6_271 = arith.constant 6 : index
    %c0_272 = arith.constant 0 : index
    %316 = vector.load %arg2[%c0_270, %315, %c6_271, %c0_272] : memref<1x14x38x32xbf16, #tpu.memory_space<vmem>>, vector<1x1x24x32xbf16>
    %317 = vector.shape_cast %316 : vector<1x1x24x32xbf16> to vector<24x32xbf16>
    %c39 = arith.constant 39 : index
    %c0_273 = arith.constant 0 : index
    %c0_274 = arith.constant 0 : index
    %318 = vector.load %arg3[%c39, %c0_273, %c0_274] : memref<99x32x128xbf16, #tpu.memory_space<vmem>>, vector<1x32x128xbf16>
    %319 = vector.shape_cast %318 : vector<1x32x128xbf16> to vector<32x128xbf16>
    %cst_275 = arith.constant dense<0.000000e+00> : vector<24x128xf32>
    %320 = tpu.matmul %317, %319, %cst_275 {dimension_numbers = #tpu.dot_dimension_numbers<[1], [0], [0], [1], [0, 0, 1, 1], [], []>} : vector<24x32xbf16>, vector<32x128xbf16>, vector<24x128xf32> -> vector<24x128xf32>
    %321 = arith.addf %313, %320 : vector<24x128xf32>
    %c4_i32_276 = arith.constant 4 : i32
    %322 = arith.addi %arg1, %c4_i32_276 : i32
    %c0_277 = arith.constant 0 : index
    %323 = arith.index_cast %322 : i32 to index
    %c7_278 = arith.constant 7 : index
    %c0_279 = arith.constant 0 : index
    %324 = vector.load %arg2[%c0_277, %323, %c7_278, %c0_279] : memref<1x14x38x32xbf16, #tpu.memory_space<vmem>>, vector<1x1x24x32xbf16>
    %325 = vector.shape_cast %324 : vector<1x1x24x32xbf16> to vector<24x32xbf16>
    %c40 = arith.constant 40 : index
    %c0_280 = arith.constant 0 : index
    %c0_281 = arith.constant 0 : index
    %326 = vector.load %arg3[%c40, %c0_280, %c0_281] : memref<99x32x128xbf16, #tpu.memory_space<vmem>>, vector<1x32x128xbf16>
    %327 = vector.shape_cast %326 : vector<1x32x128xbf16> to vector<32x128xbf16>
    %cst_282 = arith.constant dense<0.000000e+00> : vector<24x128xf32>
    %328 = tpu.matmul %325, %327, %cst_282 {dimension_numbers = #tpu.dot_dimension_numbers<[1], [0], [0], [1], [0, 0, 1, 1], [], []>} : vector<24x32xbf16>, vector<32x128xbf16>, vector<24x128xf32> -> vector<24x128xf32>
    %329 = arith.addf %321, %328 : vector<24x128xf32>
    %c4_i32_283 = arith.constant 4 : i32
    %330 = arith.addi %arg1, %c4_i32_283 : i32
    %c0_284 = arith.constant 0 : index
    %331 = arith.index_cast %330 : i32 to index
    %c8_285 = arith.constant 8 : index
    %c0_286 = arith.constant 0 : index
    %332 = vector.load %arg2[%c0_284, %331, %c8_285, %c0_286] : memref<1x14x38x32xbf16, #tpu.memory_space<vmem>>, vector<1x1x24x32xbf16>
    %333 = vector.shape_cast %332 : vector<1x1x24x32xbf16> to vector<24x32xbf16>
    %c41 = arith.constant 41 : index
    %c0_287 = arith.constant 0 : index
    %c0_288 = arith.constant 0 : index
    %334 = vector.load %arg3[%c41, %c0_287, %c0_288] : memref<99x32x128xbf16, #tpu.memory_space<vmem>>, vector<1x32x128xbf16>
    %335 = vector.shape_cast %334 : vector<1x32x128xbf16> to vector<32x128xbf16>
    %cst_289 = arith.constant dense<0.000000e+00> : vector<24x128xf32>
    %336 = tpu.matmul %333, %335, %cst_289 {dimension_numbers = #tpu.dot_dimension_numbers<[1], [0], [0], [1], [0, 0, 1, 1], [], []>} : vector<24x32xbf16>, vector<32x128xbf16>, vector<24x128xf32> -> vector<24x128xf32>
    %337 = arith.addf %329, %336 : vector<24x128xf32>
    %c4_i32_290 = arith.constant 4 : i32
    %338 = arith.addi %arg1, %c4_i32_290 : i32
    %c0_291 = arith.constant 0 : index
    %339 = arith.index_cast %338 : i32 to index
    %c12_292 = arith.constant 12 : index
    %c0_293 = arith.constant 0 : index
    %340 = vector.load %arg2[%c0_291, %339, %c12_292, %c0_293] : memref<1x14x38x32xbf16, #tpu.memory_space<vmem>>, vector<1x1x24x32xbf16>
    %341 = vector.shape_cast %340 : vector<1x1x24x32xbf16> to vector<24x32xbf16>
    %c42 = arith.constant 42 : index
    %c0_294 = arith.constant 0 : index
    %c0_295 = arith.constant 0 : index
    %342 = vector.load %arg3[%c42, %c0_294, %c0_295] : memref<99x32x128xbf16, #tpu.memory_space<vmem>>, vector<1x32x128xbf16>
    %343 = vector.shape_cast %342 : vector<1x32x128xbf16> to vector<32x128xbf16>
    %cst_296 = arith.constant dense<0.000000e+00> : vector<24x128xf32>
    %344 = tpu.matmul %341, %343, %cst_296 {dimension_numbers = #tpu.dot_dimension_numbers<[1], [0], [0], [1], [0, 0, 1, 1], [], []>} : vector<24x32xbf16>, vector<32x128xbf16>, vector<24x128xf32> -> vector<24x128xf32>
    %345 = arith.addf %337, %344 : vector<24x128xf32>
    %c4_i32_297 = arith.constant 4 : i32
    %346 = arith.addi %arg1, %c4_i32_297 : i32
    %c0_298 = arith.constant 0 : index
    %347 = arith.index_cast %346 : i32 to index
    %c13_299 = arith.constant 13 : index
    %c0_300 = arith.constant 0 : index
    %348 = vector.load %arg2[%c0_298, %347, %c13_299, %c0_300] : memref<1x14x38x32xbf16, #tpu.memory_space<vmem>>, vector<1x1x24x32xbf16>
    %349 = vector.shape_cast %348 : vector<1x1x24x32xbf16> to vector<24x32xbf16>
    %c43 = arith.constant 43 : index
    %c0_301 = arith.constant 0 : index
    %c0_302 = arith.constant 0 : index
    %350 = vector.load %arg3[%c43, %c0_301, %c0_302] : memref<99x32x128xbf16, #tpu.memory_space<vmem>>, vector<1x32x128xbf16>
    %351 = vector.shape_cast %350 : vector<1x32x128xbf16> to vector<32x128xbf16>
    %cst_303 = arith.constant dense<0.000000e+00> : vector<24x128xf32>
    %352 = tpu.matmul %349, %351, %cst_303 {dimension_numbers = #tpu.dot_dimension_numbers<[1], [0], [0], [1], [0, 0, 1, 1], [], []>} : vector<24x32xbf16>, vector<32x128xbf16>, vector<24x128xf32> -> vector<24x128xf32>
    %353 = arith.addf %345, %352 : vector<24x128xf32>
    %c4_i32_304 = arith.constant 4 : i32
    %354 = arith.addi %arg1, %c4_i32_304 : i32
    %c0_305 = arith.constant 0 : index
    %355 = arith.index_cast %354 : i32 to index
    %c14_306 = arith.constant 14 : index
    %c0_307 = arith.constant 0 : index
    %356 = vector.load %arg2[%c0_305, %355, %c14_306, %c0_307] : memref<1x14x38x32xbf16, #tpu.memory_space<vmem>>, vector<1x1x24x32xbf16>
    %357 = vector.shape_cast %356 : vector<1x1x24x32xbf16> to vector<24x32xbf16>
    %c44 = arith.constant 44 : index
    %c0_308 = arith.constant 0 : index
    %c0_309 = arith.constant 0 : index
    %358 = vector.load %arg3[%c44, %c0_308, %c0_309] : memref<99x32x128xbf16, #tpu.memory_space<vmem>>, vector<1x32x128xbf16>
    %359 = vector.shape_cast %358 : vector<1x32x128xbf16> to vector<32x128xbf16>
    %cst_310 = arith.constant dense<0.000000e+00> : vector<24x128xf32>
    %360 = tpu.matmul %357, %359, %cst_310 {dimension_numbers = #tpu.dot_dimension_numbers<[1], [0], [0], [1], [0, 0, 1, 1], [], []>} : vector<24x32xbf16>, vector<32x128xbf16>, vector<24x128xf32> -> vector<24x128xf32>
    %361 = arith.addf %353, %360 : vector<24x128xf32>
    %c5_i32 = arith.constant 5 : i32
    %362 = arith.addi %arg1, %c5_i32 : i32
    %c0_311 = arith.constant 0 : index
    %363 = arith.index_cast %362 : i32 to index
    %c0_312 = arith.constant 0 : index
    %c0_313 = arith.constant 0 : index
    %364 = vector.load %arg2[%c0_311, %363, %c0_312, %c0_313] : memref<1x14x38x32xbf16, #tpu.memory_space<vmem>>, vector<1x1x24x32xbf16>
    %365 = vector.shape_cast %364 : vector<1x1x24x32xbf16> to vector<24x32xbf16>
    %c45 = arith.constant 45 : index
    %c0_314 = arith.constant 0 : index
    %c0_315 = arith.constant 0 : index
    %366 = vector.load %arg3[%c45, %c0_314, %c0_315] : memref<99x32x128xbf16, #tpu.memory_space<vmem>>, vector<1x32x128xbf16>
    %367 = vector.shape_cast %366 : vector<1x32x128xbf16> to vector<32x128xbf16>
    %cst_316 = arith.constant dense<0.000000e+00> : vector<24x128xf32>
    %368 = tpu.matmul %365, %367, %cst_316 {dimension_numbers = #tpu.dot_dimension_numbers<[1], [0], [0], [1], [0, 0, 1, 1], [], []>} : vector<24x32xbf16>, vector<32x128xbf16>, vector<24x128xf32> -> vector<24x128xf32>
    %369 = arith.addf %361, %368 : vector<24x128xf32>
    %c5_i32_317 = arith.constant 5 : i32
    %370 = arith.addi %arg1, %c5_i32_317 : i32
    %c0_318 = arith.constant 0 : index
    %371 = arith.index_cast %370 : i32 to index
    %c1_319 = arith.constant 1 : index
    %c0_320 = arith.constant 0 : index
    %372 = vector.load %arg2[%c0_318, %371, %c1_319, %c0_320] : memref<1x14x38x32xbf16, #tpu.memory_space<vmem>>, vector<1x1x24x32xbf16>
    %373 = vector.shape_cast %372 : vector<1x1x24x32xbf16> to vector<24x32xbf16>
    %c46 = arith.constant 46 : index
    %c0_321 = arith.constant 0 : index
    %c0_322 = arith.constant 0 : index
    %374 = vector.load %arg3[%c46, %c0_321, %c0_322] : memref<99x32x128xbf16, #tpu.memory_space<vmem>>, vector<1x32x128xbf16>
    %375 = vector.shape_cast %374 : vector<1x32x128xbf16> to vector<32x128xbf16>
    %cst_323 = arith.constant dense<0.000000e+00> : vector<24x128xf32>
    %376 = tpu.matmul %373, %375, %cst_323 {dimension_numbers = #tpu.dot_dimension_numbers<[1], [0], [0], [1], [0, 0, 1, 1], [], []>} : vector<24x32xbf16>, vector<32x128xbf16>, vector<24x128xf32> -> vector<24x128xf32>
    %377 = arith.addf %369, %376 : vector<24x128xf32>
    %c5_i32_324 = arith.constant 5 : i32
    %378 = arith.addi %arg1, %c5_i32_324 : i32
    %c0_325 = arith.constant 0 : index
    %379 = arith.index_cast %378 : i32 to index
    %c2_326 = arith.constant 2 : index
    %c0_327 = arith.constant 0 : index
    %380 = vector.load %arg2[%c0_325, %379, %c2_326, %c0_327] : memref<1x14x38x32xbf16, #tpu.memory_space<vmem>>, vector<1x1x24x32xbf16>
    %381 = vector.shape_cast %380 : vector<1x1x24x32xbf16> to vector<24x32xbf16>
    %c47 = arith.constant 47 : index
    %c0_328 = arith.constant 0 : index
    %c0_329 = arith.constant 0 : index
    %382 = vector.load %arg3[%c47, %c0_328, %c0_329] : memref<99x32x128xbf16, #tpu.memory_space<vmem>>, vector<1x32x128xbf16>
    %383 = vector.shape_cast %382 : vector<1x32x128xbf16> to vector<32x128xbf16>
    %cst_330 = arith.constant dense<0.000000e+00> : vector<24x128xf32>
    %384 = tpu.matmul %381, %383, %cst_330 {dimension_numbers = #tpu.dot_dimension_numbers<[1], [0], [0], [1], [0, 0, 1, 1], [], []>} : vector<24x32xbf16>, vector<32x128xbf16>, vector<24x128xf32> -> vector<24x128xf32>
    %385 = arith.addf %377, %384 : vector<24x128xf32>
    %c5_i32_331 = arith.constant 5 : i32
    %386 = arith.addi %arg1, %c5_i32_331 : i32
    %c0_332 = arith.constant 0 : index
    %387 = arith.index_cast %386 : i32 to index
    %c6_333 = arith.constant 6 : index
    %c0_334 = arith.constant 0 : index
    %388 = vector.load %arg2[%c0_332, %387, %c6_333, %c0_334] : memref<1x14x38x32xbf16, #tpu.memory_space<vmem>>, vector<1x1x24x32xbf16>
    %389 = vector.shape_cast %388 : vector<1x1x24x32xbf16> to vector<24x32xbf16>
    %c48 = arith.constant 48 : index
    %c0_335 = arith.constant 0 : index
    %c0_336 = arith.constant 0 : index
    %390 = vector.load %arg3[%c48, %c0_335, %c0_336] : memref<99x32x128xbf16, #tpu.memory_space<vmem>>, vector<1x32x128xbf16>
    %391 = vector.shape_cast %390 : vector<1x32x128xbf16> to vector<32x128xbf16>
    %cst_337 = arith.constant dense<0.000000e+00> : vector<24x128xf32>
    %392 = tpu.matmul %389, %391, %cst_337 {dimension_numbers = #tpu.dot_dimension_numbers<[1], [0], [0], [1], [0, 0, 1, 1], [], []>} : vector<24x32xbf16>, vector<32x128xbf16>, vector<24x128xf32> -> vector<24x128xf32>
    %393 = arith.addf %385, %392 : vector<24x128xf32>
    %c5_i32_338 = arith.constant 5 : i32
    %394 = arith.addi %arg1, %c5_i32_338 : i32
    %c0_339 = arith.constant 0 : index
    %395 = arith.index_cast %394 : i32 to index
    %c7_340 = arith.constant 7 : index
    %c0_341 = arith.constant 0 : index
    %396 = vector.load %arg2[%c0_339, %395, %c7_340, %c0_341] : memref<1x14x38x32xbf16, #tpu.memory_space<vmem>>, vector<1x1x24x32xbf16>
    %397 = vector.shape_cast %396 : vector<1x1x24x32xbf16> to vector<24x32xbf16>
    %c49 = arith.constant 49 : index
    %c0_342 = arith.constant 0 : index
    %c0_343 = arith.constant 0 : index
    %398 = vector.load %arg3[%c49, %c0_342, %c0_343] : memref<99x32x128xbf16, #tpu.memory_space<vmem>>, vector<1x32x128xbf16>
    %399 = vector.shape_cast %398 : vector<1x32x128xbf16> to vector<32x128xbf16>
    %cst_344 = arith.constant dense<0.000000e+00> : vector<24x128xf32>
    %400 = tpu.matmul %397, %399, %cst_344 {dimension_numbers = #tpu.dot_dimension_numbers<[1], [0], [0], [1], [0, 0, 1, 1], [], []>} : vector<24x32xbf16>, vector<32x128xbf16>, vector<24x128xf32> -> vector<24x128xf32>
    %401 = arith.addf %393, %400 : vector<24x128xf32>
    %c5_i32_345 = arith.constant 5 : i32
    %402 = arith.addi %arg1, %c5_i32_345 : i32
    %c0_346 = arith.constant 0 : index
    %403 = arith.index_cast %402 : i32 to index
    %c8_347 = arith.constant 8 : index
    %c0_348 = arith.constant 0 : index
    %404 = vector.load %arg2[%c0_346, %403, %c8_347, %c0_348] : memref<1x14x38x32xbf16, #tpu.memory_space<vmem>>, vector<1x1x24x32xbf16>
    %405 = vector.shape_cast %404 : vector<1x1x24x32xbf16> to vector<24x32xbf16>
    %c50 = arith.constant 50 : index
    %c0_349 = arith.constant 0 : index
    %c0_350 = arith.constant 0 : index
    %406 = vector.load %arg3[%c50, %c0_349, %c0_350] : memref<99x32x128xbf16, #tpu.memory_space<vmem>>, vector<1x32x128xbf16>
    %407 = vector.shape_cast %406 : vector<1x32x128xbf16> to vector<32x128xbf16>
    %cst_351 = arith.constant dense<0.000000e+00> : vector<24x128xf32>
    %408 = tpu.matmul %405, %407, %cst_351 {dimension_numbers = #tpu.dot_dimension_numbers<[1], [0], [0], [1], [0, 0, 1, 1], [], []>} : vector<24x32xbf16>, vector<32x128xbf16>, vector<24x128xf32> -> vector<24x128xf32>
    %409 = arith.addf %401, %408 : vector<24x128xf32>
    %c5_i32_352 = arith.constant 5 : i32
    %410 = arith.addi %arg1, %c5_i32_352 : i32
    %c0_353 = arith.constant 0 : index
    %411 = arith.index_cast %410 : i32 to index
    %c12_354 = arith.constant 12 : index
    %c0_355 = arith.constant 0 : index
    %412 = vector.load %arg2[%c0_353, %411, %c12_354, %c0_355] : memref<1x14x38x32xbf16, #tpu.memory_space<vmem>>, vector<1x1x24x32xbf16>
    %413 = vector.shape_cast %412 : vector<1x1x24x32xbf16> to vector<24x32xbf16>
    %c51 = arith.constant 51 : index
    %c0_356 = arith.constant 0 : index
    %c0_357 = arith.constant 0 : index
    %414 = vector.load %arg3[%c51, %c0_356, %c0_357] : memref<99x32x128xbf16, #tpu.memory_space<vmem>>, vector<1x32x128xbf16>
    %415 = vector.shape_cast %414 : vector<1x32x128xbf16> to vector<32x128xbf16>
    %cst_358 = arith.constant dense<0.000000e+00> : vector<24x128xf32>
    %416 = tpu.matmul %413, %415, %cst_358 {dimension_numbers = #tpu.dot_dimension_numbers<[1], [0], [0], [1], [0, 0, 1, 1], [], []>} : vector<24x32xbf16>, vector<32x128xbf16>, vector<24x128xf32> -> vector<24x128xf32>
    %417 = arith.addf %409, %416 : vector<24x128xf32>
    %c5_i32_359 = arith.constant 5 : i32
    %418 = arith.addi %arg1, %c5_i32_359 : i32
    %c0_360 = arith.constant 0 : index
    %419 = arith.index_cast %418 : i32 to index
    %c13_361 = arith.constant 13 : index
    %c0_362 = arith.constant 0 : index
    %420 = vector.load %arg2[%c0_360, %419, %c13_361, %c0_362] : memref<1x14x38x32xbf16, #tpu.memory_space<vmem>>, vector<1x1x24x32xbf16>
    %421 = vector.shape_cast %420 : vector<1x1x24x32xbf16> to vector<24x32xbf16>
    %c52 = arith.constant 52 : index
    %c0_363 = arith.constant 0 : index
    %c0_364 = arith.constant 0 : index
    %422 = vector.load %arg3[%c52, %c0_363, %c0_364] : memref<99x32x128xbf16, #tpu.memory_space<vmem>>, vector<1x32x128xbf16>
    %423 = vector.shape_cast %422 : vector<1x32x128xbf16> to vector<32x128xbf16>
    %cst_365 = arith.constant dense<0.000000e+00> : vector<24x128xf32>
    %424 = tpu.matmul %421, %423, %cst_365 {dimension_numbers = #tpu.dot_dimension_numbers<[1], [0], [0], [1], [0, 0, 1, 1], [], []>} : vector<24x32xbf16>, vector<32x128xbf16>, vector<24x128xf32> -> vector<24x128xf32>
    %425 = arith.addf %417, %424 : vector<24x128xf32>
    %c5_i32_366 = arith.constant 5 : i32
    %426 = arith.addi %arg1, %c5_i32_366 : i32
    %c0_367 = arith.constant 0 : index
    %427 = arith.index_cast %426 : i32 to index
    %c14_368 = arith.constant 14 : index
    %c0_369 = arith.constant 0 : index
    %428 = vector.load %arg2[%c0_367, %427, %c14_368, %c0_369] : memref<1x14x38x32xbf16, #tpu.memory_space<vmem>>, vector<1x1x24x32xbf16>
    %429 = vector.shape_cast %428 : vector<1x1x24x32xbf16> to vector<24x32xbf16>
    %c53 = arith.constant 53 : index
    %c0_370 = arith.constant 0 : index
    %c0_371 = arith.constant 0 : index
    %430 = vector.load %arg3[%c53, %c0_370, %c0_371] : memref<99x32x128xbf16, #tpu.memory_space<vmem>>, vector<1x32x128xbf16>
    %431 = vector.shape_cast %430 : vector<1x32x128xbf16> to vector<32x128xbf16>
    %cst_372 = arith.constant dense<0.000000e+00> : vector<24x128xf32>
    %432 = tpu.matmul %429, %431, %cst_372 {dimension_numbers = #tpu.dot_dimension_numbers<[1], [0], [0], [1], [0, 0, 1, 1], [], []>} : vector<24x32xbf16>, vector<32x128xbf16>, vector<24x128xf32> -> vector<24x128xf32>
    %433 = arith.addf %425, %432 : vector<24x128xf32>
    %c6_i32 = arith.constant 6 : i32
    %434 = arith.addi %arg1, %c6_i32 : i32
    %c0_373 = arith.constant 0 : index
    %435 = arith.index_cast %434 : i32 to index
    %c0_374 = arith.constant 0 : index
    %c0_375 = arith.constant 0 : index
    %436 = vector.load %arg2[%c0_373, %435, %c0_374, %c0_375] : memref<1x14x38x32xbf16, #tpu.memory_space<vmem>>, vector<1x1x24x32xbf16>
    %437 = vector.shape_cast %436 : vector<1x1x24x32xbf16> to vector<24x32xbf16>
    %c54 = arith.constant 54 : index
    %c0_376 = arith.constant 0 : index
    %c0_377 = arith.constant 0 : index
    %438 = vector.load %arg3[%c54, %c0_376, %c0_377] : memref<99x32x128xbf16, #tpu.memory_space<vmem>>, vector<1x32x128xbf16>
    %439 = vector.shape_cast %438 : vector<1x32x128xbf16> to vector<32x128xbf16>
    %cst_378 = arith.constant dense<0.000000e+00> : vector<24x128xf32>
    %440 = tpu.matmul %437, %439, %cst_378 {dimension_numbers = #tpu.dot_dimension_numbers<[1], [0], [0], [1], [0, 0, 1, 1], [], []>} : vector<24x32xbf16>, vector<32x128xbf16>, vector<24x128xf32> -> vector<24x128xf32>
    %441 = arith.addf %433, %440 : vector<24x128xf32>
    %c6_i32_379 = arith.constant 6 : i32
    %442 = arith.addi %arg1, %c6_i32_379 : i32
    %c0_380 = arith.constant 0 : index
    %443 = arith.index_cast %442 : i32 to index
    %c1_381 = arith.constant 1 : index
    %c0_382 = arith.constant 0 : index
    %444 = vector.load %arg2[%c0_380, %443, %c1_381, %c0_382] : memref<1x14x38x32xbf16, #tpu.memory_space<vmem>>, vector<1x1x24x32xbf16>
    %445 = vector.shape_cast %444 : vector<1x1x24x32xbf16> to vector<24x32xbf16>
    %c55 = arith.constant 55 : index
    %c0_383 = arith.constant 0 : index
    %c0_384 = arith.constant 0 : index
    %446 = vector.load %arg3[%c55, %c0_383, %c0_384] : memref<99x32x128xbf16, #tpu.memory_space<vmem>>, vector<1x32x128xbf16>
    %447 = vector.shape_cast %446 : vector<1x32x128xbf16> to vector<32x128xbf16>
    %cst_385 = arith.constant dense<0.000000e+00> : vector<24x128xf32>
    %448 = tpu.matmul %445, %447, %cst_385 {dimension_numbers = #tpu.dot_dimension_numbers<[1], [0], [0], [1], [0, 0, 1, 1], [], []>} : vector<24x32xbf16>, vector<32x128xbf16>, vector<24x128xf32> -> vector<24x128xf32>
    %449 = arith.addf %441, %448 : vector<24x128xf32>
    %c6_i32_386 = arith.constant 6 : i32
    %450 = arith.addi %arg1, %c6_i32_386 : i32
    %c0_387 = arith.constant 0 : index
    %451 = arith.index_cast %450 : i32 to index
    %c2_388 = arith.constant 2 : index
    %c0_389 = arith.constant 0 : index
    %452 = vector.load %arg2[%c0_387, %451, %c2_388, %c0_389] : memref<1x14x38x32xbf16, #tpu.memory_space<vmem>>, vector<1x1x24x32xbf16>
    %453 = vector.shape_cast %452 : vector<1x1x24x32xbf16> to vector<24x32xbf16>
    %c56 = arith.constant 56 : index
    %c0_390 = arith.constant 0 : index
    %c0_391 = arith.constant 0 : index
    %454 = vector.load %arg3[%c56, %c0_390, %c0_391] : memref<99x32x128xbf16, #tpu.memory_space<vmem>>, vector<1x32x128xbf16>
    %455 = vector.shape_cast %454 : vector<1x32x128xbf16> to vector<32x128xbf16>
    %cst_392 = arith.constant dense<0.000000e+00> : vector<24x128xf32>
    %456 = tpu.matmul %453, %455, %cst_392 {dimension_numbers = #tpu.dot_dimension_numbers<[1], [0], [0], [1], [0, 0, 1, 1], [], []>} : vector<24x32xbf16>, vector<32x128xbf16>, vector<24x128xf32> -> vector<24x128xf32>
    %457 = arith.addf %449, %456 : vector<24x128xf32>
    %c6_i32_393 = arith.constant 6 : i32
    %458 = arith.addi %arg1, %c6_i32_393 : i32
    %c0_394 = arith.constant 0 : index
    %459 = arith.index_cast %458 : i32 to index
    %c6_395 = arith.constant 6 : index
    %c0_396 = arith.constant 0 : index
    %460 = vector.load %arg2[%c0_394, %459, %c6_395, %c0_396] : memref<1x14x38x32xbf16, #tpu.memory_space<vmem>>, vector<1x1x24x32xbf16>
    %461 = vector.shape_cast %460 : vector<1x1x24x32xbf16> to vector<24x32xbf16>
    %c57 = arith.constant 57 : index
    %c0_397 = arith.constant 0 : index
    %c0_398 = arith.constant 0 : index
    %462 = vector.load %arg3[%c57, %c0_397, %c0_398] : memref<99x32x128xbf16, #tpu.memory_space<vmem>>, vector<1x32x128xbf16>
    %463 = vector.shape_cast %462 : vector<1x32x128xbf16> to vector<32x128xbf16>
    %cst_399 = arith.constant dense<0.000000e+00> : vector<24x128xf32>
    %464 = tpu.matmul %461, %463, %cst_399 {dimension_numbers = #tpu.dot_dimension_numbers<[1], [0], [0], [1], [0, 0, 1, 1], [], []>} : vector<24x32xbf16>, vector<32x128xbf16>, vector<24x128xf32> -> vector<24x128xf32>
    %465 = arith.addf %457, %464 : vector<24x128xf32>
    %c6_i32_400 = arith.constant 6 : i32
    %466 = arith.addi %arg1, %c6_i32_400 : i32
    %c0_401 = arith.constant 0 : index
    %467 = arith.index_cast %466 : i32 to index
    %c7_402 = arith.constant 7 : index
    %c0_403 = arith.constant 0 : index
    %468 = vector.load %arg2[%c0_401, %467, %c7_402, %c0_403] : memref<1x14x38x32xbf16, #tpu.memory_space<vmem>>, vector<1x1x24x32xbf16>
    %469 = vector.shape_cast %468 : vector<1x1x24x32xbf16> to vector<24x32xbf16>
    %c58 = arith.constant 58 : index
    %c0_404 = arith.constant 0 : index
    %c0_405 = arith.constant 0 : index
    %470 = vector.load %arg3[%c58, %c0_404, %c0_405] : memref<99x32x128xbf16, #tpu.memory_space<vmem>>, vector<1x32x128xbf16>
    %471 = vector.shape_cast %470 : vector<1x32x128xbf16> to vector<32x128xbf16>
    %cst_406 = arith.constant dense<0.000000e+00> : vector<24x128xf32>
    %472 = tpu.matmul %469, %471, %cst_406 {dimension_numbers = #tpu.dot_dimension_numbers<[1], [0], [0], [1], [0, 0, 1, 1], [], []>} : vector<24x32xbf16>, vector<32x128xbf16>, vector<24x128xf32> -> vector<24x128xf32>
    %473 = arith.addf %465, %472 : vector<24x128xf32>
    %c6_i32_407 = arith.constant 6 : i32
    %474 = arith.addi %arg1, %c6_i32_407 : i32
    %c0_408 = arith.constant 0 : index
    %475 = arith.index_cast %474 : i32 to index
    %c8_409 = arith.constant 8 : index
    %c0_410 = arith.constant 0 : index
    %476 = vector.load %arg2[%c0_408, %475, %c8_409, %c0_410] : memref<1x14x38x32xbf16, #tpu.memory_space<vmem>>, vector<1x1x24x32xbf16>
    %477 = vector.shape_cast %476 : vector<1x1x24x32xbf16> to vector<24x32xbf16>
    %c59 = arith.constant 59 : index
    %c0_411 = arith.constant 0 : index
    %c0_412 = arith.constant 0 : index
    %478 = vector.load %arg3[%c59, %c0_411, %c0_412] : memref<99x32x128xbf16, #tpu.memory_space<vmem>>, vector<1x32x128xbf16>
    %479 = vector.shape_cast %478 : vector<1x32x128xbf16> to vector<32x128xbf16>
    %cst_413 = arith.constant dense<0.000000e+00> : vector<24x128xf32>
    %480 = tpu.matmul %477, %479, %cst_413 {dimension_numbers = #tpu.dot_dimension_numbers<[1], [0], [0], [1], [0, 0, 1, 1], [], []>} : vector<24x32xbf16>, vector<32x128xbf16>, vector<24x128xf32> -> vector<24x128xf32>
    %481 = arith.addf %473, %480 : vector<24x128xf32>
    %c6_i32_414 = arith.constant 6 : i32
    %482 = arith.addi %arg1, %c6_i32_414 : i32
    %c0_415 = arith.constant 0 : index
    %483 = arith.index_cast %482 : i32 to index
    %c12_416 = arith.constant 12 : index
    %c0_417 = arith.constant 0 : index
    %484 = vector.load %arg2[%c0_415, %483, %c12_416, %c0_417] : memref<1x14x38x32xbf16, #tpu.memory_space<vmem>>, vector<1x1x24x32xbf16>
    %485 = vector.shape_cast %484 : vector<1x1x24x32xbf16> to vector<24x32xbf16>
    %c60 = arith.constant 60 : index
    %c0_418 = arith.constant 0 : index
    %c0_419 = arith.constant 0 : index
    %486 = vector.load %arg3[%c60, %c0_418, %c0_419] : memref<99x32x128xbf16, #tpu.memory_space<vmem>>, vector<1x32x128xbf16>
    %487 = vector.shape_cast %486 : vector<1x32x128xbf16> to vector<32x128xbf16>
    %cst_420 = arith.constant dense<0.000000e+00> : vector<24x128xf32>
    %488 = tpu.matmul %485, %487, %cst_420 {dimension_numbers = #tpu.dot_dimension_numbers<[1], [0], [0], [1], [0, 0, 1, 1], [], []>} : vector<24x32xbf16>, vector<32x128xbf16>, vector<24x128xf32> -> vector<24x128xf32>
    %489 = arith.addf %481, %488 : vector<24x128xf32>
    %c6_i32_421 = arith.constant 6 : i32
    %490 = arith.addi %arg1, %c6_i32_421 : i32
    %c0_422 = arith.constant 0 : index
    %491 = arith.index_cast %490 : i32 to index
    %c13_423 = arith.constant 13 : index
    %c0_424 = arith.constant 0 : index
    %492 = vector.load %arg2[%c0_422, %491, %c13_423, %c0_424] : memref<1x14x38x32xbf16, #tpu.memory_space<vmem>>, vector<1x1x24x32xbf16>
    %493 = vector.shape_cast %492 : vector<1x1x24x32xbf16> to vector<24x32xbf16>
    %c61 = arith.constant 61 : index
    %c0_425 = arith.constant 0 : index
    %c0_426 = arith.constant 0 : index
    %494 = vector.load %arg3[%c61, %c0_425, %c0_426] : memref<99x32x128xbf16, #tpu.memory_space<vmem>>, vector<1x32x128xbf16>
    %495 = vector.shape_cast %494 : vector<1x32x128xbf16> to vector<32x128xbf16>
    %cst_427 = arith.constant dense<0.000000e+00> : vector<24x128xf32>
    %496 = tpu.matmul %493, %495, %cst_427 {dimension_numbers = #tpu.dot_dimension_numbers<[1], [0], [0], [1], [0, 0, 1, 1], [], []>} : vector<24x32xbf16>, vector<32x128xbf16>, vector<24x128xf32> -> vector<24x128xf32>
    %497 = arith.addf %489, %496 : vector<24x128xf32>
    %c6_i32_428 = arith.constant 6 : i32
    %498 = arith.addi %arg1, %c6_i32_428 : i32
    %c0_429 = arith.constant 0 : index
    %499 = arith.index_cast %498 : i32 to index
    %c14_430 = arith.constant 14 : index
    %c0_431 = arith.constant 0 : index
    %500 = vector.load %arg2[%c0_429, %499, %c14_430, %c0_431] : memref<1x14x38x32xbf16, #tpu.memory_space<vmem>>, vector<1x1x24x32xbf16>
    %501 = vector.shape_cast %500 : vector<1x1x24x32xbf16> to vector<24x32xbf16>
    %c62 = arith.constant 62 : index
    %c0_432 = arith.constant 0 : index
    %c0_433 = arith.constant 0 : index
    %502 = vector.load %arg3[%c62, %c0_432, %c0_433] : memref<99x32x128xbf16, #tpu.memory_space<vmem>>, vector<1x32x128xbf16>
    %503 = vector.shape_cast %502 : vector<1x32x128xbf16> to vector<32x128xbf16>
    %cst_434 = arith.constant dense<0.000000e+00> : vector<24x128xf32>
    %504 = tpu.matmul %501, %503, %cst_434 {dimension_numbers = #tpu.dot_dimension_numbers<[1], [0], [0], [1], [0, 0, 1, 1], [], []>} : vector<24x32xbf16>, vector<32x128xbf16>, vector<24x128xf32> -> vector<24x128xf32>
    %505 = arith.addf %497, %504 : vector<24x128xf32>
    %c7_i32 = arith.constant 7 : i32
    %506 = arith.addi %arg1, %c7_i32 : i32
    %c0_435 = arith.constant 0 : index
    %507 = arith.index_cast %506 : i32 to index
    %c0_436 = arith.constant 0 : index
    %c0_437 = arith.constant 0 : index
    %508 = vector.load %arg2[%c0_435, %507, %c0_436, %c0_437] : memref<1x14x38x32xbf16, #tpu.memory_space<vmem>>, vector<1x1x24x32xbf16>
    %509 = vector.shape_cast %508 : vector<1x1x24x32xbf16> to vector<24x32xbf16>
    %c63 = arith.constant 63 : index
    %c0_438 = arith.constant 0 : index
    %c0_439 = arith.constant 0 : index
    %510 = vector.load %arg3[%c63, %c0_438, %c0_439] : memref<99x32x128xbf16, #tpu.memory_space<vmem>>, vector<1x32x128xbf16>
    %511 = vector.shape_cast %510 : vector<1x32x128xbf16> to vector<32x128xbf16>
    %cst_440 = arith.constant dense<0.000000e+00> : vector<24x128xf32>
    %512 = tpu.matmul %509, %511, %cst_440 {dimension_numbers = #tpu.dot_dimension_numbers<[1], [0], [0], [1], [0, 0, 1, 1], [], []>} : vector<24x32xbf16>, vector<32x128xbf16>, vector<24x128xf32> -> vector<24x128xf32>
    %513 = arith.addf %505, %512 : vector<24x128xf32>
    %c7_i32_441 = arith.constant 7 : i32
    %514 = arith.addi %arg1, %c7_i32_441 : i32
    %c0_442 = arith.constant 0 : index
    %515 = arith.index_cast %514 : i32 to index
    %c1_443 = arith.constant 1 : index
    %c0_444 = arith.constant 0 : index
    %516 = vector.load %arg2[%c0_442, %515, %c1_443, %c0_444] : memref<1x14x38x32xbf16, #tpu.memory_space<vmem>>, vector<1x1x24x32xbf16>
    %517 = vector.shape_cast %516 : vector<1x1x24x32xbf16> to vector<24x32xbf16>
    %c64 = arith.constant 64 : index
    %c0_445 = arith.constant 0 : index
    %c0_446 = arith.constant 0 : index
    %518 = vector.load %arg3[%c64, %c0_445, %c0_446] : memref<99x32x128xbf16, #tpu.memory_space<vmem>>, vector<1x32x128xbf16>
    %519 = vector.shape_cast %518 : vector<1x32x128xbf16> to vector<32x128xbf16>
    %cst_447 = arith.constant dense<0.000000e+00> : vector<24x128xf32>
    %520 = tpu.matmul %517, %519, %cst_447 {dimension_numbers = #tpu.dot_dimension_numbers<[1], [0], [0], [1], [0, 0, 1, 1], [], []>} : vector<24x32xbf16>, vector<32x128xbf16>, vector<24x128xf32> -> vector<24x128xf32>
    %521 = arith.addf %513, %520 : vector<24x128xf32>
    %c7_i32_448 = arith.constant 7 : i32
    %522 = arith.addi %arg1, %c7_i32_448 : i32
    %c0_449 = arith.constant 0 : index
    %523 = arith.index_cast %522 : i32 to index
    %c2_450 = arith.constant 2 : index
    %c0_451 = arith.constant 0 : index
    %524 = vector.load %arg2[%c0_449, %523, %c2_450, %c0_451] : memref<1x14x38x32xbf16, #tpu.memory_space<vmem>>, vector<1x1x24x32xbf16>
    %525 = vector.shape_cast %524 : vector<1x1x24x32xbf16> to vector<24x32xbf16>
    %c65 = arith.constant 65 : index
    %c0_452 = arith.constant 0 : index
    %c0_453 = arith.constant 0 : index
    %526 = vector.load %arg3[%c65, %c0_452, %c0_453] : memref<99x32x128xbf16, #tpu.memory_space<vmem>>, vector<1x32x128xbf16>
    %527 = vector.shape_cast %526 : vector<1x32x128xbf16> to vector<32x128xbf16>
    %cst_454 = arith.constant dense<0.000000e+00> : vector<24x128xf32>
    %528 = tpu.matmul %525, %527, %cst_454 {dimension_numbers = #tpu.dot_dimension_numbers<[1], [0], [0], [1], [0, 0, 1, 1], [], []>} : vector<24x32xbf16>, vector<32x128xbf16>, vector<24x128xf32> -> vector<24x128xf32>
    %529 = arith.addf %521, %528 : vector<24x128xf32>
    %c7_i32_455 = arith.constant 7 : i32
    %530 = arith.addi %arg1, %c7_i32_455 : i32
    %c0_456 = arith.constant 0 : index
    %531 = arith.index_cast %530 : i32 to index
    %c6_457 = arith.constant 6 : index
    %c0_458 = arith.constant 0 : index
    %532 = vector.load %arg2[%c0_456, %531, %c6_457, %c0_458] : memref<1x14x38x32xbf16, #tpu.memory_space<vmem>>, vector<1x1x24x32xbf16>
    %533 = vector.shape_cast %532 : vector<1x1x24x32xbf16> to vector<24x32xbf16>
    %c66 = arith.constant 66 : index
    %c0_459 = arith.constant 0 : index
    %c0_460 = arith.constant 0 : index
    %534 = vector.load %arg3[%c66, %c0_459, %c0_460] : memref<99x32x128xbf16, #tpu.memory_space<vmem>>, vector<1x32x128xbf16>
    %535 = vector.shape_cast %534 : vector<1x32x128xbf16> to vector<32x128xbf16>
    %cst_461 = arith.constant dense<0.000000e+00> : vector<24x128xf32>
    %536 = tpu.matmul %533, %535, %cst_461 {dimension_numbers = #tpu.dot_dimension_numbers<[1], [0], [0], [1], [0, 0, 1, 1], [], []>} : vector<24x32xbf16>, vector<32x128xbf16>, vector<24x128xf32> -> vector<24x128xf32>
    %537 = arith.addf %529, %536 : vector<24x128xf32>
    %c7_i32_462 = arith.constant 7 : i32
    %538 = arith.addi %arg1, %c7_i32_462 : i32
    %c0_463 = arith.constant 0 : index
    %539 = arith.index_cast %538 : i32 to index
    %c7_464 = arith.constant 7 : index
    %c0_465 = arith.constant 0 : index
    %540 = vector.load %arg2[%c0_463, %539, %c7_464, %c0_465] : memref<1x14x38x32xbf16, #tpu.memory_space<vmem>>, vector<1x1x24x32xbf16>
    %541 = vector.shape_cast %540 : vector<1x1x24x32xbf16> to vector<24x32xbf16>
    %c67 = arith.constant 67 : index
    %c0_466 = arith.constant 0 : index
    %c0_467 = arith.constant 0 : index
    %542 = vector.load %arg3[%c67, %c0_466, %c0_467] : memref<99x32x128xbf16, #tpu.memory_space<vmem>>, vector<1x32x128xbf16>
    %543 = vector.shape_cast %542 : vector<1x32x128xbf16> to vector<32x128xbf16>
    %cst_468 = arith.constant dense<0.000000e+00> : vector<24x128xf32>
    %544 = tpu.matmul %541, %543, %cst_468 {dimension_numbers = #tpu.dot_dimension_numbers<[1], [0], [0], [1], [0, 0, 1, 1], [], []>} : vector<24x32xbf16>, vector<32x128xbf16>, vector<24x128xf32> -> vector<24x128xf32>
    %545 = arith.addf %537, %544 : vector<24x128xf32>
    %c7_i32_469 = arith.constant 7 : i32
    %546 = arith.addi %arg1, %c7_i32_469 : i32
    %c0_470 = arith.constant 0 : index
    %547 = arith.index_cast %546 : i32 to index
    %c8_471 = arith.constant 8 : index
    %c0_472 = arith.constant 0 : index
    %548 = vector.load %arg2[%c0_470, %547, %c8_471, %c0_472] : memref<1x14x38x32xbf16, #tpu.memory_space<vmem>>, vector<1x1x24x32xbf16>
    %549 = vector.shape_cast %548 : vector<1x1x24x32xbf16> to vector<24x32xbf16>
    %c68 = arith.constant 68 : index
    %c0_473 = arith.constant 0 : index
    %c0_474 = arith.constant 0 : index
    %550 = vector.load %arg3[%c68, %c0_473, %c0_474] : memref<99x32x128xbf16, #tpu.memory_space<vmem>>, vector<1x32x128xbf16>
    %551 = vector.shape_cast %550 : vector<1x32x128xbf16> to vector<32x128xbf16>
    %cst_475 = arith.constant dense<0.000000e+00> : vector<24x128xf32>
    %552 = tpu.matmul %549, %551, %cst_475 {dimension_numbers = #tpu.dot_dimension_numbers<[1], [0], [0], [1], [0, 0, 1, 1], [], []>} : vector<24x32xbf16>, vector<32x128xbf16>, vector<24x128xf32> -> vector<24x128xf32>
    %553 = arith.addf %545, %552 : vector<24x128xf32>
    %c7_i32_476 = arith.constant 7 : i32
    %554 = arith.addi %arg1, %c7_i32_476 : i32
    %c0_477 = arith.constant 0 : index
    %555 = arith.index_cast %554 : i32 to index
    %c12_478 = arith.constant 12 : index
    %c0_479 = arith.constant 0 : index
    %556 = vector.load %arg2[%c0_477, %555, %c12_478, %c0_479] : memref<1x14x38x32xbf16, #tpu.memory_space<vmem>>, vector<1x1x24x32xbf16>
    %557 = vector.shape_cast %556 : vector<1x1x24x32xbf16> to vector<24x32xbf16>
    %c69 = arith.constant 69 : index
    %c0_480 = arith.constant 0 : index
    %c0_481 = arith.constant 0 : index
    %558 = vector.load %arg3[%c69, %c0_480, %c0_481] : memref<99x32x128xbf16, #tpu.memory_space<vmem>>, vector<1x32x128xbf16>
    %559 = vector.shape_cast %558 : vector<1x32x128xbf16> to vector<32x128xbf16>
    %cst_482 = arith.constant dense<0.000000e+00> : vector<24x128xf32>
    %560 = tpu.matmul %557, %559, %cst_482 {dimension_numbers = #tpu.dot_dimension_numbers<[1], [0], [0], [1], [0, 0, 1, 1], [], []>} : vector<24x32xbf16>, vector<32x128xbf16>, vector<24x128xf32> -> vector<24x128xf32>
    %561 = arith.addf %553, %560 : vector<24x128xf32>
    %c7_i32_483 = arith.constant 7 : i32
    %562 = arith.addi %arg1, %c7_i32_483 : i32
    %c0_484 = arith.constant 0 : index
    %563 = arith.index_cast %562 : i32 to index
    %c13_485 = arith.constant 13 : index
    %c0_486 = arith.constant 0 : index
    %564 = vector.load %arg2[%c0_484, %563, %c13_485, %c0_486] : memref<1x14x38x32xbf16, #tpu.memory_space<vmem>>, vector<1x1x24x32xbf16>
    %565 = vector.shape_cast %564 : vector<1x1x24x32xbf16> to vector<24x32xbf16>
    %c70 = arith.constant 70 : index
    %c0_487 = arith.constant 0 : index
    %c0_488 = arith.constant 0 : index
    %566 = vector.load %arg3[%c70, %c0_487, %c0_488] : memref<99x32x128xbf16, #tpu.memory_space<vmem>>, vector<1x32x128xbf16>
    %567 = vector.shape_cast %566 : vector<1x32x128xbf16> to vector<32x128xbf16>
    %cst_489 = arith.constant dense<0.000000e+00> : vector<24x128xf32>
    %568 = tpu.matmul %565, %567, %cst_489 {dimension_numbers = #tpu.dot_dimension_numbers<[1], [0], [0], [1], [0, 0, 1, 1], [], []>} : vector<24x32xbf16>, vector<32x128xbf16>, vector<24x128xf32> -> vector<24x128xf32>
    %569 = arith.addf %561, %568 : vector<24x128xf32>
    %c7_i32_490 = arith.constant 7 : i32
    %570 = arith.addi %arg1, %c7_i32_490 : i32
    %c0_491 = arith.constant 0 : index
    %571 = arith.index_cast %570 : i32 to index
    %c14_492 = arith.constant 14 : index
    %c0_493 = arith.constant 0 : index
    %572 = vector.load %arg2[%c0_491, %571, %c14_492, %c0_493] : memref<1x14x38x32xbf16, #tpu.memory_space<vmem>>, vector<1x1x24x32xbf16>
    %573 = vector.shape_cast %572 : vector<1x1x24x32xbf16> to vector<24x32xbf16>
    %c71 = arith.constant 71 : index
    %c0_494 = arith.constant 0 : index
    %c0_495 = arith.constant 0 : index
    %574 = vector.load %arg3[%c71, %c0_494, %c0_495] : memref<99x32x128xbf16, #tpu.memory_space<vmem>>, vector<1x32x128xbf16>
    %575 = vector.shape_cast %574 : vector<1x32x128xbf16> to vector<32x128xbf16>
    %cst_496 = arith.constant dense<0.000000e+00> : vector<24x128xf32>
    %576 = tpu.matmul %573, %575, %cst_496 {dimension_numbers = #tpu.dot_dimension_numbers<[1], [0], [0], [1], [0, 0, 1, 1], [], []>} : vector<24x32xbf16>, vector<32x128xbf16>, vector<24x128xf32> -> vector<24x128xf32>
    %577 = arith.addf %569, %576 : vector<24x128xf32>
    %c8_i32 = arith.constant 8 : i32
    %578 = arith.addi %arg1, %c8_i32 : i32
    %c0_497 = arith.constant 0 : index
    %579 = arith.index_cast %578 : i32 to index
    %c0_498 = arith.constant 0 : index
    %c0_499 = arith.constant 0 : index
    %580 = vector.load %arg2[%c0_497, %579, %c0_498, %c0_499] : memref<1x14x38x32xbf16, #tpu.memory_space<vmem>>, vector<1x1x24x32xbf16>
    %581 = vector.shape_cast %580 : vector<1x1x24x32xbf16> to vector<24x32xbf16>
    %c72 = arith.constant 72 : index
    %c0_500 = arith.constant 0 : index
    %c0_501 = arith.constant 0 : index
    %582 = vector.load %arg3[%c72, %c0_500, %c0_501] : memref<99x32x128xbf16, #tpu.memory_space<vmem>>, vector<1x32x128xbf16>
    %583 = vector.shape_cast %582 : vector<1x32x128xbf16> to vector<32x128xbf16>
    %cst_502 = arith.constant dense<0.000000e+00> : vector<24x128xf32>
    %584 = tpu.matmul %581, %583, %cst_502 {dimension_numbers = #tpu.dot_dimension_numbers<[1], [0], [0], [1], [0, 0, 1, 1], [], []>} : vector<24x32xbf16>, vector<32x128xbf16>, vector<24x128xf32> -> vector<24x128xf32>
    %585 = arith.addf %577, %584 : vector<24x128xf32>
    %c8_i32_503 = arith.constant 8 : i32
    %586 = arith.addi %arg1, %c8_i32_503 : i32
    %c0_504 = arith.constant 0 : index
    %587 = arith.index_cast %586 : i32 to index
    %c1_505 = arith.constant 1 : index
    %c0_506 = arith.constant 0 : index
    %588 = vector.load %arg2[%c0_504, %587, %c1_505, %c0_506] : memref<1x14x38x32xbf16, #tpu.memory_space<vmem>>, vector<1x1x24x32xbf16>
    %589 = vector.shape_cast %588 : vector<1x1x24x32xbf16> to vector<24x32xbf16>
    %c73 = arith.constant 73 : index
    %c0_507 = arith.constant 0 : index
    %c0_508 = arith.constant 0 : index
    %590 = vector.load %arg3[%c73, %c0_507, %c0_508] : memref<99x32x128xbf16, #tpu.memory_space<vmem>>, vector<1x32x128xbf16>
    %591 = vector.shape_cast %590 : vector<1x32x128xbf16> to vector<32x128xbf16>
    %cst_509 = arith.constant dense<0.000000e+00> : vector<24x128xf32>
    %592 = tpu.matmul %589, %591, %cst_509 {dimension_numbers = #tpu.dot_dimension_numbers<[1], [0], [0], [1], [0, 0, 1, 1], [], []>} : vector<24x32xbf16>, vector<32x128xbf16>, vector<24x128xf32> -> vector<24x128xf32>
    %593 = arith.addf %585, %592 : vector<24x128xf32>
    %c8_i32_510 = arith.constant 8 : i32
    %594 = arith.addi %arg1, %c8_i32_510 : i32
    %c0_511 = arith.constant 0 : index
    %595 = arith.index_cast %594 : i32 to index
    %c2_512 = arith.constant 2 : index
    %c0_513 = arith.constant 0 : index
    %596 = vector.load %arg2[%c0_511, %595, %c2_512, %c0_513] : memref<1x14x38x32xbf16, #tpu.memory_space<vmem>>, vector<1x1x24x32xbf16>
    %597 = vector.shape_cast %596 : vector<1x1x24x32xbf16> to vector<24x32xbf16>
    %c74 = arith.constant 74 : index
    %c0_514 = arith.constant 0 : index
    %c0_515 = arith.constant 0 : index
    %598 = vector.load %arg3[%c74, %c0_514, %c0_515] : memref<99x32x128xbf16, #tpu.memory_space<vmem>>, vector<1x32x128xbf16>
    %599 = vector.shape_cast %598 : vector<1x32x128xbf16> to vector<32x128xbf16>
    %cst_516 = arith.constant dense<0.000000e+00> : vector<24x128xf32>
    %600 = tpu.matmul %597, %599, %cst_516 {dimension_numbers = #tpu.dot_dimension_numbers<[1], [0], [0], [1], [0, 0, 1, 1], [], []>} : vector<24x32xbf16>, vector<32x128xbf16>, vector<24x128xf32> -> vector<24x128xf32>
    %601 = arith.addf %593, %600 : vector<24x128xf32>
    %c8_i32_517 = arith.constant 8 : i32
    %602 = arith.addi %arg1, %c8_i32_517 : i32
    %c0_518 = arith.constant 0 : index
    %603 = arith.index_cast %602 : i32 to index
    %c6_519 = arith.constant 6 : index
    %c0_520 = arith.constant 0 : index
    %604 = vector.load %arg2[%c0_518, %603, %c6_519, %c0_520] : memref<1x14x38x32xbf16, #tpu.memory_space<vmem>>, vector<1x1x24x32xbf16>
    %605 = vector.shape_cast %604 : vector<1x1x24x32xbf16> to vector<24x32xbf16>
    %c75 = arith.constant 75 : index
    %c0_521 = arith.constant 0 : index
    %c0_522 = arith.constant 0 : index
    %606 = vector.load %arg3[%c75, %c0_521, %c0_522] : memref<99x32x128xbf16, #tpu.memory_space<vmem>>, vector<1x32x128xbf16>
    %607 = vector.shape_cast %606 : vector<1x32x128xbf16> to vector<32x128xbf16>
    %cst_523 = arith.constant dense<0.000000e+00> : vector<24x128xf32>
    %608 = tpu.matmul %605, %607, %cst_523 {dimension_numbers = #tpu.dot_dimension_numbers<[1], [0], [0], [1], [0, 0, 1, 1], [], []>} : vector<24x32xbf16>, vector<32x128xbf16>, vector<24x128xf32> -> vector<24x128xf32>
    %609 = arith.addf %601, %608 : vector<24x128xf32>
    %c8_i32_524 = arith.constant 8 : i32
    %610 = arith.addi %arg1, %c8_i32_524 : i32
    %c0_525 = arith.constant 0 : index
    %611 = arith.index_cast %610 : i32 to index
    %c7_526 = arith.constant 7 : index
    %c0_527 = arith.constant 0 : index
    %612 = vector.load %arg2[%c0_525, %611, %c7_526, %c0_527] : memref<1x14x38x32xbf16, #tpu.memory_space<vmem>>, vector<1x1x24x32xbf16>
    %613 = vector.shape_cast %612 : vector<1x1x24x32xbf16> to vector<24x32xbf16>
    %c76 = arith.constant 76 : index
    %c0_528 = arith.constant 0 : index
    %c0_529 = arith.constant 0 : index
    %614 = vector.load %arg3[%c76, %c0_528, %c0_529] : memref<99x32x128xbf16, #tpu.memory_space<vmem>>, vector<1x32x128xbf16>
    %615 = vector.shape_cast %614 : vector<1x32x128xbf16> to vector<32x128xbf16>
    %cst_530 = arith.constant dense<0.000000e+00> : vector<24x128xf32>
    %616 = tpu.matmul %613, %615, %cst_530 {dimension_numbers = #tpu.dot_dimension_numbers<[1], [0], [0], [1], [0, 0, 1, 1], [], []>} : vector<24x32xbf16>, vector<32x128xbf16>, vector<24x128xf32> -> vector<24x128xf32>
    %617 = arith.addf %609, %616 : vector<24x128xf32>
    %c8_i32_531 = arith.constant 8 : i32
    %618 = arith.addi %arg1, %c8_i32_531 : i32
    %c0_532 = arith.constant 0 : index
    %619 = arith.index_cast %618 : i32 to index
    %c8_533 = arith.constant 8 : index
    %c0_534 = arith.constant 0 : index
    %620 = vector.load %arg2[%c0_532, %619, %c8_533, %c0_534] : memref<1x14x38x32xbf16, #tpu.memory_space<vmem>>, vector<1x1x24x32xbf16>
    %621 = vector.shape_cast %620 : vector<1x1x24x32xbf16> to vector<24x32xbf16>
    %c77 = arith.constant 77 : index
    %c0_535 = arith.constant 0 : index
    %c0_536 = arith.constant 0 : index
    %622 = vector.load %arg3[%c77, %c0_535, %c0_536] : memref<99x32x128xbf16, #tpu.memory_space<vmem>>, vector<1x32x128xbf16>
    %623 = vector.shape_cast %622 : vector<1x32x128xbf16> to vector<32x128xbf16>
    %cst_537 = arith.constant dense<0.000000e+00> : vector<24x128xf32>
    %624 = tpu.matmul %621, %623, %cst_537 {dimension_numbers = #tpu.dot_dimension_numbers<[1], [0], [0], [1], [0, 0, 1, 1], [], []>} : vector<24x32xbf16>, vector<32x128xbf16>, vector<24x128xf32> -> vector<24x128xf32>
    %625 = arith.addf %617, %624 : vector<24x128xf32>
    %c8_i32_538 = arith.constant 8 : i32
    %626 = arith.addi %arg1, %c8_i32_538 : i32
    %c0_539 = arith.constant 0 : index
    %627 = arith.index_cast %626 : i32 to index
    %c12_540 = arith.constant 12 : index
    %c0_541 = arith.constant 0 : index
    %628 = vector.load %arg2[%c0_539, %627, %c12_540, %c0_541] : memref<1x14x38x32xbf16, #tpu.memory_space<vmem>>, vector<1x1x24x32xbf16>
    %629 = vector.shape_cast %628 : vector<1x1x24x32xbf16> to vector<24x32xbf16>
    %c78 = arith.constant 78 : index
    %c0_542 = arith.constant 0 : index
    %c0_543 = arith.constant 0 : index
    %630 = vector.load %arg3[%c78, %c0_542, %c0_543] : memref<99x32x128xbf16, #tpu.memory_space<vmem>>, vector<1x32x128xbf16>
    %631 = vector.shape_cast %630 : vector<1x32x128xbf16> to vector<32x128xbf16>
    %cst_544 = arith.constant dense<0.000000e+00> : vector<24x128xf32>
    %632 = tpu.matmul %629, %631, %cst_544 {dimension_numbers = #tpu.dot_dimension_numbers<[1], [0], [0], [1], [0, 0, 1, 1], [], []>} : vector<24x32xbf16>, vector<32x128xbf16>, vector<24x128xf32> -> vector<24x128xf32>
    %633 = arith.addf %625, %632 : vector<24x128xf32>
    %c8_i32_545 = arith.constant 8 : i32
    %634 = arith.addi %arg1, %c8_i32_545 : i32
    %c0_546 = arith.constant 0 : index
    %635 = arith.index_cast %634 : i32 to index
    %c13_547 = arith.constant 13 : index
    %c0_548 = arith.constant 0 : index
    %636 = vector.load %arg2[%c0_546, %635, %c13_547, %c0_548] : memref<1x14x38x32xbf16, #tpu.memory_space<vmem>>, vector<1x1x24x32xbf16>
    %637 = vector.shape_cast %636 : vector<1x1x24x32xbf16> to vector<24x32xbf16>
    %c79 = arith.constant 79 : index
    %c0_549 = arith.constant 0 : index
    %c0_550 = arith.constant 0 : index
    %638 = vector.load %arg3[%c79, %c0_549, %c0_550] : memref<99x32x128xbf16, #tpu.memory_space<vmem>>, vector<1x32x128xbf16>
    %639 = vector.shape_cast %638 : vector<1x32x128xbf16> to vector<32x128xbf16>
    %cst_551 = arith.constant dense<0.000000e+00> : vector<24x128xf32>
    %640 = tpu.matmul %637, %639, %cst_551 {dimension_numbers = #tpu.dot_dimension_numbers<[1], [0], [0], [1], [0, 0, 1, 1], [], []>} : vector<24x32xbf16>, vector<32x128xbf16>, vector<24x128xf32> -> vector<24x128xf32>
    %641 = arith.addf %633, %640 : vector<24x128xf32>
    %c8_i32_552 = arith.constant 8 : i32
    %642 = arith.addi %arg1, %c8_i32_552 : i32
    %c0_553 = arith.constant 0 : index
    %643 = arith.index_cast %642 : i32 to index
    %c14_554 = arith.constant 14 : index
    %c0_555 = arith.constant 0 : index
    %644 = vector.load %arg2[%c0_553, %643, %c14_554, %c0_555] : memref<1x14x38x32xbf16, #tpu.memory_space<vmem>>, vector<1x1x24x32xbf16>
    %645 = vector.shape_cast %644 : vector<1x1x24x32xbf16> to vector<24x32xbf16>
    %c80 = arith.constant 80 : index
    %c0_556 = arith.constant 0 : index
    %c0_557 = arith.constant 0 : index
    %646 = vector.load %arg3[%c80, %c0_556, %c0_557] : memref<99x32x128xbf16, #tpu.memory_space<vmem>>, vector<1x32x128xbf16>
    %647 = vector.shape_cast %646 : vector<1x32x128xbf16> to vector<32x128xbf16>
    %cst_558 = arith.constant dense<0.000000e+00> : vector<24x128xf32>
    %648 = tpu.matmul %645, %647, %cst_558 {dimension_numbers = #tpu.dot_dimension_numbers<[1], [0], [0], [1], [0, 0, 1, 1], [], []>} : vector<24x32xbf16>, vector<32x128xbf16>, vector<24x128xf32> -> vector<24x128xf32>
    %649 = arith.addf %641, %648 : vector<24x128xf32>
    %c9_i32 = arith.constant 9 : i32
    %650 = arith.addi %arg1, %c9_i32 : i32
    %c0_559 = arith.constant 0 : index
    %651 = arith.index_cast %650 : i32 to index
    %c0_560 = arith.constant 0 : index
    %c0_561 = arith.constant 0 : index
    %652 = vector.load %arg2[%c0_559, %651, %c0_560, %c0_561] : memref<1x14x38x32xbf16, #tpu.memory_space<vmem>>, vector<1x1x24x32xbf16>
    %653 = vector.shape_cast %652 : vector<1x1x24x32xbf16> to vector<24x32xbf16>
    %c81 = arith.constant 81 : index
    %c0_562 = arith.constant 0 : index
    %c0_563 = arith.constant 0 : index
    %654 = vector.load %arg3[%c81, %c0_562, %c0_563] : memref<99x32x128xbf16, #tpu.memory_space<vmem>>, vector<1x32x128xbf16>
    %655 = vector.shape_cast %654 : vector<1x32x128xbf16> to vector<32x128xbf16>
    %cst_564 = arith.constant dense<0.000000e+00> : vector<24x128xf32>
    %656 = tpu.matmul %653, %655, %cst_564 {dimension_numbers = #tpu.dot_dimension_numbers<[1], [0], [0], [1], [0, 0, 1, 1], [], []>} : vector<24x32xbf16>, vector<32x128xbf16>, vector<24x128xf32> -> vector<24x128xf32>
    %657 = arith.addf %649, %656 : vector<24x128xf32>
    %c9_i32_565 = arith.constant 9 : i32
    %658 = arith.addi %arg1, %c9_i32_565 : i32
    %c0_566 = arith.constant 0 : index
    %659 = arith.index_cast %658 : i32 to index
    %c1_567 = arith.constant 1 : index
    %c0_568 = arith.constant 0 : index
    %660 = vector.load %arg2[%c0_566, %659, %c1_567, %c0_568] : memref<1x14x38x32xbf16, #tpu.memory_space<vmem>>, vector<1x1x24x32xbf16>
    %661 = vector.shape_cast %660 : vector<1x1x24x32xbf16> to vector<24x32xbf16>
    %c82 = arith.constant 82 : index
    %c0_569 = arith.constant 0 : index
    %c0_570 = arith.constant 0 : index
    %662 = vector.load %arg3[%c82, %c0_569, %c0_570] : memref<99x32x128xbf16, #tpu.memory_space<vmem>>, vector<1x32x128xbf16>
    %663 = vector.shape_cast %662 : vector<1x32x128xbf16> to vector<32x128xbf16>
    %cst_571 = arith.constant dense<0.000000e+00> : vector<24x128xf32>
    %664 = tpu.matmul %661, %663, %cst_571 {dimension_numbers = #tpu.dot_dimension_numbers<[1], [0], [0], [1], [0, 0, 1, 1], [], []>} : vector<24x32xbf16>, vector<32x128xbf16>, vector<24x128xf32> -> vector<24x128xf32>
    %665 = arith.addf %657, %664 : vector<24x128xf32>
    %c9_i32_572 = arith.constant 9 : i32
    %666 = arith.addi %arg1, %c9_i32_572 : i32
    %c0_573 = arith.constant 0 : index
    %667 = arith.index_cast %666 : i32 to index
    %c2_574 = arith.constant 2 : index
    %c0_575 = arith.constant 0 : index
    %668 = vector.load %arg2[%c0_573, %667, %c2_574, %c0_575] : memref<1x14x38x32xbf16, #tpu.memory_space<vmem>>, vector<1x1x24x32xbf16>
    %669 = vector.shape_cast %668 : vector<1x1x24x32xbf16> to vector<24x32xbf16>
    %c83 = arith.constant 83 : index
    %c0_576 = arith.constant 0 : index
    %c0_577 = arith.constant 0 : index
    %670 = vector.load %arg3[%c83, %c0_576, %c0_577] : memref<99x32x128xbf16, #tpu.memory_space<vmem>>, vector<1x32x128xbf16>
    %671 = vector.shape_cast %670 : vector<1x32x128xbf16> to vector<32x128xbf16>
    %cst_578 = arith.constant dense<0.000000e+00> : vector<24x128xf32>
    %672 = tpu.matmul %669, %671, %cst_578 {dimension_numbers = #tpu.dot_dimension_numbers<[1], [0], [0], [1], [0, 0, 1, 1], [], []>} : vector<24x32xbf16>, vector<32x128xbf16>, vector<24x128xf32> -> vector<24x128xf32>
    %673 = arith.addf %665, %672 : vector<24x128xf32>
    %c9_i32_579 = arith.constant 9 : i32
    %674 = arith.addi %arg1, %c9_i32_579 : i32
    %c0_580 = arith.constant 0 : index
    %675 = arith.index_cast %674 : i32 to index
    %c6_581 = arith.constant 6 : index
    %c0_582 = arith.constant 0 : index
    %676 = vector.load %arg2[%c0_580, %675, %c6_581, %c0_582] : memref<1x14x38x32xbf16, #tpu.memory_space<vmem>>, vector<1x1x24x32xbf16>
    %677 = vector.shape_cast %676 : vector<1x1x24x32xbf16> to vector<24x32xbf16>
    %c84 = arith.constant 84 : index
    %c0_583 = arith.constant 0 : index
    %c0_584 = arith.constant 0 : index
    %678 = vector.load %arg3[%c84, %c0_583, %c0_584] : memref<99x32x128xbf16, #tpu.memory_space<vmem>>, vector<1x32x128xbf16>
    %679 = vector.shape_cast %678 : vector<1x32x128xbf16> to vector<32x128xbf16>
    %cst_585 = arith.constant dense<0.000000e+00> : vector<24x128xf32>
    %680 = tpu.matmul %677, %679, %cst_585 {dimension_numbers = #tpu.dot_dimension_numbers<[1], [0], [0], [1], [0, 0, 1, 1], [], []>} : vector<24x32xbf16>, vector<32x128xbf16>, vector<24x128xf32> -> vector<24x128xf32>
    %681 = arith.addf %673, %680 : vector<24x128xf32>
    %c9_i32_586 = arith.constant 9 : i32
    %682 = arith.addi %arg1, %c9_i32_586 : i32
    %c0_587 = arith.constant 0 : index
    %683 = arith.index_cast %682 : i32 to index
    %c7_588 = arith.constant 7 : index
    %c0_589 = arith.constant 0 : index
    %684 = vector.load %arg2[%c0_587, %683, %c7_588, %c0_589] : memref<1x14x38x32xbf16, #tpu.memory_space<vmem>>, vector<1x1x24x32xbf16>
    %685 = vector.shape_cast %684 : vector<1x1x24x32xbf16> to vector<24x32xbf16>
    %c85 = arith.constant 85 : index
    %c0_590 = arith.constant 0 : index
    %c0_591 = arith.constant 0 : index
    %686 = vector.load %arg3[%c85, %c0_590, %c0_591] : memref<99x32x128xbf16, #tpu.memory_space<vmem>>, vector<1x32x128xbf16>
    %687 = vector.shape_cast %686 : vector<1x32x128xbf16> to vector<32x128xbf16>
    %cst_592 = arith.constant dense<0.000000e+00> : vector<24x128xf32>
    %688 = tpu.matmul %685, %687, %cst_592 {dimension_numbers = #tpu.dot_dimension_numbers<[1], [0], [0], [1], [0, 0, 1, 1], [], []>} : vector<24x32xbf16>, vector<32x128xbf16>, vector<24x128xf32> -> vector<24x128xf32>
    %689 = arith.addf %681, %688 : vector<24x128xf32>
    %c9_i32_593 = arith.constant 9 : i32
    %690 = arith.addi %arg1, %c9_i32_593 : i32
    %c0_594 = arith.constant 0 : index
    %691 = arith.index_cast %690 : i32 to index
    %c8_595 = arith.constant 8 : index
    %c0_596 = arith.constant 0 : index
    %692 = vector.load %arg2[%c0_594, %691, %c8_595, %c0_596] : memref<1x14x38x32xbf16, #tpu.memory_space<vmem>>, vector<1x1x24x32xbf16>
    %693 = vector.shape_cast %692 : vector<1x1x24x32xbf16> to vector<24x32xbf16>
    %c86 = arith.constant 86 : index
    %c0_597 = arith.constant 0 : index
    %c0_598 = arith.constant 0 : index
    %694 = vector.load %arg3[%c86, %c0_597, %c0_598] : memref<99x32x128xbf16, #tpu.memory_space<vmem>>, vector<1x32x128xbf16>
    %695 = vector.shape_cast %694 : vector<1x32x128xbf16> to vector<32x128xbf16>
    %cst_599 = arith.constant dense<0.000000e+00> : vector<24x128xf32>
    %696 = tpu.matmul %693, %695, %cst_599 {dimension_numbers = #tpu.dot_dimension_numbers<[1], [0], [0], [1], [0, 0, 1, 1], [], []>} : vector<24x32xbf16>, vector<32x128xbf16>, vector<24x128xf32> -> vector<24x128xf32>
    %697 = arith.addf %689, %696 : vector<24x128xf32>
    %c9_i32_600 = arith.constant 9 : i32
    %698 = arith.addi %arg1, %c9_i32_600 : i32
    %c0_601 = arith.constant 0 : index
    %699 = arith.index_cast %698 : i32 to index
    %c12_602 = arith.constant 12 : index
    %c0_603 = arith.constant 0 : index
    %700 = vector.load %arg2[%c0_601, %699, %c12_602, %c0_603] : memref<1x14x38x32xbf16, #tpu.memory_space<vmem>>, vector<1x1x24x32xbf16>
    %701 = vector.shape_cast %700 : vector<1x1x24x32xbf16> to vector<24x32xbf16>
    %c87 = arith.constant 87 : index
    %c0_604 = arith.constant 0 : index
    %c0_605 = arith.constant 0 : index
    %702 = vector.load %arg3[%c87, %c0_604, %c0_605] : memref<99x32x128xbf16, #tpu.memory_space<vmem>>, vector<1x32x128xbf16>
    %703 = vector.shape_cast %702 : vector<1x32x128xbf16> to vector<32x128xbf16>
    %cst_606 = arith.constant dense<0.000000e+00> : vector<24x128xf32>
    %704 = tpu.matmul %701, %703, %cst_606 {dimension_numbers = #tpu.dot_dimension_numbers<[1], [0], [0], [1], [0, 0, 1, 1], [], []>} : vector<24x32xbf16>, vector<32x128xbf16>, vector<24x128xf32> -> vector<24x128xf32>
    %705 = arith.addf %697, %704 : vector<24x128xf32>
    %c9_i32_607 = arith.constant 9 : i32
    %706 = arith.addi %arg1, %c9_i32_607 : i32
    %c0_608 = arith.constant 0 : index
    %707 = arith.index_cast %706 : i32 to index
    %c13_609 = arith.constant 13 : index
    %c0_610 = arith.constant 0 : index
    %708 = vector.load %arg2[%c0_608, %707, %c13_609, %c0_610] : memref<1x14x38x32xbf16, #tpu.memory_space<vmem>>, vector<1x1x24x32xbf16>
    %709 = vector.shape_cast %708 : vector<1x1x24x32xbf16> to vector<24x32xbf16>
    %c88 = arith.constant 88 : index
    %c0_611 = arith.constant 0 : index
    %c0_612 = arith.constant 0 : index
    %710 = vector.load %arg3[%c88, %c0_611, %c0_612] : memref<99x32x128xbf16, #tpu.memory_space<vmem>>, vector<1x32x128xbf16>
    %711 = vector.shape_cast %710 : vector<1x32x128xbf16> to vector<32x128xbf16>
    %cst_613 = arith.constant dense<0.000000e+00> : vector<24x128xf32>
    %712 = tpu.matmul %709, %711, %cst_613 {dimension_numbers = #tpu.dot_dimension_numbers<[1], [0], [0], [1], [0, 0, 1, 1], [], []>} : vector<24x32xbf16>, vector<32x128xbf16>, vector<24x128xf32> -> vector<24x128xf32>
    %713 = arith.addf %705, %712 : vector<24x128xf32>
    %c9_i32_614 = arith.constant 9 : i32
    %714 = arith.addi %arg1, %c9_i32_614 : i32
    %c0_615 = arith.constant 0 : index
    %715 = arith.index_cast %714 : i32 to index
    %c14_616 = arith.constant 14 : index
    %c0_617 = arith.constant 0 : index
    %716 = vector.load %arg2[%c0_615, %715, %c14_616, %c0_617] : memref<1x14x38x32xbf16, #tpu.memory_space<vmem>>, vector<1x1x24x32xbf16>
    %717 = vector.shape_cast %716 : vector<1x1x24x32xbf16> to vector<24x32xbf16>
    %c89 = arith.constant 89 : index
    %c0_618 = arith.constant 0 : index
    %c0_619 = arith.constant 0 : index
    %718 = vector.load %arg3[%c89, %c0_618, %c0_619] : memref<99x32x128xbf16, #tpu.memory_space<vmem>>, vector<1x32x128xbf16>
    %719 = vector.shape_cast %718 : vector<1x32x128xbf16> to vector<32x128xbf16>
    %cst_620 = arith.constant dense<0.000000e+00> : vector<24x128xf32>
    %720 = tpu.matmul %717, %719, %cst_620 {dimension_numbers = #tpu.dot_dimension_numbers<[1], [0], [0], [1], [0, 0, 1, 1], [], []>} : vector<24x32xbf16>, vector<32x128xbf16>, vector<24x128xf32> -> vector<24x128xf32>
    %721 = arith.addf %713, %720 : vector<24x128xf32>
    %c10_i32 = arith.constant 10 : i32
    %722 = arith.addi %arg1, %c10_i32 : i32
    %c0_621 = arith.constant 0 : index
    %723 = arith.index_cast %722 : i32 to index
    %c0_622 = arith.constant 0 : index
    %c0_623 = arith.constant 0 : index
    %724 = vector.load %arg2[%c0_621, %723, %c0_622, %c0_623] : memref<1x14x38x32xbf16, #tpu.memory_space<vmem>>, vector<1x1x24x32xbf16>
    %725 = vector.shape_cast %724 : vector<1x1x24x32xbf16> to vector<24x32xbf16>
    %c90 = arith.constant 90 : index
    %c0_624 = arith.constant 0 : index
    %c0_625 = arith.constant 0 : index
    %726 = vector.load %arg3[%c90, %c0_624, %c0_625] : memref<99x32x128xbf16, #tpu.memory_space<vmem>>, vector<1x32x128xbf16>
    %727 = vector.shape_cast %726 : vector<1x32x128xbf16> to vector<32x128xbf16>
    %cst_626 = arith.constant dense<0.000000e+00> : vector<24x128xf32>
    %728 = tpu.matmul %725, %727, %cst_626 {dimension_numbers = #tpu.dot_dimension_numbers<[1], [0], [0], [1], [0, 0, 1, 1], [], []>} : vector<24x32xbf16>, vector<32x128xbf16>, vector<24x128xf32> -> vector<24x128xf32>
    %729 = arith.addf %721, %728 : vector<24x128xf32>
    %730 = arith.extf %725 : vector<24x32xbf16> to vector<24x32xf32>
    %731 = arith.addf %1, %730 : vector<24x32xf32>
    %c10_i32_627 = arith.constant 10 : i32
    %732 = arith.addi %arg1, %c10_i32_627 : i32
    %c0_628 = arith.constant 0 : index
    %733 = arith.index_cast %732 : i32 to index
    %c1_629 = arith.constant 1 : index
    %c0_630 = arith.constant 0 : index
    %734 = vector.load %arg2[%c0_628, %733, %c1_629, %c0_630] : memref<1x14x38x32xbf16, #tpu.memory_space<vmem>>, vector<1x1x24x32xbf16>
    %735 = vector.shape_cast %734 : vector<1x1x24x32xbf16> to vector<24x32xbf16>
    %c91 = arith.constant 91 : index
    %c0_631 = arith.constant 0 : index
    %c0_632 = arith.constant 0 : index
    %736 = vector.load %arg3[%c91, %c0_631, %c0_632] : memref<99x32x128xbf16, #tpu.memory_space<vmem>>, vector<1x32x128xbf16>
    %737 = vector.shape_cast %736 : vector<1x32x128xbf16> to vector<32x128xbf16>
    %cst_633 = arith.constant dense<0.000000e+00> : vector<24x128xf32>
    %738 = tpu.matmul %735, %737, %cst_633 {dimension_numbers = #tpu.dot_dimension_numbers<[1], [0], [0], [1], [0, 0, 1, 1], [], []>} : vector<24x32xbf16>, vector<32x128xbf16>, vector<24x128xf32> -> vector<24x128xf32>
    %739 = arith.addf %729, %738 : vector<24x128xf32>
    %740 = arith.extf %735 : vector<24x32xbf16> to vector<24x32xf32>
    %741 = arith.addf %731, %740 : vector<24x32xf32>
    %c10_i32_634 = arith.constant 10 : i32
    %742 = arith.addi %arg1, %c10_i32_634 : i32
    %c0_635 = arith.constant 0 : index
    %743 = arith.index_cast %742 : i32 to index
    %c2_636 = arith.constant 2 : index
    %c0_637 = arith.constant 0 : index
    %744 = vector.load %arg2[%c0_635, %743, %c2_636, %c0_637] : memref<1x14x38x32xbf16, #tpu.memory_space<vmem>>, vector<1x1x24x32xbf16>
    %745 = vector.shape_cast %744 : vector<1x1x24x32xbf16> to vector<24x32xbf16>
    %c92 = arith.constant 92 : index
    %c0_638 = arith.constant 0 : index
    %c0_639 = arith.constant 0 : index
    %746 = vector.load %arg3[%c92, %c0_638, %c0_639] : memref<99x32x128xbf16, #tpu.memory_space<vmem>>, vector<1x32x128xbf16>
    %747 = vector.shape_cast %746 : vector<1x32x128xbf16> to vector<32x128xbf16>
    %cst_640 = arith.constant dense<0.000000e+00> : vector<24x128xf32>
    %748 = tpu.matmul %745, %747, %cst_640 {dimension_numbers = #tpu.dot_dimension_numbers<[1], [0], [0], [1], [0, 0, 1, 1], [], []>} : vector<24x32xbf16>, vector<32x128xbf16>, vector<24x128xf32> -> vector<24x128xf32>
    %749 = arith.addf %739, %748 : vector<24x128xf32>
    %750 = arith.extf %745 : vector<24x32xbf16> to vector<24x32xf32>
    %751 = arith.addf %741, %750 : vector<24x32xf32>
    %c10_i32_641 = arith.constant 10 : i32
    %752 = arith.addi %arg1, %c10_i32_641 : i32
    %c0_642 = arith.constant 0 : index
    %753 = arith.index_cast %752 : i32 to index
    %c6_643 = arith.constant 6 : index
    %c0_644 = arith.constant 0 : index
    %754 = vector.load %arg2[%c0_642, %753, %c6_643, %c0_644] : memref<1x14x38x32xbf16, #tpu.memory_space<vmem>>, vector<1x1x24x32xbf16>
    %755 = vector.shape_cast %754 : vector<1x1x24x32xbf16> to vector<24x32xbf16>
    %c93 = arith.constant 93 : index
    %c0_645 = arith.constant 0 : index
    %c0_646 = arith.constant 0 : index
    %756 = vector.load %arg3[%c93, %c0_645, %c0_646] : memref<99x32x128xbf16, #tpu.memory_space<vmem>>, vector<1x32x128xbf16>
    %757 = vector.shape_cast %756 : vector<1x32x128xbf16> to vector<32x128xbf16>
    %cst_647 = arith.constant dense<0.000000e+00> : vector<24x128xf32>
    %758 = tpu.matmul %755, %757, %cst_647 {dimension_numbers = #tpu.dot_dimension_numbers<[1], [0], [0], [1], [0, 0, 1, 1], [], []>} : vector<24x32xbf16>, vector<32x128xbf16>, vector<24x128xf32> -> vector<24x128xf32>
    %759 = arith.addf %749, %758 : vector<24x128xf32>
    %760 = arith.extf %755 : vector<24x32xbf16> to vector<24x32xf32>
    %761 = arith.addf %751, %760 : vector<24x32xf32>
    %c10_i32_648 = arith.constant 10 : i32
    %762 = arith.addi %arg1, %c10_i32_648 : i32
    %c0_649 = arith.constant 0 : index
    %763 = arith.index_cast %762 : i32 to index
    %c7_650 = arith.constant 7 : index
    %c0_651 = arith.constant 0 : index
    %764 = vector.load %arg2[%c0_649, %763, %c7_650, %c0_651] : memref<1x14x38x32xbf16, #tpu.memory_space<vmem>>, vector<1x1x24x32xbf16>
    %765 = vector.shape_cast %764 : vector<1x1x24x32xbf16> to vector<24x32xbf16>
    %c94 = arith.constant 94 : index
    %c0_652 = arith.constant 0 : index
    %c0_653 = arith.constant 0 : index
    %766 = vector.load %arg3[%c94, %c0_652, %c0_653] : memref<99x32x128xbf16, #tpu.memory_space<vmem>>, vector<1x32x128xbf16>
    %767 = vector.shape_cast %766 : vector<1x32x128xbf16> to vector<32x128xbf16>
    %cst_654 = arith.constant dense<0.000000e+00> : vector<24x128xf32>
    %768 = tpu.matmul %765, %767, %cst_654 {dimension_numbers = #tpu.dot_dimension_numbers<[1], [0], [0], [1], [0, 0, 1, 1], [], []>} : vector<24x32xbf16>, vector<32x128xbf16>, vector<24x128xf32> -> vector<24x128xf32>
    %769 = arith.addf %759, %768 : vector<24x128xf32>
    %770 = arith.extf %765 : vector<24x32xbf16> to vector<24x32xf32>
    %771 = arith.addf %761, %770 : vector<24x32xf32>
    %c10_i32_655 = arith.constant 10 : i32
    %772 = arith.addi %arg1, %c10_i32_655 : i32
    %c0_656 = arith.constant 0 : index
    %773 = arith.index_cast %772 : i32 to index
    %c8_657 = arith.constant 8 : index
    %c0_658 = arith.constant 0 : index
    %774 = vector.load %arg2[%c0_656, %773, %c8_657, %c0_658] : memref<1x14x38x32xbf16, #tpu.memory_space<vmem>>, vector<1x1x24x32xbf16>
    %775 = vector.shape_cast %774 : vector<1x1x24x32xbf16> to vector<24x32xbf16>
    %c95 = arith.constant 95 : index
    %c0_659 = arith.constant 0 : index
    %c0_660 = arith.constant 0 : index
    %776 = vector.load %arg3[%c95, %c0_659, %c0_660] : memref<99x32x128xbf16, #tpu.memory_space<vmem>>, vector<1x32x128xbf16>
    %777 = vector.shape_cast %776 : vector<1x32x128xbf16> to vector<32x128xbf16>
    %cst_661 = arith.constant dense<0.000000e+00> : vector<24x128xf32>
    %778 = tpu.matmul %775, %777, %cst_661 {dimension_numbers = #tpu.dot_dimension_numbers<[1], [0], [0], [1], [0, 0, 1, 1], [], []>} : vector<24x32xbf16>, vector<32x128xbf16>, vector<24x128xf32> -> vector<24x128xf32>
    %779 = arith.addf %769, %778 : vector<24x128xf32>
    %780 = arith.extf %775 : vector<24x32xbf16> to vector<24x32xf32>
    %781 = arith.addf %771, %780 : vector<24x32xf32>
    %c10_i32_662 = arith.constant 10 : i32
    %782 = arith.addi %arg1, %c10_i32_662 : i32
    %c0_663 = arith.constant 0 : index
    %783 = arith.index_cast %782 : i32 to index
    %c12_664 = arith.constant 12 : index
    %c0_665 = arith.constant 0 : index
    %784 = vector.load %arg2[%c0_663, %783, %c12_664, %c0_665] : memref<1x14x38x32xbf16, #tpu.memory_space<vmem>>, vector<1x1x24x32xbf16>
    %785 = vector.shape_cast %784 : vector<1x1x24x32xbf16> to vector<24x32xbf16>
    %c96 = arith.constant 96 : index
    %c0_666 = arith.constant 0 : index
    %c0_667 = arith.constant 0 : index
    %786 = vector.load %arg3[%c96, %c0_666, %c0_667] : memref<99x32x128xbf16, #tpu.memory_space<vmem>>, vector<1x32x128xbf16>
    %787 = vector.shape_cast %786 : vector<1x32x128xbf16> to vector<32x128xbf16>
    %cst_668 = arith.constant dense<0.000000e+00> : vector<24x128xf32>
    %788 = tpu.matmul %785, %787, %cst_668 {dimension_numbers = #tpu.dot_dimension_numbers<[1], [0], [0], [1], [0, 0, 1, 1], [], []>} : vector<24x32xbf16>, vector<32x128xbf16>, vector<24x128xf32> -> vector<24x128xf32>
    %789 = arith.addf %779, %788 : vector<24x128xf32>
    %790 = arith.extf %785 : vector<24x32xbf16> to vector<24x32xf32>
    %791 = arith.addf %781, %790 : vector<24x32xf32>
    %c10_i32_669 = arith.constant 10 : i32
    %792 = arith.addi %arg1, %c10_i32_669 : i32
    %c0_670 = arith.constant 0 : index
    %793 = arith.index_cast %792 : i32 to index
    %c13_671 = arith.constant 13 : index
    %c0_672 = arith.constant 0 : index
    %794 = vector.load %arg2[%c0_670, %793, %c13_671, %c0_672] : memref<1x14x38x32xbf16, #tpu.memory_space<vmem>>, vector<1x1x24x32xbf16>
    %795 = vector.shape_cast %794 : vector<1x1x24x32xbf16> to vector<24x32xbf16>
    %c97 = arith.constant 97 : index
    %c0_673 = arith.constant 0 : index
    %c0_674 = arith.constant 0 : index
    %796 = vector.load %arg3[%c97, %c0_673, %c0_674] : memref<99x32x128xbf16, #tpu.memory_space<vmem>>, vector<1x32x128xbf16>
    %797 = vector.shape_cast %796 : vector<1x32x128xbf16> to vector<32x128xbf16>
    %cst_675 = arith.constant dense<0.000000e+00> : vector<24x128xf32>
    %798 = tpu.matmul %795, %797, %cst_675 {dimension_numbers = #tpu.dot_dimension_numbers<[1], [0], [0], [1], [0, 0, 1, 1], [], []>} : vector<24x32xbf16>, vector<32x128xbf16>, vector<24x128xf32> -> vector<24x128xf32>
    %799 = arith.addf %789, %798 : vector<24x128xf32>
    %800 = arith.extf %795 : vector<24x32xbf16> to vector<24x32xf32>
    %801 = arith.addf %791, %800 : vector<24x32xf32>
    %c10_i32_676 = arith.constant 10 : i32
    %802 = arith.addi %arg1, %c10_i32_676 : i32
    %c0_677 = arith.constant 0 : index
    %803 = arith.index_cast %802 : i32 to index
    %c14_678 = arith.constant 14 : index
    %c0_679 = arith.constant 0 : index
    %804 = vector.load %arg2[%c0_677, %803, %c14_678, %c0_679] : memref<1x14x38x32xbf16, #tpu.memory_space<vmem>>, vector<1x1x24x32xbf16>
    %805 = vector.shape_cast %804 : vector<1x1x24x32xbf16> to vector<24x32xbf16>
    %c98 = arith.constant 98 : index
    %c0_680 = arith.constant 0 : index
    %c0_681 = arith.constant 0 : index
    %806 = vector.load %arg3[%c98, %c0_680, %c0_681] : memref<99x32x128xbf16, #tpu.memory_space<vmem>>, vector<1x32x128xbf16>
    %807 = vector.shape_cast %806 : vector<1x32x128xbf16> to vector<32x128xbf16>
    %cst_682 = arith.constant dense<0.000000e+00> : vector<24x128xf32>
    %808 = tpu.matmul %805, %807, %cst_682 {dimension_numbers = #tpu.dot_dimension_numbers<[1], [0], [0], [1], [0, 0, 1, 1], [], []>} : vector<24x32xbf16>, vector<32x128xbf16>, vector<24x128xf32> -> vector<24x128xf32>
    %809 = arith.addf %799, %808 : vector<24x128xf32>
    %810 = arith.extf %805 : vector<24x32xbf16> to vector<24x32xf32>
    %811 = arith.addf %801, %810 : vector<24x32xf32>
    %c0_683 = arith.constant 0 : index
    %c0_684 = arith.constant 0 : index
    %812 = vector.load %arg4[%c0_683, %c0_684] : memref<1x128xf32, #tpu.memory_space<vmem>>, vector<1x128xf32>
    %813 = vector.broadcast %812 : vector<1x128xf32> to vector<24x128xf32>
    %814 = arith.addf %809, %813 : vector<24x128xf32>
    %cst_685 = arith.constant 0.000000e+00 : f32
    %815 = vector.broadcast %cst_685 : f32 to vector<24x128xf32>
    %816 = arith.cmpf ogt, %814, %815 : vector<24x128xf32>
    %cst_686 = arith.constant 1.000000e-01 : f32
    %817 = vector.broadcast %cst_686 : f32 to vector<24x128xf32>
    %818 = arith.mulf %817, %814 : vector<24x128xf32>
    %819 = arith.select %816, %814, %818 : vector<24x128xi1>, vector<24x128xf32>
    %820 = vector.extract_strided_slice %819 {offsets = [0, 0], sizes = [24, 32], strides = [1, 1]} : vector<24x128xf32> to vector<24x32xf32>
    %821 = vector.extract_strided_slice %819 {offsets = [0, 32], sizes = [24, 32], strides = [1, 1]} : vector<24x128xf32> to vector<24x32xf32>
    %822 = arith.addf %820, %821 : vector<24x32xf32>
    %823 = vector.extract_strided_slice %819 {offsets = [0, 64], sizes = [24, 32], strides = [1, 1]} : vector<24x128xf32> to vector<24x32xf32>
    %824 = arith.addf %822, %823 : vector<24x32xf32>
    %825 = vector.extract_strided_slice %819 {offsets = [0, 96], sizes = [24, 32], strides = [1, 1]} : vector<24x128xf32> to vector<24x32xf32>
    %826 = arith.addf %824, %825 : vector<24x32xf32>
    %827 = arith.truncf %826 : vector<24x32xf32> to vector<24x32xbf16>
    %c0_687 = arith.constant 0 : index
    %c0_688 = arith.constant 0 : index
    %828 = vector.load %arg5[%c0_687, %c0_688] : memref<32x32xbf16, #tpu.memory_space<vmem>>, vector<32x32xbf16>
    %cst_689 = arith.constant dense<0.000000e+00> : vector<24x32xf32>
    %829 = tpu.matmul %827, %828, %cst_689 {dimension_numbers = #tpu.dot_dimension_numbers<[1], [0], [0], [1], [0, 0, 1, 1], [], []>} : vector<24x32xbf16>, vector<32x32xbf16>, vector<24x32xf32> -> vector<24x32xf32>
    %c0_690 = arith.constant 0 : index
    %c0_691 = arith.constant 0 : index
    %830 = vector.load %arg6[%c0_690, %c0_691] : memref<1x32xf32, #tpu.memory_space<vmem>>, vector<1x32xf32>
    %831 = vector.broadcast %830 : vector<1x32xf32> to vector<24x32xf32>
    %832 = arith.addf %829, %831 : vector<24x32xf32>
    %cst_692 = arith.constant 0.111111112 : f32
    %833 = vector.broadcast %cst_692 : f32 to vector<24x32xf32>
    %834 = arith.mulf %811, %833 : vector<24x32xf32>
    %835 = arith.truncf %834 : vector<24x32xf32> to vector<24x32xbf16>
    %c0_693 = arith.constant 0 : index
    %c0_694 = arith.constant 0 : index
    %836 = vector.load %arg7[%c0_693, %c0_694] : memref<32x32xbf16, #tpu.memory_space<vmem>>, vector<32x32xbf16>
    %cst_695 = arith.constant dense<0.000000e+00> : vector<24x32xf32>
    %837 = tpu.matmul %835, %836, %cst_695 {dimension_numbers = #tpu.dot_dimension_numbers<[1], [0], [0], [1], [0, 0, 1, 1], [], []>} : vector<24x32xbf16>, vector<32x32xbf16>, vector<24x32xf32> -> vector<24x32xf32>
    %c0_696 = arith.constant 0 : index
    %c0_697 = arith.constant 0 : index
    %838 = vector.load %arg8[%c0_696, %c0_697] : memref<1x32xf32, #tpu.memory_space<vmem>>, vector<1x32xf32>
    %839 = vector.broadcast %838 : vector<1x32xf32> to vector<24x32xf32>
    %840 = arith.addf %837, %839 : vector<24x32xf32>
    %841 = arith.addf %832, %840 : vector<24x32xf32>
    %c0_698 = arith.constant 0 : index
    %c0_699 = arith.constant 0 : index
    %c0_700 = arith.constant 0 : index
    %c0_701 = arith.constant 0 : index
    %842 = vector.load %arg9[%c0_698, %c0_699, %c0_700, %c0_701] : memref<1x1x24x32xf32, #tpu.memory_space<vmem>>, vector<1x1x24x32xf32>
    %843 = vector.shape_cast %842 : vector<1x1x24x32xf32> to vector<24x32xf32>
    %844 = vector.shape_cast %841 : vector<24x32xf32> to vector<1x1x24x32xf32>
    tpu.vector_store %arg9[%c0_698, %c0_699, %c0_700, %c0_701], %844 {strides = array<i32>} : memref<1x1x24x32xf32, #tpu.memory_space<vmem>>, vector<1x1x24x32xf32>,
    return
  }
  func.func @transform_0(%arg0: i32, %arg1: i32) -> (i32, i32, i32, i32) {
    %c0_i32 = arith.constant 0 : i32
    %c0_i32_0 = arith.constant 0 : i32
    %c0_i32_1 = arith.constant 0 : i32
    %c0_i32_2 = arith.constant 0 : i32
    return %arg0, %c0_i32, %c0_i32_0, %c0_i32_1 : i32, i32, i32, i32
  }
  func.func @transform_1(%arg0: i32, %arg1: i32) -> (i32, i32, i32) {
    %c0_i32 = arith.constant 0 : i32
    %c0_i32_0 = arith.constant 0 : i32
    %c0_i32_1 = arith.constant 0 : i32
    %c0_i32_2 = arith.constant 0 : i32
    return %c0_i32, %c0_i32_0, %c0_i32_1 : i32, i32, i32
  }
  func.func @transform_2(%arg0: i32, %arg1: i32) -> (i32, i32) {
    %c0_i32 = arith.constant 0 : i32
    %c0_i32_0 = arith.constant 0 : i32
    %c0_i32_1 = arith.constant 0 : i32
    return %c0_i32, %c0_i32_0 : i32, i32
  }
  func.func @transform_3(%arg0: i32, %arg1: i32) -> (i32, i32) {
    %c0_i32 = arith.constant 0 : i32
    %c0_i32_0 = arith.constant 0 : i32
    %c0_i32_1 = arith.constant 0 : i32
    return %c0_i32, %c0_i32_0 : i32, i32
  }
  func.func @transform_4(%arg0: i32, %arg1: i32) -> (i32, i32) {
    %c0_i32 = arith.constant 0 : i32
    %c0_i32_0 = arith.constant 0 : i32
    %c0_i32_1 = arith.constant 0 : i32
    return %c0_i32, %c0_i32_0 : i32, i32
  }
  func.func @transform_5(%arg0: i32, %arg1: i32) -> (i32, i32) {
    %c0_i32 = arith.constant 0 : i32
    %c0_i32_0 = arith.constant 0 : i32
    %c0_i32_1 = arith.constant 0 : i32
    return %c0_i32, %c0_i32_0 : i32, i32
  }
  func.func @transform_6(%arg0: i32, %arg1: i32) -> (i32, i32) {
    %c0_i32 = arith.constant 0 : i32
    %c0_i32_0 = arith.constant 0 : i32
    %c0_i32_1 = arith.constant 0 : i32
    return %c0_i32, %c0_i32_0 : i32, i32
  }
  func.func @transform_7(%arg0: i32, %arg1: i32) -> (i32, i32, i32, i32) {
    %c0_i32 = arith.constant 0 : i32
    %c0_i32_0 = arith.constant 0 : i32
    %c0_i32_1 = arith.constant 0 : i32
    return %arg0, %arg1, %c0_i32, %c0_i32_0 : i32, i32, i32, i32
  }
}

</mosaic_0001>

<llo_original>
// kernel: tpu_custom_call.1
$region0: #{tpu_custom_call.1}
  #allocation0 [shape = 'u32[]', space=smem, size = 0x4, offset = 0x4, fixed_abs, tag = 'smem constant byte address 0x4 - core index']
  #allocation1 [shape = 'u32[144,128]{1,0:T(1,128)}', space=vmem, size = 0x12000, scoped, tag = 'internal scratch']
  %s0 = inlined_call_operand.vmem [shape: bf16[2,14,38,32], index: 0, kind: input, shape index: {}]
  %s1 = inlined_call_operand.hbm [shape: bf16[99,32,128], index: 1, kind: input, shape index: {}]
  %s2 = inlined_call_operand.vmem [shape: f32[1,128], index: 2, kind: input, shape index: {}]
  %s3 = inlined_call_operand.vmem [shape: bf16[32,32], index: 3, kind: input, shape index: {}]
  %s4 = inlined_call_operand.vmem [shape: f32[1,32], index: 4, kind: input, shape index: {}]
  %s5 = inlined_call_operand.vmem [shape: bf16[32,32], index: 5, kind: input, shape index: {}]
  %s6 = inlined_call_operand.vmem [shape: f32[1,32], index: 6, kind: input, shape index: {}]
  %s7 = inlined_call_operand.hbm [shape: f32[2,4,24,32], index: 7, kind: output, shape index: {}]
  %s8 = sld [smem:[#allocation0]]
  $region65: #{tpu_custom_call.1} parent=0
    _
  %s10 = ssub.s32 1, %s8
  %s11 = scalar_select 0, %s10, %s8
  $region1: #{tpu_custom_call.1} parent=0
    #allocation2 [shape = 'u8[811008]{0}', space=vmem, size = 0xc6000, scoped, tag = 'input window, operand 1, single buffered']
    #allocation3 [shape = 's32[2]{0}', space=sflag, size = 0x8, scoped, tag = 'scoped memory for tpu_custom_call.1']
    #allocation4 [shape = 's32[2]{0}', space=sflag, size = 0x8, scoped, tag = 'scoped memory for tpu_custom_call.1']
    #allocation5 [shape = 'u8[24576]{0}', space=vmem, size = 0x6000, scoped, tag = 'output window, operand 0']
    %12 = vsyncpa [#allocation3], 0
    %13 = vsyncpa [#allocation4], 0
    %s14 = scalar_lea.sflag [#allocation4], 1
    %15 = vsyncpa %s14, 0
    loop: start=0, step=1, limit=10
    $region2: #{tpu_custom_call.1} parent=1 // loop_pre_header
      _
    $region3: #{tpu_custom_call.1} parent=1 // loop_header
      %s17 = sphi 0, %s21
      %p18 = scmp.ge.s32.totalorder %s17, 10
      %s24 = sphi 0, %s36
      %s25 = sphi 0, %s32
      %s26 = sphi 0, %s24
      %s27 = sphi 0, %s25
      %s28 = sphi 0, %s26
      %s29 = sphi 0, %s27
      %s39 = sphi 0, %s41
      %s42 = sphi 0, %s39
      %s43 = sphi 0, %s42
      %s59 = sphi 0, %s43
      %s63 = sphi 0, %s63
      %s65 = sphi 0, %s63
      %s66 = sphi 0, %s65
      %s80 = sphi 0, %s66
      %s84 = sphi 0, %s84
      %s86 = sphi 0, %s84
      %s87 = sphi 0, %s86
      %s101 = sphi 0, %s87
      %s105 = sphi 0, %s105
      %s107 = sphi 0, %s105
      %s108 = sphi 0, %s107
      %s122 = sphi 0, %s108
      %s126 = sphi 0, %s126
      %s128 = sphi 0, %s126
      %s129 = sphi 0, %s128
      %s143 = sphi 0, %s129
      %s147 = sphi 0, %s147
      %s149 = sphi 0, %s147
      %s150 = sphi 0, %s149
      %s164 = sphi 0, %s150
      %s168 = sphi 0, %s168
      %s170 = sphi 0, %s168
      %s171 = sphi 0, %s170
      %s185 = sphi 0, %s171
      %s193 = sphi 0, %s195
      %s196 = sphi 0, %s193
      %s197 = sphi 0, %s196
      %s213 = sphi 0, %s197
    $region4: #{tpu_custom_call.1} parent=1 // loop_header_branch
      %20 = sbr.rel (%p18) target = $region8
    $region5: #{tpu_custom_call.1} parent=1 // loop_body
      %s22 = ssub.s32 %s17, 1
      %s23 = ssub.s32 %s17, 2
      %s30 = sadd.s32 1, %s25
      %p31 = scmp.ge.s32.totalorder %s30, 4
      %s32 = scalar_select %p31, 0, %s30
      %s33 = sadd.s32 1, %s24
      %s34 = scalar_select %p31, %s33, %s24
      %p35 = scmp.ge.s32.totalorder %s34, 2
      %s36 = scalar_select %p35, 0, %s34
      %s37 = ssub.s32 %s24, %s36
      %p38 = scmp.eq.s32.totalorder %s37, 0
      %s40 = sadd.s32 %s39, 1
      %s41 = scalar_select %p38, %s39, %s40
      %p44 = pneg %p38
      %p45 = scmp.eq.s32.totalorder %s17, 7
      %p46 = por %p44, %p45
      %p47 = scmp.ne.s32.totalorder %s39, %s42
      %p48 = scmp.eq.s32.totalorder %s17, 0
      %p49 = por %p47, %p48
      %p50 = scmp.ne.s32.totalorder %s39, %s42
      %p51 = scmp.eq.s32.totalorder %s22, 7
      %p52 = por %p50, %p51
      %p53 = scmp.ne.s32.totalorder %s42, %s43
      %p54 = scmp.eq.s32.totalorder %s22, 0
      %p55 = por %p53, %p54
      %p56 = scmp.ne.s32.totalorder %s42, %s43
      %p57 = scmp.eq.s32.totalorder %s23, 7
      %p58 = por %p56, %p57
      %p60 = scmp.ne.s32.totalorder %s43, %s59
      %p61 = scmp.eq.s32.totalorder %s23, 0
      %p62 = por %p60, %p61
      %s64 = sadd.s32 %s63, 1
      %p67 = scmp.eq.s32.totalorder %s17, 7
      %p68 = scmp.ne.s32.totalorder %s63, %s65
      %p69 = scmp.eq.s32.totalorder %s17, 0
      %p70 = por %p68, %p69
      %p71 = scmp.ne.s32.totalorder %s63, %s65
      %p72 = scmp.eq.s32.totalorder %s22, 7
      %p73 = por %p71, %p72
      %p74 = scmp.ne.s32.totalorder %s65, %s66
      %p75 = scmp.eq.s32.totalorder %s22, 0
      %p76 = por %p74, %p75
      %p77 = scmp.ne.s32.totalorder %s65, %s66
      %p78 = scmp.eq.s32.totalorder %s23, 7
      %p79 = por %p77, %p78
      %p81 = scmp.ne.s32.totalorder %s66, %s80
      %p82 = scmp.eq.s32.totalorder %s23, 0
      %p83 = por %p81, %p82
      %s85 = sadd.s32 %s84, 1
      %p88 = scmp.eq.s32.totalorder %s17, 7
      %p89 = scmp.ne.s32.totalorder %s84, %s86
      %p90 = scmp.eq.s32.totalorder %s17, 0
      %p91 = por %p89, %p90
      %p92 = scmp.ne.s32.totalorder %s84, %s86
      %p93 = scmp.eq.s32.totalorder %s22, 7
      %p94 = por %p92, %p93
      %p95 = scmp.ne.s32.totalorder %s86, %s87
      %p96 = scmp.eq.s32.totalorder %s22, 0
      %p97 = por %p95, %p96
      %p98 = scmp.ne.s32.totalorder %s86, %s87
      %p99 = scmp.eq.s32.totalorder %s23, 7
      %p100 = por %p98, %p99
      %p102 = scmp.ne.s32.totalorder %s87, %s101
      %p103 = scmp.eq.s32.totalorder %s23, 0
      %p104 = por %p102, %p103
      %s106 = sadd.s32 %s105, 1
      %p109 = scmp.eq.s32.totalorder %s17, 7
      %p110 = scmp.ne.s32.totalorder %s105, %s107
      %p111 = scmp.eq.s32.totalorder %s17, 0
      %p112 = por %p110, %p111
      %p113 = scmp.ne.s32.totalorder %s105, %s107
      %p114 = scmp.eq.s32.totalorder %s22, 7
      %p115 = por %p113, %p114
      %p116 = scmp.ne.s32.totalorder %s107, %s108
      %p117 = scmp.eq.s32.totalorder %s22, 0
      %p118 = por %p116, %p117
      %p119 = scmp.ne.s32.totalorder %s107, %s108
      %p120 = scmp.eq.s32.totalorder %s23, 7
      %p121 = por %p119, %p120
      %p123 = scmp.ne.s32.totalorder %s108, %s122
      %p124 = scmp.eq.s32.totalorder %s23, 0
      %p125 = por %p123, %p124
      %s127 = sadd.s32 %s126, 1
      %p130 = scmp.eq.s32.totalorder %s17, 7
      %p131 = scmp.ne.s32.totalorder %s126, %s128
      %p132 = scmp.eq.s32.totalorder %s17, 0
      %p133 = por %p131, %p132
      %p134 = scmp.ne.s32.totalorder %s126, %s128
      %p135 = scmp.eq.s32.totalorder %s22, 7
      %p136 = por %p134, %p135
      %p137 = scmp.ne.s32.totalorder %s128, %s129
      %p138 = scmp.eq.s32.totalorder %s22, 0
      %p139 = por %p137, %p138
      %p140 = scmp.ne.s32.totalorder %s128, %s129
      %p141 = scmp.eq.s32.totalorder %s23, 7
      %p142 = por %p140, %p141
      %p144 = scmp.ne.s32.totalorder %s129, %s143
      %p145 = scmp.eq.s32.totalorder %s23, 0
      %p146 = por %p144, %p145
      %s148 = sadd.s32 %s147, 1
      %p151 = scmp.eq.s32.totalorder %s17, 7
      %p152 = scmp.ne.s32.totalorder %s147, %s149
      %p153 = scmp.eq.s32.totalorder %s17, 0
      %p154 = por %p152, %p153
      %p155 = scmp.ne.s32.totalorder %s147, %s149
      %p156 = scmp.eq.s32.totalorder %s22, 7
      %p157 = por %p155, %p156
      %p158 = scmp.ne.s32.totalorder %s149, %s150
      %p159 = scmp.eq.s32.totalorder %s22, 0
      %p160 = por %p158, %p159
      %p161 = scmp.ne.s32.totalorder %s149, %s150
      %p162 = scmp.eq.s32.totalorder %s23, 7
      %p163 = por %p161, %p162
      %p165 = scmp.ne.s32.totalorder %s150, %s164
      %p166 = scmp.eq.s32.totalorder %s23, 0
      %p167 = por %p165, %p166
      %s169 = sadd.s32 %s168, 1
      %p172 = scmp.eq.s32.totalorder %s17, 7
      %p173 = scmp.ne.s32.totalorder %s168, %s170
      %p174 = scmp.eq.s32.totalorder %s17, 0
      %p175 = por %p173, %p174
      %p176 = scmp.ne.s32.totalorder %s168, %s170
      %p177 = scmp.eq.s32.totalorder %s22, 7
      %p178 = por %p176, %p177
      %p179 = scmp.ne.s32.totalorder %s170, %s171
      %p180 = scmp.eq.s32.totalorder %s22, 0
      %p181 = por %p179, %p180
      %p182 = scmp.ne.s32.totalorder %s170, %s171
      %p183 = scmp.eq.s32.totalorder %s23, 7
      %p184 = por %p182, %p183
      %p186 = scmp.ne.s32.totalorder %s171, %s185
      %p187 = scmp.eq.s32.totalorder %s23, 0
      %p188 = por %p186, %p187
      %s189 = ssub.s32 %s24, %s36
      %s190 = ssub.s32 %s25, %s32
      %s191 = sor.u32 %s189, %s190
      %p192 = scmp.eq.s32.totalorder %s191, 0
      %s194 = sadd.s32 %s193, 1
      %s195 = scalar_select %p192, %s193, %s194
      %p198 = pneg %p192
      %p199 = scmp.eq.s32.totalorder %s17, 7
      %p200 = por %p198, %p199
      %p201 = scmp.ne.s32.totalorder %s193, %s196
      %p202 = scmp.eq.s32.totalorder %s17, 0
      %p203 = por %p201, %p202
      %p204 = scmp.ne.s32.totalorder %s193, %s196
      %p205 = scmp.eq.s32.totalorder %s22, 7
      %p206 = por %p204, %p205
      %p207 = scmp.ne.s32.totalorder %s196, %s197
      %p208 = scmp.eq.s32.totalorder %s22, 0
      %p209 = por %p207, %p208
      %p210 = scmp.ne.s32.totalorder %s196, %s197
      %p211 = scmp.eq.s32.totalorder %s23, 7
      %p212 = por %p210, %p211
      %p214 = scmp.ne.s32.totalorder %s197, %s213
      %p215 = scmp.eq.s32.totalorder %s23, 0
      %p216 = por %p214, %p215
      %p217 = scmp.le.s32.totalorder 1, %s17
      %p218 = scmp.lt.s32.totalorder %s17, 9
      %p219 = pnand %p217, %p218
      %p220 = pneg %p219
      // Predicated region
      $region9: #{tpu_custom_call.1} parent=5 // pred_check
        _
      $region10: #{tpu_custom_call.1} parent=5 // pred_check_branch
        %222 = sbr.rel (%p219) target = $region12
      $region11: #{tpu_custom_call.1} parent=5 // pred_region
        %s223 = ssub.s32 %s17, 1
        // Predicated region
        $region13: #{tpu_custom_call.1} parent=11 // pred_check
          %p224 = pneg %p76
        $region14: #{tpu_custom_call.1} parent=11 // pred_check_branch
          %226 = sbr.rel (%p224) target = $region16
        $region15: #{tpu_custom_call.1} parent=11 // pred_region
          %s228 = ssub.s32 25344, 25344
          %229 = vsyncadd [#allocation3], %s228
          %s230 = sshll.u32 [#allocation2], 4
          %s231 = int_to_ptr.vmem [resolvable:$true] %s230
          %236 = dma.hbm_to_vmem [thread:$0]  %s1, 25344, %s231, [#allocation3], 64, 64, 4
        $region16: #{tpu_custom_call.1} parent=11 // pred_fallthru
          _
        // Predicated region
        $region17: #{tpu_custom_call.1} parent=11 // pred_check
          %p237 = pneg %p97
        $region18: #{tpu_custom_call.1} parent=11 // pred_check_branch
          %239 = sbr.rel (%p237) target = $region20
        $region19: #{tpu_custom_call.1} parent=11 // pred_region
          _
        $region20: #{tpu_custom_call.1} parent=11 // pred_fallthru
          _
        // Predicated region
        $region21: #{tpu_custom_call.1} parent=11 // pred_check
          %p240 = pneg %p118
        $region22: #{tpu_custom_call.1} parent=11 // pred_check_branch
          %242 = sbr.rel (%p240) target = $region24
        $region23: #{tpu_custom_call.1} parent=11 // pred_region
          _
        $region24: #{tpu_custom_call.1} parent=11 // pred_fallthru
          _
        // Predicated region
        $region25: #{tpu_custom_call.1} parent=11 // pred_check
          %p243 = pneg %p139
        $region26: #{tpu_custom_call.1} parent=11 // pred_check_branch
          %245 = sbr.rel (%p243) target = $region28
        $region27: #{tpu_custom_call.1} parent=11 // pred_region
          _
        $region28: #{tpu_custom_call.1} parent=11 // pred_fallthru
          _
        // Predicated region
        $region29: #{tpu_custom_call.1} parent=11 // pred_check
          %p246 = pneg %p160
        $region30: #{tpu_custom_call.1} parent=11 // pred_check_branch
          %248 = sbr.rel (%p246) target = $region32
        $region31: #{tpu_custom_call.1} parent=11 // pred_region
          _
        $region32: #{tpu_custom_call.1} parent=11 // pred_fallthru
          _
        // Predicated region
        $region33: #{tpu_custom_call.1} parent=11 // pred_check
          %p249 = pneg %p181
        $region34: #{tpu_custom_call.1} parent=11 // pred_check_branch
          %251 = sbr.rel (%p249) target = $region36
        $region35: #{tpu_custom_call.1} parent=11 // pred_region
          _
        $region36: #{tpu_custom_call.1} parent=11 // pred_fallthru
          _
      $region12: #{tpu_custom_call.1} parent=5 // pred_fallthru
        _
      %p252 = scmp.lt.s32.totalorder %s17, 8
      // Predicated region
      $region37: #{tpu_custom_call.1} parent=5 // pred_check
        %p253 = pneg %p252
      $region38: #{tpu_custom_call.1} parent=5 // pred_check_branch
        %255 = sbr.rel (%p253) target = $region40
      $region39: #{tpu_custom_call.1} parent=5 // pred_region
        // Predicated region
        $region41: #{tpu_custom_call.1} parent=39 // pred_check
          %p256 = pneg %p49
        $region42: #{tpu_custom_call.1} parent=39 // pred_check_branch
          %258 = sbr.rel (%p256) target = $region44
        $region43: #{tpu_custom_call.1} parent=39 // pred_region
          %p259 = scmp.lt.s32.totalorder %s24, 1
          %s260 = scalar_select %p259, %s24, 1
          %s261 = smul.addr %s260, 70
          %s262 = smul.addr %s261, 4
          %s263 = scalar_lea.vmem %s0, %s262
        $region44: #{tpu_custom_call.1} parent=39 // pred_fallthru
          _
      $region40: #{tpu_custom_call.1} parent=5 // pred_fallthru
        _
      %p264 = scmp.le.s32.totalorder 1, %s17
      %p265 = scmp.lt.s32.totalorder %s17, 9
      %p266 = pnand %p264, %p265
      %p267 = pneg %p266
      // Predicated region
      $region45: #{tpu_custom_call.1} parent=5 // pred_check
        _
      $region46: #{tpu_custom_call.1} parent=5 // pred_check_branch
        %269 = sbr.rel (%p266) target = $region48
      $region47: #{tpu_custom_call.1} parent=5 // pred_region
        %s270 = ssub.s32 %s17, 1
        // Predicated region
        $region49: #{tpu_custom_call.1} parent=47 // pred_check
          %p271 = pneg %p76
        $region50: #{tpu_custom_call.1} parent=47 // pred_check_branch
          %273 = sbr.rel (%p271) target = $region52
        $region51: #{tpu_custom_call.1} parent=47 // pred_region
          %274 = dma.done [#allocation3], 25344
        $region52: #{tpu_custom_call.1} parent=47 // pred_fallthru
          _
        %p275 = scmp.lt.s32.totalorder %s26, 1
        %s276 = scalar_select %p275, %s26, 1
        %s277 = smul.addr %s276, 70
        %s278 = smul.addr %s277, 4
        %s279 = scalar_lea.vmem %s0, %s278
        %p280 = pneg %p55
        %p281 = pneg %p52
        %p282 = pneg %p76
        %p283 = pneg %p73
        %p284 = pneg %p97
        %p285 = pneg %p94
        %p286 = pneg %p118
        %p287 = pneg %p115
        %p288 = pneg %p139
        %p289 = pneg %p136
        %p290 = pneg %p160
        %p291 = pneg %p157
        %p292 = pneg %p181
        %p293 = pneg %p178
        %p294 = pneg %p209
        %p295 = pneg %p206
        %s296 = sand.u32 %s196, 1
        %s297 = scalar_lea.sflag [#allocation4], %s296
        %s298 = sand.u32 %s196, 1
        %s299 = smul.addr %s298, 24
        %s300 = scalar_lea.vmem [#allocation5], %s299
        %p301 = scmp.lt.s32.totalorder %s26, 1
        %s302 = scalar_select %p301, %s26, 1
        %s303 = smul.addr %s302, 70
        %s304 = smul.addr %s303, 4
        %s305 = scalar_lea.vmem %s0, %s304
        %s307 = smul.u32 %s27, 5
        %s308 = smul.addr %s307, 4
        %s309 = scalar_lea.vmem %s305, %s308
        %v310 = vld [vmem:[%s309] sm:$0xf]
        %v311 = vld [vmem:[%s309 + $0x4] sm:$0xf]
        %v312 = vld [vmem:[%s309 + $0x8] sm:$0xf]
        %v313 = vld [vmem:[#allocation2] sm:$0xf]
        %v314 = vld [vmem:[#allocation2 + $0x4] sm:$0xf]
        %v315 = vld [vmem:[#allocation2 + $0x8] sm:$0xf]
        %v316 = vld [vmem:[#allocation2 + $0xc] sm:$0xf]
        %v317 = vld [vmem:[%s309 + $0xc] sm:$0x1]
        %s318 = scalar_lea.vmem [#allocation2], 16
        %v319 = vld [vmem:[%s318] sm:$0xf]
        %v320 = vld [vmem:[%s318 + $0x4] sm:$0xf]
        %v321 = vld [vmem:[%s318 + $0x8] sm:$0xf]
        %v322 = vld [vmem:[%s318 + $0xc] sm:$0xf]
        %v327 = vunpack.c.l.b16 %v310
        %v328 = vunpack.c.l.b16 %v311
        %v329 = vunpack.c.l.b16 %v312
        %v330 = vunpack.c.l.b16 %v317
        %v331 = vpack.c.b16 %v328, %v327
        %v332 = vpack.c.b16 %v330, %v329
        %vm333 = vsmask.f32 7424
        %v335 = vshrl.u32 %v331, 16
        %v337 = vshll.u32 %v331, 16
        %v339 = vrot.slane %v337, 1
        %v340 = vor.u32 %v335, %v339
        %v342 = vshll.u32 %v332, 16
        %v344 = vrot.slane %v342, 1
        %v345 = vsel %vm333, %v340, %v344
        %v346 = vshrl.u32 %v332, 16
        %v348 = vor.u32 %v346, %v344
        %v353 = vunpack.c.l.b16 %v319
        %v354 = vunpack.c.l.b16 %v320
        %v355 = vunpack.c.l.b16 %v321
        %v356 = vunpack.c.l.b16 %v322
        %v357 = vpack.c.b16 %v354, %v353
        %v358 = vpack.c.b16 %v356, %v355
        %vm361 = vcmask 261120
        %v363 = vsel %vm361, %v345, 0
        %v366 = vsel %vm361, %v348, 0
        %368 = vmatprep.subr.bf16.mxu0 0
        %369 = vmatpush1.bf16.msra.mxu0 %v357
        %370 = vmatprep.subr.bf16.mxu0 0
        %371 = vmatpush1.bf16.msra.mxu0 %v358
        %372 = vmatprep.subr.bf16.mxu0 0
        %373 = vmatpush1.bf16.msra.mxu0 0
        %374 = vmatprep.subr.bf16.mxu0 0
        %375 = vmatpush1.bf16.msra.mxu0 0
        %376 = vmatprep.subr.bf16.mxu0 0
        %377 = vmatpush1.bf16.msra.mxu0 0
        %378 = vmatprep.subr.bf16.mxu0 0
        %379 = vmatpush1.bf16.msra.mxu0 0
        %380 = vmatprep.subr.bf16.mxu0 0
        %381 = vmatpush1.bf16.msra.mxu0 0
        %382 = vmatprep.subr.bf16.mxu0 0
        %383 = vmatpush1.bf16.msra.mxu0 0
        %384 = vmatprep.subr.bf16.mxu0 0
        %385 = vmatpush1.bf16.msra.mxu0 0
        %386 = vmatprep.subr.bf16.mxu0 0
        %387 = vmatpush1.bf16.msra.mxu0 0
        %388 = vmatprep.subr.bf16.mxu0 0
        %389 = vmatpush1.bf16.msra.mxu0 0
        %390 = vmatprep.subr.bf16.mxu0 0
        %391 = vmatpush1.bf16.msra.mxu0 0
        %392 = vmatprep.subr.bf16.mxu0 0
        %393 = vmatpush1.bf16.msra.mxu0 0
        %394 = vmatprep.subr.bf16.mxu0 0
        %395 = vmatpush1.bf16.msra.mxu0 0
        %396 = vmatprep.subr.bf16.mxu0 0
        %397 = vmatpush1.bf16.msra.mxu0 0
        %398 = vmatprep.subr.bf16.mxu0 0
        %399 = vmatpush1.bf16.msra.mxu0 0
        %400 = vmatprep.mubr.bf16.mxu0 0
        %401 = vmatmul.mubr.bf16.gmra.mrb[0].mxu0 %v363
        %v402 = vpop.f32.mrb[0].mxu0
        %v403 = vadd.f32 0.0, %v402
        %v404 = vpop.f32.mrb[0].mxu0
        %v405 = vpop.f32.mrb[0].mxu0
        %v406 = vadd.f32 0.0, %v405
        %v407 = vpop.f32.mrb[0].mxu0
        %408 = vmatprep.mubr.bf16.mxu0 0
        %409 = vmatmul.mubr.bf16.gmra.mrb[0].mxu0 %v366
        %v410 = vpop.f32.mrb[0].mxu0
        %v411 = vadd.f32 0.0, %v410
        %v412 = vpop.f32.mrb[0].mxu0
        %v413 = vpop.f32.mrb[0].mxu0
        %v414 = vpop.f32.mrb[0].mxu0
        %415 = vdwg.mxu0
        %v416 = vpack.c.b16 %v329, %v329
        %v421 = vunpack.c.l.b16 %v313
        %v422 = vunpack.c.l.b16 %v314
        %v423 = vunpack.c.l.b16 %v315
        %v424 = vunpack.c.l.b16 %v316
        %v425 = vpack.c.b16 %v422, %v421
        %v426 = vpack.c.b16 %v424, %v423
        %v429 = vsel %vm361, %v331, 0
        %v432 = vsel %vm361, %v416, 0
        %434 = vmatprep.subr.bf16.mxu0 0
        %435 = vmatpush1.bf16.msra.mxu0 %v425
        %436 = vmatprep.subr.bf16.mxu0 0
        %437 = vmatpush1.bf16.msra.mxu0 %v426
        %438 = vmatprep.subr.bf16.mxu0 0
        %439 = vmatpush1.bf16.msra.mxu0 0
        %440 = vmatprep.subr.bf16.mxu0 0
        %441 = vmatpush1.bf16.msra.mxu0 0
        %442 = vmatprep.subr.bf16.mxu0 0
        %443 = vmatpush1.bf16.msra.mxu0 0
        %444 = vmatprep.subr.bf16.mxu0 0
        %445 = vmatpush1.bf16.msra.mxu0 0
        %446 = vmatprep.subr.bf16.mxu0 0
        %447 = vmatpush1.bf16.msra.mxu0 0
        %448 = vmatprep.subr.bf16.mxu0 0
        %449 = vmatpush1.bf16.msra.mxu0 0
        %450 = vmatprep.subr.bf16.mxu0 0
        %451 = vmatpush1.bf16.msra.mxu0 0
        %452 = vmatprep.subr.bf16.mxu0 0
        %453 = vmatpush1.bf16.msra.mxu0 0
        %454 = vmatprep.subr.bf16.mxu0 0
        %455 = vmatpush1.bf16.msra.mxu0 0
        %456 = vmatprep.subr.bf16.mxu0 0
        %457 = vmatpush1.bf16.msra.mxu0 0
        %458 = vmatprep.subr.bf16.mxu0 0
        %459 = vmatpush1.bf16.msra.mxu0 0
        %460 = vmatprep.subr.bf16.mxu0 0
        %461 = vmatpush1.bf16.msra.mxu0 0
        %462 = vmatprep.subr.bf16.mxu0 0
        %463 = vmatpush1.bf16.msra.mxu0 0
        %464 = vmatprep.subr.bf16.mxu0 0
        %465 = vmatpush1.bf16.msra.mxu0 0
        %466 = vmatprep.mubr.bf16.mxu0 0
        %467 = vmatmul.mubr.bf16.gmra.mrb[0].mxu0 %v429
        %v468 = vpop.f32.mrb[0].mxu0
        %v469 = vadd.f32 %v403, %v468
        %v470 = vpop.f32.mrb[0].mxu0
        %v471 = vpop.f32.mrb[0].mxu0
        %v472 = vadd.f32 %v406, %v471
        %v473 = vpop.f32.mrb[0].mxu0
        %474 = vmatprep.mubr.bf16.mxu0 0
        %475 = vmatmul.mubr.bf16.gmra.mrb[0].mxu0 %v432
        %v476 = vpop.f32.mrb[0].mxu0
        %v477 = vadd.f32 %v411, %v476
        %v478 = vpop.f32.mrb[0].mxu0
        %v479 = vpop.f32.mrb[0].mxu0
        %v480 = vpop.f32.mrb[0].mxu0
        %481 = vdwg.mxu0
        %v482 = vld [vmem:[%s309] sm:$0xe]
        %s483 = scalar_lea.vmem [#allocation2], 32
        %v484 = vld [vmem:[%s483] sm:$0xf]
        %v485 = vld [vmem:[%s483 + $0x4] sm:$0xf]
        %v486 = vld [vmem:[%s483 + $0x8] sm:$0xf]
        %v487 = vld [vmem:[%s483 + $0xc] sm:$0xf]
        %v489 = vunpack.c.l.b16 %v482
        %v490 = vpack.c.b16 %v328, %v489
        %vm491 = vcmask 1046528
        %v492 = vrot.slane %v490, 1
        %v493 = vrot.slane %v332, 1
        %v494 = vsel %vm491, %v492, %v493
        %v499 = vunpack.c.l.b16 %v484
        %v500 = vunpack.c.l.b16 %v485
        %v501 = vunpack.c.l.b16 %v486
        %v502 = vunpack.c.l.b16 %v487
        %v503 = vpack.c.b16 %v500, %v499
        %v504 = vpack.c.b16 %v502, %v501
        %v508 = vsel %vm361, %v494, 0
        %v511 = vsel %vm361, %v493, 0
        %513 = vmatprep.subr.bf16.mxu0 0
        %514 = vmatpush1.bf16.msra.mxu0 %v503
        %515 = vmatprep.subr.bf16.mxu0 0
        %516 = vmatpush1.bf16.msra.mxu0 %v504
        %517 = vmatprep.subr.bf16.mxu0 0
        %518 = vmatpush1.bf16.msra.mxu0 0
        %519 = vmatprep.subr.bf16.mxu0 0
        %520 = vmatpush1.bf16.msra.mxu0 0
        %521 = vmatprep.subr.bf16.mxu0 0
        %522 = vmatpush1.bf16.msra.mxu0 0
        %523 = vmatprep.subr.bf16.mxu0 0
        %524 = vmatpush1.bf16.msra.mxu0 0
        %525 = vmatprep.subr.bf16.mxu0 0
        %526 = vmatpush1.bf16.msra.mxu0 0
        %527 = vmatprep.subr.bf16.mxu0 0
        %528 = vmatpush1.bf16.msra.mxu0 0
        %529 = vmatprep.subr.bf16.mxu0 0
        %530 = vmatpush1.bf16.msra.mxu0 0
        %531 = vmatprep.subr.bf16.mxu0 0
        %532 = vmatpush1.bf16.msra.mxu0 0
        %533 = vmatprep.subr.bf16.mxu0 0
        %534 = vmatpush1.bf16.msra.mxu0 0
        %535 = vmatprep.subr.bf16.mxu0 0
        %536 = vmatpush1.bf16.msra.mxu0 0
        %537 = vmatprep.subr.bf16.mxu0 0
        %538 = vmatpush1.bf16.msra.mxu0 0
        %539 = vmatprep.subr.bf16.mxu0 0
        %540 = vmatpush1.bf16.msra.mxu0 0
        %541 = vmatprep.subr.bf16.mxu0 0
        %542 = vmatpush1.bf16.msra.mxu0 0
        %543 = vmatprep.subr.bf16.mxu0 0
        %544 = vmatpush1.bf16.msra.mxu0 0
        %545 = vmatprep.mubr.bf16.mxu0 0
        %546 = vmatmul.mubr.bf16.gmra.mrb[0].mxu0 %v508
        %v547 = vpop.f32.mrb[0].mxu0
        %v548 = vadd.f32 0.0, %v547
        %v549 = vpop.f32.mrb[0].mxu0
        %v550 = vpop.f32.mrb[0].mxu0
        %v551 = vadd.f32 0.0, %v550
        %v552 = vpop.f32.mrb[0].mxu0
        %553 = vmatprep.mubr.bf16.mxu0 0
        %554 = vmatmul.mubr.bf16.gmra.mrb[0].mxu0 %v511
        %v555 = vpop.f32.mrb[0].mxu0
        %v556 = vadd.f32 0.0, %v555
        %v557 = vpop.f32.mrb[0].mxu0
        %v558 = vpop.f32.mrb[0].mxu0
        %v559 = vpop.f32.mrb[0].mxu0
        %560 = vdwg.mxu0
        %v561 = vadd.f32 %v469, %v548
        %v562 = vadd.f32 %v472, %v551
        %v563 = vadd.f32 %v477, %v556
        %v564 = vld [vmem:[%s309] sm:$0x8]
        %v565 = vld [vmem:[%s309 + $0xc] sm:$0x7]
        %s566 = scalar_lea.vmem [#allocation2], 48
        %v567 = vld [vmem:[%s566] sm:$0xf]
        %v568 = vld [vmem:[%s566 + $0x4] sm:$0xf]
        %v569 = vld [vmem:[%s566 + $0x8] sm:$0xf]
        %v570 = vld [vmem:[%s566 + $0xc] sm:$0xf]
        %v573 = vunpack.c.l.b16 %v564
        %v574 = vunpack.c.l.b16 %v565
        %v575 = vpack.c.b16 %v328, %v573
        %v576 = vpack.c.b16 %v574, %v329
        %vm577 = vcmask 1044480
        %v578 = vrot.slane %v575, 3
        %v579 = vrot.slane %v576, 3
        %v580 = vsel %vm577, %v578, %v579
        %v585 = vunpack.c.l.b16 %v567
        %v586 = vunpack.c.l.b16 %v568
        %v587 = vunpack.c.l.b16 %v569
        %v588 = vunpack.c.l.b16 %v570
        %v589 = vpack.c.b16 %v586, %v585
        %v590 = vpack.c.b16 %v588, %v587
        %v594 = vsel %vm361, %v580, 0
        %v597 = vsel %vm361, %v579, 0
        %599 = vmatprep.subr.bf16.mxu0 0
        %600 = vmatpush1.bf16.msra.mxu0 %v589
        %601 = vmatprep.subr.bf16.mxu0 0
        %602 = vmatpush1.bf16.msra.mxu0 %v590
        %603 = vmatprep.subr.bf16.mxu0 0
        %604 = vmatpush1.bf16.msra.mxu0 0
        %605 = vmatprep.subr.bf16.mxu0 0
        %606 = vmatpush1.bf16.msra.mxu0 0
        %607 = vmatprep.subr.bf16.mxu0 0
        %608 = vmatpush1.bf16.msra.mxu0 0
        %609 = vmatprep.subr.bf16.mxu0 0
        %610 = vmatpush1.bf16.msra.mxu0 0
        %611 = vmatprep.subr.bf16.mxu0 0
        %612 = vmatpush1.bf16.msra.mxu0 0
        %613 = vmatprep.subr.bf16.mxu0 0
        %614 = vmatpush1.bf16.msra.mxu0 0
        %615 = vmatprep.subr.bf16.mxu0 0
        %616 = vmatpush1.bf16.msra.mxu0 0
        %617 = vmatprep.subr.bf16.mxu0 0
        %618 = vmatpush1.bf16.msra.mxu0 0
        %619 = vmatprep.subr.bf16.mxu0 0
        %620 = vmatpush1.bf16.msra.mxu0 0
        %621 = vmatprep.subr.bf16.mxu0 0
        %622 = vmatpush1.bf16.msra.mxu0 0
        %623 = vmatprep.subr.bf16.mxu0 0
        %624 = vmatpush1.bf16.msra.mxu0 0
        %625 = vmatprep.subr.bf16.mxu0 0
        %626 = vmatpush1.bf16.msra.mxu0 0
        %627 = vmatprep.subr.bf16.mxu0 0
        %628 = vmatpush1.bf16.msra.mxu0 0
        %629 = vmatprep.subr.bf16.mxu0 0
        %630 = vmatpush1.bf16.msra.mxu0 0
        %631 = vmatprep.mubr.bf16.mxu0 0
        %632 = vmatmul.mubr.bf16.gmra.mrb[0].mxu0 %v594
        %v633 = vpop.f32.mrb[0].mxu0
        %v634 = vadd.f32 0.0, %v633
        %v635 = vpop.f32.mrb[0].mxu0
        %v636 = vpop.f32.mrb[0].mxu0
        %v637 = vadd.f32 0.0, %v636
        %v638 = vpop.f32.mrb[0].mxu0
        %639 = vmatprep.mubr.bf16.mxu0 0
        %640 = vmatmul.mubr.bf16.gmra.mrb[0].mxu0 %v597
        %v641 = vpop.f32.mrb[0].mxu0
        %v642 = vadd.f32 0.0, %v641
        %v643 = vpop.f32.mrb[0].mxu0
        %v644 = vpop.f32.mrb[0].mxu0
        %v645 = vpop.f32.mrb[0].mxu0
        %646 = vdwg.mxu0
        %v647 = vadd.f32 %v561, %v634
        %v648 = vadd.f32 %v562, %v637
        %v649 = vadd.f32 %v563, %v642
        %v650 = vld [vmem:[%s309 + $0xc] sm:$0xf]
        %s651 = scalar_lea.vmem [#allocation2], 64
        %v652 = vld [vmem:[%s651] sm:$0xf]
        %v653 = vld [vmem:[%s651 + $0x4] sm:$0xf]
        %v654 = vld [vmem:[%s651 + $0x8] sm:$0xf]
        %v655 = vld [vmem:[%s651 + $0xc] sm:$0xf]
        %v657 = vunpack.c.l.b16 %v650
        %v658 = vpack.c.b16 %v657, %v329
        %vm659 = vsmask.f32 4352
        %v661 = vshrl.u32 %v575, 16
        %v663 = vrot.slane %v661, 3
        %v664 = vshll.u32 %v575, 16
        %v666 = vrot.slane %v664, 4
        %v667 = vor.u32 %v663, %v666
        %v669 = vshrl.u32 %v658, 16
        %v671 = vrot.slane %v669, 3
        %v672 = vshll.u32 %v658, 16
        %v674 = vrot.slane %v672, 4
        %v675 = vor.u32 %v671, %v674
        %v676 = vsel %vm659, %v667, %v675
        %v681 = vunpack.c.l.b16 %v652
        %v682 = vunpack.c.l.b16 %v653
        %v683 = vunpack.c.l.b16 %v654
        %v684 = vunpack.c.l.b16 %v655
        %v685 = vpack.c.b16 %v682, %v681
        %v686 = vpack.c.b16 %v684, %v683
        %v690 = vsel %vm361, %v676, 0
        %v693 = vsel %vm361, %v675, 0
        %695 = vmatprep.subr.bf16.mxu0 0
        %696 = vmatpush1.bf16.msra.mxu0 %v685
        %697 = vmatprep.subr.bf16.mxu0 0
        %698 = vmatpush1.bf16.msra.mxu0 %v686
        %699 = vmatprep.subr.bf16.mxu0 0
        %700 = vmatpush1.bf16.msra.mxu0 0
        %701 = vmatprep.subr.bf16.mxu0 0
        %702 = vmatpush1.bf16.msra.mxu0 0
        %703 = vmatprep.subr.bf16.mxu0 0
        %704 = vmatpush1.bf16.msra.mxu0 0
        %705 = vmatprep.subr.bf16.mxu0 0
        %706 = vmatpush1.bf16.msra.mxu0 0
        %707 = vmatprep.subr.bf16.mxu0 0
        %708 = vmatpush1.bf16.msra.mxu0 0
        %709 = vmatprep.subr.bf16.mxu0 0
        %710 = vmatpush1.bf16.msra.mxu0 0
        %711 = vmatprep.subr.bf16.mxu0 0
        %712 = vmatpush1.bf16.msra.mxu0 0
        %713 = vmatprep.subr.bf16.mxu0 0
        %714 = vmatpush1.bf16.msra.mxu0 0
        %715 = vmatprep.subr.bf16.mxu0 0
        %716 = vmatpush1.bf16.msra.mxu0 0
        %717 = vmatprep.subr.bf16.mxu0 0
        %718 = vmatpush1.bf16.msra.mxu0 0
        %719 = vmatprep.subr.bf16.mxu0 0
        %720 = vmatpush1.bf16.msra.mxu0 0
        %721 = vmatprep.subr.bf16.mxu0 0
        %722 = vmatpush1.bf16.msra.mxu0 0
        %723 = vmatprep.subr.bf16.mxu0 0
        %724 = vmatpush1.bf16.msra.mxu0 0
        %725 = vmatprep.subr.bf16.mxu0 0
        %726 = vmatpush1.bf16.msra.mxu0 0
        %727 = vmatprep.mubr.bf16.mxu0 0
        %728 = vmatmul.mubr.bf16.gmra.mrb[0].mxu0 %v690
        %v729 = vpop.f32.mrb[0].mxu0
        %v730 = vadd.f32 0.0, %v729
        %v731 = vpop.f32.mrb[0].mxu0
        %v732 = vpop.f32.mrb[0].mxu0
        %v733 = vadd.f32 0.0, %v732
        %v734 = vpop.f32.mrb[0].mxu0
        %735 = vmatprep.mubr.bf16.mxu0 0
        %736 = vmatmul.mubr.bf16.gmra.mrb[0].mxu0 %v693
        %v737 = vpop.f32.mrb[0].mxu0
        %v738 = vadd.f32 0.0, %v737
        %v739 = vpop.f32.mrb[0].mxu0
        %v740 = vpop.f32.mrb[0].mxu0
        %v741 = vpop.f32.mrb[0].mxu0
        %742 = vdwg.mxu0
        %v743 = vadd.f32 %v647, %v730
        %v744 = vadd.f32 %v648, %v733
        %v745 = vadd.f32 %v649, %v738
        %s746 = scalar_lea.vmem [#allocation2], 80
        %v747 = vld [vmem:[%s746] sm:$0xf]
        %v748 = vld [vmem:[%s746 + $0x4] sm:$0xf]
        %v749 = vld [vmem:[%s746 + $0x8] sm:$0xf]
        %v750 = vld [vmem:[%s746 + $0xc] sm:$0xf]
        %v751 = vpack.c.b16 %v329, %v328
        %v752 = vpack.c.b16 %v657, %v657
        %v757 = vunpack.c.l.b16 %v747
        %v758 = vunpack.c.l.b16 %v748
        %v759 = vunpack.c.l.b16 %v749
        %v760 = vunpack.c.l.b16 %v750
        %v761 = vpack.c.b16 %v758, %v757
        %v762 = vpack.c.b16 %v760, %v759
        %v766 = vsel %vm361, %v751, 0
        %v769 = vsel %vm361, %v752, 0
        %771 = vmatprep.subr.bf16.mxu0 0
        %772 = vmatpush1.bf16.msra.mxu0 %v761
        %773 = vmatprep.subr.bf16.mxu0 0
        %774 = vmatpush1.bf16.msra.mxu0 %v762
        %775 = vmatprep.subr.bf16.mxu0 0
        %776 = vmatpush1.bf16.msra.mxu0 0
        %777 = vmatprep.subr.bf16.mxu0 0
        %778 = vmatpush1.bf16.msra.mxu0 0
        %779 = vmatprep.subr.bf16.mxu0 0
        %780 = vmatpush1.bf16.msra.mxu0 0
        %781 = vmatprep.subr.bf16.mxu0 0
        %782 = vmatpush1.bf16.msra.mxu0 0
        %783 = vmatprep.subr.bf16.mxu0 0
        %784 = vmatpush1.bf16.msra.mxu0 0
        %785 = vmatprep.subr.bf16.mxu0 0
        %786 = vmatpush1.bf16.msra.mxu0 0
        %787 = vmatprep.subr.bf16.mxu0 0
        %788 = vmatpush1.bf16.msra.mxu0 0
        %789 = vmatprep.subr.bf16.mxu0 0
        %790 = vmatpush1.bf16.msra.mxu0 0
        %791 = vmatprep.subr.bf16.mxu0 0
        %792 = vmatpush1.bf16.msra.mxu0 0
        %793 = vmatprep.subr.bf16.mxu0 0
        %794 = vmatpush1.bf16.msra.mxu0 0
        %795 = vmatprep.subr.bf16.mxu0 0
        %796 = vmatpush1.bf16.msra.mxu0 0
        %797 = vmatprep.subr.bf16.mxu0 0
        %798 = vmatpush1.bf16.msra.mxu0 0
        %799 = vmatprep.subr.bf16.mxu0 0
        %800 = vmatpush1.bf16.msra.mxu0 0
        %801 = vmatprep.subr.bf16.mxu0 0
        %802 = vmatpush1.bf16.msra.mxu0 0
        %803 = vmatprep.mubr.bf16.mxu0 0
        %804 = vmatmul.mubr.bf16.gmra.mrb[0].mxu0 %v766
        %v805 = vpop.f32.mrb[0].mxu0
        %v806 = vadd.f32 0.0, %v805
        %v807 = vpop.f32.mrb[0].mxu0
        %v808 = vpop.f32.mrb[0].mxu0
        %v809 = vadd.f32 0.0, %v808
        %v810 = vpop.f32.mrb[0].mxu0
        %811 = vmatprep.mubr.bf16.mxu0 0
        %812 = vmatmul.mubr.bf16.gmra.mrb[0].mxu0 %v769
        %v813 = vpop.f32.mrb[0].mxu0
        %v814 = vadd.f32 0.0, %v813
        %v815 = vpop.f32.mrb[0].mxu0
        %v816 = vpop.f32.mrb[0].mxu0
        %v817 = vpop.f32.mrb[0].mxu0
        %818 = vdwg.mxu0
        %v819 = vadd.f32 %v743, %v806
        %v820 = vadd.f32 %v744, %v809
        %v821 = vadd.f32 %v745, %v814
        %v822 = vld [vmem:[%s309 + $0x4] sm:$0xc]
        %v823 = vld [vmem:[%s309 + $0x8] sm:$0xf]
        %v824 = vld [vmem:[%s309 + $0xc] sm:$0xf]
        %v825 = vld [vmem:[%s309 + $0x10] sm:$0x3]
        %s826 = scalar_lea.vmem [#allocation2], 96
        %v827 = vld [vmem:[%s826] sm:$0xf]
        %v828 = vld [vmem:[%s826 + $0x4] sm:$0xf]
        %v829 = vld [vmem:[%s826 + $0x8] sm:$0xf]
        %v830 = vld [vmem:[%s826 + $0xc] sm:$0xf]
        %v835 = vunpack.c.l.b16 %v822
        %v836 = vunpack.c.l.b16 %v823
        %v837 = vunpack.c.l.b16 %v824
        %v838 = vunpack.c.l.b16 %v825
        %v839 = vpack.c.b16 %v836, %v835
        %v840 = vpack.c.b16 %v838, %v837
        %vm841 = vcmask 1045504
        %v842 = vrot.slane %v839, 2
        %v843 = vrot.slane %v840, 2
        %v844 = vsel %vm841, %v842, %v843
        %v849 = vunpack.c.l.b16 %v827
        %v850 = vunpack.c.l.b16 %v828
        %v851 = vunpack.c.l.b16 %v829
        %v852 = vunpack.c.l.b16 %v830
        %v853 = vpack.c.b16 %v850, %v849
        %v854 = vpack.c.b16 %v852, %v851
        %v858 = vsel %vm361, %v844, 0
        %v861 = vsel %vm361, %v843, 0
        %863 = vmatprep.subr.bf16.mxu0 0
        %864 = vmatpush1.bf16.msra.mxu0 %v853
        %865 = vmatprep.subr.bf16.mxu0 0
        %866 = vmatpush1.bf16.msra.mxu0 %v854
        %867 = vmatprep.subr.bf16.mxu0 0
        %868 = vmatpush1.bf16.msra.mxu0 0
        %869 = vmatprep.subr.bf16.mxu0 0
        %870 = vmatpush1.bf16.msra.mxu0 0
        %871 = vmatprep.subr.bf16.mxu0 0
        %872 = vmatpush1.bf16.msra.mxu0 0
        %873 = vmatprep.subr.bf16.mxu0 0
        %874 = vmatpush1.bf16.msra.mxu0 0
        %875 = vmatprep.subr.bf16.mxu0 0
        %876 = vmatpush1.bf16.msra.mxu0 0
        %877 = vmatprep.subr.bf16.mxu0 0
        %878 = vmatpush1.bf16.msra.mxu0 0
        %879 = vmatprep.subr.bf16.mxu0 0
        %880 = vmatpush1.bf16.msra.mxu0 0
        %881 = vmatprep.subr.bf16.mxu0 0
        %882 = vmatpush1.bf16.msra.mxu0 0
        %883 = vmatprep.subr.bf16.mxu0 0
        %884 = vmatpush1.bf16.msra.mxu0 0
        %885 = vmatprep.subr.bf16.mxu0 0
        %886 = vmatpush1.bf16.msra.mxu0 0
        %887 = vmatprep.subr.bf16.mxu0 0
        %888 = vmatpush1.bf16.msra.mxu0 0
        %889 = vmatprep.subr.bf16.mxu0 0
        %890 = vmatpush1.bf16.msra.mxu0 0
        %891 = vmatprep.subr.bf16.mxu0 0
        %892 = vmatpush1.bf16.msra.mxu0 0
        %893 = vmatprep.subr.bf16.mxu0 0
        %894 = vmatpush1.bf16.msra.mxu0 0
        %895 = vmatprep.mubr.bf16.mxu0 0
        %896 = vmatmul.mubr.bf16.gmra.mrb[0].mxu0 %v858
        %v897 = vpop.f32.mrb[0].mxu0
        %v898 = vadd.f32 0.0, %v897
        %v899 = vpop.f32.mrb[0].mxu0
        %v900 = vpop.f32.mrb[0].mxu0
        %v901 = vadd.f32 0.0, %v900
        %v902 = vpop.f32.mrb[0].mxu0
        %903 = vmatprep.mubr.bf16.mxu0 0
        %904 = vmatmul.mubr.bf16.gmra.mrb[0].mxu0 %v861
        %v905 = vpop.f32.mrb[0].mxu0
        %v906 = vadd.f32 0.0, %v905
        %v907 = vpop.f32.mrb[0].mxu0
        %v908 = vpop.f32.mrb[0].mxu0
        %v909 = vpop.f32.mrb[0].mxu0
        %910 = vdwg.mxu0
        %v911 = vadd.f32 %v819, %v898
        %v912 = vadd.f32 %v820, %v901
        %v913 = vadd.f32 %v821, %v906
        %v914 = vld [vmem:[%s309 + $0x10] sm:$0x7]
        %s915 = scalar_lea.vmem [#allocation2], 112
        %v916 = vld [vmem:[%s915] sm:$0xf]
        %v917 = vld [vmem:[%s915 + $0x4] sm:$0xf]
        %v918 = vld [vmem:[%s915 + $0x8] sm:$0xf]
        %v919 = vld [vmem:[%s915 + $0xc] sm:$0xf]
        %v921 = vunpack.c.l.b16 %v914
        %v922 = vpack.c.b16 %v921, %v837
        %vm923 = vsmask.f32 5376
        %v925 = vshrl.u32 %v839, 16
        %v927 = vrot.slane %v925, 2
        %v928 = vshll.u32 %v839, 16
        %v930 = vrot.slane %v928, 3
        %v931 = vor.u32 %v927, %v930
        %v933 = vshrl.u32 %v922, 16
        %v935 = vrot.slane %v933, 2
        %v936 = vshll.u32 %v922, 16
        %v938 = vrot.slane %v936, 3
        %v939 = vor.u32 %v935, %v938
        %v940 = vsel %vm923, %v931, %v939
        %v945 = vunpack.c.l.b16 %v916
        %v946 = vunpack.c.l.b16 %v917
        %v947 = vunpack.c.l.b16 %v918
        %v948 = vunpack.c.l.b16 %v919
        %v949 = vpack.c.b16 %v946, %v945
        %v950 = vpack.c.b16 %v948, %v947
        %v954 = vsel %vm361, %v940, 0
        %v957 = vsel %vm361, %v939, 0
        %959 = vmatprep.subr.bf16.mxu0 0
        %960 = vmatpush1.bf16.msra.mxu0 %v949
        %961 = vmatprep.subr.bf16.mxu0 0
        %962 = vmatpush1.bf16.msra.mxu0 %v950
        %963 = vmatprep.subr.bf16.mxu0 0
        %964 = vmatpush1.bf16.msra.mxu0 0
        %965 = vmatprep.subr.bf16.mxu0 0
        %966 = vmatpush1.bf16.msra.mxu0 0
        %967 = vmatprep.subr.bf16.mxu0 0
        %968 = vmatpush1.bf16.msra.mxu0 0
        %969 = vmatprep.subr.bf16.mxu0 0
        %970 = vmatpush1.bf16.msra.mxu0 0
        %971 = vmatprep.subr.bf16.mxu0 0
        %972 = vmatpush1.bf16.msra.mxu0 0
        %973 = vmatprep.subr.bf16.mxu0 0
        %974 = vmatpush1.bf16.msra.mxu0 0
        %975 = vmatprep.subr.bf16.mxu0 0
        %976 = vmatpush1.bf16.msra.mxu0 0
        %977 = vmatprep.subr.bf16.mxu0 0
        %978 = vmatpush1.bf16.msra.mxu0 0
        %979 = vmatprep.subr.bf16.mxu0 0
        %980 = vmatpush1.bf16.msra.mxu0 0
        %981 = vmatprep.subr.bf16.mxu0 0
        %982 = vmatpush1.bf16.msra.mxu0 0
        %983 = vmatprep.subr.bf16.mxu0 0
        %984 = vmatpush1.bf16.msra.mxu0 0
        %985 = vmatprep.subr.bf16.mxu0 0
        %986 = vmatpush1.bf16.msra.mxu0 0
        %987 = vmatprep.subr.bf16.mxu0 0
        %988 = vmatpush1.bf16.msra.mxu0 0
        %989 = vmatprep.subr.bf16.mxu0 0
        %990 = vmatpush1.bf16.msra.mxu0 0
        %991 = vmatprep.mubr.bf16.mxu0 0
        %992 = vmatmul.mubr.bf16.gmra.mrb[0].mxu0 %v954
        %v993 = vpop.f32.mrb[0].mxu0
        %v994 = vadd.f32 0.0, %v993
        %v995 = vpop.f32.mrb[0].mxu0
        %v996 = vpop.f32.mrb[0].mxu0
        %v997 = vadd.f32 0.0, %v996
        %v998 = vpop.f32.mrb[0].mxu0
        %999 = vmatprep.mubr.bf16.mxu0 0
        %1000 = vmatmul.mubr.bf16.gmra.mrb[0].mxu0 %v957
        %v1001 = vpop.f32.mrb[0].mxu0
        %v1002 = vadd.f32 0.0, %v1001
        %v1003 = vpop.f32.mrb[0].mxu0
        %v1004 = vpop.f32.mrb[0].mxu0
        %v1005 = vpop.f32.mrb[0].mxu0
        %1006 = vdwg.mxu0
        %v1007 = vadd.f32 %v911, %v994
        %v1008 = vadd.f32 %v912, %v997
        %v1009 = vadd.f32 %v913, %v1002
        %v1010 = vld [vmem:[%s309 + $0x4] sm:$0x8]
        %s1011 = scalar_lea.vmem [#allocation2], 128
        %v1012 = vld [vmem:[%s1011] sm:$0xf]
        %v1013 = vld [vmem:[%s1011 + $0x4] sm:$0xf]
        %v1014 = vld [vmem:[%s1011 + $0x8] sm:$0xf]
        %v1015 = vld [vmem:[%s1011 + $0xc] sm:$0xf]
        %v1017 = vunpack.c.l.b16 %v1010
        %v1018 = vpack.c.b16 %v836, %v1017
        %v1019 = vrot.slane %v1018, 3
        %v1020 = vrot.slane %v922, 3
        %v1021 = vsel %vm577, %v1019, %v1020
        %v1026 = vunpack.c.l.b16 %v1012
        %v1027 = vunpack.c.l.b16 %v1013
        %v1028 = vunpack.c.l.b16 %v1014
        %v1029 = vunpack.c.l.b16 %v1015
        %v1030 = vpack.c.b16 %v1027, %v1026
        %v1031 = vpack.c.b16 %v1029, %v1028
        %v1035 = vsel %vm361, %v1021, 0
        %v1038 = vsel %vm361, %v1020, 0
        %1040 = vmatprep.subr.bf16.mxu0 0
        %1041 = vmatpush1.bf16.msra.mxu0 %v1030
        %1042 = vmatprep.subr.bf16.mxu0 0
        %1043 = vmatpush1.bf16.msra.mxu0 %v1031
        %1044 = vmatprep.subr.bf16.mxu0 0
        %1045 = vmatpush1.bf16.msra.mxu0 0
        %1046 = vmatprep.subr.bf16.mxu0 0
        %1047 = vmatpush1.bf16.msra.mxu0 0
        %1048 = vmatprep.subr.bf16.mxu0 0
        %1049 = vmatpush1.bf16.msra.mxu0 0
        %1050 = vmatprep.subr.bf16.mxu0 0
        %1051 = vmatpush1.bf16.msra.mxu0 0
        %1052 = vmatprep.subr.bf16.mxu0 0
        %1053 = vmatpush1.bf16.msra.mxu0 0
        %1054 = vmatprep.subr.bf16.mxu0 0
        %1055 = vmatpush1.bf16.msra.mxu0 0
        %1056 = vmatprep.subr.bf16.mxu0 0
        %1057 = vmatpush1.bf16.msra.mxu0 0
        %1058 = vmatprep.subr.bf16.mxu0 0
        %1059 = vmatpush1.bf16.msra.mxu0 0
        %1060 = vmatprep.subr.bf16.mxu0 0
        %1061 = vmatpush1.bf16.msra.mxu0 0
        %1062 = vmatprep.subr.bf16.mxu0 0
        %1063 = vmatpush1.bf16.msra.mxu0 0
        %1064 = vmatprep.subr.bf16.mxu0 0
        %1065 = vmatpush1.bf16.msra.mxu0 0
        %1066 = vmatprep.subr.bf16.mxu0 0
        %1067 = vmatpush1.bf16.msra.mxu0 0
        %1068 = vmatprep.subr.bf16.mxu0 0
        %1069 = vmatpush1.bf16.msra.mxu0 0
        %1070 = vmatprep.subr.bf16.mxu0 0
        %1071 = vmatpush1.bf16.msra.mxu0 0
        %1072 = vmatprep.mubr.bf16.mxu0 0
        %1073 = vmatmul.mubr.bf16.gmra.mrb[0].mxu0 %v1035
        %v1074 = vpop.f32.mrb[0].mxu0
        %v1075 = vadd.f32 0.0, %v1074
        %v1076 = vpop.f32.mrb[0].mxu0
        %v1077 = vpop.f32.mrb[0].mxu0
        %v1078 = vadd.f32 0.0, %v1077
        %v1079 = vpop.f32.mrb[0].mxu0
        %1080 = vmatprep.mubr.bf16.mxu0 0
        %1081 = vmatmul.mubr.bf16.gmra.mrb[0].mxu0 %v1038
        %v1082 = vpop.f32.mrb[0].mxu0
        %v1083 = vadd.f32 0.0, %v1082
        %v1084 = vpop.f32.mrb[0].mxu0
        %v1085 = vpop.f32.mrb[0].mxu0
        %v1086 = vpop.f32.mrb[0].mxu0
        %1087 = vdwg.mxu0
        %v1088 = vadd.f32 %v1007, %v1075
        %v1089 = vadd.f32 %v1008, %v1078
        %v1090 = vadd.f32 %v1009, %v1083
        %s1091 = sadd.s32 %s27, 1
        %s1092 = smul.u32 %s1091, 5
        %s1093 = smul.addr %s1092, 4
        %s1094 = scalar_lea.vmem %s305, %s1093
        %v1095 = vld [vmem:[%s1094] sm:$0xf]
        %v1096 = vld [vmem:[%s1094 + $0x4] sm:$0xf]
        %v1097 = vld [vmem:[%s1094 + $0x8] sm:$0xf]
        %s1098 = scalar_lea.vmem [#allocation2], 144
        %v1099 = vld [vmem:[%s1098] sm:$0xf]
        %v1100 = vld [vmem:[%s1098 + $0x4] sm:$0xf]
        %v1101 = vld [vmem:[%s1098 + $0x8] sm:$0xf]
        %v1102 = vld [vmem:[%s1098 + $0xc] sm:$0xf]
        %v1106 = vunpack.c.l.b16 %v1095
        %v1107 = vunpack.c.l.b16 %v1096
        %v1108 = vunpack.c.l.b16 %v1097
        %v1109 = vpack.c.b16 %v1107, %v1106
        %v1110 = vpack.c.b16 %v1108, %v1108
        %v1115 = vunpack.c.l.b16 %v1099
        %v1116 = vunpack.c.l.b16 %v1100
        %v1117 = vunpack.c.l.b16 %v1101
        %v1118 = vunpack.c.l.b16 %v1102
        %v1119 = vpack.c.b16 %v1116, %v1115
        %v1120 = vpack.c.b16 %v1118, %v1117
        %v1124 = vsel %vm361, %v1109, 0
        %v1127 = vsel %vm361, %v1110, 0
        %1129 = vmatprep.subr.bf16.mxu0 0
        %1130 = vmatpush1.bf16.msra.mxu0 %v1119
        %1131 = vmatprep.subr.bf16.mxu0 0
        %1132 = vmatpush1.bf16.msra.mxu0 %v1120
        %1133 = vmatprep.subr.bf16.mxu0 0
        %1134 = vmatpush1.bf16.msra.mxu0 0
        %1135 = vmatprep.subr.bf16.mxu0 0
        %1136 = vmatpush1.bf16.msra.mxu0 0
        %1137 = vmatprep.subr.bf16.mxu0 0
        %1138 = vmatpush1.bf16.msra.mxu0 0
        %1139 = vmatprep.subr.bf16.mxu0 0
        %1140 = vmatpush1.bf16.msra.mxu0 0
        %1141 = vmatprep.subr.bf16.mxu0 0
        %1142 = vmatpush1.bf16.msra.mxu0 0
        %1143 = vmatprep.subr.bf16.mxu0 0
        %1144 = vmatpush1.bf16.msra.mxu0 0
        %1145 = vmatprep.subr.bf16.mxu0 0
        %1146 = vmatpush1.bf16.msra.mxu0 0
        %1147 = vmatprep.subr.bf16.mxu0 0
        %1148 = vmatpush1.bf16.msra.mxu0 0
        %1149 = vmatprep.subr.bf16.mxu0 0
        %1150 = vmatpush1.bf16.msra.mxu0 0
        %1151 = vmatprep.subr.bf16.mxu0 0
        %1152 = vmatpush1.bf16.msra.mxu0 0
        %1153 = vmatprep.subr.bf16.mxu0 0
        %1154 = vmatpush1.bf16.msra.mxu0 0
        %1155 = vmatprep.subr.bf16.mxu0 0
        %1156 = vmatpush1.bf16.msra.mxu0 0
        %1157 = vmatprep.subr.bf16.mxu0 0
        %1158 = vmatpush1.bf16.msra.mxu0 0
        %1159 = vmatprep.subr.bf16.mxu0 0
        %1160 = vmatpush1.bf16.msra.mxu0 0
        %1161 = vmatprep.mubr.bf16.mxu0 0
        %1162 = vmatmul.mubr.bf16.gmra.mrb[0].mxu0 %v1124
        %v1163 = vpop.f32.mrb[0].mxu0
        %v1164 = vadd.f32 0.0, %v1163
        %v1165 = vpop.f32.mrb[0].mxu0
        %v1166 = vpop.f32.mrb[0].mxu0
        %v1167 = vadd.f32 0.0, %v1166
        %v1168 = vpop.f32.mrb[0].mxu0
        %1169 = vmatprep.mubr.bf16.mxu0 0
        %1170 = vmatmul.mubr.bf16.gmra.mrb[0].mxu0 %v1127
        %v1171 = vpop.f32.mrb[0].mxu0
        %v1172 = vadd.f32 0.0, %v1171
        %v1173 = vpop.f32.mrb[0].mxu0
        %v1174 = vpop.f32.mrb[0].mxu0
        %v1175 = vpop.f32.mrb[0].mxu0
        %1176 = vdwg.mxu0
        %v1177 = vadd.f32 %v1088, %v1164
        %v1178 = vadd.f32 %v1089, %v1167
        %v1179 = vadd.f32 %v1090, %v1172
        %v1180 = vld [vmem:[%s1094] sm:$0xf]
        %v1181 = vld [vmem:[%s1094 + $0x4] sm:$0xf]
        %v1182 = vld [vmem:[%s1094 + $0x8] sm:$0xf]
        %v1183 = vld [vmem:[%s1094 + $0xc] sm:$0x1]
        %s1184 = scalar_lea.vmem [#allocation2], 160
        %v1185 = vld [vmem:[%s1184] sm:$0xf]
        %v1186 = vld [vmem:[%s1184 + $0x4] sm:$0xf]
        %v1187 = vld [vmem:[%s1184 + $0x8] sm:$0xf]
        %v1188 = vld [vmem:[%s1184 + $0xc] sm:$0xf]
        %v1193 = vunpack.c.l.b16 %v1180
        %v1194 = vunpack.c.l.b16 %v1181
        %v1195 = vunpack.c.l.b16 %v1182
        %v1196 = vunpack.c.l.b16 %v1183
        %v1197 = vpack.c.b16 %v1194, %v1193
        %v1198 = vpack.c.b16 %v1196, %v1195
        %v1200 = vshrl.u32 %v1197, 16
        %v1202 = vshll.u32 %v1197, 16
        %v1204 = vrot.slane %v1202, 1
        %v1205 = vor.u32 %v1200, %v1204
        %v1207 = vshll.u32 %v1198, 16
        %v1209 = vrot.slane %v1207, 1
        %v1210 = vsel %vm333, %v1205, %v1209
        %v1211 = vshrl.u32 %v1198, 16
        %v1213 = vor.u32 %v1211, %v1209
        %v1218 = vunpack.c.l.b16 %v1185
        %v1219 = vunpack.c.l.b16 %v1186
        %v1220 = vunpack.c.l.b16 %v1187
        %v1221 = vunpack.c.l.b16 %v1188
        %v1222 = vpack.c.b16 %v1219, %v1218
        %v1223 = vpack.c.b16 %v1221, %v1220
        %v1227 = vsel %vm361, %v1210, 0
        %v1230 = vsel %vm361, %v1213, 0
        %1232 = vmatprep.subr.bf16.mxu0 0
        %1233 = vmatpush1.bf16.msra.mxu0 %v1222
        %1234 = vmatprep.subr.bf16.mxu0 0
        %1235 = vmatpush1.bf16.msra.mxu0 %v1223
        %1236 = vmatprep.subr.bf16.mxu0 0
        %1237 = vmatpush1.bf16.msra.mxu0 0
        %1238 = vmatprep.subr.bf16.mxu0 0
        %1239 = vmatpush1.bf16.msra.mxu0 0
        %1240 = vmatprep.subr.bf16.mxu0 0
        %1241 = vmatpush1.bf16.msra.mxu0 0
        %1242 = vmatprep.subr.bf16.mxu0 0
        %1243 = vmatpush1.bf16.msra.mxu0 0
        %1244 = vmatprep.subr.bf16.mxu0 0
        %1245 = vmatpush1.bf16.msra.mxu0 0
        %1246 = vmatprep.subr.bf16.mxu0 0
        %1247 = vmatpush1.bf16.msra.mxu0 0
        %1248 = vmatprep.subr.bf16.mxu0 0
        %1249 = vmatpush1.bf16.msra.mxu0 0
        %1250 = vmatprep.subr.bf16.mxu0 0
        %1251 = vmatpush1.bf16.msra.mxu0 0
        %1252 = vmatprep.subr.bf16.mxu0 0
        %1253 = vmatpush1.bf16.msra.mxu0 0
        %1254 = vmatprep.subr.bf16.mxu0 0
        %1255 = vmatpush1.bf16.msra.mxu0 0
        %1256 = vmatprep.subr.bf16.mxu0 0
        %1257 = vmatpush1.bf16.msra.mxu0 0
        %1258 = vmatprep.subr.bf16.mxu0 0
        %1259 = vmatpush1.bf16.msra.mxu0 0
        %1260 = vmatprep.subr.bf16.mxu0 0
        %1261 = vmatpush1.bf16.msra.mxu0 0
        %1262 = vmatprep.subr.bf16.mxu0 0
        %1263 = vmatpush1.bf16.msra.mxu0 0
        %1264 = vmatprep.mubr.bf16.mxu0 0
        %1265 = vmatmul.mubr.bf16.gmra.mrb[0].mxu0 %v1227
        %v1266 = vpop.f32.mrb[0].mxu0
        %v1267 = vadd.f32 0.0, %v1266
        %v1268 = vpop.f32.mrb[0].mxu0
        %v1269 = vpop.f32.mrb[0].mxu0
        %v1270 = vadd.f32 0.0, %v1269
        %v1271 = vpop.f32.mrb[0].mxu0
        %1272 = vmatprep.mubr.bf16.mxu0 0
        %1273 = vmatmul.mubr.bf16.gmra.mrb[0].mxu0 %v1230
        %v1274 = vpop.f32.mrb[0].mxu0
        %v1275 = vadd.f32 0.0, %v1274
        %v1276 = vpop.f32.mrb[0].mxu0
        %v1277 = vpop.f32.mrb[0].mxu0
        %v1278 = vpop.f32.mrb[0].mxu0
        %1279 = vdwg.mxu0
        %v1280 = vadd.f32 %v1177, %v1267
        %v1281 = vadd.f32 %v1178, %v1270
        %v1282 = vadd.f32 %v1179, %v1275
        %v1283 = vld [vmem:[%s1094] sm:$0xe]
        %s1284 = scalar_lea.vmem [#allocation2], 176
        %v1285 = vld [vmem:[%s1284] sm:$0xf]
        %v1286 = vld [vmem:[%s1284 + $0x4] sm:$0xf]
        %v1287 = vld [vmem:[%s1284 + $0x8] sm:$0xf]
        %v1288 = vld [vmem:[%s1284 + $0xc] sm:$0xf]
        %v1290 = vunpack.c.l.b16 %v1283
        %v1291 = vpack.c.b16 %v1194, %v1290
        %v1292 = vrot.slane %v1291, 1
        %v1293 = vrot.slane %v1198, 1
        %v1294 = vsel %vm491, %v1292, %v1293
        %v1299 = vunpack.c.l.b16 %v1285
        %v1300 = vunpack.c.l.b16 %v1286
        %v1301 = vunpack.c.l.b16 %v1287
        %v1302 = vunpack.c.l.b16 %v1288
        %v1303 = vpack.c.b16 %v1300, %v1299
        %v1304 = vpack.c.b16 %v1302, %v1301
        %v1308 = vsel %vm361, %v1294, 0
        %v1311 = vsel %vm361, %v1293, 0
        %1313 = vmatprep.subr.bf16.mxu0 0
        %1314 = vmatpush1.bf16.msra.mxu0 %v1303
        %1315 = vmatprep.subr.bf16.mxu0 0
        %1316 = vmatpush1.bf16.msra.mxu0 %v1304
        %1317 = vmatprep.subr.bf16.mxu0 0
        %1318 = vmatpush1.bf16.msra.mxu0 0
        %1319 = vmatprep.subr.bf16.mxu0 0
        %1320 = vmatpush1.bf16.msra.mxu0 0
        %1321 = vmatprep.subr.bf16.mxu0 0
        %1322 = vmatpush1.bf16.msra.mxu0 0
        %1323 = vmatprep.subr.bf16.mxu0 0
        %1324 = vmatpush1.bf16.msra.mxu0 0
        %1325 = vmatprep.subr.bf16.mxu0 0
        %1326 = vmatpush1.bf16.msra.mxu0 0
        %1327 = vmatprep.subr.bf16.mxu0 0
        %1328 = vmatpush1.bf16.msra.mxu0 0
        %1329 = vmatprep.subr.bf16.mxu0 0
        %1330 = vmatpush1.bf16.msra.mxu0 0
        %1331 = vmatprep.subr.bf16.mxu0 0
        %1332 = vmatpush1.bf16.msra.mxu0 0
        %1333 = vmatprep.subr.bf16.mxu0 0
        %1334 = vmatpush1.bf16.msra.mxu0 0
        %1335 = vmatprep.subr.bf16.mxu0 0
        %1336 = vmatpush1.bf16.msra.mxu0 0
        %1337 = vmatprep.subr.bf16.mxu0 0
        %1338 = vmatpush1.bf16.msra.mxu0 0
        %1339 = vmatprep.subr.bf16.mxu0 0
        %1340 = vmatpush1.bf16.msra.mxu0 0
        %1341 = vmatprep.subr.bf16.mxu0 0
        %1342 = vmatpush1.bf16.msra.mxu0 0
        %1343 = vmatprep.subr.bf16.mxu0 0
        %1344 = vmatpush1.bf16.msra.mxu0 0
        %1345 = vmatprep.mubr.bf16.mxu0 0
        %1346 = vmatmul.mubr.bf16.gmra.mrb[0].mxu0 %v1308
        %v1347 = vpop.f32.mrb[0].mxu0
        %v1348 = vadd.f32 0.0, %v1347
        %v1349 = vpop.f32.mrb[0].mxu0
        %v1350 = vpop.f32.mrb[0].mxu0
        %v1351 = vadd.f32 0.0, %v1350
        %v1352 = vpop.f32.mrb[0].mxu0
        %1353 = vmatprep.mubr.bf16.mxu0 0
        %1354 = vmatmul.mubr.bf16.gmra.mrb[0].mxu0 %v1311
        %v1355 = vpop.f32.mrb[0].mxu0
        %v1356 = vadd.f32 0.0, %v1355
        %v1357 = vpop.f32.mrb[0].mxu0
        %v1358 = vpop.f32.mrb[0].mxu0
        %v1359 = vpop.f32.mrb[0].mxu0
        %1360 = vdwg.mxu0
        %v1361 = vadd.f32 %v1280, %v1348
        %v1362 = vadd.f32 %v1281, %v1351
        %v1363 = vadd.f32 %v1282, %v1356
        %v1364 = vld [vmem:[%s1094] sm:$0x8]
        %v1365 = vld [vmem:[%s1094 + $0xc] sm:$0x7]
        %s1366 = scalar_lea.vmem [#allocation2], 192
        %v1367 = vld [vmem:[%s1366] sm:$0xf]
        %v1368 = vld [vmem:[%s1366 + $0x4] sm:$0xf]
        %v1369 = vld [vmem:[%s1366 + $0x8] sm:$0xf]
        %v1370 = vld [vmem:[%s1366 + $0xc] sm:$0xf]
        %v1373 = vunpack.c.l.b16 %v1364
        %v1374 = vunpack.c.l.b16 %v1365
        %v1375 = vpack.c.b16 %v1194, %v1373
        %v1376 = vpack.c.b16 %v1374, %v1195
        %v1377 = vrot.slane %v1375, 3
        %v1378 = vrot.slane %v1376, 3
        %v1379 = vsel %vm577, %v1377, %v1378
        %v1384 = vunpack.c.l.b16 %v1367
        %v1385 = vunpack.c.l.b16 %v1368
        %v1386 = vunpack.c.l.b16 %v1369
        %v1387 = vunpack.c.l.b16 %v1370
        %v1388 = vpack.c.b16 %v1385, %v1384
        %v1389 = vpack.c.b16 %v1387, %v1386
        %v1393 = vsel %vm361, %v1379, 0
        %v1396 = vsel %vm361, %v1378, 0
        %1398 = vmatprep.subr.bf16.mxu0 0
        %1399 = vmatpush1.bf16.msra.mxu0 %v1388
        %1400 = vmatprep.subr.bf16.mxu0 0
        %1401 = vmatpush1.bf16.msra.mxu0 %v1389
        %1402 = vmatprep.subr.bf16.mxu0 0
        %1403 = vmatpush1.bf16.msra.mxu0 0
        %1404 = vmatprep.subr.bf16.mxu0 0
        %1405 = vmatpush1.bf16.msra.mxu0 0
        %1406 = vmatprep.subr.bf16.mxu0 0
        %1407 = vmatpush1.bf16.msra.mxu0 0
        %1408 = vmatprep.subr.bf16.mxu0 0
        %1409 = vmatpush1.bf16.msra.mxu0 0
        %1410 = vmatprep.subr.bf16.mxu0 0
        %1411 = vmatpush1.bf16.msra.mxu0 0
        %1412 = vmatprep.subr.bf16.mxu0 0
        %1413 = vmatpush1.bf16.msra.mxu0 0
        %1414 = vmatprep.subr.bf16.mxu0 0
        %1415 = vmatpush1.bf16.msra.mxu0 0
        %1416 = vmatprep.subr.bf16.mxu0 0
        %1417 = vmatpush1.bf16.msra.mxu0 0
        %1418 = vmatprep.subr.bf16.mxu0 0
        %1419 = vmatpush1.bf16.msra.mxu0 0
        %1420 = vmatprep.subr.bf16.mxu0 0
        %1421 = vmatpush1.bf16.msra.mxu0 0
        %1422 = vmatprep.subr.bf16.mxu0 0
        %1423 = vmatpush1.bf16.msra.mxu0 0
        %1424 = vmatprep.subr.bf16.mxu0 0
        %1425 = vmatpush1.bf16.msra.mxu0 0
        %1426 = vmatprep.subr.bf16.mxu0 0
        %1427 = vmatpush1.bf16.msra.mxu0 0
        %1428 = vmatprep.subr.bf16.mxu0 0
        %1429 = vmatpush1.bf16.msra.mxu0 0
        %1430 = vmatprep.mubr.bf16.mxu0 0
        %1431 = vmatmul.mubr.bf16.gmra.mrb[0].mxu0 %v1393
        %v1432 = vpop.f32.mrb[0].mxu0
        %v1433 = vadd.f32 0.0, %v1432
        %v1434 = vpop.f32.mrb[0].mxu0
        %v1435 = vpop.f32.mrb[0].mxu0
        %v1436 = vadd.f32 0.0, %v1435
        %v1437 = vpop.f32.mrb[0].mxu0
        %1438 = vmatprep.mubr.bf16.mxu0 0
        %1439 = vmatmul.mubr.bf16.gmra.mrb[0].mxu0 %v1396
        %v1440 = vpop.f32.mrb[0].mxu0
        %v1441 = vadd.f32 0.0, %v1440
        %v1442 = vpop.f32.mrb[0].mxu0
        %v1443 = vpop.f32.mrb[0].mxu0
        %v1444 = vpop.f32.mrb[0].mxu0
        %1445 = vdwg.mxu0
        %v1446 = vadd.f32 %v1361, %v1433
        %v1447 = vadd.f32 %v1362, %v1436
        %v1448 = vadd.f32 %v1363, %v1441
        %v1449 = vld [vmem:[%s1094 + $0xc] sm:$0xf]
        %s1450 = scalar_lea.vmem [#allocation2], 208
        %v1451 = vld [vmem:[%s1450] sm:$0xf]
        %v1452 = vld [vmem:[%s1450 + $0x4] sm:$0xf]
        %v1453 = vld [vmem:[%s1450 + $0x8] sm:$0xf]
        %v1454 = vld [vmem:[%s1450 + $0xc] sm:$0xf]
        %v1456 = vunpack.c.l.b16 %v1449
        %v1457 = vpack.c.b16 %v1456, %v1195
        %v1459 = vshrl.u32 %v1375, 16
        %v1461 = vrot.slane %v1459, 3
        %v1462 = vshll.u32 %v1375, 16
        %v1464 = vrot.slane %v1462, 4
        %v1465 = vor.u32 %v1461, %v1464
        %v1467 = vshrl.u32 %v1457, 16
        %v1469 = vrot.slane %v1467, 3
        %v1470 = vshll.u32 %v1457, 16
        %v1472 = vrot.slane %v1470, 4
        %v1473 = vor.u32 %v1469, %v1472
        %v1474 = vsel %vm659, %v1465, %v1473
        %v1479 = vunpack.c.l.b16 %v1451
        %v1480 = vunpack.c.l.b16 %v1452
        %v1481 = vunpack.c.l.b16 %v1453
        %v1482 = vunpack.c.l.b16 %v1454
        %v1483 = vpack.c.b16 %v1480, %v1479
        %v1484 = vpack.c.b16 %v1482, %v1481
        %v1488 = vsel %vm361, %v1474, 0
        %v1491 = vsel %vm361, %v1473, 0
        %1493 = vmatprep.subr.bf16.mxu0 0
        %1494 = vmatpush1.bf16.msra.mxu0 %v1483
        %1495 = vmatprep.subr.bf16.mxu0 0
        %1496 = vmatpush1.bf16.msra.mxu0 %v1484
        %1497 = vmatprep.subr.bf16.mxu0 0
        %1498 = vmatpush1.bf16.msra.mxu0 0
        %1499 = vmatprep.subr.bf16.mxu0 0
        %1500 = vmatpush1.bf16.msra.mxu0 0
        %1501 = vmatprep.subr.bf16.mxu0 0
        %1502 = vmatpush1.bf16.msra.mxu0 0
        %1503 = vmatprep.subr.bf16.mxu0 0
        %1504 = vmatpush1.bf16.msra.mxu0 0
        %1505 = vmatprep.subr.bf16.mxu0 0
        %1506 = vmatpush1.bf16.msra.mxu0 0
        %1507 = vmatprep.subr.bf16.mxu0 0
        %1508 = vmatpush1.bf16.msra.mxu0 0
        %1509 = vmatprep.subr.bf16.mxu0 0
        %1510 = vmatpush1.bf16.msra.mxu0 0
        %1511 = vmatprep.subr.bf16.mxu0 0
        %1512 = vmatpush1.bf16.msra.mxu0 0
        %1513 = vmatprep.subr.bf16.mxu0 0
        %1514 = vmatpush1.bf16.msra.mxu0 0
        %1515 = vmatprep.subr.bf16.mxu0 0
        %1516 = vmatpush1.bf16.msra.mxu0 0
        %1517 = vmatprep.subr.bf16.mxu0 0
        %1518 = vmatpush1.bf16.msra.mxu0 0
        %1519 = vmatprep.subr.bf16.mxu0 0
        %1520 = vmatpush1.bf16.msra.mxu0 0
        %1521 = vmatprep.subr.bf16.mxu0 0
        %1522 = vmatpush1.bf16.msra.mxu0 0
        %1523 = vmatprep.subr.bf16.mxu0 0
        %1524 = vmatpush1.bf16.msra.mxu0 0
        %1525 = vmatprep.mubr.bf16.mxu0 0
        %1526 = vmatmul.mubr.bf16.gmra.mrb[0].mxu0 %v1488
        %v1527 = vpop.f32.mrb[0].mxu0
        %v1528 = vadd.f32 0.0, %v1527
        %v1529 = vpop.f32.mrb[0].mxu0
        %v1530 = vpop.f32.mrb[0].mxu0
        %v1531 = vadd.f32 0.0, %v1530
        %v1532 = vpop.f32.mrb[0].mxu0
        %1533 = vmatprep.mubr.bf16.mxu0 0
        %1534 = vmatmul.mubr.bf16.gmra.mrb[0].mxu0 %v1491
        %v1535 = vpop.f32.mrb[0].mxu0
        %v1536 = vadd.f32 0.0, %v1535
        %v1537 = vpop.f32.mrb[0].mxu0
        %v1538 = vpop.f32.mrb[0].mxu0
        %v1539 = vpop.f32.mrb[0].mxu0
        %1540 = vdwg.mxu0
        %v1541 = vadd.f32 %v1446, %v1528
        %v1542 = vadd.f32 %v1447, %v1531
        %v1543 = vadd.f32 %v1448, %v1536
        %s1544 = scalar_lea.vmem [#allocation2], 224
        %v1545 = vld [vmem:[%s1544] sm:$0xf]
        %v1546 = vld [vmem:[%s1544 + $0x4] sm:$0xf]
        %v1547 = vld [vmem:[%s1544 + $0x8] sm:$0xf]
        %v1548 = vld [vmem:[%s1544 + $0xc] sm:$0xf]
        %v1549 = vpack.c.b16 %v1195, %v1194
        %v1550 = vpack.c.b16 %v1456, %v1456
        %v1555 = vunpack.c.l.b16 %v1545
        %v1556 = vunpack.c.l.b16 %v1546
        %v1557 = vunpack.c.l.b16 %v1547
        %v1558 = vunpack.c.l.b16 %v1548
        %v1559 = vpack.c.b16 %v1556, %v1555
        %v1560 = vpack.c.b16 %v1558, %v1557
        %v1564 = vsel %vm361, %v1549, 0
        %v1567 = vsel %vm361, %v1550, 0
        %1569 = vmatprep.subr.bf16.mxu0 0
        %1570 = vmatpush1.bf16.msra.mxu0 %v1559
        %1571 = vmatprep.subr.bf16.mxu0 0
        %1572 = vmatpush1.bf16.msra.mxu0 %v1560
        %1573 = vmatprep.subr.bf16.mxu0 0
        %1574 = vmatpush1.bf16.msra.mxu0 0
        %1575 = vmatprep.subr.bf16.mxu0 0
        %1576 = vmatpush1.bf16.msra.mxu0 0
        %1577 = vmatprep.subr.bf16.mxu0 0
        %1578 = vmatpush1.bf16.msra.mxu0 0
        %1579 = vmatprep.subr.bf16.mxu0 0
        %1580 = vmatpush1.bf16.msra.mxu0 0
        %1581 = vmatprep.subr.bf16.mxu0 0
        %1582 = vmatpush1.bf16.msra.mxu0 0
        %1583 = vmatprep.subr.bf16.mxu0 0
        %1584 = vmatpush1.bf16.msra.mxu0 0
        %1585 = vmatprep.subr.bf16.mxu0 0
        %1586 = vmatpush1.bf16.msra.mxu0 0
        %1587 = vmatprep.subr.bf16.mxu0 0
        %1588 = vmatpush1.bf16.msra.mxu0 0
        %1589 = vmatprep.subr.bf16.mxu0 0
        %1590 = vmatpush1.bf16.msra.mxu0 0
        %1591 = vmatprep.subr.bf16.mxu0 0
        %1592 = vmatpush1.bf16.msra.mxu0 0
        %1593 = vmatprep.subr.bf16.mxu0 0
        %1594 = vmatpush1.bf16.msra.mxu0 0
        %1595 = vmatprep.subr.bf16.mxu0 0
        %1596 = vmatpush1.bf16.msra.mxu0 0
        %1597 = vmatprep.subr.bf16.mxu0 0
        %1598 = vmatpush1.bf16.msra.mxu0 0
        %1599 = vmatprep.subr.bf16.mxu0 0
        %1600 = vmatpush1.bf16.msra.mxu0 0
        %1601 = vmatprep.mubr.bf16.mxu0 0
        %1602 = vmatmul.mubr.bf16.gmra.mrb[0].mxu0 %v1564
        %v1603 = vpop.f32.mrb[0].mxu0
        %v1604 = vadd.f32 0.0, %v1603
        %v1605 = vpop.f32.mrb[0].mxu0
        %v1606 = vpop.f32.mrb[0].mxu0
        %v1607 = vadd.f32 0.0, %v1606
        %v1608 = vpop.f32.mrb[0].mxu0
        %1609 = vmatprep.mubr.bf16.mxu0 0
        %1610 = vmatmul.mubr.bf16.gmra.mrb[0].mxu0 %v1567
        %v1611 = vpop.f32.mrb[0].mxu0
        %v1612 = vadd.f32 0.0, %v1611
        %v1613 = vpop.f32.mrb[0].mxu0
        %v1614 = vpop.f32.mrb[0].mxu0
        %v1615 = vpop.f32.mrb[0].mxu0
        %1616 = vdwg.mxu0
        %v1617 = vadd.f32 %v1541, %v1604
        %v1618 = vadd.f32 %v1542, %v1607
        %v1619 = vadd.f32 %v1543, %v1612
        %v1620 = vld [vmem:[%s1094 + $0x4] sm:$0xc]
        %v1621 = vld [vmem:[%s1094 + $0x8] sm:$0xf]
        %v1622 = vld [vmem:[%s1094 + $0xc] sm:$0xf]
        %v1623 = vld [vmem:[%s1094 + $0x10] sm:$0x3]
        %s1624 = scalar_lea.vmem [#allocation2], 240
        %v1625 = vld [vmem:[%s1624] sm:$0xf]
        %v1626 = vld [vmem:[%s1624 + $0x4] sm:$0xf]
        %v1627 = vld [vmem:[%s1624 + $0x8] sm:$0xf]
        %v1628 = vld [vmem:[%s1624 + $0xc] sm:$0xf]
        %v1633 = vunpack.c.l.b16 %v1620
        %v1634 = vunpack.c.l.b16 %v1621
        %v1635 = vunpack.c.l.b16 %v1622
        %v1636 = vunpack.c.l.b16 %v1623
        %v1637 = vpack.c.b16 %v1634, %v1633
        %v1638 = vpack.c.b16 %v1636, %v1635
        %v1639 = vrot.slane %v1637, 2
        %v1640 = vrot.slane %v1638, 2
        %v1641 = vsel %vm841, %v1639, %v1640
        %v1646 = vunpack.c.l.b16 %v1625
        %v1647 = vunpack.c.l.b16 %v1626
        %v1648 = vunpack.c.l.b16 %v1627
        %v1649 = vunpack.c.l.b16 %v1628
        %v1650 = vpack.c.b16 %v1647, %v1646
        %v1651 = vpack.c.b16 %v1649, %v1648
        %v1655 = vsel %vm361, %v1641, 0
        %v1658 = vsel %vm361, %v1640, 0
        %1660 = vmatprep.subr.bf16.mxu0 0
        %1661 = vmatpush1.bf16.msra.mxu0 %v1650
        %1662 = vmatprep.subr.bf16.mxu0 0
        %1663 = vmatpush1.bf16.msra.mxu0 %v1651
        %1664 = vmatprep.subr.bf16.mxu0 0
        %1665 = vmatpush1.bf16.msra.mxu0 0
        %1666 = vmatprep.subr.bf16.mxu0 0
        %1667 = vmatpush1.bf16.msra.mxu0 0
        %1668 = vmatprep.subr.bf16.mxu0 0
        %1669 = vmatpush1.bf16.msra.mxu0 0
        %1670 = vmatprep.subr.bf16.mxu0 0
        %1671 = vmatpush1.bf16.msra.mxu0 0
        %1672 = vmatprep.subr.bf16.mxu0 0
        %1673 = vmatpush1.bf16.msra.mxu0 0
        %1674 = vmatprep.subr.bf16.mxu0 0
        %1675 = vmatpush1.bf16.msra.mxu0 0
        %1676 = vmatprep.subr.bf16.mxu0 0
        %1677 = vmatpush1.bf16.msra.mxu0 0
        %1678 = vmatprep.subr.bf16.mxu0 0
        %1679 = vmatpush1.bf16.msra.mxu0 0
        %1680 = vmatprep.subr.bf16.mxu0 0
        %1681 = vmatpush1.bf16.msra.mxu0 0
        %1682 = vmatprep.subr.bf16.mxu0 0
        %1683 = vmatpush1.bf16.msra.mxu0 0
        %1684 = vmatprep.subr.bf16.mxu0 0
        %1685 = vmatpush1.bf16.msra.mxu0 0
        %1686 = vmatprep.subr.bf16.mxu0 0
        %1687 = vmatpush1.bf16.msra.mxu0 0
        %1688 = vmatprep.subr.bf16.mxu0 0
        %1689 = vmatpush1.bf16.msra.mxu0 0
        %1690 = vmatprep.subr.bf16.mxu0 0
        %1691 = vmatpush1.bf16.msra.mxu0 0
        %1692 = vmatprep.mubr.bf16.mxu0 0
        %1693 = vmatmul.mubr.bf16.gmra.mrb[0].mxu0 %v1655
        %v1694 = vpop.f32.mrb[0].mxu0
        %v1695 = vadd.f32 0.0, %v1694
        %v1696 = vpop.f32.mrb[0].mxu0
        %v1697 = vpop.f32.mrb[0].mxu0
        %v1698 = vadd.f32 0.0, %v1697
        %v1699 = vpop.f32.mrb[0].mxu0
        %1700 = vmatprep.mubr.bf16.mxu0 0
        %1701 = vmatmul.mubr.bf16.gmra.mrb[0].mxu0 %v1658
        %v1702 = vpop.f32.mrb[0].mxu0
        %v1703 = vadd.f32 0.0, %v1702
        %v1704 = vpop.f32.mrb[0].mxu0
        %v1705 = vpop.f32.mrb[0].mxu0
        %v1706 = vpop.f32.mrb[0].mxu0
        %1707 = vdwg.mxu0
        %v1708 = vadd.f32 %v1617, %v1695
        %v1709 = vadd.f32 %v1618, %v1698
        %v1710 = vadd.f32 %v1619, %v1703
        %v1711 = vld [vmem:[%s1094 + $0x10] sm:$0x7]
        %s1712 = scalar_lea.vmem [#allocation2], 256
        %v1713 = vld [vmem:[%s1712] sm:$0xf]
        %v1714 = vld [vmem:[%s1712 + $0x4] sm:$0xf]
        %v1715 = vld [vmem:[%s1712 + $0x8] sm:$0xf]
        %v1716 = vld [vmem:[%s1712 + $0xc] sm:$0xf]
        %v1718 = vunpack.c.l.b16 %v1711
        %v1719 = vpack.c.b16 %v1718, %v1635
        %v1721 = vshrl.u32 %v1637, 16
        %v1723 = vrot.slane %v1721, 2
        %v1724 = vshll.u32 %v1637, 16
        %v1726 = vrot.slane %v1724, 3
        %v1727 = vor.u32 %v1723, %v1726
        %v1729 = vshrl.u32 %v1719, 16
        %v1731 = vrot.slane %v1729, 2
        %v1732 = vshll.u32 %v1719, 16
        %v1734 = vrot.slane %v1732, 3
        %v1735 = vor.u32 %v1731, %v1734
        %v1736 = vsel %vm923, %v1727, %v1735
        %v1741 = vunpack.c.l.b16 %v1713
        %v1742 = vunpack.c.l.b16 %v1714
        %v1743 = vunpack.c.l.b16 %v1715
        %v1744 = vunpack.c.l.b16 %v1716
        %v1745 = vpack.c.b16 %v1742, %v1741
        %v1746 = vpack.c.b16 %v1744, %v1743
        %v1750 = vsel %vm361, %v1736, 0
        %v1753 = vsel %vm361, %v1735, 0
        %1755 = vmatprep.subr.bf16.mxu0 0
        %1756 = vmatpush1.bf16.msra.mxu0 %v1745
        %1757 = vmatprep.subr.bf16.mxu0 0
        %1758 = vmatpush1.bf16.msra.mxu0 %v1746
        %1759 = vmatprep.subr.bf16.mxu0 0
        %1760 = vmatpush1.bf16.msra.mxu0 0
        %1761 = vmatprep.subr.bf16.mxu0 0
        %1762 = vmatpush1.bf16.msra.mxu0 0
        %1763 = vmatprep.subr.bf16.mxu0 0
        %1764 = vmatpush1.bf16.msra.mxu0 0
        %1765 = vmatprep.subr.bf16.mxu0 0
        %1766 = vmatpush1.bf16.msra.mxu0 0
        %1767 = vmatprep.subr.bf16.mxu0 0
        %1768 = vmatpush1.bf16.msra.mxu0 0
        %1769 = vmatprep.subr.bf16.mxu0 0
        %1770 = vmatpush1.bf16.msra.mxu0 0
        %1771 = vmatprep.subr.bf16.mxu0 0
        %1772 = vmatpush1.bf16.msra.mxu0 0
        %1773 = vmatprep.subr.bf16.mxu0 0
        %1774 = vmatpush1.bf16.msra.mxu0 0
        %1775 = vmatprep.subr.bf16.mxu0 0
        %1776 = vmatpush1.bf16.msra.mxu0 0
        %1777 = vmatprep.subr.bf16.mxu0 0
        %1778 = vmatpush1.bf16.msra.mxu0 0
        %1779 = vmatprep.subr.bf16.mxu0 0
        %1780 = vmatpush1.bf16.msra.mxu0 0
        %1781 = vmatprep.subr.bf16.mxu0 0
        %1782 = vmatpush1.bf16.msra.mxu0 0
        %1783 = vmatprep.subr.bf16.mxu0 0
        %1784 = vmatpush1.bf16.msra.mxu0 0
        %1785 = vmatprep.subr.bf16.mxu0 0
        %1786 = vmatpush1.bf16.msra.mxu0 0
        %1787 = vmatprep.mubr.bf16.mxu0 0
        %1788 = vmatmul.mubr.bf16.gmra.mrb[0].mxu0 %v1750
        %v1789 = vpop.f32.mrb[0].mxu0
        %v1790 = vadd.f32 0.0, %v1789
        %v1791 = vpop.f32.mrb[0].mxu0
        %v1792 = vpop.f32.mrb[0].mxu0
        %v1793 = vadd.f32 0.0, %v1792
        %v1794 = vpop.f32.mrb[0].mxu0
        %1795 = vmatprep.mubr.bf16.mxu0 0
        %1796 = vmatmul.mubr.bf16.gmra.mrb[0].mxu0 %v1753
        %v1797 = vpop.f32.mrb[0].mxu0
        %v1798 = vadd.f32 0.0, %v1797
        %v1799 = vpop.f32.mrb[0].mxu0
        %v1800 = vpop.f32.mrb[0].mxu0
        %v1801 = vpop.f32.mrb[0].mxu0
        %1802 = vdwg.mxu0
        %v1803 = vadd.f32 %v1708, %v1790
        %v1804 = vadd.f32 %v1709, %v1793
        %v1805 = vadd.f32 %v1710, %v1798
        %v1806 = vld [vmem:[%s1094 + $0x4] sm:$0x8]
        %s1807 = scalar_lea.vmem [#allocation2], 272
        %v1808 = vld [vmem:[%s1807] sm:$0xf]
        %v1809 = vld [vmem:[%s1807 + $0x4] sm:$0xf]
        %v1810 = vld [vmem:[%s1807 + $0x8] sm:$0xf]
        %v1811 = vld [vmem:[%s1807 + $0xc] sm:$0xf]
        %v1813 = vunpack.c.l.b16 %v1806
        %v1814 = vpack.c.b16 %v1634, %v1813
        %v1815 = vrot.slane %v1814, 3
        %v1816 = vrot.slane %v1719, 3
        %v1817 = vsel %vm577, %v1815, %v1816
        %v1822 = vunpack.c.l.b16 %v1808
        %v1823 = vunpack.c.l.b16 %v1809
        %v1824 = vunpack.c.l.b16 %v1810
        %v1825 = vunpack.c.l.b16 %v1811
        %v1826 = vpack.c.b16 %v1823, %v1822
        %v1827 = vpack.c.b16 %v1825, %v1824
        %v1831 = vsel %vm361, %v1817, 0
        %v1834 = vsel %vm361, %v1816, 0
        %1836 = vmatprep.subr.bf16.mxu0 0
        %1837 = vmatpush1.bf16.msra.mxu0 %v1826
        %1838 = vmatprep.subr.bf16.mxu0 0
        %1839 = vmatpush1.bf16.msra.mxu0 %v1827
        %1840 = vmatprep.subr.bf16.mxu0 0
        %1841 = vmatpush1.bf16.msra.mxu0 0
        %1842 = vmatprep.subr.bf16.mxu0 0
        %1843 = vmatpush1.bf16.msra.mxu0 0
        %1844 = vmatprep.subr.bf16.mxu0 0
        %1845 = vmatpush1.bf16.msra.mxu0 0
        %1846 = vmatprep.subr.bf16.mxu0 0
        %1847 = vmatpush1.bf16.msra.mxu0 0
        %1848 = vmatprep.subr.bf16.mxu0 0
        %1849 = vmatpush1.bf16.msra.mxu0 0
        %1850 = vmatprep.subr.bf16.mxu0 0
        %1851 = vmatpush1.bf16.msra.mxu0 0
        %1852 = vmatprep.subr.bf16.mxu0 0
        %1853 = vmatpush1.bf16.msra.mxu0 0
        %1854 = vmatprep.subr.bf16.mxu0 0
        %1855 = vmatpush1.bf16.msra.mxu0 0
        %1856 = vmatprep.subr.bf16.mxu0 0
        %1857 = vmatpush1.bf16.msra.mxu0 0
        %1858 = vmatprep.subr.bf16.mxu0 0
        %1859 = vmatpush1.bf16.msra.mxu0 0
        %1860 = vmatprep.subr.bf16.mxu0 0
        %1861 = vmatpush1.bf16.msra.mxu0 0
        %1862 = vmatprep.subr.bf16.mxu0 0
        %1863 = vmatpush1.bf16.msra.mxu0 0
        %1864 = vmatprep.subr.bf16.mxu0 0
        %1865 = vmatpush1.bf16.msra.mxu0 0
        %1866 = vmatprep.subr.bf16.mxu0 0
        %1867 = vmatpush1.bf16.msra.mxu0 0
        %1868 = vmatprep.mubr.bf16.mxu0 0
        %1869 = vmatmul.mubr.bf16.gmra.mrb[0].mxu0 %v1831
        %v1870 = vpop.f32.mrb[0].mxu0
        %v1871 = vadd.f32 0.0, %v1870
        %v1872 = vpop.f32.mrb[0].mxu0
        %v1873 = vpop.f32.mrb[0].mxu0
        %v1874 = vadd.f32 0.0, %v1873
        %v1875 = vpop.f32.mrb[0].mxu0
        %1876 = vmatprep.mubr.bf16.mxu0 0
        %1877 = vmatmul.mubr.bf16.gmra.mrb[0].mxu0 %v1834
        %v1878 = vpop.f32.mrb[0].mxu0
        %v1879 = vadd.f32 0.0, %v1878
        %v1880 = vpop.f32.mrb[0].mxu0
        %v1881 = vpop.f32.mrb[0].mxu0
        %v1882 = vpop.f32.mrb[0].mxu0
        %1883 = vdwg.mxu0
        %v1884 = vadd.f32 %v1803, %v1871
        %v1885 = vadd.f32 %v1804, %v1874
        %v1886 = vadd.f32 %v1805, %v1879
        %s1887 = sadd.s32 %s27, 2
        %s1888 = smul.u32 %s1887, 5
        %s1889 = smul.addr %s1888, 4
        %s1890 = scalar_lea.vmem %s305, %s1889
        %v1891 = vld [vmem:[%s1890] sm:$0xf]
        %v1892 = vld [vmem:[%s1890 + $0x4] sm:$0xf]
        %v1893 = vld [vmem:[%s1890 + $0x8] sm:$0xf]
        %s1894 = scalar_lea.vmem [#allocation2], 288
        %v1895 = vld [vmem:[%s1894] sm:$0xf]
        %v1896 = vld [vmem:[%s1894 + $0x4] sm:$0xf]
        %v1897 = vld [vmem:[%s1894 + $0x8] sm:$0xf]
        %v1898 = vld [vmem:[%s1894 + $0xc] sm:$0xf]
        %v1902 = vunpack.c.l.b16 %v1891
        %v1903 = vunpack.c.l.b16 %v1892
        %v1904 = vunpack.c.l.b16 %v1893
        %v1905 = vpack.c.b16 %v1903, %v1902
        %v1906 = vpack.c.b16 %v1904, %v1904
        %v1911 = vunpack.c.l.b16 %v1895
        %v1912 = vunpack.c.l.b16 %v1896
        %v1913 = vunpack.c.l.b16 %v1897
        %v1914 = vunpack.c.l.b16 %v1898
        %v1915 = vpack.c.b16 %v1912, %v1911
        %v1916 = vpack.c.b16 %v1914, %v1913
        %v1920 = vsel %vm361, %v1905, 0
        %v1923 = vsel %vm361, %v1906, 0
        %1925 = vmatprep.subr.bf16.mxu0 0
        %1926 = vmatpush1.bf16.msra.mxu0 %v1915
        %1927 = vmatprep.subr.bf16.mxu0 0
        %1928 = vmatpush1.bf16.msra.mxu0 %v1916
        %1929 = vmatprep.subr.bf16.mxu0 0
        %1930 = vmatpush1.bf16.msra.mxu0 0
        %1931 = vmatprep.subr.bf16.mxu0 0
        %1932 = vmatpush1.bf16.msra.mxu0 0
        %1933 = vmatprep.subr.bf16.mxu0 0
        %1934 = vmatpush1.bf16.msra.mxu0 0
        %1935 = vmatprep.subr.bf16.mxu0 0
        %1936 = vmatpush1.bf16.msra.mxu0 0
        %1937 = vmatprep.subr.bf16.mxu0 0
        %1938 = vmatpush1.bf16.msra.mxu0 0
        %1939 = vmatprep.subr.bf16.mxu0 0
        %1940 = vmatpush1.bf16.msra.mxu0 0
        %1941 = vmatprep.subr.bf16.mxu0 0
        %1942 = vmatpush1.bf16.msra.mxu0 0
        %1943 = vmatprep.subr.bf16.mxu0 0
        %1944 = vmatpush1.bf16.msra.mxu0 0
        %1945 = vmatprep.subr.bf16.mxu0 0
        %1946 = vmatpush1.bf16.msra.mxu0 0
        %1947 = vmatprep.subr.bf16.mxu0 0
        %1948 = vmatpush1.bf16.msra.mxu0 0
        %1949 = vmatprep.subr.bf16.mxu0 0
        %1950 = vmatpush1.bf16.msra.mxu0 0
        %1951 = vmatprep.subr.bf16.mxu0 0
        %1952 = vmatpush1.bf16.msra.mxu0 0
        %1953 = vmatprep.subr.bf16.mxu0 0
        %1954 = vmatpush1.bf16.msra.mxu0 0
        %1955 = vmatprep.subr.bf16.mxu0 0
        %1956 = vmatpush1.bf16.msra.mxu0 0
        %1957 = vmatprep.mubr.bf16.mxu0 0
        %1958 = vmatmul.mubr.bf16.gmra.mrb[0].mxu0 %v1920
        %v1959 = vpop.f32.mrb[0].mxu0
        %v1960 = vadd.f32 0.0, %v1959
        %v1961 = vpop.f32.mrb[0].mxu0
        %v1962 = vpop.f32.mrb[0].mxu0
        %v1963 = vadd.f32 0.0, %v1962
        %v1964 = vpop.f32.mrb[0].mxu0
        %1965 = vmatprep.mubr.bf16.mxu0 0
        %1966 = vmatmul.mubr.bf16.gmra.mrb[0].mxu0 %v1923
        %v1967 = vpop.f32.mrb[0].mxu0
        %v1968 = vadd.f32 0.0, %v1967
        %v1969 = vpop.f32.mrb[0].mxu0
        %v1970 = vpop.f32.mrb[0].mxu0
        %v1971 = vpop.f32.mrb[0].mxu0
        %1972 = vdwg.mxu0
        %v1973 = vadd.f32 %v1884, %v1960
        %v1974 = vadd.f32 %v1885, %v1963
        %v1975 = vadd.f32 %v1886, %v1968
        %v1976 = vld [vmem:[%s1890] sm:$0xf]
        %v1977 = vld [vmem:[%s1890 + $0x4] sm:$0xf]
        %v1978 = vld [vmem:[%s1890 + $0x8] sm:$0xf]
        %v1979 = vld [vmem:[%s1890 + $0xc] sm:$0x1]
        %s1980 = scalar_lea.vmem [#allocation2], 304
        %v1981 = vld [vmem:[%s1980] sm:$0xf]
        %v1982 = vld [vmem:[%s1980 + $0x4] sm:$0xf]
        %v1983 = vld [vmem:[%s1980 + $0x8] sm:$0xf]
        %v1984 = vld [vmem:[%s1980 + $0xc] sm:$0xf]
        %v1989 = vunpack.c.l.b16 %v1976
        %v1990 = vunpack.c.l.b16 %v1977
        %v1991 = vunpack.c.l.b16 %v1978
        %v1992 = vunpack.c.l.b16 %v1979
        %v1993 = vpack.c.b16 %v1990, %v1989
        %v1994 = vpack.c.b16 %v1992, %v1991
        %v1996 = vshrl.u32 %v1993, 16
        %v1998 = vshll.u32 %v1993, 16
        %v2000 = vrot.slane %v1998, 1
        %v2001 = vor.u32 %v1996, %v2000
        %v2003 = vshll.u32 %v1994, 16
        %v2005 = vrot.slane %v2003, 1
        %v2006 = vsel %vm333, %v2001, %v2005
        %v2007 = vshrl.u32 %v1994, 16
        %v2009 = vor.u32 %v2007, %v2005
        %v2014 = vunpack.c.l.b16 %v1981
        %v2015 = vunpack.c.l.b16 %v1982
        %v2016 = vunpack.c.l.b16 %v1983
        %v2017 = vunpack.c.l.b16 %v1984
        %v2018 = vpack.c.b16 %v2015, %v2014
        %v2019 = vpack.c.b16 %v2017, %v2016
        %v2023 = vsel %vm361, %v2006, 0
        %v2026 = vsel %vm361, %v2009, 0
        %2028 = vmatprep.subr.bf16.mxu0 0
        %2029 = vmatpush1.bf16.msra.mxu0 %v2018
        %2030 = vmatprep.subr.bf16.mxu0 0
        %2031 = vmatpush1.bf16.msra.mxu0 %v2019
        %2032 = vmatprep.subr.bf16.mxu0 0
        %2033 = vmatpush1.bf16.msra.mxu0 0
        %2034 = vmatprep.subr.bf16.mxu0 0
        %2035 = vmatpush1.bf16.msra.mxu0 0
        %2036 = vmatprep.subr.bf16.mxu0 0
        %2037 = vmatpush1.bf16.msra.mxu0 0
        %2038 = vmatprep.subr.bf16.mxu0 0
        %2039 = vmatpush1.bf16.msra.mxu0 0
        %2040 = vmatprep.subr.bf16.mxu0 0
        %2041 = vmatpush1.bf16.msra.mxu0 0
        %2042 = vmatprep.subr.bf16.mxu0 0
        %2043 = vmatpush1.bf16.msra.mxu0 0
        %2044 = vmatprep.subr.bf16.mxu0 0
        %2045 = vmatpush1.bf16.msra.mxu0 0
        %2046 = vmatprep.subr.bf16.mxu0 0
        %2047 = vmatpush1.bf16.msra.mxu0 0
        %2048 = vmatprep.subr.bf16.mxu0 0
        %2049 = vmatpush1.bf16.msra.mxu0 0
        %2050 = vmatprep.subr.bf16.mxu0 0
        %2051 = vmatpush1.bf16.msra.mxu0 0
        %2052 = vmatprep.subr.bf16.mxu0 0
        %2053 = vmatpush1.bf16.msra.mxu0 0
        %2054 = vmatprep.subr.bf16.mxu0 0
        %2055 = vmatpush1.bf16.msra.mxu0 0
        %2056 = vmatprep.subr.bf16.mxu0 0
        %2057 = vmatpush1.bf16.msra.mxu0 0
        %2058 = vmatprep.subr.bf16.mxu0 0
        %2059 = vmatpush1.bf16.msra.mxu0 0
        %2060 = vmatprep.mubr.bf16.mxu0 0
        %2061 = vmatmul.mubr.bf16.gmra.mrb[0].mxu0 %v2023
        %v2062 = vpop.f32.mrb[0].mxu0
        %v2063 = vadd.f32 0.0, %v2062
        %v2064 = vpop.f32.mrb[0].mxu0
        %v2065 = vpop.f32.mrb[0].mxu0
        %v2066 = vadd.f32 0.0, %v2065
        %v2067 = vpop.f32.mrb[0].mxu0
        %2068 = vmatprep.mubr.bf16.mxu0 0
        %2069 = vmatmul.mubr.bf16.gmra.mrb[0].mxu0 %v2026
        %v2070 = vpop.f32.mrb[0].mxu0
        %v2071 = vadd.f32 0.0, %v2070
        %v2072 = vpop.f32.mrb[0].mxu0
        %v2073 = vpop.f32.mrb[0].mxu0
        %v2074 = vpop.f32.mrb[0].mxu0
        %2075 = vdwg.mxu0
        %v2076 = vadd.f32 %v1973, %v2063
        %v2077 = vadd.f32 %v1974, %v2066
        %v2078 = vadd.f32 %v1975, %v2071
        %v2079 = vld [vmem:[%s1890] sm:$0xe]
        %s2080 = scalar_lea.vmem [#allocation2], 320
        %v2081 = vld [vmem:[%s2080] sm:$0xf]
        %v2082 = vld [vmem:[%s2080 + $0x4] sm:$0xf]
        %v2083 = vld [vmem:[%s2080 + $0x8] sm:$0xf]
        %v2084 = vld [vmem:[%s2080 + $0xc] sm:$0xf]
        %v2086 = vunpack.c.l.b16 %v2079
        %v2087 = vpack.c.b16 %v1990, %v2086
        %v2088 = vrot.slane %v2087, 1
        %v2089 = vrot.slane %v1994, 1
        %v2090 = vsel %vm491, %v2088, %v2089
        %v2095 = vunpack.c.l.b16 %v2081
        %v2096 = vunpack.c.l.b16 %v2082
        %v2097 = vunpack.c.l.b16 %v2083
        %v2098 = vunpack.c.l.b16 %v2084
        %v2099 = vpack.c.b16 %v2096, %v2095
        %v2100 = vpack.c.b16 %v2098, %v2097
        %v2104 = vsel %vm361, %v2090, 0
        %v2107 = vsel %vm361, %v2089, 0
        %2109 = vmatprep.subr.bf16.mxu0 0
        %2110 = vmatpush1.bf16.msra.mxu0 %v2099
        %2111 = vmatprep.subr.bf16.mxu0 0
        %2112 = vmatpush1.bf16.msra.mxu0 %v2100
        %2113 = vmatprep.subr.bf16.mxu0 0
        %2114 = vmatpush1.bf16.msra.mxu0 0
        %2115 = vmatprep.subr.bf16.mxu0 0
        %2116 = vmatpush1.bf16.msra.mxu0 0
        %2117 = vmatprep.subr.bf16.mxu0 0
        %2118 = vmatpush1.bf16.msra.mxu0 0
        %2119 = vmatprep.subr.bf16.mxu0 0
        %2120 = vmatpush1.bf16.msra.mxu0 0
        %2121 = vmatprep.subr.bf16.mxu0 0
        %2122 = vmatpush1.bf16.msra.mxu0 0
        %2123 = vmatprep.subr.bf16.mxu0 0
        %2124 = vmatpush1.bf16.msra.mxu0 0
        %2125 = vmatprep.subr.bf16.mxu0 0
        %2126 = vmatpush1.bf16.msra.mxu0 0
        %2127 = vmatprep.subr.bf16.mxu0 0
        %2128 = vmatpush1.bf16.msra.mxu0 0
        %2129 = vmatprep.subr.bf16.mxu0 0
        %2130 = vmatpush1.bf16.msra.mxu0 0
        %2131 = vmatprep.subr.bf16.mxu0 0
        %2132 = vmatpush1.bf16.msra.mxu0 0
        %2133 = vmatprep.subr.bf16.mxu0 0
        %2134 = vmatpush1.bf16.msra.mxu0 0
        %2135 = vmatprep.subr.bf16.mxu0 0
        %2136 = vmatpush1.bf16.msra.mxu0 0
        %2137 = vmatprep.subr.bf16.mxu0 0
        %2138 = vmatpush1.bf16.msra.mxu0 0
        %2139 = vmatprep.subr.bf16.mxu0 0
        %2140 = vmatpush1.bf16.msra.mxu0 0
        %2141 = vmatprep.mubr.bf16.mxu0 0
        %2142 = vmatmul.mubr.bf16.gmra.mrb[0].mxu0 %v2104
        %v2143 = vpop.f32.mrb[0].mxu0
        %v2144 = vadd.f32 0.0, %v2143
        %v2145 = vpop.f32.mrb[0].mxu0
        %v2146 = vpop.f32.mrb[0].mxu0
        %v2147 = vadd.f32 0.0, %v2146
        %v2148 = vpop.f32.mrb[0].mxu0
        %2149 = vmatprep.mubr.bf16.mxu0 0
        %2150 = vmatmul.mubr.bf16.gmra.mrb[0].mxu0 %v2107
        %v2151 = vpop.f32.mrb[0].mxu0
        %v2152 = vadd.f32 0.0, %v2151
        %v2153 = vpop.f32.mrb[0].mxu0
        %v2154 = vpop.f32.mrb[0].mxu0
        %v2155 = vpop.f32.mrb[0].mxu0
        %2156 = vdwg.mxu0
        %v2157 = vadd.f32 %v2076, %v2144
        %v2158 = vadd.f32 %v2077, %v2147
        %v2159 = vadd.f32 %v2078, %v2152
        %v2160 = vld [vmem:[%s1890] sm:$0x8]
        %v2161 = vld [vmem:[%s1890 + $0xc] sm:$0x7]
        %s2162 = scalar_lea.vmem [#allocation2], 336
        %v2163 = vld [vmem:[%s2162] sm:$0xf]
        %v2164 = vld [vmem:[%s2162 + $0x4] sm:$0xf]
        %v2165 = vld [vmem:[%s2162 + $0x8] sm:$0xf]
        %v2166 = vld [vmem:[%s2162 + $0xc] sm:$0xf]
        %v2169 = vunpack.c.l.b16 %v2160
        %v2170 = vunpack.c.l.b16 %v2161
        %v2171 = vpack.c.b16 %v1990, %v2169
        %v2172 = vpack.c.b16 %v2170, %v1991
        %v2173 = vrot.slane %v2171, 3
        %v2174 = vrot.slane %v2172, 3
        %v2175 = vsel %vm577, %v2173, %v2174
        %v2180 = vunpack.c.l.b16 %v2163
        %v2181 = vunpack.c.l.b16 %v2164
        %v2182 = vunpack.c.l.b16 %v2165
        %v2183 = vunpack.c.l.b16 %v2166
        %v2184 = vpack.c.b16 %v2181, %v2180
        %v2185 = vpack.c.b16 %v2183, %v2182
        %v2189 = vsel %vm361, %v2175, 0
        %v2192 = vsel %vm361, %v2174, 0
        %2194 = vmatprep.subr.bf16.mxu0 0
        %2195 = vmatpush1.bf16.msra.mxu0 %v2184
        %2196 = vmatprep.subr.bf16.mxu0 0
        %2197 = vmatpush1.bf16.msra.mxu0 %v2185
        %2198 = vmatprep.subr.bf16.mxu0 0
        %2199 = vmatpush1.bf16.msra.mxu0 0
        %2200 = vmatprep.subr.bf16.mxu0 0
        %2201 = vmatpush1.bf16.msra.mxu0 0
        %2202 = vmatprep.subr.bf16.mxu0 0
        %2203 = vmatpush1.bf16.msra.mxu0 0
        %2204 = vmatprep.subr.bf16.mxu0 0
        %2205 = vmatpush1.bf16.msra.mxu0 0
        %2206 = vmatprep.subr.bf16.mxu0 0
        %2207 = vmatpush1.bf16.msra.mxu0 0
        %2208 = vmatprep.subr.bf16.mxu0 0
        %2209 = vmatpush1.bf16.msra.mxu0 0
        %2210 = vmatprep.subr.bf16.mxu0 0
        %2211 = vmatpush1.bf16.msra.mxu0 0
        %2212 = vmatprep.subr.bf16.mxu0 0
        %2213 = vmatpush1.bf16.msra.mxu0 0
        %2214 = vmatprep.subr.bf16.mxu0 0
        %2215 = vmatpush1.bf16.msra.mxu0 0
        %2216 = vmatprep.subr.bf16.mxu0 0
        %2217 = vmatpush1.bf16.msra.mxu0 0
        %2218 = vmatprep.subr.bf16.mxu0 0
        %2219 = vmatpush1.bf16.msra.mxu0 0
        %2220 = vmatprep.subr.bf16.mxu0 0
        %2221 = vmatpush1.bf16.msra.mxu0 0
        %2222 = vmatprep.subr.bf16.mxu0 0
        %2223 = vmatpush1.bf16.msra.mxu0 0
        %2224 = vmatprep.subr.bf16.mxu0 0
        %2225 = vmatpush1.bf16.msra.mxu0 0
        %2226 = vmatprep.mubr.bf16.mxu0 0
        %2227 = vmatmul.mubr.bf16.gmra.mrb[0].mxu0 %v2189
        %v2228 = vpop.f32.mrb[0].mxu0
        %v2229 = vadd.f32 0.0, %v2228
        %v2230 = vpop.f32.mrb[0].mxu0
        %v2231 = vpop.f32.mrb[0].mxu0
        %v2232 = vadd.f32 0.0, %v2231
        %v2233 = vpop.f32.mrb[0].mxu0
        %2234 = vmatprep.mubr.bf16.mxu0 0
        %2235 = vmatmul.mubr.bf16.gmra.mrb[0].mxu0 %v2192
        %v2236 = vpop.f32.mrb[0].mxu0
        %v2237 = vadd.f32 0.0, %v2236
        %v2238 = vpop.f32.mrb[0].mxu0
        %v2239 = vpop.f32.mrb[0].mxu0
        %v2240 = vpop.f32.mrb[0].mxu0
        %2241 = vdwg.mxu0
        %v2242 = vadd.f32 %v2157, %v2229
        %v2243 = vadd.f32 %v2158, %v2232
        %v2244 = vadd.f32 %v2159, %v2237
        %v2245 = vld [vmem:[%s1890 + $0xc] sm:$0xf]
        %s2246 = scalar_lea.vmem [#allocation2], 352
        %v2247 = vld [vmem:[%s2246] sm:$0xf]
        %v2248 = vld [vmem:[%s2246 + $0x4] sm:$0xf]
        %v2249 = vld [vmem:[%s2246 + $0x8] sm:$0xf]
        %v2250 = vld [vmem:[%s2246 + $0xc] sm:$0xf]
        %v2252 = vunpack.c.l.b16 %v2245
        %v2253 = vpack.c.b16 %v2252, %v1991
        %v2255 = vshrl.u32 %v2171, 16
        %v2257 = vrot.slane %v2255, 3
        %v2258 = vshll.u32 %v2171, 16
        %v2260 = vrot.slane %v2258, 4
        %v2261 = vor.u32 %v2257, %v2260
        %v2263 = vshrl.u32 %v2253, 16
        %v2265 = vrot.slane %v2263, 3
        %v2266 = vshll.u32 %v2253, 16
        %v2268 = vrot.slane %v2266, 4
        %v2269 = vor.u32 %v2265, %v2268
        %v2270 = vsel %vm659, %v2261, %v2269
        %v2275 = vunpack.c.l.b16 %v2247
        %v2276 = vunpack.c.l.b16 %v2248
        %v2277 = vunpack.c.l.b16 %v2249
        %v2278 = vunpack.c.l.b16 %v2250
        %v2279 = vpack.c.b16 %v2276, %v2275
        %v2280 = vpack.c.b16 %v2278, %v2277
        %v2284 = vsel %vm361, %v2270, 0
        %v2287 = vsel %vm361, %v2269, 0
        %2289 = vmatprep.subr.bf16.mxu0 0
        %2290 = vmatpush1.bf16.msra.mxu0 %v2279
        %2291 = vmatprep.subr.bf16.mxu0 0
        %2292 = vmatpush1.bf16.msra.mxu0 %v2280
        %2293 = vmatprep.subr.bf16.mxu0 0
        %2294 = vmatpush1.bf16.msra.mxu0 0
        %2295 = vmatprep.subr.bf16.mxu0 0
        %2296 = vmatpush1.bf16.msra.mxu0 0
        %2297 = vmatprep.subr.bf16.mxu0 0
        %2298 = vmatpush1.bf16.msra.mxu0 0
        %2299 = vmatprep.subr.bf16.mxu0 0
        %2300 = vmatpush1.bf16.msra.mxu0 0
        %2301 = vmatprep.subr.bf16.mxu0 0
        %2302 = vmatpush1.bf16.msra.mxu0 0
        %2303 = vmatprep.subr.bf16.mxu0 0
        %2304 = vmatpush1.bf16.msra.mxu0 0
        %2305 = vmatprep.subr.bf16.mxu0 0
        %2306 = vmatpush1.bf16.msra.mxu0 0
        %2307 = vmatprep.subr.bf16.mxu0 0
        %2308 = vmatpush1.bf16.msra.mxu0 0
        %2309 = vmatprep.subr.bf16.mxu0 0
        %2310 = vmatpush1.bf16.msra.mxu0 0
        %2311 = vmatprep.subr.bf16.mxu0 0
        %2312 = vmatpush1.bf16.msra.mxu0 0
        %2313 = vmatprep.subr.bf16.mxu0 0
        %2314 = vmatpush1.bf16.msra.mxu0 0
        %2315 = vmatprep.subr.bf16.mxu0 0
        %2316 = vmatpush1.bf16.msra.mxu0 0
        %2317 = vmatprep.subr.bf16.mxu0 0
        %2318 = vmatpush1.bf16.msra.mxu0 0
        %2319 = vmatprep.subr.bf16.mxu0 0
        %2320 = vmatpush1.bf16.msra.mxu0 0
        %2321 = vmatprep.mubr.bf16.mxu0 0
        %2322 = vmatmul.mubr.bf16.gmra.mrb[0].mxu0 %v2284
        %v2323 = vpop.f32.mrb[0].mxu0
        %v2324 = vadd.f32 0.0, %v2323
        %v2325 = vpop.f32.mrb[0].mxu0
        %v2326 = vpop.f32.mrb[0].mxu0
        %v2327 = vadd.f32 0.0, %v2326
        %v2328 = vpop.f32.mrb[0].mxu0
        %2329 = vmatprep.mubr.bf16.mxu0 0
        %2330 = vmatmul.mubr.bf16.gmra.mrb[0].mxu0 %v2287
        %v2331 = vpop.f32.mrb[0].mxu0
        %v2332 = vadd.f32 0.0, %v2331
        %v2333 = vpop.f32.mrb[0].mxu0
        %v2334 = vpop.f32.mrb[0].mxu0
        %v2335 = vpop.f32.mrb[0].mxu0
        %2336 = vdwg.mxu0
        %v2337 = vadd.f32 %v2242, %v2324
        %v2338 = vadd.f32 %v2243, %v2327
        %v2339 = vadd.f32 %v2244, %v2332
        %s2340 = scalar_lea.vmem [#allocation2], 368
        %v2341 = vld [vmem:[%s2340] sm:$0xf]
        %v2342 = vld [vmem:[%s2340 + $0x4] sm:$0xf]
        %v2343 = vld [vmem:[%s2340 + $0x8] sm:$0xf]
        %v2344 = vld [vmem:[%s2340 + $0xc] sm:$0xf]
        %v2345 = vpack.c.b16 %v1991, %v1990
        %v2346 = vpack.c.b16 %v2252, %v2252
        %v2351 = vunpack.c.l.b16 %v2341
        %v2352 = vunpack.c.l.b16 %v2342
        %v2353 = vunpack.c.l.b16 %v2343
        %v2354 = vunpack.c.l.b16 %v2344
        %v2355 = vpack.c.b16 %v2352, %v2351
        %v2356 = vpack.c.b16 %v2354, %v2353
        %v2360 = vsel %vm361, %v2345, 0
        %v2363 = vsel %vm361, %v2346, 0
        %2365 = vmatprep.subr.bf16.mxu0 0
        %2366 = vmatpush1.bf16.msra.mxu0 %v2355
        %2367 = vmatprep.subr.bf16.mxu0 0
        %2368 = vmatpush1.bf16.msra.mxu0 %v2356
        %2369 = vmatprep.subr.bf16.mxu0 0
        %2370 = vmatpush1.bf16.msra.mxu0 0
        %2371 = vmatprep.subr.bf16.mxu0 0
        %2372 = vmatpush1.bf16.msra.mxu0 0
        %2373 = vmatprep.subr.bf16.mxu0 0
        %2374 = vmatpush1.bf16.msra.mxu0 0
        %2375 = vmatprep.subr.bf16.mxu0 0
        %2376 = vmatpush1.bf16.msra.mxu0 0
        %2377 = vmatprep.subr.bf16.mxu0 0
        %2378 = vmatpush1.bf16.msra.mxu0 0
        %2379 = vmatprep.subr.bf16.mxu0 0
        %2380 = vmatpush1.bf16.msra.mxu0 0
        %2381 = vmatprep.subr.bf16.mxu0 0
        %2382 = vmatpush1.bf16.msra.mxu0 0
        %2383 = vmatprep.subr.bf16.mxu0 0
        %2384 = vmatpush1.bf16.msra.mxu0 0
        %2385 = vmatprep.subr.bf16.mxu0 0
        %2386 = vmatpush1.bf16.msra.mxu0 0
        %2387 = vmatprep.subr.bf16.mxu0 0
        %2388 = vmatpush1.bf16.msra.mxu0 0
        %2389 = vmatprep.subr.bf16.mxu0 0
        %2390 = vmatpush1.bf16.msra.mxu0 0
        %2391 = vmatprep.subr.bf16.mxu0 0
        %2392 = vmatpush1.bf16.msra.mxu0 0
        %2393 = vmatprep.subr.bf16.mxu0 0
        %2394 = vmatpush1.bf16.msra.mxu0 0
        %2395 = vmatprep.subr.bf16.mxu0 0
        %2396 = vmatpush1.bf16.msra.mxu0 0
        %2397 = vmatprep.mubr.bf16.mxu0 0
        %2398 = vmatmul.mubr.bf16.gmra.mrb[0].mxu0 %v2360
        %v2399 = vpop.f32.mrb[0].mxu0
        %v2400 = vadd.f32 0.0, %v2399
        %v2401 = vpop.f32.mrb[0].mxu0
        %v2402 = vpop.f32.mrb[0].mxu0
        %v2403 = vadd.f32 0.0, %v2402
        %v2404 = vpop.f32.mrb[0].mxu0
        %2405 = vmatprep.mubr.bf16.mxu0 0
        %2406 = vmatmul.mubr.bf16.gmra.mrb[0].mxu0 %v2363
        %v2407 = vpop.f32.mrb[0].mxu0
        %v2408 = vadd.f32 0.0, %v2407
        %v2409 = vpop.f32.mrb[0].mxu0
        %v2410 = vpop.f32.mrb[0].mxu0
        %v2411 = vpop.f32.mrb[0].mxu0
        %2412 = vdwg.mxu0
        %v2413 = vadd.f32 %v2337, %v2400
        %v2414 = vadd.f32 %v2338, %v2403
        %v2415 = vadd.f32 %v2339, %v2408
        %v2416 = vld [vmem:[%s1890 + $0x4] sm:$0xc]
        %v2417 = vld [vmem:[%s1890 + $0x8] sm:$0xf]
        %v2418 = vld [vmem:[%s1890 + $0xc] sm:$0xf]
        %v2419 = vld [vmem:[%s1890 + $0x10] sm:$0x3]
        %s2420 = scalar_lea.vmem [#allocation2], 384
        %v2421 = vld [vmem:[%s2420] sm:$0xf]
        %v2422 = vld [vmem:[%s2420 + $0x4] sm:$0xf]
        %v2423 = vld [vmem:[%s2420 + $0x8] sm:$0xf]
        %v2424 = vld [vmem:[%s2420 + $0xc] sm:$0xf]
        %v2429 = vunpack.c.l.b16 %v2416
        %v2430 = vunpack.c.l.b16 %v2417
        %v2431 = vunpack.c.l.b16 %v2418
        %v2432 = vunpack.c.l.b16 %v2419
        %v2433 = vpack.c.b16 %v2430, %v2429
        %v2434 = vpack.c.b16 %v2432, %v2431
        %v2435 = vrot.slane %v2433, 2
        %v2436 = vrot.slane %v2434, 2
        %v2437 = vsel %vm841, %v2435, %v2436
        %v2442 = vunpack.c.l.b16 %v2421
        %v2443 = vunpack.c.l.b16 %v2422
        %v2444 = vunpack.c.l.b16 %v2423
        %v2445 = vunpack.c.l.b16 %v2424
        %v2446 = vpack.c.b16 %v2443, %v2442
        %v2447 = vpack.c.b16 %v2445, %v2444
        %v2451 = vsel %vm361, %v2437, 0
        %v2454 = vsel %vm361, %v2436, 0
        %2456 = vmatprep.subr.bf16.mxu0 0
        %2457 = vmatpush1.bf16.msra.mxu0 %v2446
        %2458 = vmatprep.subr.bf16.mxu0 0
        %2459 = vmatpush1.bf16.msra.mxu0 %v2447
        %2460 = vmatprep.subr.bf16.mxu0 0
        %2461 = vmatpush1.bf16.msra.mxu0 0
        %2462 = vmatprep.subr.bf16.mxu0 0
        %2463 = vmatpush1.bf16.msra.mxu0 0
        %2464 = vmatprep.subr.bf16.mxu0 0
        %2465 = vmatpush1.bf16.msra.mxu0 0
        %2466 = vmatprep.subr.bf16.mxu0 0
        %2467 = vmatpush1.bf16.msra.mxu0 0
        %2468 = vmatprep.subr.bf16.mxu0 0
        %2469 = vmatpush1.bf16.msra.mxu0 0
        %2470 = vmatprep.subr.bf16.mxu0 0
        %2471 = vmatpush1.bf16.msra.mxu0 0
        %2472 = vmatprep.subr.bf16.mxu0 0
        %2473 = vmatpush1.bf16.msra.mxu0 0
        %2474 = vmatprep.subr.bf16.mxu0 0
        %2475 = vmatpush1.bf16.msra.mxu0 0
        %2476 = vmatprep.subr.bf16.mxu0 0
        %2477 = vmatpush1.bf16.msra.mxu0 0
        %2478 = vmatprep.subr.bf16.mxu0 0
        %2479 = vmatpush1.bf16.msra.mxu0 0
        %2480 = vmatprep.subr.bf16.mxu0 0
        %2481 = vmatpush1.bf16.msra.mxu0 0
        %2482 = vmatprep.subr.bf16.mxu0 0
        %2483 = vmatpush1.bf16.msra.mxu0 0
        %2484 = vmatprep.subr.bf16.mxu0 0
        %2485 = vmatpush1.bf16.msra.mxu0 0
        %2486 = vmatprep.subr.bf16.mxu0 0
        %2487 = vmatpush1.bf16.msra.mxu0 0
        %2488 = vmatprep.mubr.bf16.mxu0 0
        %2489 = vmatmul.mubr.bf16.gmra.mrb[0].mxu0 %v2451
        %v2490 = vpop.f32.mrb[0].mxu0
        %v2491 = vadd.f32 0.0, %v2490
        %v2492 = vpop.f32.mrb[0].mxu0
        %v2493 = vpop.f32.mrb[0].mxu0
        %v2494 = vadd.f32 0.0, %v2493
        %v2495 = vpop.f32.mrb[0].mxu0
        %2496 = vmatprep.mubr.bf16.mxu0 0
        %2497 = vmatmul.mubr.bf16.gmra.mrb[0].mxu0 %v2454
        %v2498 = vpop.f32.mrb[0].mxu0
        %v2499 = vadd.f32 0.0, %v2498
        %v2500 = vpop.f32.mrb[0].mxu0
        %v2501 = vpop.f32.mrb[0].mxu0
        %v2502 = vpop.f32.mrb[0].mxu0
        %2503 = vdwg.mxu0
        %v2504 = vadd.f32 %v2413, %v2491
        %v2505 = vadd.f32 %v2414, %v2494
        %v2506 = vadd.f32 %v2415, %v2499
        %v2507 = vld [vmem:[%s1890 + $0x10] sm:$0x7]
        %s2508 = scalar_lea.vmem [#allocation2], 400
        %v2509 = vld [vmem:[%s2508] sm:$0xf]
        %v2510 = vld [vmem:[%s2508 + $0x4] sm:$0xf]
        %v2511 = vld [vmem:[%s2508 + $0x8] sm:$0xf]
        %v2512 = vld [vmem:[%s2508 + $0xc] sm:$0xf]
        %v2514 = vunpack.c.l.b16 %v2507
        %v2515 = vpack.c.b16 %v2514, %v2431
        %v2517 = vshrl.u32 %v2433, 16
        %v2519 = vrot.slane %v2517, 2
        %v2520 = vshll.u32 %v2433, 16
        %v2522 = vrot.slane %v2520, 3
        %v2523 = vor.u32 %v2519, %v2522
        %v2525 = vshrl.u32 %v2515, 16
        %v2527 = vrot.slane %v2525, 2
        %v2528 = vshll.u32 %v2515, 16
        %v2530 = vrot.slane %v2528, 3
        %v2531 = vor.u32 %v2527, %v2530
        %v2532 = vsel %vm923, %v2523, %v2531
        %v2537 = vunpack.c.l.b16 %v2509
        %v2538 = vunpack.c.l.b16 %v2510
        %v2539 = vunpack.c.l.b16 %v2511
        %v2540 = vunpack.c.l.b16 %v2512
        %v2541 = vpack.c.b16 %v2538, %v2537
        %v2542 = vpack.c.b16 %v2540, %v2539
        %v2546 = vsel %vm361, %v2532, 0
        %v2549 = vsel %vm361, %v2531, 0
        %2551 = vmatprep.subr.bf16.mxu0 0
        %2552 = vmatpush1.bf16.msra.mxu0 %v2541
        %2553 = vmatprep.subr.bf16.mxu0 0
        %2554 = vmatpush1.bf16.msra.mxu0 %v2542
        %2555 = vmatprep.subr.bf16.mxu0 0
        %2556 = vmatpush1.bf16.msra.mxu0 0
        %2557 = vmatprep.subr.bf16.mxu0 0
        %2558 = vmatpush1.bf16.msra.mxu0 0
        %2559 = vmatprep.subr.bf16.mxu0 0
        %2560 = vmatpush1.bf16.msra.mxu0 0
        %2561 = vmatprep.subr.bf16.mxu0 0
        %2562 = vmatpush1.bf16.msra.mxu0 0
        %2563 = vmatprep.subr.bf16.mxu0 0
        %2564 = vmatpush1.bf16.msra.mxu0 0
        %2565 = vmatprep.subr.bf16.mxu0 0
        %2566 = vmatpush1.bf16.msra.mxu0 0
        %2567 = vmatprep.subr.bf16.mxu0 0
        %2568 = vmatpush1.bf16.msra.mxu0 0
        %2569 = vmatprep.subr.bf16.mxu0 0
        %2570 = vmatpush1.bf16.msra.mxu0 0
        %2571 = vmatprep.subr.bf16.mxu0 0
        %2572 = vmatpush1.bf16.msra.mxu0 0
        %2573 = vmatprep.subr.bf16.mxu0 0
        %2574 = vmatpush1.bf16.msra.mxu0 0
        %2575 = vmatprep.subr.bf16.mxu0 0
        %2576 = vmatpush1.bf16.msra.mxu0 0
        %2577 = vmatprep.subr.bf16.mxu0 0
        %2578 = vmatpush1.bf16.msra.mxu0 0
        %2579 = vmatprep.subr.bf16.mxu0 0
        %2580 = vmatpush1.bf16.msra.mxu0 0
        %2581 = vmatprep.subr.bf16.mxu0 0
        %2582 = vmatpush1.bf16.msra.mxu0 0
        %2583 = vmatprep.mubr.bf16.mxu0 0
        %2584 = vmatmul.mubr.bf16.gmra.mrb[0].mxu0 %v2546
        %v2585 = vpop.f32.mrb[0].mxu0
        %v2586 = vadd.f32 0.0, %v2585
        %v2587 = vpop.f32.mrb[0].mxu0
        %v2588 = vpop.f32.mrb[0].mxu0
        %v2589 = vadd.f32 0.0, %v2588
        %v2590 = vpop.f32.mrb[0].mxu0
        %2591 = vmatprep.mubr.bf16.mxu0 0
        %2592 = vmatmul.mubr.bf16.gmra.mrb[0].mxu0 %v2549
        %v2593 = vpop.f32.mrb[0].mxu0
        %v2594 = vadd.f32 0.0, %v2593
        %v2595 = vpop.f32.mrb[0].mxu0
        %v2596 = vpop.f32.mrb[0].mxu0
        %v2597 = vpop.f32.mrb[0].mxu0
        %2598 = vdwg.mxu0
        %v2599 = vadd.f32 %v2504, %v2586
        %v2600 = vadd.f32 %v2505, %v2589
        %v2601 = vadd.f32 %v2506, %v2594
        %v2602 = vld [vmem:[%s1890 + $0x4] sm:$0x8]
        %s2603 = scalar_lea.vmem [#allocation2], 416
        %v2604 = vld [vmem:[%s2603] sm:$0xf]
        %v2605 = vld [vmem:[%s2603 + $0x4] sm:$0xf]
        %v2606 = vld [vmem:[%s2603 + $0x8] sm:$0xf]
        %v2607 = vld [vmem:[%s2603 + $0xc] sm:$0xf]
        %v2609 = vunpack.c.l.b16 %v2602
        %v2610 = vpack.c.b16 %v2430, %v2609
        %v2611 = vrot.slane %v2610, 3
        %v2612 = vrot.slane %v2515, 3
        %v2613 = vsel %vm577, %v2611, %v2612
        %v2618 = vunpack.c.l.b16 %v2604
        %v2619 = vunpack.c.l.b16 %v2605
        %v2620 = vunpack.c.l.b16 %v2606
        %v2621 = vunpack.c.l.b16 %v2607
        %v2622 = vpack.c.b16 %v2619, %v2618
        %v2623 = vpack.c.b16 %v2621, %v2620
        %v2627 = vsel %vm361, %v2613, 0
        %v2630 = vsel %vm361, %v2612, 0
        %2632 = vmatprep.subr.bf16.mxu0 0
        %2633 = vmatpush1.bf16.msra.mxu0 %v2622
        %2634 = vmatprep.subr.bf16.mxu0 0
        %2635 = vmatpush1.bf16.msra.mxu0 %v2623
        %2636 = vmatprep.subr.bf16.mxu0 0
        %2637 = vmatpush1.bf16.msra.mxu0 0
        %2638 = vmatprep.subr.bf16.mxu0 0
        %2639 = vmatpush1.bf16.msra.mxu0 0
        %2640 = vmatprep.subr.bf16.mxu0 0
        %2641 = vmatpush1.bf16.msra.mxu0 0
        %2642 = vmatprep.subr.bf16.mxu0 0
        %2643 = vmatpush1.bf16.msra.mxu0 0
        %2644 = vmatprep.subr.bf16.mxu0 0
        %2645 = vmatpush1.bf16.msra.mxu0 0
        %2646 = vmatprep.subr.bf16.mxu0 0
        %2647 = vmatpush1.bf16.msra.mxu0 0
        %2648 = vmatprep.subr.bf16.mxu0 0
        %2649 = vmatpush1.bf16.msra.mxu0 0
        %2650 = vmatprep.subr.bf16.mxu0 0
        %2651 = vmatpush1.bf16.msra.mxu0 0
        %2652 = vmatprep.subr.bf16.mxu0 0
        %2653 = vmatpush1.bf16.msra.mxu0 0
        %2654 = vmatprep.subr.bf16.mxu0 0
        %2655 = vmatpush1.bf16.msra.mxu0 0
        %2656 = vmatprep.subr.bf16.mxu0 0
        %2657 = vmatpush1.bf16.msra.mxu0 0
        %2658 = vmatprep.subr.bf16.mxu0 0
        %2659 = vmatpush1.bf16.msra.mxu0 0
        %2660 = vmatprep.subr.bf16.mxu0 0
        %2661 = vmatpush1.bf16.msra.mxu0 0
        %2662 = vmatprep.subr.bf16.mxu0 0
        %2663 = vmatpush1.bf16.msra.mxu0 0
        %2664 = vmatprep.mubr.bf16.mxu0 0
        %2665 = vmatmul.mubr.bf16.gmra.mrb[0].mxu0 %v2627
        %v2666 = vpop.f32.mrb[0].mxu0
        %v2667 = vadd.f32 0.0, %v2666
        %v2668 = vpop.f32.mrb[0].mxu0
        %v2669 = vpop.f32.mrb[0].mxu0
        %v2670 = vadd.f32 0.0, %v2669
        %v2671 = vpop.f32.mrb[0].mxu0
        %2672 = vmatprep.mubr.bf16.mxu0 0
        %2673 = vmatmul.mubr.bf16.gmra.mrb[0].mxu0 %v2630
        %v2674 = vpop.f32.mrb[0].mxu0
        %v2675 = vadd.f32 0.0, %v2674
        %v2676 = vpop.f32.mrb[0].mxu0
        %v2677 = vpop.f32.mrb[0].mxu0
        %v2678 = vpop.f32.mrb[0].mxu0
        %2679 = vdwg.mxu0
        %v2680 = vadd.f32 %v2599, %v2667
        %v2681 = vadd.f32 %v2600, %v2670
        %v2682 = vadd.f32 %v2601, %v2675
        %s2683 = sadd.s32 %s27, 3
        %s2684 = smul.u32 %s2683, 5
        %s2685 = smul.addr %s2684, 4
        %s2686 = scalar_lea.vmem %s305, %s2685
        %v2687 = vld [vmem:[%s2686] sm:$0xf]
        %v2688 = vld [vmem:[%s2686 + $0x4] sm:$0xf]
        %v2689 = vld [vmem:[%s2686 + $0x8] sm:$0xf]
        %s2690 = scalar_lea.vmem [#allocation2], 432
        %v2691 = vld [vmem:[%s2690] sm:$0xf]
        %v2692 = vld [vmem:[%s2690 + $0x4] sm:$0xf]
        %v2693 = vld [vmem:[%s2690 + $0x8] sm:$0xf]
        %v2694 = vld [vmem:[%s2690 + $0xc] sm:$0xf]
        %v2698 = vunpack.c.l.b16 %v2687
        %v2699 = vunpack.c.l.b16 %v2688
        %v2700 = vunpack.c.l.b16 %v2689
        %v2701 = vpack.c.b16 %v2699, %v2698
        %v2702 = vpack.c.b16 %v2700, %v2700
        %v2707 = vunpack.c.l.b16 %v2691
        %v2708 = vunpack.c.l.b16 %v2692
        %v2709 = vunpack.c.l.b16 %v2693
        %v2710 = vunpack.c.l.b16 %v2694
        %v2711 = vpack.c.b16 %v2708, %v2707
        %v2712 = vpack.c.b16 %v2710, %v2709
        %v2716 = vsel %vm361, %v2701, 0
        %v2719 = vsel %vm361, %v2702, 0
        %2721 = vmatprep.subr.bf16.mxu0 0
        %2722 = vmatpush1.bf16.msra.mxu0 %v2711
        %2723 = vmatprep.subr.bf16.mxu0 0
        %2724 = vmatpush1.bf16.msra.mxu0 %v2712
        %2725 = vmatprep.subr.bf16.mxu0 0
        %2726 = vmatpush1.bf16.msra.mxu0 0
        %2727 = vmatprep.subr.bf16.mxu0 0
        %2728 = vmatpush1.bf16.msra.mxu0 0
        %2729 = vmatprep.subr.bf16.mxu0 0
        %2730 = vmatpush1.bf16.msra.mxu0 0
        %2731 = vmatprep.subr.bf16.mxu0 0
        %2732 = vmatpush1.bf16.msra.mxu0 0
        %2733 = vmatprep.subr.bf16.mxu0 0
        %2734 = vmatpush1.bf16.msra.mxu0 0
        %2735 = vmatprep.subr.bf16.mxu0 0
        %2736 = vmatpush1.bf16.msra.mxu0 0
        %2737 = vmatprep.subr.bf16.mxu0 0
        %2738 = vmatpush1.bf16.msra.mxu0 0
        %2739 = vmatprep.subr.bf16.mxu0 0
        %2740 = vmatpush1.bf16.msra.mxu0 0
        %2741 = vmatprep.subr.bf16.mxu0 0
        %2742 = vmatpush1.bf16.msra.mxu0 0
        %2743 = vmatprep.subr.bf16.mxu0 0
        %2744 = vmatpush1.bf16.msra.mxu0 0
        %2745 = vmatprep.subr.bf16.mxu0 0
        %2746 = vmatpush1.bf16.msra.mxu0 0
        %2747 = vmatprep.subr.bf16.mxu0 0
        %2748 = vmatpush1.bf16.msra.mxu0 0
        %2749 = vmatprep.subr.bf16.mxu0 0
        %2750 = vmatpush1.bf16.msra.mxu0 0
        %2751 = vmatprep.subr.bf16.mxu0 0
        %2752 = vmatpush1.bf16.msra.mxu0 0
        %2753 = vmatprep.mubr.bf16.mxu0 0
        %2754 = vmatmul.mubr.bf16.gmra.mrb[0].mxu0 %v2716
        %v2755 = vpop.f32.mrb[0].mxu0
        %v2756 = vadd.f32 0.0, %v2755
        %v2757 = vpop.f32.mrb[0].mxu0
        %v2758 = vpop.f32.mrb[0].mxu0
        %v2759 = vadd.f32 0.0, %v2758
        %v2760 = vpop.f32.mrb[0].mxu0
        %2761 = vmatprep.mubr.bf16.mxu0 0
        %2762 = vmatmul.mubr.bf16.gmra.mrb[0].mxu0 %v2719
        %v2763 = vpop.f32.mrb[0].mxu0
        %v2764 = vadd.f32 0.0, %v2763
        %v2765 = vpop.f32.mrb[0].mxu0
        %v2766 = vpop.f32.mrb[0].mxu0
        %v2767 = vpop.f32.mrb[0].mxu0
        %2768 = vdwg.mxu0
        %v2769 = vadd.f32 %v2680, %v2756
        %v2770 = vadd.f32 %v2681, %v2759
        %v2771 = vadd.f32 %v2682, %v2764
        %v2772 = vld [vmem:[%s2686] sm:$0xf]
        %v2773 = vld [vmem:[%s2686 + $0x4] sm:$0xf]
        %v2774 = vld [vmem:[%s2686 + $0x8] sm:$0xf]
        %v2775 = vld [vmem:[%s2686 + $0xc] sm:$0x1]
        %s2776 = scalar_lea.vmem [#allocation2], 448
        %v2777 = vld [vmem:[%s2776] sm:$0xf]
        %v2778 = vld [vmem:[%s2776 + $0x4] sm:$0xf]
        %v2779 = vld [vmem:[%s2776 + $0x8] sm:$0xf]
        %v2780 = vld [vmem:[%s2776 + $0xc] sm:$0xf]
        %v2785 = vunpack.c.l.b16 %v2772
        %v2786 = vunpack.c.l.b16 %v2773
        %v2787 = vunpack.c.l.b16 %v2774
        %v2788 = vunpack.c.l.b16 %v2775
        %v2789 = vpack.c.b16 %v2786, %v2785
        %v2790 = vpack.c.b16 %v2788, %v2787
        %v2792 = vshrl.u32 %v2789, 16
        %v2794 = vshll.u32 %v2789, 16
        %v2796 = vrot.slane %v2794, 1
        %v2797 = vor.u32 %v2792, %v2796
        %v2799 = vshll.u32 %v2790, 16
        %v2801 = vrot.slane %v2799, 1
        %v2802 = vsel %vm333, %v2797, %v2801
        %v2803 = vshrl.u32 %v2790, 16
        %v2805 = vor.u32 %v2803, %v2801
        %v2810 = vunpack.c.l.b16 %v2777
        %v2811 = vunpack.c.l.b16 %v2778
        %v2812 = vunpack.c.l.b16 %v2779
        %v2813 = vunpack.c.l.b16 %v2780
        %v2814 = vpack.c.b16 %v2811, %v2810
        %v2815 = vpack.c.b16 %v2813, %v2812
        %v2819 = vsel %vm361, %v2802, 0
        %v2822 = vsel %vm361, %v2805, 0
        %2824 = vmatprep.subr.bf16.mxu0 0
        %2825 = vmatpush1.bf16.msra.mxu0 %v2814
        %2826 = vmatprep.subr.bf16.mxu0 0
        %2827 = vmatpush1.bf16.msra.mxu0 %v2815
        %2828 = vmatprep.subr.bf16.mxu0 0
        %2829 = vmatpush1.bf16.msra.mxu0 0
        %2830 = vmatprep.subr.bf16.mxu0 0
        %2831 = vmatpush1.bf16.msra.mxu0 0
        %2832 = vmatprep.subr.bf16.mxu0 0
        %2833 = vmatpush1.bf16.msra.mxu0 0
        %2834 = vmatprep.subr.bf16.mxu0 0
        %2835 = vmatpush1.bf16.msra.mxu0 0
        %2836 = vmatprep.subr.bf16.mxu0 0
        %2837 = vmatpush1.bf16.msra.mxu0 0
        %2838 = vmatprep.subr.bf16.mxu0 0
        %2839 = vmatpush1.bf16.msra.mxu0 0
        %2840 = vmatprep.subr.bf16.mxu0 0
        %2841 = vmatpush1.bf16.msra.mxu0 0
        %2842 = vmatprep.subr.bf16.mxu0 0
        %2843 = vmatpush1.bf16.msra.mxu0 0
        %2844 = vmatprep.subr.bf16.mxu0 0
        %2845 = vmatpush1.bf16.msra.mxu0 0
        %2846 = vmatprep.subr.bf16.mxu0 0
        %2847 = vmatpush1.bf16.msra.mxu0 0
        %2848 = vmatprep.subr.bf16.mxu0 0
        %2849 = vmatpush1.bf16.msra.mxu0 0
        %2850 = vmatprep.subr.bf16.mxu0 0
        %2851 = vmatpush1.bf16.msra.mxu0 0
        %2852 = vmatprep.subr.bf16.mxu0 0
        %2853 = vmatpush1.bf16.msra.mxu0 0
        %2854 = vmatprep.subr.bf16.mxu0 0
        %2855 = vmatpush1.bf16.msra.mxu0 0
        %2856 = vmatprep.mubr.bf16.mxu0 0
        %2857 = vmatmul.mubr.bf16.gmra.mrb[0].mxu0 %v2819
        %v2858 = vpop.f32.mrb[0].mxu0
        %v2859 = vadd.f32 0.0, %v2858
        %v2860 = vpop.f32.mrb[0].mxu0
        %v2861 = vpop.f32.mrb[0].mxu0
        %v2862 = vadd.f32 0.0, %v2861
        %v2863 = vpop.f32.mrb[0].mxu0
        %2864 = vmatprep.mubr.bf16.mxu0 0
        %2865 = vmatmul.mubr.bf16.gmra.mrb[0].mxu0 %v2822
        %v2866 = vpop.f32.mrb[0].mxu0
        %v2867 = vadd.f32 0.0, %v2866
        %v2868 = vpop.f32.mrb[0].mxu0
        %v2869 = vpop.f32.mrb[0].mxu0
        %v2870 = vpop.f32.mrb[0].mxu0
        %2871 = vdwg.mxu0
        %v2872 = vadd.f32 %v2769, %v2859
        %v2873 = vadd.f32 %v2770, %v2862
        %v2874 = vadd.f32 %v2771, %v2867
        %v2875 = vld [vmem:[%s2686] sm:$0xe]
        %s2876 = scalar_lea.vmem [#allocation2], 464
        %v2877 = vld [vmem:[%s2876] sm:$0xf]
        %v2878 = vld [vmem:[%s2876 + $0x4] sm:$0xf]
        %v2879 = vld [vmem:[%s2876 + $0x8] sm:$0xf]
        %v2880 = vld [vmem:[%s2876 + $0xc] sm:$0xf]
        %v2882 = vunpack.c.l.b16 %v2875
        %v2883 = vpack.c.b16 %v2786, %v2882
        %v2884 = vrot.slane %v2883, 1
        %v2885 = vrot.slane %v2790, 1
        %v2886 = vsel %vm491, %v2884, %v2885
        %v2891 = vunpack.c.l.b16 %v2877
        %v2892 = vunpack.c.l.b16 %v2878
        %v2893 = vunpack.c.l.b16 %v2879
        %v2894 = vunpack.c.l.b16 %v2880
        %v2895 = vpack.c.b16 %v2892, %v2891
        %v2896 = vpack.c.b16 %v2894, %v2893
        %v2900 = vsel %vm361, %v2886, 0
        %v2903 = vsel %vm361, %v2885, 0
        %2905 = vmatprep.subr.bf16.mxu0 0
        %2906 = vmatpush1.bf16.msra.mxu0 %v2895
        %2907 = vmatprep.subr.bf16.mxu0 0
        %2908 = vmatpush1.bf16.msra.mxu0 %v2896
        %2909 = vmatprep.subr.bf16.mxu0 0
        %2910 = vmatpush1.bf16.msra.mxu0 0
        %2911 = vmatprep.subr.bf16.mxu0 0
        %2912 = vmatpush1.bf16.msra.mxu0 0
        %2913 = vmatprep.subr.bf16.mxu0 0
        %2914 = vmatpush1.bf16.msra.mxu0 0
        %2915 = vmatprep.subr.bf16.mxu0 0
        %2916 = vmatpush1.bf16.msra.mxu0 0
        %2917 = vmatprep.subr.bf16.mxu0 0
        %2918 = vmatpush1.bf16.msra.mxu0 0
        %2919 = vmatprep.subr.bf16.mxu0 0
        %2920 = vmatpush1.bf16.msra.mxu0 0
        %2921 = vmatprep.subr.bf16.mxu0 0
        %2922 = vmatpush1.bf16.msra.mxu0 0
        %2923 = vmatprep.subr.bf16.mxu0 0
        %2924 = vmatpush1.bf16.msra.mxu0 0
        %2925 = vmatprep.subr.bf16.mxu0 0
        %2926 = vmatpush1.bf16.msra.mxu0 0
        %2927 = vmatprep.subr.bf16.mxu0 0
        %2928 = vmatpush1.bf16.msra.mxu0 0
        %2929 = vmatprep.subr.bf16.mxu0 0
        %2930 = vmatpush1.bf16.msra.mxu0 0
        %2931 = vmatprep.subr.bf16.mxu0 0
        %2932 = vmatpush1.bf16.msra.mxu0 0
        %2933 = vmatprep.subr.bf16.mxu0 0
        %2934 = vmatpush1.bf16.msra.mxu0 0
        %2935 = vmatprep.subr.bf16.mxu0 0
        %2936 = vmatpush1.bf16.msra.mxu0 0
        %2937 = vmatprep.mubr.bf16.mxu0 0
        %2938 = vmatmul.mubr.bf16.gmra.mrb[0].mxu0 %v2900
        %v2939 = vpop.f32.mrb[0].mxu0
        %v2940 = vadd.f32 0.0, %v2939
        %v2941 = vpop.f32.mrb[0].mxu0
        %v2942 = vpop.f32.mrb[0].mxu0
        %v2943 = vadd.f32 0.0, %v2942
        %v2944 = vpop.f32.mrb[0].mxu0
        %2945 = vmatprep.mubr.bf16.mxu0 0
        %2946 = vmatmul.mubr.bf16.gmra.mrb[0].mxu0 %v2903
        %v2947 = vpop.f32.mrb[0].mxu0
        %v2948 = vadd.f32 0.0, %v2947
        %v2949 = vpop.f32.mrb[0].mxu0
        %v2950 = vpop.f32.mrb[0].mxu0
        %v2951 = vpop.f32.mrb[0].mxu0
        %2952 = vdwg.mxu0
        %v2953 = vadd.f32 %v2872, %v2940
        %v2954 = vadd.f32 %v2873, %v2943
        %v2955 = vadd.f32 %v2874, %v2948
        %v2956 = vld [vmem:[%s2686] sm:$0x8]
        %v2957 = vld [vmem:[%s2686 + $0xc] sm:$0x7]
        %s2958 = scalar_lea.vmem [#allocation2], 480
        %v2959 = vld [vmem:[%s2958] sm:$0xf]
        %v2960 = vld [vmem:[%s2958 + $0x4] sm:$0xf]
        %v2961 = vld [vmem:[%s2958 + $0x8] sm:$0xf]
        %v2962 = vld [vmem:[%s2958 + $0xc] sm:$0xf]
        %v2965 = vunpack.c.l.b16 %v2956
        %v2966 = vunpack.c.l.b16 %v2957
        %v2967 = vpack.c.b16 %v2786, %v2965
        %v2968 = vpack.c.b16 %v2966, %v2787
        %v2969 = vrot.slane %v2967, 3
        %v2970 = vrot.slane %v2968, 3
        %v2971 = vsel %vm577, %v2969, %v2970
        %v2976 = vunpack.c.l.b16 %v2959
        %v2977 = vunpack.c.l.b16 %v2960
        %v2978 = vunpack.c.l.b16 %v2961
        %v2979 = vunpack.c.l.b16 %v2962
        %v2980 = vpack.c.b16 %v2977, %v2976
        %v2981 = vpack.c.b16 %v2979, %v2978
        %v2985 = vsel %vm361, %v2971, 0
        %v2988 = vsel %vm361, %v2970, 0
        %2990 = vmatprep.subr.bf16.mxu0 0
        %2991 = vmatpush1.bf16.msra.mxu0 %v2980
        %2992 = vmatprep.subr.bf16.mxu0 0
        %2993 = vmatpush1.bf16.msra.mxu0 %v2981
        %2994 = vmatprep.subr.bf16.mxu0 0
        %2995 = vmatpush1.bf16.msra.mxu0 0
        %2996 = vmatprep.subr.bf16.mxu0 0
        %2997 = vmatpush1.bf16.msra.mxu0 0
        %2998 = vmatprep.subr.bf16.mxu0 0
        %2999 = vmatpush1.bf16.msra.mxu0 0
        %3000 = vmatprep.subr.bf16.mxu0 0
        %3001 = vmatpush1.bf16.msra.mxu0 0
        %3002 = vmatprep.subr.bf16.mxu0 0
        %3003 = vmatpush1.bf16.msra.mxu0 0
        %3004 = vmatprep.subr.bf16.mxu0 0
        %3005 = vmatpush1.bf16.msra.mxu0 0
        %3006 = vmatprep.subr.bf16.mxu0 0
        %3007 = vmatpush1.bf16.msra.mxu0 0
        %3008 = vmatprep.subr.bf16.mxu0 0
        %3009 = vmatpush1.bf16.msra.mxu0 0
        %3010 = vmatprep.subr.bf16.mxu0 0
        %3011 = vmatpush1.bf16.msra.mxu0 0
        %3012 = vmatprep.subr.bf16.mxu0 0
        %3013 = vmatpush1.bf16.msra.mxu0 0
        %3014 = vmatprep.subr.bf16.mxu0 0
        %3015 = vmatpush1.bf16.msra.mxu0 0
        %3016 = vmatprep.subr.bf16.mxu0 0
        %3017 = vmatpush1.bf16.msra.mxu0 0
        %3018 = vmatprep.subr.bf16.mxu0 0
        %3019 = vmatpush1.bf16.msra.mxu0 0
        %3020 = vmatprep.subr.bf16.mxu0 0
        %3021 = vmatpush1.bf16.msra.mxu0 0
        %3022 = vmatprep.mubr.bf16.mxu0 0
        %3023 = vmatmul.mubr.bf16.gmra.mrb[0].mxu0 %v2985
        %v3024 = vpop.f32.mrb[0].mxu0
        %v3025 = vadd.f32 0.0, %v3024
        %v3026 = vpop.f32.mrb[0].mxu0
        %v3027 = vpop.f32.mrb[0].mxu0
        %v3028 = vadd.f32 0.0, %v3027
        %v3029 = vpop.f32.mrb[0].mxu0
        %3030 = vmatprep.mubr.bf16.mxu0 0
        %3031 = vmatmul.mubr.bf16.gmra.mrb[0].mxu0 %v2988
        %v3032 = vpop.f32.mrb[0].mxu0
        %v3033 = vadd.f32 0.0, %v3032
        %v3034 = vpop.f32.mrb[0].mxu0
        %v3035 = vpop.f32.mrb[0].mxu0
        %v3036 = vpop.f32.mrb[0].mxu0
        %3037 = vdwg.mxu0
        %v3038 = vadd.f32 %v2953, %v3025
        %v3039 = vadd.f32 %v2954, %v3028
        %v3040 = vadd.f32 %v2955, %v3033
        %v3041 = vld [vmem:[%s2686 + $0xc] sm:$0xf]
        %s3042 = scalar_lea.vmem [#allocation2], 496
        %v3043 = vld [vmem:[%s3042] sm:$0xf]
        %v3044 = vld [vmem:[%s3042 + $0x4] sm:$0xf]
        %v3045 = vld [vmem:[%s3042 + $0x8] sm:$0xf]
        %v3046 = vld [vmem:[%s3042 + $0xc] sm:$0xf]
        %v3048 = vunpack.c.l.b16 %v3041
        %v3049 = vpack.c.b16 %v3048, %v2787
        %v3051 = vshrl.u32 %v2967, 16
        %v3053 = vrot.slane %v3051, 3
        %v3054 = vshll.u32 %v2967, 16
        %v3056 = vrot.slane %v3054, 4
        %v3057 = vor.u32 %v3053, %v3056
        %v3059 = vshrl.u32 %v3049, 16
        %v3061 = vrot.slane %v3059, 3
        %v3062 = vshll.u32 %v3049, 16
        %v3064 = vrot.slane %v3062, 4
        %v3065 = vor.u32 %v3061, %v3064
        %v3066 = vsel %vm659, %v3057, %v3065
        %v3071 = vunpack.c.l.b16 %v3043
        %v3072 = vunpack.c.l.b16 %v3044
        %v3073 = vunpack.c.l.b16 %v3045
        %v3074 = vunpack.c.l.b16 %v3046
        %v3075 = vpack.c.b16 %v3072, %v3071
        %v3076 = vpack.c.b16 %v3074, %v3073
        %v3080 = vsel %vm361, %v3066, 0
        %v3083 = vsel %vm361, %v3065, 0
        %3085 = vmatprep.subr.bf16.mxu0 0
        %3086 = vmatpush1.bf16.msra.mxu0 %v3075
        %3087 = vmatprep.subr.bf16.mxu0 0
        %3088 = vmatpush1.bf16.msra.mxu0 %v3076
        %3089 = vmatprep.subr.bf16.mxu0 0
        %3090 = vmatpush1.bf16.msra.mxu0 0
        %3091 = vmatprep.subr.bf16.mxu0 0
        %3092 = vmatpush1.bf16.msra.mxu0 0
        %3093 = vmatprep.subr.bf16.mxu0 0
        %3094 = vmatpush1.bf16.msra.mxu0 0
        %3095 = vmatprep.subr.bf16.mxu0 0
        %3096 = vmatpush1.bf16.msra.mxu0 0
        %3097 = vmatprep.subr.bf16.mxu0 0
        %3098 = vmatpush1.bf16.msra.mxu0 0
        %3099 = vmatprep.subr.bf16.mxu0 0
        %3100 = vmatpush1.bf16.msra.mxu0 0
        %3101 = vmatprep.subr.bf16.mxu0 0
        %3102 = vmatpush1.bf16.msra.mxu0 0
        %3103 = vmatprep.subr.bf16.mxu0 0
        %3104 = vmatpush1.bf16.msra.mxu0 0
        %3105 = vmatprep.subr.bf16.mxu0 0
        %3106 = vmatpush1.bf16.msra.mxu0 0
        %3107 = vmatprep.subr.bf16.mxu0 0
        %3108 = vmatpush1.bf16.msra.mxu0 0
        %3109 = vmatprep.subr.bf16.mxu0 0
        %3110 = vmatpush1.bf16.msra.mxu0 0
        %3111 = vmatprep.subr.bf16.mxu0 0
        %3112 = vmatpush1.bf16.msra.mxu0 0
        %3113 = vmatprep.subr.bf16.mxu0 0
        %3114 = vmatpush1.bf16.msra.mxu0 0
        %3115 = vmatprep.subr.bf16.mxu0 0
        %3116 = vmatpush1.bf16.msra.mxu0 0
        %3117 = vmatprep.mubr.bf16.mxu0 0
        %3118 = vmatmul.mubr.bf16.gmra.mrb[0].mxu0 %v3080
        %v3119 = vpop.f32.mrb[0].mxu0
        %v3120 = vadd.f32 0.0, %v3119
        %v3121 = vpop.f32.mrb[0].mxu0
        %v3122 = vpop.f32.mrb[0].mxu0
        %v3123 = vadd.f32 0.0, %v3122
        %v3124 = vpop.f32.mrb[0].mxu0
        %3125 = vmatprep.mubr.bf16.mxu0 0
        %3126 = vmatmul.mubr.bf16.gmra.mrb[0].mxu0 %v3083
        %v3127 = vpop.f32.mrb[0].mxu0
        %v3128 = vadd.f32 0.0, %v3127
        %v3129 = vpop.f32.mrb[0].mxu0
        %v3130 = vpop.f32.mrb[0].mxu0
        %v3131 = vpop.f32.mrb[0].mxu0
        %3132 = vdwg.mxu0
        %v3133 = vadd.f32 %v3038, %v3120
        %v3134 = vadd.f32 %v3039, %v3123
        %v3135 = vadd.f32 %v3040, %v3128
        %s3136 = scalar_lea.vmem [#allocation2], 512
        %v3137 = vld [vmem:[%s3136] sm:$0xf]
        %v3138 = vld [vmem:[%s3136 + $0x4] sm:$0xf]
        %v3139 = vld [vmem:[%s3136 + $0x8] sm:$0xf]
        %v3140 = vld [vmem:[%s3136 + $0xc] sm:$0xf]
        %v3141 = vpack.c.b16 %v2787, %v2786
        %v3142 = vpack.c.b16 %v3048, %v3048
        %v3147 = vunpack.c.l.b16 %v3137
        %v3148 = vunpack.c.l.b16 %v3138
        %v3149 = vunpack.c.l.b16 %v3139
        %v3150 = vunpack.c.l.b16 %v3140
        %v3151 = vpack.c.b16 %v3148, %v3147
        %v3152 = vpack.c.b16 %v3150, %v3149
        %v3156 = vsel %vm361, %v3141, 0
        %v3159 = vsel %vm361, %v3142, 0
        %3161 = vmatprep.subr.bf16.mxu0 0
        %3162 = vmatpush1.bf16.msra.mxu0 %v3151
        %3163 = vmatprep.subr.bf16.mxu0 0
        %3164 = vmatpush1.bf16.msra.mxu0 %v3152
        %3165 = vmatprep.subr.bf16.mxu0 0
        %3166 = vmatpush1.bf16.msra.mxu0 0
        %3167 = vmatprep.subr.bf16.mxu0 0
        %3168 = vmatpush1.bf16.msra.mxu0 0
        %3169 = vmatprep.subr.bf16.mxu0 0
        %3170 = vmatpush1.bf16.msra.mxu0 0
        %3171 = vmatprep.subr.bf16.mxu0 0
        %3172 = vmatpush1.bf16.msra.mxu0 0
        %3173 = vmatprep.subr.bf16.mxu0 0
        %3174 = vmatpush1.bf16.msra.mxu0 0
        %3175 = vmatprep.subr.bf16.mxu0 0
        %3176 = vmatpush1.bf16.msra.mxu0 0
        %3177 = vmatprep.subr.bf16.mxu0 0
        %3178 = vmatpush1.bf16.msra.mxu0 0
        %3179 = vmatprep.subr.bf16.mxu0 0
        %3180 = vmatpush1.bf16.msra.mxu0 0
        %3181 = vmatprep.subr.bf16.mxu0 0
        %3182 = vmatpush1.bf16.msra.mxu0 0
        %3183 = vmatprep.subr.bf16.mxu0 0
        %3184 = vmatpush1.bf16.msra.mxu0 0
        %3185 = vmatprep.subr.bf16.mxu0 0
        %3186 = vmatpush1.bf16.msra.mxu0 0
        %3187 = vmatprep.subr.bf16.mxu0 0
        %3188 = vmatpush1.bf16.msra.mxu0 0
        %3189 = vmatprep.subr.bf16.mxu0 0
        %3190 = vmatpush1.bf16.msra.mxu0 0
        %3191 = vmatprep.subr.bf16.mxu0 0
        %3192 = vmatpush1.bf16.msra.mxu0 0
        %3193 = vmatprep.mubr.bf16.mxu0 0
        %3194 = vmatmul.mubr.bf16.gmra.mrb[0].mxu0 %v3156
        %v3195 = vpop.f32.mrb[0].mxu0
        %v3196 = vadd.f32 0.0, %v3195
        %v3197 = vpop.f32.mrb[0].mxu0
        %v3198 = vpop.f32.mrb[0].mxu0
        %v3199 = vadd.f32 0.0, %v3198
        %v3200 = vpop.f32.mrb[0].mxu0
        %3201 = vmatprep.mubr.bf16.mxu0 0
        %3202 = vmatmul.mubr.bf16.gmra.mrb[0].mxu0 %v3159
        %v3203 = vpop.f32.mrb[0].mxu0
        %v3204 = vadd.f32 0.0, %v3203
        %v3205 = vpop.f32.mrb[0].mxu0
        %v3206 = vpop.f32.mrb[0].mxu0
        %v3207 = vpop.f32.mrb[0].mxu0
        %3208 = vdwg.mxu0
        %v3209 = vadd.f32 %v3133, %v3196
        %v3210 = vadd.f32 %v3134, %v3199
        %v3211 = vadd.f32 %v3135, %v3204
        %v3212 = vld [vmem:[%s2686 + $0x4] sm:$0xc]
        %v3213 = vld [vmem:[%s2686 + $0x8] sm:$0xf]
        %v3214 = vld [vmem:[%s2686 + $0xc] sm:$0xf]
        %v3215 = vld [vmem:[%s2686 + $0x10] sm:$0x3]
        %s3216 = scalar_lea.vmem [#allocation2], 528
        %v3217 = vld [vmem:[%s3216] sm:$0xf]
        %v3218 = vld [vmem:[%s3216 + $0x4] sm:$0xf]
        %v3219 = vld [vmem:[%s3216 + $0x8] sm:$0xf]
        %v3220 = vld [vmem:[%s3216 + $0xc] sm:$0xf]
        %v3225 = vunpack.c.l.b16 %v3212
        %v3226 = vunpack.c.l.b16 %v3213
        %v3227 = vunpack.c.l.b16 %v3214
        %v3228 = vunpack.c.l.b16 %v3215
        %v3229 = vpack.c.b16 %v3226, %v3225
        %v3230 = vpack.c.b16 %v3228, %v3227
        %v3231 = vrot.slane %v3229, 2
        %v3232 = vrot.slane %v3230, 2
        %v3233 = vsel %vm841, %v3231, %v3232
        %v3238 = vunpack.c.l.b16 %v3217
        %v3239 = vunpack.c.l.b16 %v3218
        %v3240 = vunpack.c.l.b16 %v3219
        %v3241 = vunpack.c.l.b16 %v3220
        %v3242 = vpack.c.b16 %v3239, %v3238
        %v3243 = vpack.c.b16 %v3241, %v3240
        %v3247 = vsel %vm361, %v3233, 0
        %v3250 = vsel %vm361, %v3232, 0
        %3252 = vmatprep.subr.bf16.mxu0 0
        %3253 = vmatpush1.bf16.msra.mxu0 %v3242
        %3254 = vmatprep.subr.bf16.mxu0 0
        %3255 = vmatpush1.bf16.msra.mxu0 %v3243
        %3256 = vmatprep.subr.bf16.mxu0 0
        %3257 = vmatpush1.bf16.msra.mxu0 0
        %3258 = vmatprep.subr.bf16.mxu0 0
        %3259 = vmatpush1.bf16.msra.mxu0 0
        %3260 = vmatprep.subr.bf16.mxu0 0
        %3261 = vmatpush1.bf16.msra.mxu0 0
        %3262 = vmatprep.subr.bf16.mxu0 0
        %3263 = vmatpush1.bf16.msra.mxu0 0
        %3264 = vmatprep.subr.bf16.mxu0 0
        %3265 = vmatpush1.bf16.msra.mxu0 0
        %3266 = vmatprep.subr.bf16.mxu0 0
        %3267 = vmatpush1.bf16.msra.mxu0 0
        %3268 = vmatprep.subr.bf16.mxu0 0
        %3269 = vmatpush1.bf16.msra.mxu0 0
        %3270 = vmatprep.subr.bf16.mxu0 0
        %3271 = vmatpush1.bf16.msra.mxu0 0
        %3272 = vmatprep.subr.bf16.mxu0 0
        %3273 = vmatpush1.bf16.msra.mxu0 0
        %3274 = vmatprep.subr.bf16.mxu0 0
        %3275 = vmatpush1.bf16.msra.mxu0 0
        %3276 = vmatprep.subr.bf16.mxu0 0
        %3277 = vmatpush1.bf16.msra.mxu0 0
        %3278 = vmatprep.subr.bf16.mxu0 0
        %3279 = vmatpush1.bf16.msra.mxu0 0
        %3280 = vmatprep.subr.bf16.mxu0 0
        %3281 = vmatpush1.bf16.msra.mxu0 0
        %3282 = vmatprep.subr.bf16.mxu0 0
        %3283 = vmatpush1.bf16.msra.mxu0 0
        %3284 = vmatprep.mubr.bf16.mxu0 0
        %3285 = vmatmul.mubr.bf16.gmra.mrb[0].mxu0 %v3247
        %v3286 = vpop.f32.mrb[0].mxu0
        %v3287 = vadd.f32 0.0, %v3286
        %v3288 = vpop.f32.mrb[0].mxu0
        %v3289 = vpop.f32.mrb[0].mxu0
        %v3290 = vadd.f32 0.0, %v3289
        %v3291 = vpop.f32.mrb[0].mxu0
        %3292 = vmatprep.mubr.bf16.mxu0 0
        %3293 = vmatmul.mubr.bf16.gmra.mrb[0].mxu0 %v3250
        %v3294 = vpop.f32.mrb[0].mxu0
        %v3295 = vadd.f32 0.0, %v3294
        %v3296 = vpop.f32.mrb[0].mxu0
        %v3297 = vpop.f32.mrb[0].mxu0
        %v3298 = vpop.f32.mrb[0].mxu0
        %3299 = vdwg.mxu0
        %v3300 = vadd.f32 %v3209, %v3287
        %v3301 = vadd.f32 %v3210, %v3290
        %v3302 = vadd.f32 %v3211, %v3295
        %v3303 = vld [vmem:[%s2686 + $0x10] sm:$0x7]
        %s3304 = scalar_lea.vmem [#allocation2], 544
        %v3305 = vld [vmem:[%s3304] sm:$0xf]
        %v3306 = vld [vmem:[%s3304 + $0x4] sm:$0xf]
        %v3307 = vld [vmem:[%s3304 + $0x8] sm:$0xf]
        %v3308 = vld [vmem:[%s3304 + $0xc] sm:$0xf]
        %v3310 = vunpack.c.l.b16 %v3303
        %v3311 = vpack.c.b16 %v3310, %v3227
        %v3313 = vshrl.u32 %v3229, 16
        %v3315 = vrot.slane %v3313, 2
        %v3316 = vshll.u32 %v3229, 16
        %v3318 = vrot.slane %v3316, 3
        %v3319 = vor.u32 %v3315, %v3318
        %v3321 = vshrl.u32 %v3311, 16
        %v3323 = vrot.slane %v3321, 2
        %v3324 = vshll.u32 %v3311, 16
        %v3326 = vrot.slane %v3324, 3
        %v3327 = vor.u32 %v3323, %v3326
        %v3328 = vsel %vm923, %v3319, %v3327
        %v3333 = vunpack.c.l.b16 %v3305
        %v3334 = vunpack.c.l.b16 %v3306
        %v3335 = vunpack.c.l.b16 %v3307
        %v3336 = vunpack.c.l.b16 %v3308
        %v3337 = vpack.c.b16 %v3334, %v3333
        %v3338 = vpack.c.b16 %v3336, %v3335
        %v3342 = vsel %vm361, %v3328, 0
        %v3345 = vsel %vm361, %v3327, 0
        %3347 = vmatprep.subr.bf16.mxu0 0
        %3348 = vmatpush1.bf16.msra.mxu0 %v3337
        %3349 = vmatprep.subr.bf16.mxu0 0
        %3350 = vmatpush1.bf16.msra.mxu0 %v3338
        %3351 = vmatprep.subr.bf16.mxu0 0
        %3352 = vmatpush1.bf16.msra.mxu0 0
        %3353 = vmatprep.subr.bf16.mxu0 0
        %3354 = vmatpush1.bf16.msra.mxu0 0
        %3355 = vmatprep.subr.bf16.mxu0 0
        %3356 = vmatpush1.bf16.msra.mxu0 0
        %3357 = vmatprep.subr.bf16.mxu0 0
        %3358 = vmatpush1.bf16.msra.mxu0 0
        %3359 = vmatprep.subr.bf16.mxu0 0
        %3360 = vmatpush1.bf16.msra.mxu0 0
        %3361 = vmatprep.subr.bf16.mxu0 0
        %3362 = vmatpush1.bf16.msra.mxu0 0
        %3363 = vmatprep.subr.bf16.mxu0 0
        %3364 = vmatpush1.bf16.msra.mxu0 0
        %3365 = vmatprep.subr.bf16.mxu0 0
        %3366 = vmatpush1.bf16.msra.mxu0 0
        %3367 = vmatprep.subr.bf16.mxu0 0
        %3368 = vmatpush1.bf16.msra.mxu0 0
        %3369 = vmatprep.subr.bf16.mxu0 0
        %3370 = vmatpush1.bf16.msra.mxu0 0
        %3371 = vmatprep.subr.bf16.mxu0 0
        %3372 = vmatpush1.bf16.msra.mxu0 0
        %3373 = vmatprep.subr.bf16.mxu0 0
        %3374 = vmatpush1.bf16.msra.mxu0 0
        %3375 = vmatprep.subr.bf16.mxu0 0
        %3376 = vmatpush1.bf16.msra.mxu0 0
        %3377 = vmatprep.subr.bf16.mxu0 0
        %3378 = vmatpush1.bf16.msra.mxu0 0
        %3379 = vmatprep.mubr.bf16.mxu0 0
        %3380 = vmatmul.mubr.bf16.gmra.mrb[0].mxu0 %v3342
        %v3381 = vpop.f32.mrb[0].mxu0
        %v3382 = vadd.f32 0.0, %v3381
        %v3383 = vpop.f32.mrb[0].mxu0
        %v3384 = vpop.f32.mrb[0].mxu0
        %v3385 = vadd.f32 0.0, %v3384
        %v3386 = vpop.f32.mrb[0].mxu0
        %3387 = vmatprep.mubr.bf16.mxu0 0
        %3388 = vmatmul.mubr.bf16.gmra.mrb[0].mxu0 %v3345
        %v3389 = vpop.f32.mrb[0].mxu0
        %v3390 = vadd.f32 0.0, %v3389
        %v3391 = vpop.f32.mrb[0].mxu0
        %v3392 = vpop.f32.mrb[0].mxu0
        %v3393 = vpop.f32.mrb[0].mxu0
        %3394 = vdwg.mxu0
        %v3395 = vadd.f32 %v3300, %v3382
        %v3396 = vadd.f32 %v3301, %v3385
        %v3397 = vadd.f32 %v3302, %v3390
        %v3398 = vld [vmem:[%s2686 + $0x4] sm:$0x8]
        %s3399 = scalar_lea.vmem [#allocation2], 560
        %v3400 = vld [vmem:[%s3399] sm:$0xf]
        %v3401 = vld [vmem:[%s3399 + $0x4] sm:$0xf]
        %v3402 = vld [vmem:[%s3399 + $0x8] sm:$0xf]
        %v3403 = vld [vmem:[%s3399 + $0xc] sm:$0xf]
        %v3405 = vunpack.c.l.b16 %v3398
        %v3406 = vpack.c.b16 %v3226, %v3405
        %v3407 = vrot.slane %v3406, 3
        %v3408 = vrot.slane %v3311, 3
        %v3409 = vsel %vm577, %v3407, %v3408
        %v3414 = vunpack.c.l.b16 %v3400
        %v3415 = vunpack.c.l.b16 %v3401
        %v3416 = vunpack.c.l.b16 %v3402
        %v3417 = vunpack.c.l.b16 %v3403
        %v3418 = vpack.c.b16 %v3415, %v3414
        %v3419 = vpack.c.b16 %v3417, %v3416
        %v3423 = vsel %vm361, %v3409, 0
        %v3426 = vsel %vm361, %v3408, 0
        %3428 = vmatprep.subr.bf16.mxu0 0
        %3429 = vmatpush1.bf16.msra.mxu0 %v3418
        %3430 = vmatprep.subr.bf16.mxu0 0
        %3431 = vmatpush1.bf16.msra.mxu0 %v3419
        %3432 = vmatprep.subr.bf16.mxu0 0
        %3433 = vmatpush1.bf16.msra.mxu0 0
        %3434 = vmatprep.subr.bf16.mxu0 0
        %3435 = vmatpush1.bf16.msra.mxu0 0
        %3436 = vmatprep.subr.bf16.mxu0 0
        %3437 = vmatpush1.bf16.msra.mxu0 0
        %3438 = vmatprep.subr.bf16.mxu0 0
        %3439 = vmatpush1.bf16.msra.mxu0 0
        %3440 = vmatprep.subr.bf16.mxu0 0
        %3441 = vmatpush1.bf16.msra.mxu0 0
        %3442 = vmatprep.subr.bf16.mxu0 0
        %3443 = vmatpush1.bf16.msra.mxu0 0
        %3444 = vmatprep.subr.bf16.mxu0 0
        %3445 = vmatpush1.bf16.msra.mxu0 0
        %3446 = vmatprep.subr.bf16.mxu0 0
        %3447 = vmatpush1.bf16.msra.mxu0 0
        %3448 = vmatprep.subr.bf16.mxu0 0
        %3449 = vmatpush1.bf16.msra.mxu0 0
        %3450 = vmatprep.subr.bf16.mxu0 0
        %3451 = vmatpush1.bf16.msra.mxu0 0
        %3452 = vmatprep.subr.bf16.mxu0 0
        %3453 = vmatpush1.bf16.msra.mxu0 0
        %3454 = vmatprep.subr.bf16.mxu0 0
        %3455 = vmatpush1.bf16.msra.mxu0 0
        %3456 = vmatprep.subr.bf16.mxu0 0
        %3457 = vmatpush1.bf16.msra.mxu0 0
        %3458 = vmatprep.subr.bf16.mxu0 0
        %3459 = vmatpush1.bf16.msra.mxu0 0
        %3460 = vmatprep.mubr.bf16.mxu0 0
        %3461 = vmatmul.mubr.bf16.gmra.mrb[0].mxu0 %v3423
        %v3462 = vpop.f32.mrb[0].mxu0
        %v3463 = vadd.f32 0.0, %v3462
        %v3464 = vpop.f32.mrb[0].mxu0
        %v3465 = vpop.f32.mrb[0].mxu0
        %v3466 = vadd.f32 0.0, %v3465
        %v3467 = vpop.f32.mrb[0].mxu0
        %3468 = vmatprep.mubr.bf16.mxu0 0
        %3469 = vmatmul.mubr.bf16.gmra.mrb[0].mxu0 %v3426
        %v3470 = vpop.f32.mrb[0].mxu0
        %v3471 = vadd.f32 0.0, %v3470
        %v3472 = vpop.f32.mrb[0].mxu0
        %v3473 = vpop.f32.mrb[0].mxu0
        %v3474 = vpop.f32.mrb[0].mxu0
        %3475 = vdwg.mxu0
        %v3476 = vadd.f32 %v3395, %v3463
        %v3477 = vadd.f32 %v3396, %v3466
        %v3478 = vadd.f32 %v3397, %v3471
        %s3479 = sadd.s32 %s27, 4
        %s3480 = smul.u32 %s3479, 5
        %s3481 = smul.addr %s3480, 4
        %s3482 = scalar_lea.vmem %s305, %s3481
        %v3483 = vld [vmem:[%s3482] sm:$0xf]
        %v3484 = vld [vmem:[%s3482 + $0x4] sm:$0xf]
        %v3485 = vld [vmem:[%s3482 + $0x8] sm:$0xf]
        %s3486 = scalar_lea.vmem [#allocation2], 576
        %v3487 = vld [vmem:[%s3486] sm:$0xf]
        %v3488 = vld [vmem:[%s3486 + $0x4] sm:$0xf]
        %v3489 = vld [vmem:[%s3486 + $0x8] sm:$0xf]
        %v3490 = vld [vmem:[%s3486 + $0xc] sm:$0xf]
        %v3494 = vunpack.c.l.b16 %v3483
        %v3495 = vunpack.c.l.b16 %v3484
        %v3496 = vunpack.c.l.b16 %v3485
        %v3497 = vpack.c.b16 %v3495, %v3494
        %v3498 = vpack.c.b16 %v3496, %v3496
        %v3503 = vunpack.c.l.b16 %v3487
        %v3504 = vunpack.c.l.b16 %v3488
        %v3505 = vunpack.c.l.b16 %v3489
        %v3506 = vunpack.c.l.b16 %v3490
        %v3507 = vpack.c.b16 %v3504, %v3503
        %v3508 = vpack.c.b16 %v3506, %v3505
        %v3512 = vsel %vm361, %v3497, 0
        %v3515 = vsel %vm361, %v3498, 0
        %3517 = vmatprep.subr.bf16.mxu0 0
        %3518 = vmatpush1.bf16.msra.mxu0 %v3507
        %3519 = vmatprep.subr.bf16.mxu0 0
        %3520 = vmatpush1.bf16.msra.mxu0 %v3508
        %3521 = vmatprep.subr.bf16.mxu0 0
        %3522 = vmatpush1.bf16.msra.mxu0 0
        %3523 = vmatprep.subr.bf16.mxu0 0
        %3524 = vmatpush1.bf16.msra.mxu0 0
        %3525 = vmatprep.subr.bf16.mxu0 0
        %3526 = vmatpush1.bf16.msra.mxu0 0
        %3527 = vmatprep.subr.bf16.mxu0 0
        %3528 = vmatpush1.bf16.msra.mxu0 0
        %3529 = vmatprep.subr.bf16.mxu0 0
        %3530 = vmatpush1.bf16.msra.mxu0 0
        %3531 = vmatprep.subr.bf16.mxu0 0
        %3532 = vmatpush1.bf16.msra.mxu0 0
        %3533 = vmatprep.subr.bf16.mxu0 0
        %3534 = vmatpush1.bf16.msra.mxu0 0
        %3535 = vmatprep.subr.bf16.mxu0 0
        %3536 = vmatpush1.bf16.msra.mxu0 0
        %3537 = vmatprep.subr.bf16.mxu0 0
        %3538 = vmatpush1.bf16.msra.mxu0 0
        %3539 = vmatprep.subr.bf16.mxu0 0
        %3540 = vmatpush1.bf16.msra.mxu0 0
        %3541 = vmatprep.subr.bf16.mxu0 0
        %3542 = vmatpush1.bf16.msra.mxu0 0
        %3543 = vmatprep.subr.bf16.mxu0 0
        %3544 = vmatpush1.bf16.msra.mxu0 0
        %3545 = vmatprep.subr.bf16.mxu0 0
        %3546 = vmatpush1.bf16.msra.mxu0 0
        %3547 = vmatprep.subr.bf16.mxu0 0
        %3548 = vmatpush1.bf16.msra.mxu0 0
        %3549 = vmatprep.mubr.bf16.mxu0 0
        %3550 = vmatmul.mubr.bf16.gmra.mrb[0].mxu0 %v3512
        %v3551 = vpop.f32.mrb[0].mxu0
        %v3552 = vadd.f32 0.0, %v3551
        %v3553 = vpop.f32.mrb[0].mxu0
        %v3554 = vpop.f32.mrb[0].mxu0
        %v3555 = vadd.f32 0.0, %v3554
        %v3556 = vpop.f32.mrb[0].mxu0
        %3557 = vmatprep.mubr.bf16.mxu0 0
        %3558 = vmatmul.mubr.bf16.gmra.mrb[0].mxu0 %v3515
        %v3559 = vpop.f32.mrb[0].mxu0
        %v3560 = vadd.f32 0.0, %v3559
        %v3561 = vpop.f32.mrb[0].mxu0
        %v3562 = vpop.f32.mrb[0].mxu0
        %v3563 = vpop.f32.mrb[0].mxu0
        %3564 = vdwg.mxu0
        %v3565 = vadd.f32 %v3476, %v3552
        %v3566 = vadd.f32 %v3477, %v3555
        %v3567 = vadd.f32 %v3478, %v3560
        %v3568 = vld [vmem:[%s3482] sm:$0xf]
        %v3569 = vld [vmem:[%s3482 + $0x4] sm:$0xf]
        %v3570 = vld [vmem:[%s3482 + $0x8] sm:$0xf]
        %v3571 = vld [vmem:[%s3482 + $0xc] sm:$0x1]
        %s3572 = scalar_lea.vmem [#allocation2], 592
        %v3573 = vld [vmem:[%s3572] sm:$0xf]
        %v3574 = vld [vmem:[%s3572 + $0x4] sm:$0xf]
        %v3575 = vld [vmem:[%s3572 + $0x8] sm:$0xf]
        %v3576 = vld [vmem:[%s3572 + $0xc] sm:$0xf]
        %v3581 = vunpack.c.l.b16 %v3568
        %v3582 = vunpack.c.l.b16 %v3569
        %v3583 = vunpack.c.l.b16 %v3570
        %v3584 = vunpack.c.l.b16 %v3571
        %v3585 = vpack.c.b16 %v3582, %v3581
        %v3586 = vpack.c.b16 %v3584, %v3583
        %v3588 = vshrl.u32 %v3585, 16
        %v3590 = vshll.u32 %v3585, 16
        %v3592 = vrot.slane %v3590, 1
        %v3593 = vor.u32 %v3588, %v3592
        %v3595 = vshll.u32 %v3586, 16
        %v3597 = vrot.slane %v3595, 1
        %v3598 = vsel %vm333, %v3593, %v3597
        %v3599 = vshrl.u32 %v3586, 16
        %v3601 = vor.u32 %v3599, %v3597
        %v3606 = vunpack.c.l.b16 %v3573
        %v3607 = vunpack.c.l.b16 %v3574
        %v3608 = vunpack.c.l.b16 %v3575
        %v3609 = vunpack.c.l.b16 %v3576
        %v3610 = vpack.c.b16 %v3607, %v3606
        %v3611 = vpack.c.b16 %v3609, %v3608
        %v3615 = vsel %vm361, %v3598, 0
        %v3618 = vsel %vm361, %v3601, 0
        %3620 = vmatprep.subr.bf16.mxu0 0
        %3621 = vmatpush1.bf16.msra.mxu0 %v3610
        %3622 = vmatprep.subr.bf16.mxu0 0
        %3623 = vmatpush1.bf16.msra.mxu0 %v3611
        %3624 = vmatprep.subr.bf16.mxu0 0
        %3625 = vmatpush1.bf16.msra.mxu0 0
        %3626 = vmatprep.subr.bf16.mxu0 0
        %3627 = vmatpush1.bf16.msra.mxu0 0
        %3628 = vmatprep.subr.bf16.mxu0 0
        %3629 = vmatpush1.bf16.msra.mxu0 0
        %3630 = vmatprep.subr.bf16.mxu0 0
        %3631 = vmatpush1.bf16.msra.mxu0 0
        %3632 = vmatprep.subr.bf16.mxu0 0
        %3633 = vmatpush1.bf16.msra.mxu0 0
        %3634 = vmatprep.subr.bf16.mxu0 0
        %3635 = vmatpush1.bf16.msra.mxu0 0
        %3636 = vmatprep.subr.bf16.mxu0 0
        %3637 = vmatpush1.bf16.msra.mxu0 0
        %3638 = vmatprep.subr.bf16.mxu0 0
        %3639 = vmatpush1.bf16.msra.mxu0 0
        %3640 = vmatprep.subr.bf16.mxu0 0
        %3641 = vmatpush1.bf16.msra.mxu0 0
        %3642 = vmatprep.subr.bf16.mxu0 0
        %3643 = vmatpush1.bf16.msra.mxu0 0
        %3644 = vmatprep.subr.bf16.mxu0 0
        %3645 = vmatpush1.bf16.msra.mxu0 0
        %3646 = vmatprep.subr.bf16.mxu0 0
        %3647 = vmatpush1.bf16.msra.mxu0 0
        %3648 = vmatprep.subr.bf16.mxu0 0
        %3649 = vmatpush1.bf16.msra.mxu0 0
        %3650 = vmatprep.subr.bf16.mxu0 0
        %3651 = vmatpush1.bf16.msra.mxu0 0
        %3652 = vmatprep.mubr.bf16.mxu0 0
        %3653 = vmatmul.mubr.bf16.gmra.mrb[0].mxu0 %v3615
        %v3654 = vpop.f32.mrb[0].mxu0
        %v3655 = vadd.f32 0.0, %v3654
        %v3656 = vpop.f32.mrb[0].mxu0
        %v3657 = vpop.f32.mrb[0].mxu0
        %v3658 = vadd.f32 0.0, %v3657
        %v3659 = vpop.f32.mrb[0].mxu0
        %3660 = vmatprep.mubr.bf16.mxu0 0
        %3661 = vmatmul.mubr.bf16.gmra.mrb[0].mxu0 %v3618
        %v3662 = vpop.f32.mrb[0].mxu0
        %v3663 = vadd.f32 0.0, %v3662
        %v3664 = vpop.f32.mrb[0].mxu0
        %v3665 = vpop.f32.mrb[0].mxu0
        %v3666 = vpop.f32.mrb[0].mxu0
        %3667 = vdwg.mxu0
        %v3668 = vadd.f32 %v3565, %v3655
        %v3669 = vadd.f32 %v3566, %v3658
        %v3670 = vadd.f32 %v3567, %v3663
        %v3671 = vld [vmem:[%s3482] sm:$0xe]
        %s3672 = scalar_lea.vmem [#allocation2], 608
        %v3673 = vld [vmem:[%s3672] sm:$0xf]
        %v3674 = vld [vmem:[%s3672 + $0x4] sm:$0xf]
        %v3675 = vld [vmem:[%s3672 + $0x8] sm:$0xf]
        %v3676 = vld [vmem:[%s3672 + $0xc] sm:$0xf]
        %v3678 = vunpack.c.l.b16 %v3671
        %v3679 = vpack.c.b16 %v3582, %v3678
        %v3680 = vrot.slane %v3679, 1
        %v3681 = vrot.slane %v3586, 1
        %v3682 = vsel %vm491, %v3680, %v3681
        %v3687 = vunpack.c.l.b16 %v3673
        %v3688 = vunpack.c.l.b16 %v3674
        %v3689 = vunpack.c.l.b16 %v3675
        %v3690 = vunpack.c.l.b16 %v3676
        %v3691 = vpack.c.b16 %v3688, %v3687
        %v3692 = vpack.c.b16 %v3690, %v3689
        %v3696 = vsel %vm361, %v3682, 0
        %v3699 = vsel %vm361, %v3681, 0
        %3701 = vmatprep.subr.bf16.mxu0 0
        %3702 = vmatpush1.bf16.msra.mxu0 %v3691
        %3703 = vmatprep.subr.bf16.mxu0 0
        %3704 = vmatpush1.bf16.msra.mxu0 %v3692
        %3705 = vmatprep.subr.bf16.mxu0 0
        %3706 = vmatpush1.bf16.msra.mxu0 0
        %3707 = vmatprep.subr.bf16.mxu0 0
        %3708 = vmatpush1.bf16.msra.mxu0 0
        %3709 = vmatprep.subr.bf16.mxu0 0
        %3710 = vmatpush1.bf16.msra.mxu0 0
        %3711 = vmatprep.subr.bf16.mxu0 0
        %3712 = vmatpush1.bf16.msra.mxu0 0
        %3713 = vmatprep.subr.bf16.mxu0 0
        %3714 = vmatpush1.bf16.msra.mxu0 0
        %3715 = vmatprep.subr.bf16.mxu0 0
        %3716 = vmatpush1.bf16.msra.mxu0 0
        %3717 = vmatprep.subr.bf16.mxu0 0
        %3718 = vmatpush1.bf16.msra.mxu0 0
        %3719 = vmatprep.subr.bf16.mxu0 0
        %3720 = vmatpush1.bf16.msra.mxu0 0
        %3721 = vmatprep.subr.bf16.mxu0 0
        %3722 = vmatpush1.bf16.msra.mxu0 0
        %3723 = vmatprep.subr.bf16.mxu0 0
        %3724 = vmatpush1.bf16.msra.mxu0 0
        %3725 = vmatprep.subr.bf16.mxu0 0
        %3726 = vmatpush1.bf16.msra.mxu0 0
        %3727 = vmatprep.subr.bf16.mxu0 0
        %3728 = vmatpush1.bf16.msra.mxu0 0
        %3729 = vmatprep.subr.bf16.mxu0 0
        %3730 = vmatpush1.bf16.msra.mxu0 0
        %3731 = vmatprep.subr.bf16.mxu0 0
        %3732 = vmatpush1.bf16.msra.mxu0 0
        %3733 = vmatprep.mubr.bf16.mxu0 0
        %3734 = vmatmul.mubr.bf16.gmra.mrb[0].mxu0 %v3696
        %v3735 = vpop.f32.mrb[0].mxu0
        %v3736 = vadd.f32 0.0, %v3735
        %v3737 = vpop.f32.mrb[0].mxu0
        %v3738 = vpop.f32.mrb[0].mxu0
        %v3739 = vadd.f32 0.0, %v3738
        %v3740 = vpop.f32.mrb[0].mxu0
        %3741 = vmatprep.mubr.bf16.mxu0 0
        %3742 = vmatmul.mubr.bf16.gmra.mrb[0].mxu0 %v3699
        %v3743 = vpop.f32.mrb[0].mxu0
        %v3744 = vadd.f32 0.0, %v3743
        %v3745 = vpop.f32.mrb[0].mxu0
        %v3746 = vpop.f32.mrb[0].mxu0
        %v3747 = vpop.f32.mrb[0].mxu0
        %3748 = vdwg.mxu0
        %v3749 = vadd.f32 %v3668, %v3736
        %v3750 = vadd.f32 %v3669, %v3739
        %v3751 = vadd.f32 %v3670, %v3744
        %v3752 = vld [vmem:[%s3482] sm:$0x8]
        %v3753 = vld [vmem:[%s3482 + $0xc] sm:$0x7]
        %s3754 = scalar_lea.vmem [#allocation2], 624
        %v3755 = vld [vmem:[%s3754] sm:$0xf]
        %v3756 = vld [vmem:[%s3754 + $0x4] sm:$0xf]
        %v3757 = vld [vmem:[%s3754 + $0x8] sm:$0xf]
        %v3758 = vld [vmem:[%s3754 + $0xc] sm:$0xf]
        %v3761 = vunpack.c.l.b16 %v3752
        %v3762 = vunpack.c.l.b16 %v3753
        %v3763 = vpack.c.b16 %v3582, %v3761
        %v3764 = vpack.c.b16 %v3762, %v3583
        %v3765 = vrot.slane %v3763, 3
        %v3766 = vrot.slane %v3764, 3
        %v3767 = vsel %vm577, %v3765, %v3766
        %v3772 = vunpack.c.l.b16 %v3755
        %v3773 = vunpack.c.l.b16 %v3756
        %v3774 = vunpack.c.l.b16 %v3757
        %v3775 = vunpack.c.l.b16 %v3758
        %v3776 = vpack.c.b16 %v3773, %v3772
        %v3777 = vpack.c.b16 %v3775, %v3774
        %v3781 = vsel %vm361, %v3767, 0
        %v3784 = vsel %vm361, %v3766, 0
        %3786 = vmatprep.subr.bf16.mxu0 0
        %3787 = vmatpush1.bf16.msra.mxu0 %v3776
        %3788 = vmatprep.subr.bf16.mxu0 0
        %3789 = vmatpush1.bf16.msra.mxu0 %v3777
        %3790 = vmatprep.subr.bf16.mxu0 0
        %3791 = vmatpush1.bf16.msra.mxu0 0
        %3792 = vmatprep.subr.bf16.mxu0 0
        %3793 = vmatpush1.bf16.msra.mxu0 0
        %3794 = vmatprep.subr.bf16.mxu0 0
        %3795 = vmatpush1.bf16.msra.mxu0 0
        %3796 = vmatprep.subr.bf16.mxu0 0
        %3797 = vmatpush1.bf16.msra.mxu0 0
        %3798 = vmatprep.subr.bf16.mxu0 0
        %3799 = vmatpush1.bf16.msra.mxu0 0
        %3800 = vmatprep.subr.bf16.mxu0 0
        %3801 = vmatpush1.bf16.msra.mxu0 0
        %3802 = vmatprep.subr.bf16.mxu0 0
        %3803 = vmatpush1.bf16.msra.mxu0 0
        %3804 = vmatprep.subr.bf16.mxu0 0
        %3805 = vmatpush1.bf16.msra.mxu0 0
        %3806 = vmatprep.subr.bf16.mxu0 0
        %3807 = vmatpush1.bf16.msra.mxu0 0
        %3808 = vmatprep.subr.bf16.mxu0 0
        %3809 = vmatpush1.bf16.msra.mxu0 0
        %3810 = vmatprep.subr.bf16.mxu0 0
        %3811 = vmatpush1.bf16.msra.mxu0 0
        %3812 = vmatprep.subr.bf16.mxu0 0
        %3813 = vmatpush1.bf16.msra.mxu0 0
        %3814 = vmatprep.subr.bf16.mxu0 0
        %3815 = vmatpush1.bf16.msra.mxu0 0
        %3816 = vmatprep.subr.bf16.mxu0 0
        %3817 = vmatpush1.bf16.msra.mxu0 0
        %3818 = vmatprep.mubr.bf16.mxu0 0
        %3819 = vmatmul.mubr.bf16.gmra.mrb[0].mxu0 %v3781
        %v3820 = vpop.f32.mrb[0].mxu0
        %v3821 = vadd.f32 0.0, %v3820
        %v3822 = vpop.f32.mrb[0].mxu0
        %v3823 = vpop.f32.mrb[0].mxu0
        %v3824 = vadd.f32 0.0, %v3823
        %v3825 = vpop.f32.mrb[0].mxu0
        %3826 = vmatprep.mubr.bf16.mxu0 0
        %3827 = vmatmul.mubr.bf16.gmra.mrb[0].mxu0 %v3784
        %v3828 = vpop.f32.mrb[0].mxu0
        %v3829 = vadd.f32 0.0, %v3828
        %v3830 = vpop.f32.mrb[0].mxu0
        %v3831 = vpop.f32.mrb[0].mxu0
        %v3832 = vpop.f32.mrb[0].mxu0
        %3833 = vdwg.mxu0
        %v3834 = vadd.f32 %v3749, %v3821
        %v3835 = vadd.f32 %v3750, %v3824
        %v3836 = vadd.f32 %v3751, %v3829
        %v3837 = vld [vmem:[%s3482 + $0xc] sm:$0xf]
        %s3838 = scalar_lea.vmem [#allocation2], 640
        %v3839 = vld [vmem:[%s3838] sm:$0xf]
        %v3840 = vld [vmem:[%s3838 + $0x4] sm:$0xf]
        %v3841 = vld [vmem:[%s3838 + $0x8] sm:$0xf]
        %v3842 = vld [vmem:[%s3838 + $0xc] sm:$0xf]
        %v3844 = vunpack.c.l.b16 %v3837
        %v3845 = vpack.c.b16 %v3844, %v3583
        %v3847 = vshrl.u32 %v3763, 16
        %v3849 = vrot.slane %v3847, 3
        %v3850 = vshll.u32 %v3763, 16
        %v3852 = vrot.slane %v3850, 4
        %v3853 = vor.u32 %v3849, %v3852
        %v3855 = vshrl.u32 %v3845, 16
        %v3857 = vrot.slane %v3855, 3
        %v3858 = vshll.u32 %v3845, 16
        %v3860 = vrot.slane %v3858, 4
        %v3861 = vor.u32 %v3857, %v3860
        %v3862 = vsel %vm659, %v3853, %v3861
        %v3867 = vunpack.c.l.b16 %v3839
        %v3868 = vunpack.c.l.b16 %v3840
        %v3869 = vunpack.c.l.b16 %v3841
        %v3870 = vunpack.c.l.b16 %v3842
        %v3871 = vpack.c.b16 %v3868, %v3867
        %v3872 = vpack.c.b16 %v3870, %v3869
        %v3876 = vsel %vm361, %v3862, 0
        %v3879 = vsel %vm361, %v3861, 0
        %3881 = vmatprep.subr.bf16.mxu0 0
        %3882 = vmatpush1.bf16.msra.mxu0 %v3871
        %3883 = vmatprep.subr.bf16.mxu0 0
        %3884 = vmatpush1.bf16.msra.mxu0 %v3872
        %3885 = vmatprep.subr.bf16.mxu0 0
        %3886 = vmatpush1.bf16.msra.mxu0 0
        %3887 = vmatprep.subr.bf16.mxu0 0
        %3888 = vmatpush1.bf16.msra.mxu0 0
        %3889 = vmatprep.subr.bf16.mxu0 0
        %3890 = vmatpush1.bf16.msra.mxu0 0
        %3891 = vmatprep.subr.bf16.mxu0 0
        %3892 = vmatpush1.bf16.msra.mxu0 0
        %3893 = vmatprep.subr.bf16.mxu0 0
        %3894 = vmatpush1.bf16.msra.mxu0 0
        %3895 = vmatprep.subr.bf16.mxu0 0
        %3896 = vmatpush1.bf16.msra.mxu0 0
        %3897 = vmatprep.subr.bf16.mxu0 0
        %3898 = vmatpush1.bf16.msra.mxu0 0
        %3899 = vmatprep.subr.bf16.mxu0 0
        %3900 = vmatpush1.bf16.msra.mxu0 0
        %3901 = vmatprep.subr.bf16.mxu0 0
        %3902 = vmatpush1.bf16.msra.mxu0 0
        %3903 = vmatprep.subr.bf16.mxu0 0
        %3904 = vmatpush1.bf16.msra.mxu0 0
        %3905 = vmatprep.subr.bf16.mxu0 0
        %3906 = vmatpush1.bf16.msra.mxu0 0
        %3907 = vmatprep.subr.bf16.mxu0 0
        %3908 = vmatpush1.bf16.msra.mxu0 0
        %3909 = vmatprep.subr.bf16.mxu0 0
        %3910 = vmatpush1.bf16.msra.mxu0 0
        %3911 = vmatprep.subr.bf16.mxu0 0
        %3912 = vmatpush1.bf16.msra.mxu0 0
        %3913 = vmatprep.mubr.bf16.mxu0 0
        %3914 = vmatmul.mubr.bf16.gmra.mrb[0].mxu0 %v3876
        %v3915 = vpop.f32.mrb[0].mxu0
        %v3916 = vadd.f32 0.0, %v3915
        %v3917 = vpop.f32.mrb[0].mxu0
        %v3918 = vpop.f32.mrb[0].mxu0
        %v3919 = vadd.f32 0.0, %v3918
        %v3920 = vpop.f32.mrb[0].mxu0
        %3921 = vmatprep.mubr.bf16.mxu0 0
        %3922 = vmatmul.mubr.bf16.gmra.mrb[0].mxu0 %v3879
        %v3923 = vpop.f32.mrb[0].mxu0
        %v3924 = vadd.f32 0.0, %v3923
        %v3925 = vpop.f32.mrb[0].mxu0
        %v3926 = vpop.f32.mrb[0].mxu0
        %v3927 = vpop.f32.mrb[0].mxu0
        %3928 = vdwg.mxu0
        %v3929 = vadd.f32 %v3834, %v3916
        %v3930 = vadd.f32 %v3835, %v3919
        %v3931 = vadd.f32 %v3836, %v3924
        %s3932 = scalar_lea.vmem [#allocation2], 656
        %v3933 = vld [vmem:[%s3932] sm:$0xf]
        %v3934 = vld [vmem:[%s3932 + $0x4] sm:$0xf]
        %v3935 = vld [vmem:[%s3932 + $0x8] sm:$0xf]
        %v3936 = vld [vmem:[%s3932 + $0xc] sm:$0xf]
        %v3937 = vpack.c.b16 %v3583, %v3582
        %v3938 = vpack.c.b16 %v3844, %v3844
        %v3943 = vunpack.c.l.b16 %v3933
        %v3944 = vunpack.c.l.b16 %v3934
        %v3945 = vunpack.c.l.b16 %v3935
        %v3946 = vunpack.c.l.b16 %v3936
        %v3947 = vpack.c.b16 %v3944, %v3943
        %v3948 = vpack.c.b16 %v3946, %v3945
        %v3952 = vsel %vm361, %v3937, 0
        %v3955 = vsel %vm361, %v3938, 0
        %3957 = vmatprep.subr.bf16.mxu0 0
        %3958 = vmatpush1.bf16.msra.mxu0 %v3947
        %3959 = vmatprep.subr.bf16.mxu0 0
        %3960 = vmatpush1.bf16.msra.mxu0 %v3948
        %3961 = vmatprep.subr.bf16.mxu0 0
        %3962 = vmatpush1.bf16.msra.mxu0 0
        %3963 = vmatprep.subr.bf16.mxu0 0
        %3964 = vmatpush1.bf16.msra.mxu0 0
        %3965 = vmatprep.subr.bf16.mxu0 0
        %3966 = vmatpush1.bf16.msra.mxu0 0
        %3967 = vmatprep.subr.bf16.mxu0 0
        %3968 = vmatpush1.bf16.msra.mxu0 0
        %3969 = vmatprep.subr.bf16.mxu0 0
        %3970 = vmatpush1.bf16.msra.mxu0 0
        %3971 = vmatprep.subr.bf16.mxu0 0
        %3972 = vmatpush1.bf16.msra.mxu0 0
        %3973 = vmatprep.subr.bf16.mxu0 0
        %3974 = vmatpush1.bf16.msra.mxu0 0
        %3975 = vmatprep.subr.bf16.mxu0 0
        %3976 = vmatpush1.bf16.msra.mxu0 0
        %3977 = vmatprep.subr.bf16.mxu0 0
        %3978 = vmatpush1.bf16.msra.mxu0 0
        %3979 = vmatprep.subr.bf16.mxu0 0
        %3980 = vmatpush1.bf16.msra.mxu0 0
        %3981 = vmatprep.subr.bf16.mxu0 0
        %3982 = vmatpush1.bf16.msra.mxu0 0
        %3983 = vmatprep.subr.bf16.mxu0 0
        %3984 = vmatpush1.bf16.msra.mxu0 0
        %3985 = vmatprep.subr.bf16.mxu0 0
        %3986 = vmatpush1.bf16.msra.mxu0 0
        %3987 = vmatprep.subr.bf16.mxu0 0
        %3988 = vmatpush1.bf16.msra.mxu0 0
        %3989 = vmatprep.mubr.bf16.mxu0 0
        %3990 = vmatmul.mubr.bf16.gmra.mrb[0].mxu0 %v3952
        %v3991 = vpop.f32.mrb[0].mxu0
        %v3992 = vadd.f32 0.0, %v3991
        %v3993 = vpop.f32.mrb[0].mxu0
        %v3994 = vpop.f32.mrb[0].mxu0
        %v3995 = vadd.f32 0.0, %v3994
        %v3996 = vpop.f32.mrb[0].mxu0
        %3997 = vmatprep.mubr.bf16.mxu0 0
        %3998 = vmatmul.mubr.bf16.gmra.mrb[0].mxu0 %v3955
        %v3999 = vpop.f32.mrb[0].mxu0
        %v4000 = vadd.f32 0.0, %v3999
        %v4001 = vpop.f32.mrb[0].mxu0
        %v4002 = vpop.f32.mrb[0].mxu0
        %v4003 = vpop.f32.mrb[0].mxu0
        %4004 = vdwg.mxu0
        %v4005 = vadd.f32 %v3929, %v3992
        %v4006 = vadd.f32 %v3930, %v3995
        %v4007 = vadd.f32 %v3931, %v4000
        %v4008 = vld [vmem:[%s3482 + $0x4] sm:$0xc]
        %v4009 = vld [vmem:[%s3482 + $0x8] sm:$0xf]
        %v4010 = vld [vmem:[%s3482 + $0xc] sm:$0xf]
        %v4011 = vld [vmem:[%s3482 + $0x10] sm:$0x3]
        %s4012 = scalar_lea.vmem [#allocation2], 672
        %v4013 = vld [vmem:[%s4012] sm:$0xf]
        %v4014 = vld [vmem:[%s4012 + $0x4] sm:$0xf]
        %v4015 = vld [vmem:[%s4012 + $0x8] sm:$0xf]
        %v4016 = vld [vmem:[%s4012 + $0xc] sm:$0xf]
        %v4021 = vunpack.c.l.b16 %v4008
        %v4022 = vunpack.c.l.b16 %v4009
        %v4023 = vunpack.c.l.b16 %v4010
        %v4024 = vunpack.c.l.b16 %v4011
        %v4025 = vpack.c.b16 %v4022, %v4021
        %v4026 = vpack.c.b16 %v4024, %v4023
        %v4027 = vrot.slane %v4025, 2
        %v4028 = vrot.slane %v4026, 2
        %v4029 = vsel %vm841, %v4027, %v4028
        %v4034 = vunpack.c.l.b16 %v4013
        %v4035 = vunpack.c.l.b16 %v4014
        %v4036 = vunpack.c.l.b16 %v4015
        %v4037 = vunpack.c.l.b16 %v4016
        %v4038 = vpack.c.b16 %v4035, %v4034
        %v4039 = vpack.c.b16 %v4037, %v4036
        %v4043 = vsel %vm361, %v4029, 0
        %v4046 = vsel %vm361, %v4028, 0
        %4048 = vmatprep.subr.bf16.mxu0 0
        %4049 = vmatpush1.bf16.msra.mxu0 %v4038
        %4050 = vmatprep.subr.bf16.mxu0 0
        %4051 = vmatpush1.bf16.msra.mxu0 %v4039
        %4052 = vmatprep.subr.bf16.mxu0 0
        %4053 = vmatpush1.bf16.msra.mxu0 0
        %4054 = vmatprep.subr.bf16.mxu0 0
        %4055 = vmatpush1.bf16.msra.mxu0 0
        %4056 = vmatprep.subr.bf16.mxu0 0
        %4057 = vmatpush1.bf16.msra.mxu0 0
        %4058 = vmatprep.subr.bf16.mxu0 0
        %4059 = vmatpush1.bf16.msra.mxu0 0
        %4060 = vmatprep.subr.bf16.mxu0 0
        %4061 = vmatpush1.bf16.msra.mxu0 0
        %4062 = vmatprep.subr.bf16.mxu0 0
        %4063 = vmatpush1.bf16.msra.mxu0 0
        %4064 = vmatprep.subr.bf16.mxu0 0
        %4065 = vmatpush1.bf16.msra.mxu0 0
        %4066 = vmatprep.subr.bf16.mxu0 0
        %4067 = vmatpush1.bf16.msra.mxu0 0
        %4068 = vmatprep.subr.bf16.mxu0 0
        %4069 = vmatpush1.bf16.msra.mxu0 0
        %4070 = vmatprep.subr.bf16.mxu0 0
        %4071 = vmatpush1.bf16.msra.mxu0 0
        %4072 = vmatprep.subr.bf16.mxu0 0
        %4073 = vmatpush1.bf16.msra.mxu0 0
        %4074 = vmatprep.subr.bf16.mxu0 0
        %4075 = vmatpush1.bf16.msra.mxu0 0
        %4076 = vmatprep.subr.bf16.mxu0 0
        %4077 = vmatpush1.bf16.msra.mxu0 0
        %4078 = vmatprep.subr.bf16.mxu0 0
        %4079 = vmatpush1.bf16.msra.mxu0 0
        %4080 = vmatprep.mubr.bf16.mxu0 0
        %4081 = vmatmul.mubr.bf16.gmra.mrb[0].mxu0 %v4043
        %v4082 = vpop.f32.mrb[0].mxu0
        %v4083 = vadd.f32 0.0, %v4082
        %v4084 = vpop.f32.mrb[0].mxu0
        %v4085 = vpop.f32.mrb[0].mxu0
        %v4086 = vadd.f32 0.0, %v4085
        %v4087 = vpop.f32.mrb[0].mxu0
        %4088 = vmatprep.mubr.bf16.mxu0 0
        %4089 = vmatmul.mubr.bf16.gmra.mrb[0].mxu0 %v4046
        %v4090 = vpop.f32.mrb[0].mxu0
        %v4091 = vadd.f32 0.0, %v4090
        %v4092 = vpop.f32.mrb[0].mxu0
        %v4093 = vpop.f32.mrb[0].mxu0
        %v4094 = vpop.f32.mrb[0].mxu0
        %4095 = vdwg.mxu0
        %v4096 = vadd.f32 %v4005, %v4083
        %v4097 = vadd.f32 %v4006, %v4086
        %v4098 = vadd.f32 %v4007, %v4091
        %v4099 = vld [vmem:[%s3482 + $0x10] sm:$0x7]
        %s4100 = scalar_lea.vmem [#allocation2], 688
        %v4101 = vld [vmem:[%s4100] sm:$0xf]
        %v4102 = vld [vmem:[%s4100 + $0x4] sm:$0xf]
        %v4103 = vld [vmem:[%s4100 + $0x8] sm:$0xf]
        %v4104 = vld [vmem:[%s4100 + $0xc] sm:$0xf]
        %v4106 = vunpack.c.l.b16 %v4099
        %v4107 = vpack.c.b16 %v4106, %v4023
        %v4109 = vshrl.u32 %v4025, 16
        %v4111 = vrot.slane %v4109, 2
        %v4112 = vshll.u32 %v4025, 16
        %v4114 = vrot.slane %v4112, 3
        %v4115 = vor.u32 %v4111, %v4114
        %v4117 = vshrl.u32 %v4107, 16
        %v4119 = vrot.slane %v4117, 2
        %v4120 = vshll.u32 %v4107, 16
        %v4122 = vrot.slane %v4120, 3
        %v4123 = vor.u32 %v4119, %v4122
        %v4124 = vsel %vm923, %v4115, %v4123
        %v4129 = vunpack.c.l.b16 %v4101
        %v4130 = vunpack.c.l.b16 %v4102
        %v4131 = vunpack.c.l.b16 %v4103
        %v4132 = vunpack.c.l.b16 %v4104
        %v4133 = vpack.c.b16 %v4130, %v4129
        %v4134 = vpack.c.b16 %v4132, %v4131
        %v4138 = vsel %vm361, %v4124, 0
        %v4141 = vsel %vm361, %v4123, 0
        %4143 = vmatprep.subr.bf16.mxu0 0
        %4144 = vmatpush1.bf16.msra.mxu0 %v4133
        %4145 = vmatprep.subr.bf16.mxu0 0
        %4146 = vmatpush1.bf16.msra.mxu0 %v4134
        %4147 = vmatprep.subr.bf16.mxu0 0
        %4148 = vmatpush1.bf16.msra.mxu0 0
        %4149 = vmatprep.subr.bf16.mxu0 0
        %4150 = vmatpush1.bf16.msra.mxu0 0
        %4151 = vmatprep.subr.bf16.mxu0 0
        %4152 = vmatpush1.bf16.msra.mxu0 0
        %4153 = vmatprep.subr.bf16.mxu0 0
        %4154 = vmatpush1.bf16.msra.mxu0 0
        %4155 = vmatprep.subr.bf16.mxu0 0
        %4156 = vmatpush1.bf16.msra.mxu0 0
        %4157 = vmatprep.subr.bf16.mxu0 0
        %4158 = vmatpush1.bf16.msra.mxu0 0
        %4159 = vmatprep.subr.bf16.mxu0 0
        %4160 = vmatpush1.bf16.msra.mxu0 0
        %4161 = vmatprep.subr.bf16.mxu0 0
        %4162 = vmatpush1.bf16.msra.mxu0 0
        %4163 = vmatprep.subr.bf16.mxu0 0
        %4164 = vmatpush1.bf16.msra.mxu0 0
        %4165 = vmatprep.subr.bf16.mxu0 0
        %4166 = vmatpush1.bf16.msra.mxu0 0
        %4167 = vmatprep.subr.bf16.mxu0 0
        %4168 = vmatpush1.bf16.msra.mxu0 0
        %4169 = vmatprep.subr.bf16.mxu0 0
        %4170 = vmatpush1.bf16.msra.mxu0 0
        %4171 = vmatprep.subr.bf16.mxu0 0
        %4172 = vmatpush1.bf16.msra.mxu0 0
        %4173 = vmatprep.subr.bf16.mxu0 0
        %4174 = vmatpush1.bf16.msra.mxu0 0
        %4175 = vmatprep.mubr.bf16.mxu0 0
        %4176 = vmatmul.mubr.bf16.gmra.mrb[0].mxu0 %v4138
        %v4177 = vpop.f32.mrb[0].mxu0
        %v4178 = vadd.f32 0.0, %v4177
        %v4179 = vpop.f32.mrb[0].mxu0
        %v4180 = vpop.f32.mrb[0].mxu0
        %v4181 = vadd.f32 0.0, %v4180
        %v4182 = vpop.f32.mrb[0].mxu0
        %4183 = vmatprep.mubr.bf16.mxu0 0
        %4184 = vmatmul.mubr.bf16.gmra.mrb[0].mxu0 %v4141
        %v4185 = vpop.f32.mrb[0].mxu0
        %v4186 = vadd.f32 0.0, %v4185
        %v4187 = vpop.f32.mrb[0].mxu0
        %v4188 = vpop.f32.mrb[0].mxu0
        %v4189 = vpop.f32.mrb[0].mxu0
        %4190 = vdwg.mxu0
        %v4191 = vadd.f32 %v4096, %v4178
        %v4192 = vadd.f32 %v4097, %v4181
        %v4193 = vadd.f32 %v4098, %v4186
        %v4194 = vld [vmem:[%s3482 + $0x4] sm:$0x8]
        %s4195 = scalar_lea.vmem [#allocation2], 704
        %v4196 = vld [vmem:[%s4195] sm:$0xf]
        %v4197 = vld [vmem:[%s4195 + $0x4] sm:$0xf]
        %v4198 = vld [vmem:[%s4195 + $0x8] sm:$0xf]
        %v4199 = vld [vmem:[%s4195 + $0xc] sm:$0xf]
        %v4201 = vunpack.c.l.b16 %v4194
        %v4202 = vpack.c.b16 %v4022, %v4201
        %v4203 = vrot.slane %v4202, 3
        %v4204 = vrot.slane %v4107, 3
        %v4205 = vsel %vm577, %v4203, %v4204
        %v4210 = vunpack.c.l.b16 %v4196
        %v4211 = vunpack.c.l.b16 %v4197
        %v4212 = vunpack.c.l.b16 %v4198
        %v4213 = vunpack.c.l.b16 %v4199
        %v4214 = vpack.c.b16 %v4211, %v4210
        %v4215 = vpack.c.b16 %v4213, %v4212
        %v4219 = vsel %vm361, %v4205, 0
        %v4222 = vsel %vm361, %v4204, 0
        %4224 = vmatprep.subr.bf16.mxu0 0
        %4225 = vmatpush1.bf16.msra.mxu0 %v4214
        %4226 = vmatprep.subr.bf16.mxu0 0
        %4227 = vmatpush1.bf16.msra.mxu0 %v4215
        %4228 = vmatprep.subr.bf16.mxu0 0
        %4229 = vmatpush1.bf16.msra.mxu0 0
        %4230 = vmatprep.subr.bf16.mxu0 0
        %4231 = vmatpush1.bf16.msra.mxu0 0
        %4232 = vmatprep.subr.bf16.mxu0 0
        %4233 = vmatpush1.bf16.msra.mxu0 0
        %4234 = vmatprep.subr.bf16.mxu0 0
        %4235 = vmatpush1.bf16.msra.mxu0 0
        %4236 = vmatprep.subr.bf16.mxu0 0
        %4237 = vmatpush1.bf16.msra.mxu0 0
        %4238 = vmatprep.subr.bf16.mxu0 0
        %4239 = vmatpush1.bf16.msra.mxu0 0
        %4240 = vmatprep.subr.bf16.mxu0 0
        %4241 = vmatpush1.bf16.msra.mxu0 0
        %4242 = vmatprep.subr.bf16.mxu0 0
        %4243 = vmatpush1.bf16.msra.mxu0 0
        %4244 = vmatprep.subr.bf16.mxu0 0
        %4245 = vmatpush1.bf16.msra.mxu0 0
        %4246 = vmatprep.subr.bf16.mxu0 0
        %4247 = vmatpush1.bf16.msra.mxu0 0
        %4248 = vmatprep.subr.bf16.mxu0 0
        %4249 = vmatpush1.bf16.msra.mxu0 0
        %4250 = vmatprep.subr.bf16.mxu0 0
        %4251 = vmatpush1.bf16.msra.mxu0 0
        %4252 = vmatprep.subr.bf16.mxu0 0
        %4253 = vmatpush1.bf16.msra.mxu0 0
        %4254 = vmatprep.subr.bf16.mxu0 0
        %4255 = vmatpush1.bf16.msra.mxu0 0
        %4256 = vmatprep.mubr.bf16.mxu0 0
        %4257 = vmatmul.mubr.bf16.gmra.mrb[0].mxu0 %v4219
        %v4258 = vpop.f32.mrb[0].mxu0
        %v4259 = vadd.f32 0.0, %v4258
        %v4260 = vpop.f32.mrb[0].mxu0
        %v4261 = vpop.f32.mrb[0].mxu0
        %v4262 = vadd.f32 0.0, %v4261
        %v4263 = vpop.f32.mrb[0].mxu0
        %4264 = vmatprep.mubr.bf16.mxu0 0
        %4265 = vmatmul.mubr.bf16.gmra.mrb[0].mxu0 %v4222
        %v4266 = vpop.f32.mrb[0].mxu0
        %v4267 = vadd.f32 0.0, %v4266
        %v4268 = vpop.f32.mrb[0].mxu0
        %v4269 = vpop.f32.mrb[0].mxu0
        %v4270 = vpop.f32.mrb[0].mxu0
        %4271 = vdwg.mxu0
        %v4272 = vadd.f32 %v4191, %v4259
        %v4273 = vadd.f32 %v4192, %v4262
        %v4274 = vadd.f32 %v4193, %v4267
        %s4275 = sadd.s32 %s27, 5
        %s4276 = smul.u32 %s4275, 5
        %s4277 = smul.addr %s4276, 4
        %s4278 = scalar_lea.vmem %s305, %s4277
        %v4279 = vld [vmem:[%s4278] sm:$0xf]
        %v4280 = vld [vmem:[%s4278 + $0x4] sm:$0xf]
        %v4281 = vld [vmem:[%s4278 + $0x8] sm:$0xf]
        %s4282 = scalar_lea.vmem [#allocation2], 720
        %v4283 = vld [vmem:[%s4282] sm:$0xf]
        %v4284 = vld [vmem:[%s4282 + $0x4] sm:$0xf]
        %v4285 = vld [vmem:[%s4282 + $0x8] sm:$0xf]
        %v4286 = vld [vmem:[%s4282 + $0xc] sm:$0xf]
        %v4290 = vunpack.c.l.b16 %v4279
        %v4291 = vunpack.c.l.b16 %v4280
        %v4292 = vunpack.c.l.b16 %v4281
        %v4293 = vpack.c.b16 %v4291, %v4290
        %v4294 = vpack.c.b16 %v4292, %v4292
        %v4299 = vunpack.c.l.b16 %v4283
        %v4300 = vunpack.c.l.b16 %v4284
        %v4301 = vunpack.c.l.b16 %v4285
        %v4302 = vunpack.c.l.b16 %v4286
        %v4303 = vpack.c.b16 %v4300, %v4299
        %v4304 = vpack.c.b16 %v4302, %v4301
        %v4308 = vsel %vm361, %v4293, 0
        %v4311 = vsel %vm361, %v4294, 0
        %4313 = vmatprep.subr.bf16.mxu0 0
        %4314 = vmatpush1.bf16.msra.mxu0 %v4303
        %4315 = vmatprep.subr.bf16.mxu0 0
        %4316 = vmatpush1.bf16.msra.mxu0 %v4304
        %4317 = vmatprep.subr.bf16.mxu0 0
        %4318 = vmatpush1.bf16.msra.mxu0 0
        %4319 = vmatprep.subr.bf16.mxu0 0
        %4320 = vmatpush1.bf16.msra.mxu0 0
        %4321 = vmatprep.subr.bf16.mxu0 0
        %4322 = vmatpush1.bf16.msra.mxu0 0
        %4323 = vmatprep.subr.bf16.mxu0 0
        %4324 = vmatpush1.bf16.msra.mxu0 0
        %4325 = vmatprep.subr.bf16.mxu0 0
        %4326 = vmatpush1.bf16.msra.mxu0 0
        %4327 = vmatprep.subr.bf16.mxu0 0
        %4328 = vmatpush1.bf16.msra.mxu0 0
        %4329 = vmatprep.subr.bf16.mxu0 0
        %4330 = vmatpush1.bf16.msra.mxu0 0
        %4331 = vmatprep.subr.bf16.mxu0 0
        %4332 = vmatpush1.bf16.msra.mxu0 0
        %4333 = vmatprep.subr.bf16.mxu0 0
        %4334 = vmatpush1.bf16.msra.mxu0 0
        %4335 = vmatprep.subr.bf16.mxu0 0
        %4336 = vmatpush1.bf16.msra.mxu0 0
        %4337 = vmatprep.subr.bf16.mxu0 0
        %4338 = vmatpush1.bf16.msra.mxu0 0
        %4339 = vmatprep.subr.bf16.mxu0 0
        %4340 = vmatpush1.bf16.msra.mxu0 0
        %4341 = vmatprep.subr.bf16.mxu0 0
        %4342 = vmatpush1.bf16.msra.mxu0 0
        %4343 = vmatprep.subr.bf16.mxu0 0
        %4344 = vmatpush1.bf16.msra.mxu0 0
        %4345 = vmatprep.mubr.bf16.mxu0 0
        %4346 = vmatmul.mubr.bf16.gmra.mrb[0].mxu0 %v4308
        %v4347 = vpop.f32.mrb[0].mxu0
        %v4348 = vadd.f32 0.0, %v4347
        %v4349 = vpop.f32.mrb[0].mxu0
        %v4350 = vpop.f32.mrb[0].mxu0
        %v4351 = vadd.f32 0.0, %v4350
        %v4352 = vpop.f32.mrb[0].mxu0
        %4353 = vmatprep.mubr.bf16.mxu0 0
        %4354 = vmatmul.mubr.bf16.gmra.mrb[0].mxu0 %v4311
        %v4355 = vpop.f32.mrb[0].mxu0
        %v4356 = vadd.f32 0.0, %v4355
        %v4357 = vpop.f32.mrb[0].mxu0
        %v4358 = vpop.f32.mrb[0].mxu0
        %v4359 = vpop.f32.mrb[0].mxu0
        %4360 = vdwg.mxu0
        %v4361 = vadd.f32 %v4272, %v4348
        %v4362 = vadd.f32 %v4273, %v4351
        %v4363 = vadd.f32 %v4274, %v4356
        %v4364 = vld [vmem:[%s4278] sm:$0xf]
        %v4365 = vld [vmem:[%s4278 + $0x4] sm:$0xf]
        %v4366 = vld [vmem:[%s4278 + $0x8] sm:$0xf]
        %v4367 = vld [vmem:[%s4278 + $0xc] sm:$0x1]
        %s4368 = scalar_lea.vmem [#allocation2], 736
        %v4369 = vld [vmem:[%s4368] sm:$0xf]
        %v4370 = vld [vmem:[%s4368 + $0x4] sm:$0xf]
        %v4371 = vld [vmem:[%s4368 + $0x8] sm:$0xf]
        %v4372 = vld [vmem:[%s4368 + $0xc] sm:$0xf]
        %v4377 = vunpack.c.l.b16 %v4364
        %v4378 = vunpack.c.l.b16 %v4365
        %v4379 = vunpack.c.l.b16 %v4366
        %v4380 = vunpack.c.l.b16 %v4367
        %v4381 = vpack.c.b16 %v4378, %v4377
        %v4382 = vpack.c.b16 %v4380, %v4379
        %v4384 = vshrl.u32 %v4381, 16
        %v4386 = vshll.u32 %v4381, 16
        %v4388 = vrot.slane %v4386, 1
        %v4389 = vor.u32 %v4384, %v4388
        %v4391 = vshll.u32 %v4382, 16
        %v4393 = vrot.slane %v4391, 1
        %v4394 = vsel %vm333, %v4389, %v4393
        %v4395 = vshrl.u32 %v4382, 16
        %v4397 = vor.u32 %v4395, %v4393
        %v4402 = vunpack.c.l.b16 %v4369
        %v4403 = vunpack.c.l.b16 %v4370
        %v4404 = vunpack.c.l.b16 %v4371
        %v4405 = vunpack.c.l.b16 %v4372
        %v4406 = vpack.c.b16 %v4403, %v4402
        %v4407 = vpack.c.b16 %v4405, %v4404
        %v4411 = vsel %vm361, %v4394, 0
        %v4414 = vsel %vm361, %v4397, 0
        %4416 = vmatprep.subr.bf16.mxu0 0
        %4417 = vmatpush1.bf16.msra.mxu0 %v4406
        %4418 = vmatprep.subr.bf16.mxu0 0
        %4419 = vmatpush1.bf16.msra.mxu0 %v4407
        %4420 = vmatprep.subr.bf16.mxu0 0
        %4421 = vmatpush1.bf16.msra.mxu0 0
        %4422 = vmatprep.subr.bf16.mxu0 0
        %4423 = vmatpush1.bf16.msra.mxu0 0
        %4424 = vmatprep.subr.bf16.mxu0 0
        %4425 = vmatpush1.bf16.msra.mxu0 0
        %4426 = vmatprep.subr.bf16.mxu0 0
        %4427 = vmatpush1.bf16.msra.mxu0 0
        %4428 = vmatprep.subr.bf16.mxu0 0
        %4429 = vmatpush1.bf16.msra.mxu0 0
        %4430 = vmatprep.subr.bf16.mxu0 0
        %4431 = vmatpush1.bf16.msra.mxu0 0
        %4432 = vmatprep.subr.bf16.mxu0 0
        %4433 = vmatpush1.bf16.msra.mxu0 0
        %4434 = vmatprep.subr.bf16.mxu0 0
        %4435 = vmatpush1.bf16.msra.mxu0 0
        %4436 = vmatprep.subr.bf16.mxu0 0
        %4437 = vmatpush1.bf16.msra.mxu0 0
        %4438 = vmatprep.subr.bf16.mxu0 0
        %4439 = vmatpush1.bf16.msra.mxu0 0
        %4440 = vmatprep.subr.bf16.mxu0 0
        %4441 = vmatpush1.bf16.msra.mxu0 0
        %4442 = vmatprep.subr.bf16.mxu0 0
        %4443 = vmatpush1.bf16.msra.mxu0 0
        %4444 = vmatprep.subr.bf16.mxu0 0
        %4445 = vmatpush1.bf16.msra.mxu0 0
        %4446 = vmatprep.subr.bf16.mxu0 0
        %4447 = vmatpush1.bf16.msra.mxu0 0
        %4448 = vmatprep.mubr.bf16.mxu0 0
        %4449 = vmatmul.mubr.bf16.gmra.mrb[0].mxu0 %v4411
        %v4450 = vpop.f32.mrb[0].mxu0
        %v4451 = vadd.f32 0.0, %v4450
        %v4452 = vpop.f32.mrb[0].mxu0
        %v4453 = vpop.f32.mrb[0].mxu0
        %v4454 = vadd.f32 0.0, %v4453
        %v4455 = vpop.f32.mrb[0].mxu0
        %4456 = vmatprep.mubr.bf16.mxu0 0
        %4457 = vmatmul.mubr.bf16.gmra.mrb[0].mxu0 %v4414
        %v4458 = vpop.f32.mrb[0].mxu0
        %v4459 = vadd.f32 0.0, %v4458
        %v4460 = vpop.f32.mrb[0].mxu0
        %v4461 = vpop.f32.mrb[0].mxu0
        %v4462 = vpop.f32.mrb[0].mxu0
        %4463 = vdwg.mxu0
        %v4464 = vadd.f32 %v4361, %v4451
        %v4465 = vadd.f32 %v4362, %v4454
        %v4466 = vadd.f32 %v4363, %v4459
        %v4467 = vld [vmem:[%s4278] sm:$0xe]
        %s4468 = scalar_lea.vmem [#allocation2], 752
        %v4469 = vld [vmem:[%s4468] sm:$0xf]
        %v4470 = vld [vmem:[%s4468 + $0x4] sm:$0xf]
        %v4471 = vld [vmem:[%s4468 + $0x8] sm:$0xf]
        %v4472 = vld [vmem:[%s4468 + $0xc] sm:$0xf]
        %v4474 = vunpack.c.l.b16 %v4467
        %v4475 = vpack.c.b16 %v4378, %v4474
        %v4476 = vrot.slane %v4475, 1
        %v4477 = vrot.slane %v4382, 1
        %v4478 = vsel %vm491, %v4476, %v4477
        %v4483 = vunpack.c.l.b16 %v4469
        %v4484 = vunpack.c.l.b16 %v4470
        %v4485 = vunpack.c.l.b16 %v4471
        %v4486 = vunpack.c.l.b16 %v4472
        %v4487 = vpack.c.b16 %v4484, %v4483
        %v4488 = vpack.c.b16 %v4486, %v4485
        %v4492 = vsel %vm361, %v4478, 0
        %v4495 = vsel %vm361, %v4477, 0
        %4497 = vmatprep.subr.bf16.mxu0 0
        %4498 = vmatpush1.bf16.msra.mxu0 %v4487
        %4499 = vmatprep.subr.bf16.mxu0 0
        %4500 = vmatpush1.bf16.msra.mxu0 %v4488
        %4501 = vmatprep.subr.bf16.mxu0 0
        %4502 = vmatpush1.bf16.msra.mxu0 0
        %4503 = vmatprep.subr.bf16.mxu0 0
        %4504 = vmatpush1.bf16.msra.mxu0 0
        %4505 = vmatprep.subr.bf16.mxu0 0
        %4506 = vmatpush1.bf16.msra.mxu0 0
        %4507 = vmatprep.subr.bf16.mxu0 0
        %4508 = vmatpush1.bf16.msra.mxu0 0
        %4509 = vmatprep.subr.bf16.mxu0 0
        %4510 = vmatpush1.bf16.msra.mxu0 0
        %4511 = vmatprep.subr.bf16.mxu0 0
        %4512 = vmatpush1.bf16.msra.mxu0 0
        %4513 = vmatprep.subr.bf16.mxu0 0
        %4514 = vmatpush1.bf16.msra.mxu0 0
        %4515 = vmatprep.subr.bf16.mxu0 0
        %4516 = vmatpush1.bf16.msra.mxu0 0
        %4517 = vmatprep.subr.bf16.mxu0 0
        %4518 = vmatpush1.bf16.msra.mxu0 0
        %4519 = vmatprep.subr.bf16.mxu0 0
        %4520 = vmatpush1.bf16.msra.mxu0 0
        %4521 = vmatprep.subr.bf16.mxu0 0
        %4522 = vmatpush1.bf16.msra.mxu0 0
        %4523 = vmatprep.subr.bf16.mxu0 0
        %4524 = vmatpush1.bf16.msra.mxu0 0
        %4525 = vmatprep.subr.bf16.mxu0 0
        %4526 = vmatpush1.bf16.msra.mxu0 0
        %4527 = vmatprep.subr.bf16.mxu0 0
        %4528 = vmatpush1.bf16.msra.mxu0 0
        %4529 = vmatprep.mubr.bf16.mxu0 0
        %4530 = vmatmul.mubr.bf16.gmra.mrb[0].mxu0 %v4492
        %v4531 = vpop.f32.mrb[0].mxu0
        %v4532 = vadd.f32 0.0, %v4531
        %v4533 = vpop.f32.mrb[0].mxu0
        %v4534 = vpop.f32.mrb[0].mxu0
        %v4535 = vadd.f32 0.0, %v4534
        %v4536 = vpop.f32.mrb[0].mxu0
        %4537 = vmatprep.mubr.bf16.mxu0 0
        %4538 = vmatmul.mubr.bf16.gmra.mrb[0].mxu0 %v4495
        %v4539 = vpop.f32.mrb[0].mxu0
        %v4540 = vadd.f32 0.0, %v4539
        %v4541 = vpop.f32.mrb[0].mxu0
        %v4542 = vpop.f32.mrb[0].mxu0
        %v4543 = vpop.f32.mrb[0].mxu0
        %4544 = vdwg.mxu0
        %v4545 = vadd.f32 %v4464, %v4532
        %v4546 = vadd.f32 %v4465, %v4535
        %v4547 = vadd.f32 %v4466, %v4540
        %v4548 = vld [vmem:[%s4278] sm:$0x8]
        %v4549 = vld [vmem:[%s4278 + $0xc] sm:$0x7]
        %s4550 = scalar_lea.vmem [#allocation2], 768
        %v4551 = vld [vmem:[%s4550] sm:$0xf]
        %v4552 = vld [vmem:[%s4550 + $0x4] sm:$0xf]
        %v4553 = vld [vmem:[%s4550 + $0x8] sm:$0xf]
        %v4554 = vld [vmem:[%s4550 + $0xc] sm:$0xf]
        %v4557 = vunpack.c.l.b16 %v4548
        %v4558 = vunpack.c.l.b16 %v4549
        %v4559 = vpack.c.b16 %v4378, %v4557
        %v4560 = vpack.c.b16 %v4558, %v4379
        %v4561 = vrot.slane %v4559, 3
        %v4562 = vrot.slane %v4560, 3
        %v4563 = vsel %vm577, %v4561, %v4562
        %v4568 = vunpack.c.l.b16 %v4551
        %v4569 = vunpack.c.l.b16 %v4552
        %v4570 = vunpack.c.l.b16 %v4553
        %v4571 = vunpack.c.l.b16 %v4554
        %v4572 = vpack.c.b16 %v4569, %v4568
        %v4573 = vpack.c.b16 %v4571, %v4570
        %v4577 = vsel %vm361, %v4563, 0
        %v4580 = vsel %vm361, %v4562, 0
        %4582 = vmatprep.subr.bf16.mxu0 0
        %4583 = vmatpush1.bf16.msra.mxu0 %v4572
        %4584 = vmatprep.subr.bf16.mxu0 0
        %4585 = vmatpush1.bf16.msra.mxu0 %v4573
        %4586 = vmatprep.subr.bf16.mxu0 0
        %4587 = vmatpush1.bf16.msra.mxu0 0
        %4588 = vmatprep.subr.bf16.mxu0 0
        %4589 = vmatpush1.bf16.msra.mxu0 0
        %4590 = vmatprep.subr.bf16.mxu0 0
        %4591 = vmatpush1.bf16.msra.mxu0 0
        %4592 = vmatprep.subr.bf16.mxu0 0
        %4593 = vmatpush1.bf16.msra.mxu0 0
        %4594 = vmatprep.subr.bf16.mxu0 0
        %4595 = vmatpush1.bf16.msra.mxu0 0
        %4596 = vmatprep.subr.bf16.mxu0 0
        %4597 = vmatpush1.bf16.msra.mxu0 0
        %4598 = vmatprep.subr.bf16.mxu0 0
        %4599 = vmatpush1.bf16.msra.mxu0 0
        %4600 = vmatprep.subr.bf16.mxu0 0
        %4601 = vmatpush1.bf16.msra.mxu0 0
        %4602 = vmatprep.subr.bf16.mxu0 0
        %4603 = vmatpush1.bf16.msra.mxu0 0
        %4604 = vmatprep.subr.bf16.mxu0 0
        %4605 = vmatpush1.bf16.msra.mxu0 0
        %4606 = vmatprep.subr.bf16.mxu0 0
        %4607 = vmatpush1.bf16.msra.mxu0 0
        %4608 = vmatprep.subr.bf16.mxu0 0
        %4609 = vmatpush1.bf16.msra.mxu0 0
        %4610 = vmatprep.subr.bf16.mxu0 0
        %4611 = vmatpush1.bf16.msra.mxu0 0
        %4612 = vmatprep.subr.bf16.mxu0 0
        %4613 = vmatpush1.bf16.msra.mxu0 0
        %4614 = vmatprep.mubr.bf16.mxu0 0
        %4615 = vmatmul.mubr.bf16.gmra.mrb[0].mxu0 %v4577
        %v4616 = vpop.f32.mrb[0].mxu0
        %v4617 = vadd.f32 0.0, %v4616
        %v4618 = vpop.f32.mrb[0].mxu0
        %v4619 = vpop.f32.mrb[0].mxu0
        %v4620 = vadd.f32 0.0, %v4619
        %v4621 = vpop.f32.mrb[0].mxu0
        %4622 = vmatprep.mubr.bf16.mxu0 0
        %4623 = vmatmul.mubr.bf16.gmra.mrb[0].mxu0 %v4580
        %v4624 = vpop.f32.mrb[0].mxu0
        %v4625 = vadd.f32 0.0, %v4624
        %v4626 = vpop.f32.mrb[0].mxu0
        %v4627 = vpop.f32.mrb[0].mxu0
        %v4628 = vpop.f32.mrb[0].mxu0
        %4629 = vdwg.mxu0
        %v4630 = vadd.f32 %v4545, %v4617
        %v4631 = vadd.f32 %v4546, %v4620
        %v4632 = vadd.f32 %v4547, %v4625
        %v4633 = vld [vmem:[%s4278 + $0xc] sm:$0xf]
        %s4634 = scalar_lea.vmem [#allocation2], 784
        %v4635 = vld [vmem:[%s4634] sm:$0xf]
        %v4636 = vld [vmem:[%s4634 + $0x4] sm:$0xf]
        %v4637 = vld [vmem:[%s4634 + $0x8] sm:$0xf]
        %v4638 = vld [vmem:[%s4634 + $0xc] sm:$0xf]
        %v4640 = vunpack.c.l.b16 %v4633
        %v4641 = vpack.c.b16 %v4640, %v4379
        %v4643 = vshrl.u32 %v4559, 16
        %v4645 = vrot.slane %v4643, 3
        %v4646 = vshll.u32 %v4559, 16
        %v4648 = vrot.slane %v4646, 4
        %v4649 = vor.u32 %v4645, %v4648
        %v4651 = vshrl.u32 %v4641, 16
        %v4653 = vrot.slane %v4651, 3
        %v4654 = vshll.u32 %v4641, 16
        %v4656 = vrot.slane %v4654, 4
        %v4657 = vor.u32 %v4653, %v4656
        %v4658 = vsel %vm659, %v4649, %v4657
        %v4663 = vunpack.c.l.b16 %v4635
        %v4664 = vunpack.c.l.b16 %v4636
        %v4665 = vunpack.c.l.b16 %v4637
        %v4666 = vunpack.c.l.b16 %v4638
        %v4667 = vpack.c.b16 %v4664, %v4663
        %v4668 = vpack.c.b16 %v4666, %v4665
        %v4672 = vsel %vm361, %v4658, 0
        %v4675 = vsel %vm361, %v4657, 0
        %4677 = vmatprep.subr.bf16.mxu0 0
        %4678 = vmatpush1.bf16.msra.mxu0 %v4667
        %4679 = vmatprep.subr.bf16.mxu0 0
        %4680 = vmatpush1.bf16.msra.mxu0 %v4668
        %4681 = vmatprep.subr.bf16.mxu0 0
        %4682 = vmatpush1.bf16.msra.mxu0 0
        %4683 = vmatprep.subr.bf16.mxu0 0
        %4684 = vmatpush1.bf16.msra.mxu0 0
        %4685 = vmatprep.subr.bf16.mxu0 0
        %4686 = vmatpush1.bf16.msra.mxu0 0
        %4687 = vmatprep.subr.bf16.mxu0 0
        %4688 = vmatpush1.bf16.msra.mxu0 0
        %4689 = vmatprep.subr.bf16.mxu0 0
        %4690 = vmatpush1.bf16.msra.mxu0 0
        %4691 = vmatprep.subr.bf16.mxu0 0
        %4692 = vmatpush1.bf16.msra.mxu0 0
        %4693 = vmatprep.subr.bf16.mxu0 0
        %4694 = vmatpush1.bf16.msra.mxu0 0
        %4695 = vmatprep.subr.bf16.mxu0 0
        %4696 = vmatpush1.bf16.msra.mxu0 0
        %4697 = vmatprep.subr.bf16.mxu0 0
        %4698 = vmatpush1.bf16.msra.mxu0 0
        %4699 = vmatprep.subr.bf16.mxu0 0
        %4700 = vmatpush1.bf16.msra.mxu0 0
        %4701 = vmatprep.subr.bf16.mxu0 0
        %4702 = vmatpush1.bf16.msra.mxu0 0
        %4703 = vmatprep.subr.bf16.mxu0 0
        %4704 = vmatpush1.bf16.msra.mxu0 0
        %4705 = vmatprep.subr.bf16.mxu0 0
        %4706 = vmatpush1.bf16.msra.mxu0 0
        %4707 = vmatprep.subr.bf16.mxu0 0
        %4708 = vmatpush1.bf16.msra.mxu0 0
        %4709 = vmatprep.mubr.bf16.mxu0 0
        %4710 = vmatmul.mubr.bf16.gmra.mrb[0].mxu0 %v4672
        %v4711 = vpop.f32.mrb[0].mxu0
        %v4712 = vadd.f32 0.0, %v4711
        %v4713 = vpop.f32.mrb[0].mxu0
        %v4714 = vpop.f32.mrb[0].mxu0
        %v4715 = vadd.f32 0.0, %v4714
        %v4716 = vpop.f32.mrb[0].mxu0
        %4717 = vmatprep.mubr.bf16.mxu0 0
        %4718 = vmatmul.mubr.bf16.gmra.mrb[0].mxu0 %v4675
        %v4719 = vpop.f32.mrb[0].mxu0
        %v4720 = vadd.f32 0.0, %v4719
        %v4721 = vpop.f32.mrb[0].mxu0
        %v4722 = vpop.f32.mrb[0].mxu0
        %v4723 = vpop.f32.mrb[0].mxu0
        %4724 = vdwg.mxu0
        %v4725 = vadd.f32 %v4630, %v4712
        %v4726 = vadd.f32 %v4631, %v4715
        %v4727 = vadd.f32 %v4632, %v4720
        %s4728 = scalar_lea.vmem [#allocation2], 800
        %v4729 = vld [vmem:[%s4728] sm:$0xf]
        %v4730 = vld [vmem:[%s4728 + $0x4] sm:$0xf]
        %v4731 = vld [vmem:[%s4728 + $0x8] sm:$0xf]
        %v4732 = vld [vmem:[%s4728 + $0xc] sm:$0xf]
        %v4733 = vpack.c.b16 %v4379, %v4378
        %v4734 = vpack.c.b16 %v4640, %v4640
        %v4739 = vunpack.c.l.b16 %v4729
        %v4740 = vunpack.c.l.b16 %v4730
        %v4741 = vunpack.c.l.b16 %v4731
        %v4742 = vunpack.c.l.b16 %v4732
        %v4743 = vpack.c.b16 %v4740, %v4739
        %v4744 = vpack.c.b16 %v4742, %v4741
        %v4748 = vsel %vm361, %v4733, 0
        %v4751 = vsel %vm361, %v4734, 0
        %4753 = vmatprep.subr.bf16.mxu0 0
        %4754 = vmatpush1.bf16.msra.mxu0 %v4743
        %4755 = vmatprep.subr.bf16.mxu0 0
        %4756 = vmatpush1.bf16.msra.mxu0 %v4744
        %4757 = vmatprep.subr.bf16.mxu0 0
        %4758 = vmatpush1.bf16.msra.mxu0 0
        %4759 = vmatprep.subr.bf16.mxu0 0
        %4760 = vmatpush1.bf16.msra.mxu0 0
        %4761 = vmatprep.subr.bf16.mxu0 0
        %4762 = vmatpush1.bf16.msra.mxu0 0
        %4763 = vmatprep.subr.bf16.mxu0 0
        %4764 = vmatpush1.bf16.msra.mxu0 0
        %4765 = vmatprep.subr.bf16.mxu0 0
        %4766 = vmatpush1.bf16.msra.mxu0 0
        %4767 = vmatprep.subr.bf16.mxu0 0
        %4768 = vmatpush1.bf16.msra.mxu0 0
        %4769 = vmatprep.subr.bf16.mxu0 0
        %4770 = vmatpush1.bf16.msra.mxu0 0
        %4771 = vmatprep.subr.bf16.mxu0 0
        %4772 = vmatpush1.bf16.msra.mxu0 0
        %4773 = vmatprep.subr.bf16.mxu0 0
        %4774 = vmatpush1.bf16.msra.mxu0 0
        %4775 = vmatprep.subr.bf16.mxu0 0
        %4776 = vmatpush1.bf16.msra.mxu0 0
        %4777 = vmatprep.subr.bf16.mxu0 0
        %4778 = vmatpush1.bf16.msra.mxu0 0
        %4779 = vmatprep.subr.bf16.mxu0 0
        %4780 = vmatpush1.bf16.msra.mxu0 0
        %4781 = vmatprep.subr.bf16.mxu0 0
        %4782 = vmatpush1.bf16.msra.mxu0 0
        %4783 = vmatprep.subr.bf16.mxu0 0
        %4784 = vmatpush1.bf16.msra.mxu0 0
        %4785 = vmatprep.mubr.bf16.mxu0 0
        %4786 = vmatmul.mubr.bf16.gmra.mrb[0].mxu0 %v4748
        %v4787 = vpop.f32.mrb[0].mxu0
        %v4788 = vadd.f32 0.0, %v4787
        %v4789 = vpop.f32.mrb[0].mxu0
        %v4790 = vpop.f32.mrb[0].mxu0
        %v4791 = vadd.f32 0.0, %v4790
        %v4792 = vpop.f32.mrb[0].mxu0
        %4793 = vmatprep.mubr.bf16.mxu0 0
        %4794 = vmatmul.mubr.bf16.gmra.mrb[0].mxu0 %v4751
        %v4795 = vpop.f32.mrb[0].mxu0
        %v4796 = vadd.f32 0.0, %v4795
        %v4797 = vpop.f32.mrb[0].mxu0
        %v4798 = vpop.f32.mrb[0].mxu0
        %v4799 = vpop.f32.mrb[0].mxu0
        %4800 = vdwg.mxu0
        %v4801 = vadd.f32 %v4725, %v4788
        %v4802 = vadd.f32 %v4726, %v4791
        %v4803 = vadd.f32 %v4727, %v4796
        %v4804 = vld [vmem:[%s4278 + $0x4] sm:$0xc]
        %v4805 = vld [vmem:[%s4278 + $0x8] sm:$0xf]
        %v4806 = vld [vmem:[%s4278 + $0xc] sm:$0xf]
        %v4807 = vld [vmem:[%s4278 + $0x10] sm:$0x3]
        %s4808 = scalar_lea.vmem [#allocation2], 816
        %v4809 = vld [vmem:[%s4808] sm:$0xf]
        %v4810 = vld [vmem:[%s4808 + $0x4] sm:$0xf]
        %v4811 = vld [vmem:[%s4808 + $0x8] sm:$0xf]
        %v4812 = vld [vmem:[%s4808 + $0xc] sm:$0xf]
        %v4817 = vunpack.c.l.b16 %v4804
        %v4818 = vunpack.c.l.b16 %v4805
        %v4819 = vunpack.c.l.b16 %v4806
        %v4820 = vunpack.c.l.b16 %v4807
        %v4821 = vpack.c.b16 %v4818, %v4817
        %v4822 = vpack.c.b16 %v4820, %v4819
        %v4823 = vrot.slane %v4821, 2
        %v4824 = vrot.slane %v4822, 2
        %v4825 = vsel %vm841, %v4823, %v4824
        %v4830 = vunpack.c.l.b16 %v4809
        %v4831 = vunpack.c.l.b16 %v4810
        %v4832 = vunpack.c.l.b16 %v4811
        %v4833 = vunpack.c.l.b16 %v4812
        %v4834 = vpack.c.b16 %v4831, %v4830
        %v4835 = vpack.c.b16 %v4833, %v4832
        %v4839 = vsel %vm361, %v4825, 0
        %v4842 = vsel %vm361, %v4824, 0
        %4844 = vmatprep.subr.bf16.mxu0 0
        %4845 = vmatpush1.bf16.msra.mxu0 %v4834
        %4846 = vmatprep.subr.bf16.mxu0 0
        %4847 = vmatpush1.bf16.msra.mxu0 %v4835
        %4848 = vmatprep.subr.bf16.mxu0 0
        %4849 = vmatpush1.bf16.msra.mxu0 0
        %4850 = vmatprep.subr.bf16.mxu0 0
        %4851 = vmatpush1.bf16.msra.mxu0 0
        %4852 = vmatprep.subr.bf16.mxu0 0
        %4853 = vmatpush1.bf16.msra.mxu0 0
        %4854 = vmatprep.subr.bf16.mxu0 0
        %4855 = vmatpush1.bf16.msra.mxu0 0
        %4856 = vmatprep.subr.bf16.mxu0 0
        %4857 = vmatpush1.bf16.msra.mxu0 0
        %4858 = vmatprep.subr.bf16.mxu0 0
        %4859 = vmatpush1.bf16.msra.mxu0 0
        %4860 = vmatprep.subr.bf16.mxu0 0
        %4861 = vmatpush1.bf16.msra.mxu0 0
        %4862 = vmatprep.subr.bf16.mxu0 0
        %4863 = vmatpush1.bf16.msra.mxu0 0
        %4864 = vmatprep.subr.bf16.mxu0 0
        %4865 = vmatpush1.bf16.msra.mxu0 0
        %4866 = vmatprep.subr.bf16.mxu0 0
        %4867 = vmatpush1.bf16.msra.mxu0 0
        %4868 = vmatprep.subr.bf16.mxu0 0
        %4869 = vmatpush1.bf16.msra.mxu0 0
        %4870 = vmatprep.subr.bf16.mxu0 0
        %4871 = vmatpush1.bf16.msra.mxu0 0
        %4872 = vmatprep.subr.bf16.mxu0 0
        %4873 = vmatpush1.bf16.msra.mxu0 0
        %4874 = vmatprep.subr.bf16.mxu0 0
        %4875 = vmatpush1.bf16.msra.mxu0 0
        %4876 = vmatprep.mubr.bf16.mxu0 0
        %4877 = vmatmul.mubr.bf16.gmra.mrb[0].mxu0 %v4839
        %v4878 = vpop.f32.mrb[0].mxu0
        %v4879 = vadd.f32 0.0, %v4878
        %v4880 = vpop.f32.mrb[0].mxu0
        %v4881 = vpop.f32.mrb[0].mxu0
        %v4882 = vadd.f32 0.0, %v4881
        %v4883 = vpop.f32.mrb[0].mxu0
        %4884 = vmatprep.mubr.bf16.mxu0 0
        %4885 = vmatmul.mubr.bf16.gmra.mrb[0].mxu0 %v4842
        %v4886 = vpop.f32.mrb[0].mxu0
        %v4887 = vadd.f32 0.0, %v4886
        %v4888 = vpop.f32.mrb[0].mxu0
        %v4889 = vpop.f32.mrb[0].mxu0
        %v4890 = vpop.f32.mrb[0].mxu0
        %4891 = vdwg.mxu0
        %v4892 = vadd.f32 %v4801, %v4879
        %v4893 = vadd.f32 %v4802, %v4882
        %v4894 = vadd.f32 %v4803, %v4887
        %v4895 = vld [vmem:[%s4278 + $0x10] sm:$0x7]
        %s4896 = scalar_lea.vmem [#allocation2], 832
        %v4897 = vld [vmem:[%s4896] sm:$0xf]
        %v4898 = vld [vmem:[%s4896 + $0x4] sm:$0xf]
        %v4899 = vld [vmem:[%s4896 + $0x8] sm:$0xf]
        %v4900 = vld [vmem:[%s4896 + $0xc] sm:$0xf]
        %v4902 = vunpack.c.l.b16 %v4895
        %v4903 = vpack.c.b16 %v4902, %v4819
        %v4905 = vshrl.u32 %v4821, 16
        %v4907 = vrot.slane %v4905, 2
        %v4908 = vshll.u32 %v4821, 16
        %v4910 = vrot.slane %v4908, 3
        %v4911 = vor.u32 %v4907, %v4910
        %v4913 = vshrl.u32 %v4903, 16
        %v4915 = vrot.slane %v4913, 2
        %v4916 = vshll.u32 %v4903, 16
        %v4918 = vrot.slane %v4916, 3
        %v4919 = vor.u32 %v4915, %v4918
        %v4920 = vsel %vm923, %v4911, %v4919
        %v4925 = vunpack.c.l.b16 %v4897
        %v4926 = vunpack.c.l.b16 %v4898
        %v4927 = vunpack.c.l.b16 %v4899
        %v4928 = vunpack.c.l.b16 %v4900
        %v4929 = vpack.c.b16 %v4926, %v4925
        %v4930 = vpack.c.b16 %v4928, %v4927
        %v4934 = vsel %vm361, %v4920, 0
        %v4937 = vsel %vm361, %v4919, 0
        %4939 = vmatprep.subr.bf16.mxu0 0
        %4940 = vmatpush1.bf16.msra.mxu0 %v4929
        %4941 = vmatprep.subr.bf16.mxu0 0
        %4942 = vmatpush1.bf16.msra.mxu0 %v4930
        %4943 = vmatprep.subr.bf16.mxu0 0
        %4944 = vmatpush1.bf16.msra.mxu0 0
        %4945 = vmatprep.subr.bf16.mxu0 0
        %4946 = vmatpush1.bf16.msra.mxu0 0
        %4947 = vmatprep.subr.bf16.mxu0 0
        %4948 = vmatpush1.bf16.msra.mxu0 0
        %4949 = vmatprep.subr.bf16.mxu0 0
        %4950 = vmatpush1.bf16.msra.mxu0 0
        %4951 = vmatprep.subr.bf16.mxu0 0
        %4952 = vmatpush1.bf16.msra.mxu0 0
        %4953 = vmatprep.subr.bf16.mxu0 0
        %4954 = vmatpush1.bf16.msra.mxu0 0
        %4955 = vmatprep.subr.bf16.mxu0 0
        %4956 = vmatpush1.bf16.msra.mxu0 0
        %4957 = vmatprep.subr.bf16.mxu0 0
        %4958 = vmatpush1.bf16.msra.mxu0 0
        %4959 = vmatprep.subr.bf16.mxu0 0
        %4960 = vmatpush1.bf16.msra.mxu0 0
        %4961 = vmatprep.subr.bf16.mxu0 0
        %4962 = vmatpush1.bf16.msra.mxu0 0
        %4963 = vmatprep.subr.bf16.mxu0 0
        %4964 = vmatpush1.bf16.msra.mxu0 0
        %4965 = vmatprep.subr.bf16.mxu0 0
        %4966 = vmatpush1.bf16.msra.mxu0 0
        %4967 = vmatprep.subr.bf16.mxu0 0
        %4968 = vmatpush1.bf16.msra.mxu0 0
        %4969 = vmatprep.subr.bf16.mxu0 0
        %4970 = vmatpush1.bf16.msra.mxu0 0
        %4971 = vmatprep.mubr.bf16.mxu0 0
        %4972 = vmatmul.mubr.bf16.gmra.mrb[0].mxu0 %v4934
        %v4973 = vpop.f32.mrb[0].mxu0
        %v4974 = vadd.f32 0.0, %v4973
        %v4975 = vpop.f32.mrb[0].mxu0
        %v4976 = vpop.f32.mrb[0].mxu0
        %v4977 = vadd.f32 0.0, %v4976
        %v4978 = vpop.f32.mrb[0].mxu0
        %4979 = vmatprep.mubr.bf16.mxu0 0
        %4980 = vmatmul.mubr.bf16.gmra.mrb[0].mxu0 %v4937
        %v4981 = vpop.f32.mrb[0].mxu0
        %v4982 = vadd.f32 0.0, %v4981
        %v4983 = vpop.f32.mrb[0].mxu0
        %v4984 = vpop.f32.mrb[0].mxu0
        %v4985 = vpop.f32.mrb[0].mxu0
        %4986 = vdwg.mxu0
        %v4987 = vadd.f32 %v4892, %v4974
        %v4988 = vadd.f32 %v4893, %v4977
        %v4989 = vadd.f32 %v4894, %v4982
        %v4990 = vld [vmem:[%s4278 + $0x4] sm:$0x8]
        %s4991 = scalar_lea.vmem [#allocation2], 848
        %v4992 = vld [vmem:[%s4991] sm:$0xf]
        %v4993 = vld [vmem:[%s4991 + $0x4] sm:$0xf]
        %v4994 = vld [vmem:[%s4991 + $0x8] sm:$0xf]
        %v4995 = vld [vmem:[%s4991 + $0xc] sm:$0xf]
        %v4997 = vunpack.c.l.b16 %v4990
        %v4998 = vpack.c.b16 %v4818, %v4997
        %v4999 = vrot.slane %v4998, 3
        %v5000 = vrot.slane %v4903, 3
        %v5001 = vsel %vm577, %v4999, %v5000
        %v5006 = vunpack.c.l.b16 %v4992
        %v5007 = vunpack.c.l.b16 %v4993
        %v5008 = vunpack.c.l.b16 %v4994
        %v5009 = vunpack.c.l.b16 %v4995
        %v5010 = vpack.c.b16 %v5007, %v5006
        %v5011 = vpack.c.b16 %v5009, %v5008
        %v5015 = vsel %vm361, %v5001, 0
        %v5018 = vsel %vm361, %v5000, 0
        %5020 = vmatprep.subr.bf16.mxu0 0
        %5021 = vmatpush1.bf16.msra.mxu0 %v5010
        %5022 = vmatprep.subr.bf16.mxu0 0
        %5023 = vmatpush1.bf16.msra.mxu0 %v5011
        %5024 = vmatprep.subr.bf16.mxu0 0
        %5025 = vmatpush1.bf16.msra.mxu0 0
        %5026 = vmatprep.subr.bf16.mxu0 0
        %5027 = vmatpush1.bf16.msra.mxu0 0
        %5028 = vmatprep.subr.bf16.mxu0 0
        %5029 = vmatpush1.bf16.msra.mxu0 0
        %5030 = vmatprep.subr.bf16.mxu0 0
        %5031 = vmatpush1.bf16.msra.mxu0 0
        %5032 = vmatprep.subr.bf16.mxu0 0
        %5033 = vmatpush1.bf16.msra.mxu0 0
        %5034 = vmatprep.subr.bf16.mxu0 0
        %5035 = vmatpush1.bf16.msra.mxu0 0
        %5036 = vmatprep.subr.bf16.mxu0 0
        %5037 = vmatpush1.bf16.msra.mxu0 0
        %5038 = vmatprep.subr.bf16.mxu0 0
        %5039 = vmatpush1.bf16.msra.mxu0 0
        %5040 = vmatprep.subr.bf16.mxu0 0
        %5041 = vmatpush1.bf16.msra.mxu0 0
        %5042 = vmatprep.subr.bf16.mxu0 0
        %5043 = vmatpush1.bf16.msra.mxu0 0
        %5044 = vmatprep.subr.bf16.mxu0 0
        %5045 = vmatpush1.bf16.msra.mxu0 0
        %5046 = vmatprep.subr.bf16.mxu0 0
        %5047 = vmatpush1.bf16.msra.mxu0 0
        %5048 = vmatprep.subr.bf16.mxu0 0
        %5049 = vmatpush1.bf16.msra.mxu0 0
        %5050 = vmatprep.subr.bf16.mxu0 0
        %5051 = vmatpush1.bf16.msra.mxu0 0
        %5052 = vmatprep.mubr.bf16.mxu0 0
        %5053 = vmatmul.mubr.bf16.gmra.mrb[0].mxu0 %v5015
        %v5054 = vpop.f32.mrb[0].mxu0
        %v5055 = vadd.f32 0.0, %v5054
        %v5056 = vpop.f32.mrb[0].mxu0
        %v5057 = vpop.f32.mrb[0].mxu0
        %v5058 = vadd.f32 0.0, %v5057
        %v5059 = vpop.f32.mrb[0].mxu0
        %5060 = vmatprep.mubr.bf16.mxu0 0
        %5061 = vmatmul.mubr.bf16.gmra.mrb[0].mxu0 %v5018
        %v5062 = vpop.f32.mrb[0].mxu0
        %v5063 = vadd.f32 0.0, %v5062
        %v5064 = vpop.f32.mrb[0].mxu0
        %v5065 = vpop.f32.mrb[0].mxu0
        %v5066 = vpop.f32.mrb[0].mxu0
        %5067 = vdwg.mxu0
        %v5068 = vadd.f32 %v4987, %v5055
        %v5069 = vadd.f32 %v4988, %v5058
        %v5070 = vadd.f32 %v4989, %v5063
        %s5071 = sadd.s32 %s27, 6
        %s5072 = smul.u32 %s5071, 5
        %s5073 = smul.addr %s5072, 4
        %s5074 = scalar_lea.vmem %s305, %s5073
        %v5075 = vld [vmem:[%s5074] sm:$0xf]
        %v5076 = vld [vmem:[%s5074 + $0x4] sm:$0xf]
        %v5077 = vld [vmem:[%s5074 + $0x8] sm:$0xf]
        %s5078 = scalar_lea.vmem [#allocation2], 864
        %v5079 = vld [vmem:[%s5078] sm:$0xf]
        %v5080 = vld [vmem:[%s5078 + $0x4] sm:$0xf]
        %v5081 = vld [vmem:[%s5078 + $0x8] sm:$0xf]
        %v5082 = vld [vmem:[%s5078 + $0xc] sm:$0xf]
        %v5086 = vunpack.c.l.b16 %v5075
        %v5087 = vunpack.c.l.b16 %v5076
        %v5088 = vunpack.c.l.b16 %v5077
        %v5089 = vpack.c.b16 %v5087, %v5086
        %v5090 = vpack.c.b16 %v5088, %v5088
        %v5095 = vunpack.c.l.b16 %v5079
        %v5096 = vunpack.c.l.b16 %v5080
        %v5097 = vunpack.c.l.b16 %v5081
        %v5098 = vunpack.c.l.b16 %v5082
        %v5099 = vpack.c.b16 %v5096, %v5095
        %v5100 = vpack.c.b16 %v5098, %v5097
        %v5104 = vsel %vm361, %v5089, 0
        %v5107 = vsel %vm361, %v5090, 0
        %5109 = vmatprep.subr.bf16.mxu0 0
        %5110 = vmatpush1.bf16.msra.mxu0 %v5099
        %5111 = vmatprep.subr.bf16.mxu0 0
        %5112 = vmatpush1.bf16.msra.mxu0 %v5100
        %5113 = vmatprep.subr.bf16.mxu0 0
        %5114 = vmatpush1.bf16.msra.mxu0 0
        %5115 = vmatprep.subr.bf16.mxu0 0
        %5116 = vmatpush1.bf16.msra.mxu0 0
        %5117 = vmatprep.subr.bf16.mxu0 0
        %5118 = vmatpush1.bf16.msra.mxu0 0
        %5119 = vmatprep.subr.bf16.mxu0 0
        %5120 = vmatpush1.bf16.msra.mxu0 0
        %5121 = vmatprep.subr.bf16.mxu0 0
        %5122 = vmatpush1.bf16.msra.mxu0 0
        %5123 = vmatprep.subr.bf16.mxu0 0
        %5124 = vmatpush1.bf16.msra.mxu0 0
        %5125 = vmatprep.subr.bf16.mxu0 0
        %5126 = vmatpush1.bf16.msra.mxu0 0
        %5127 = vmatprep.subr.bf16.mxu0 0
        %5128 = vmatpush1.bf16.msra.mxu0 0
        %5129 = vmatprep.subr.bf16.mxu0 0
        %5130 = vmatpush1.bf16.msra.mxu0 0
        %5131 = vmatprep.subr.bf16.mxu0 0
        %5132 = vmatpush1.bf16.msra.mxu0 0
        %5133 = vmatprep.subr.bf16.mxu0 0
        %5134 = vmatpush1.bf16.msra.mxu0 0
        %5135 = vmatprep.subr.bf16.mxu0 0
        %5136 = vmatpush1.bf16.msra.mxu0 0
        %5137 = vmatprep.subr.bf16.mxu0 0
        %5138 = vmatpush1.bf16.msra.mxu0 0
        %5139 = vmatprep.subr.bf16.mxu0 0
        %5140 = vmatpush1.bf16.msra.mxu0 0
        %5141 = vmatprep.mubr.bf16.mxu0 0
        %5142 = vmatmul.mubr.bf16.gmra.mrb[0].mxu0 %v5104
        %v5143 = vpop.f32.mrb[0].mxu0
        %v5144 = vadd.f32 0.0, %v5143
        %v5145 = vpop.f32.mrb[0].mxu0
        %v5146 = vpop.f32.mrb[0].mxu0
        %v5147 = vadd.f32 0.0, %v5146
        %v5148 = vpop.f32.mrb[0].mxu0
        %5149 = vmatprep.mubr.bf16.mxu0 0
        %5150 = vmatmul.mubr.bf16.gmra.mrb[0].mxu0 %v5107
        %v5151 = vpop.f32.mrb[0].mxu0
        %v5152 = vadd.f32 0.0, %v5151
        %v5153 = vpop.f32.mrb[0].mxu0
        %v5154 = vpop.f32.mrb[0].mxu0
        %v5155 = vpop.f32.mrb[0].mxu0
        %5156 = vdwg.mxu0
        %v5157 = vadd.f32 %v5068, %v5144
        %v5158 = vadd.f32 %v5069, %v5147
        %v5159 = vadd.f32 %v5070, %v5152
        %v5160 = vld [vmem:[%s5074] sm:$0xf]
        %v5161 = vld [vmem:[%s5074 + $0x4] sm:$0xf]
        %v5162 = vld [vmem:[%s5074 + $0x8] sm:$0xf]
        %v5163 = vld [vmem:[%s5074 + $0xc] sm:$0x1]
        %s5164 = scalar_lea.vmem [#allocation2], 880
        %v5165 = vld [vmem:[%s5164] sm:$0xf]
        %v5166 = vld [vmem:[%s5164 + $0x4] sm:$0xf]
        %v5167 = vld [vmem:[%s5164 + $0x8] sm:$0xf]
        %v5168 = vld [vmem:[%s5164 + $0xc] sm:$0xf]
        %v5173 = vunpack.c.l.b16 %v5160
        %v5174 = vunpack.c.l.b16 %v5161
        %v5175 = vunpack.c.l.b16 %v5162
        %v5176 = vunpack.c.l.b16 %v5163
        %v5177 = vpack.c.b16 %v5174, %v5173
        %v5178 = vpack.c.b16 %v5176, %v5175
        %v5180 = vshrl.u32 %v5177, 16
        %v5182 = vshll.u32 %v5177, 16
        %v5184 = vrot.slane %v5182, 1
        %v5185 = vor.u32 %v5180, %v5184
        %v5187 = vshll.u32 %v5178, 16
        %v5189 = vrot.slane %v5187, 1
        %v5190 = vsel %vm333, %v5185, %v5189
        %v5191 = vshrl.u32 %v5178, 16
        %v5193 = vor.u32 %v5191, %v5189
        %v5198 = vunpack.c.l.b16 %v5165
        %v5199 = vunpack.c.l.b16 %v5166
        %v5200 = vunpack.c.l.b16 %v5167
        %v5201 = vunpack.c.l.b16 %v5168
        %v5202 = vpack.c.b16 %v5199, %v5198
        %v5203 = vpack.c.b16 %v5201, %v5200
        %v5207 = vsel %vm361, %v5190, 0
        %v5210 = vsel %vm361, %v5193, 0
        %5212 = vmatprep.subr.bf16.mxu0 0
        %5213 = vmatpush1.bf16.msra.mxu0 %v5202
        %5214 = vmatprep.subr.bf16.mxu0 0
        %5215 = vmatpush1.bf16.msra.mxu0 %v5203
        %5216 = vmatprep.subr.bf16.mxu0 0
        %5217 = vmatpush1.bf16.msra.mxu0 0
        %5218 = vmatprep.subr.bf16.mxu0 0
        %5219 = vmatpush1.bf16.msra.mxu0 0
        %5220 = vmatprep.subr.bf16.mxu0 0
        %5221 = vmatpush1.bf16.msra.mxu0 0
        %5222 = vmatprep.subr.bf16.mxu0 0
        %5223 = vmatpush1.bf16.msra.mxu0 0
        %5224 = vmatprep.subr.bf16.mxu0 0
        %5225 = vmatpush1.bf16.msra.mxu0 0
        %5226 = vmatprep.subr.bf16.mxu0 0
        %5227 = vmatpush1.bf16.msra.mxu0 0
        %5228 = vmatprep.subr.bf16.mxu0 0
        %5229 = vmatpush1.bf16.msra.mxu0 0
        %5230 = vmatprep.subr.bf16.mxu0 0
        %5231 = vmatpush1.bf16.msra.mxu0 0
        %5232 = vmatprep.subr.bf16.mxu0 0
        %5233 = vmatpush1.bf16.msra.mxu0 0
        %5234 = vmatprep.subr.bf16.mxu0 0
        %5235 = vmatpush1.bf16.msra.mxu0 0
        %5236 = vmatprep.subr.bf16.mxu0 0
        %5237 = vmatpush1.bf16.msra.mxu0 0
        %5238 = vmatprep.subr.bf16.mxu0 0
        %5239 = vmatpush1.bf16.msra.mxu0 0
        %5240 = vmatprep.subr.bf16.mxu0 0
        %5241 = vmatpush1.bf16.msra.mxu0 0
        %5242 = vmatprep.subr.bf16.mxu0 0
        %5243 = vmatpush1.bf16.msra.mxu0 0
        %5244 = vmatprep.mubr.bf16.mxu0 0
        %5245 = vmatmul.mubr.bf16.gmra.mrb[0].mxu0 %v5207
        %v5246 = vpop.f32.mrb[0].mxu0
        %v5247 = vadd.f32 0.0, %v5246
        %v5248 = vpop.f32.mrb[0].mxu0
        %v5249 = vpop.f32.mrb[0].mxu0
        %v5250 = vadd.f32 0.0, %v5249
        %v5251 = vpop.f32.mrb[0].mxu0
        %5252 = vmatprep.mubr.bf16.mxu0 0
        %5253 = vmatmul.mubr.bf16.gmra.mrb[0].mxu0 %v5210
        %v5254 = vpop.f32.mrb[0].mxu0
        %v5255 = vadd.f32 0.0, %v5254
        %v5256 = vpop.f32.mrb[0].mxu0
        %v5257 = vpop.f32.mrb[0].mxu0
        %v5258 = vpop.f32.mrb[0].mxu0
        %5259 = vdwg.mxu0
        %v5260 = vadd.f32 %v5157, %v5247
        %v5261 = vadd.f32 %v5158, %v5250
        %v5262 = vadd.f32 %v5159, %v5255
        %v5263 = vld [vmem:[%s5074] sm:$0xe]
        %s5264 = scalar_lea.vmem [#allocation2], 896
        %v5265 = vld [vmem:[%s5264] sm:$0xf]
        %v5266 = vld [vmem:[%s5264 + $0x4] sm:$0xf]
        %v5267 = vld [vmem:[%s5264 + $0x8] sm:$0xf]
        %v5268 = vld [vmem:[%s5264 + $0xc] sm:$0xf]
        %v5270 = vunpack.c.l.b16 %v5263
        %v5271 = vpack.c.b16 %v5174, %v5270
        %v5272 = vrot.slane %v5271, 1
        %v5273 = vrot.slane %v5178, 1
        %v5274 = vsel %vm491, %v5272, %v5273
        %v5279 = vunpack.c.l.b16 %v5265
        %v5280 = vunpack.c.l.b16 %v5266
        %v5281 = vunpack.c.l.b16 %v5267
        %v5282 = vunpack.c.l.b16 %v5268
        %v5283 = vpack.c.b16 %v5280, %v5279
        %v5284 = vpack.c.b16 %v5282, %v5281
        %v5288 = vsel %vm361, %v5274, 0
        %v5291 = vsel %vm361, %v5273, 0
        %5293 = vmatprep.subr.bf16.mxu0 0
        %5294 = vmatpush1.bf16.msra.mxu0 %v5283
        %5295 = vmatprep.subr.bf16.mxu0 0
        %5296 = vmatpush1.bf16.msra.mxu0 %v5284
        %5297 = vmatprep.subr.bf16.mxu0 0
        %5298 = vmatpush1.bf16.msra.mxu0 0
        %5299 = vmatprep.subr.bf16.mxu0 0
        %5300 = vmatpush1.bf16.msra.mxu0 0
        %5301 = vmatprep.subr.bf16.mxu0 0
        %5302 = vmatpush1.bf16.msra.mxu0 0
        %5303 = vmatprep.subr.bf16.mxu0 0
        %5304 = vmatpush1.bf16.msra.mxu0 0
        %5305 = vmatprep.subr.bf16.mxu0 0
        %5306 = vmatpush1.bf16.msra.mxu0 0
        %5307 = vmatprep.subr.bf16.mxu0 0
        %5308 = vmatpush1.bf16.msra.mxu0 0
        %5309 = vmatprep.subr.bf16.mxu0 0
        %5310 = vmatpush1.bf16.msra.mxu0 0
        %5311 = vmatprep.subr.bf16.mxu0 0
        %5312 = vmatpush1.bf16.msra.mxu0 0
        %5313 = vmatprep.subr.bf16.mxu0 0
        %5314 = vmatpush1.bf16.msra.mxu0 0
        %5315 = vmatprep.subr.bf16.mxu0 0
        %5316 = vmatpush1.bf16.msra.mxu0 0
        %5317 = vmatprep.subr.bf16.mxu0 0
        %5318 = vmatpush1.bf16.msra.mxu0 0
        %5319 = vmatprep.subr.bf16.mxu0 0
        %5320 = vmatpush1.bf16.msra.mxu0 0
        %5321 = vmatprep.subr.bf16.mxu0 0
        %5322 = vmatpush1.bf16.msra.mxu0 0
        %5323 = vmatprep.subr.bf16.mxu0 0
        %5324 = vmatpush1.bf16.msra.mxu0 0
        %5325 = vmatprep.mubr.bf16.mxu0 0
        %5326 = vmatmul.mubr.bf16.gmra.mrb[0].mxu0 %v5288
        %v5327 = vpop.f32.mrb[0].mxu0
        %v5328 = vadd.f32 0.0, %v5327
        %v5329 = vpop.f32.mrb[0].mxu0
        %v5330 = vpop.f32.mrb[0].mxu0
        %v5331 = vadd.f32 0.0, %v5330
        %v5332 = vpop.f32.mrb[0].mxu0
        %5333 = vmatprep.mubr.bf16.mxu0 0
        %5334 = vmatmul.mubr.bf16.gmra.mrb[0].mxu0 %v5291
        %v5335 = vpop.f32.mrb[0].mxu0
        %v5336 = vadd.f32 0.0, %v5335
        %v5337 = vpop.f32.mrb[0].mxu0
        %v5338 = vpop.f32.mrb[0].mxu0
        %v5339 = vpop.f32.mrb[0].mxu0
        %5340 = vdwg.mxu0
        %v5341 = vadd.f32 %v5260, %v5328
        %v5342 = vadd.f32 %v5261, %v5331
        %v5343 = vadd.f32 %v5262, %v5336
        %v5344 = vld [vmem:[%s5074] sm:$0x8]
        %v5345 = vld [vmem:[%s5074 + $0xc] sm:$0x7]
        %s5346 = scalar_lea.vmem [#allocation2], 912
        %v5347 = vld [vmem:[%s5346] sm:$0xf]
        %v5348 = vld [vmem:[%s5346 + $0x4] sm:$0xf]
        %v5349 = vld [vmem:[%s5346 + $0x8] sm:$0xf]
        %v5350 = vld [vmem:[%s5346 + $0xc] sm:$0xf]
        %v5353 = vunpack.c.l.b16 %v5344
        %v5354 = vunpack.c.l.b16 %v5345
        %v5355 = vpack.c.b16 %v5174, %v5353
        %v5356 = vpack.c.b16 %v5354, %v5175
        %v5357 = vrot.slane %v5355, 3
        %v5358 = vrot.slane %v5356, 3
        %v5359 = vsel %vm577, %v5357, %v5358
        %v5364 = vunpack.c.l.b16 %v5347
        %v5365 = vunpack.c.l.b16 %v5348
        %v5366 = vunpack.c.l.b16 %v5349
        %v5367 = vunpack.c.l.b16 %v5350
        %v5368 = vpack.c.b16 %v5365, %v5364
        %v5369 = vpack.c.b16 %v5367, %v5366
        %v5373 = vsel %vm361, %v5359, 0
        %v5376 = vsel %vm361, %v5358, 0
        %5378 = vmatprep.subr.bf16.mxu0 0
        %5379 = vmatpush1.bf16.msra.mxu0 %v5368
        %5380 = vmatprep.subr.bf16.mxu0 0
        %5381 = vmatpush1.bf16.msra.mxu0 %v5369
        %5382 = vmatprep.subr.bf16.mxu0 0
        %5383 = vmatpush1.bf16.msra.mxu0 0
        %5384 = vmatprep.subr.bf16.mxu0 0
        %5385 = vmatpush1.bf16.msra.mxu0 0
        %5386 = vmatprep.subr.bf16.mxu0 0
        %5387 = vmatpush1.bf16.msra.mxu0 0
        %5388 = vmatprep.subr.bf16.mxu0 0
        %5389 = vmatpush1.bf16.msra.mxu0 0
        %5390 = vmatprep.subr.bf16.mxu0 0
        %5391 = vmatpush1.bf16.msra.mxu0 0
        %5392 = vmatprep.subr.bf16.mxu0 0
        %5393 = vmatpush1.bf16.msra.mxu0 0
        %5394 = vmatprep.subr.bf16.mxu0 0
        %5395 = vmatpush1.bf16.msra.mxu0 0
        %5396 = vmatprep.subr.bf16.mxu0 0
        %5397 = vmatpush1.bf16.msra.mxu0 0
        %5398 = vmatprep.subr.bf16.mxu0 0
        %5399 = vmatpush1.bf16.msra.mxu0 0
        %5400 = vmatprep.subr.bf16.mxu0 0
        %5401 = vmatpush1.bf16.msra.mxu0 0
        %5402 = vmatprep.subr.bf16.mxu0 0
        %5403 = vmatpush1.bf16.msra.mxu0 0
        %5404 = vmatprep.subr.bf16.mxu0 0
        %5405 = vmatpush1.bf16.msra.mxu0 0
        %5406 = vmatprep.subr.bf16.mxu0 0
        %5407 = vmatpush1.bf16.msra.mxu0 0
        %5408 = vmatprep.subr.bf16.mxu0 0
        %5409 = vmatpush1.bf16.msra.mxu0 0
        %5410 = vmatprep.mubr.bf16.mxu0 0
        %5411 = vmatmul.mubr.bf16.gmra.mrb[0].mxu0 %v5373
        %v5412 = vpop.f32.mrb[0].mxu0
        %v5413 = vadd.f32 0.0, %v5412
        %v5414 = vpop.f32.mrb[0].mxu0
        %v5415 = vpop.f32.mrb[0].mxu0
        %v5416 = vadd.f32 0.0, %v5415
        %v5417 = vpop.f32.mrb[0].mxu0
        %5418 = vmatprep.mubr.bf16.mxu0 0
        %5419 = vmatmul.mubr.bf16.gmra.mrb[0].mxu0 %v5376
        %v5420 = vpop.f32.mrb[0].mxu0
        %v5421 = vadd.f32 0.0, %v5420
        %v5422 = vpop.f32.mrb[0].mxu0
        %v5423 = vpop.f32.mrb[0].mxu0
        %v5424 = vpop.f32.mrb[0].mxu0
        %5425 = vdwg.mxu0
        %v5426 = vadd.f32 %v5341, %v5413
        %v5427 = vadd.f32 %v5342, %v5416
        %v5428 = vadd.f32 %v5343, %v5421
        %v5429 = vld [vmem:[%s5074 + $0xc] sm:$0xf]
        %s5430 = scalar_lea.vmem [#allocation2], 928
        %v5431 = vld [vmem:[%s5430] sm:$0xf]
        %v5432 = vld [vmem:[%s5430 + $0x4] sm:$0xf]
        %v5433 = vld [vmem:[%s5430 + $0x8] sm:$0xf]
        %v5434 = vld [vmem:[%s5430 + $0xc] sm:$0xf]
        %v5436 = vunpack.c.l.b16 %v5429
        %v5437 = vpack.c.b16 %v5436, %v5175
        %v5439 = vshrl.u32 %v5355, 16
        %v5441 = vrot.slane %v5439, 3
        %v5442 = vshll.u32 %v5355, 16
        %v5444 = vrot.slane %v5442, 4
        %v5445 = vor.u32 %v5441, %v5444
        %v5447 = vshrl.u32 %v5437, 16
        %v5449 = vrot.slane %v5447, 3
        %v5450 = vshll.u32 %v5437, 16
        %v5452 = vrot.slane %v5450, 4
        %v5453 = vor.u32 %v5449, %v5452
        %v5454 = vsel %vm659, %v5445, %v5453
        %v5459 = vunpack.c.l.b16 %v5431
        %v5460 = vunpack.c.l.b16 %v5432
        %v5461 = vunpack.c.l.b16 %v5433
        %v5462 = vunpack.c.l.b16 %v5434
        %v5463 = vpack.c.b16 %v5460, %v5459
        %v5464 = vpack.c.b16 %v5462, %v5461
        %v5468 = vsel %vm361, %v5454, 0
        %v5471 = vsel %vm361, %v5453, 0
        %5473 = vmatprep.subr.bf16.mxu0 0
        %5474 = vmatpush1.bf16.msra.mxu0 %v5463
        %5475 = vmatprep.subr.bf16.mxu0 0
        %5476 = vmatpush1.bf16.msra.mxu0 %v5464
        %5477 = vmatprep.subr.bf16.mxu0 0
        %5478 = vmatpush1.bf16.msra.mxu0 0
        %5479 = vmatprep.subr.bf16.mxu0 0
        %5480 = vmatpush1.bf16.msra.mxu0 0
        %5481 = vmatprep.subr.bf16.mxu0 0
        %5482 = vmatpush1.bf16.msra.mxu0 0
        %5483 = vmatprep.subr.bf16.mxu0 0
        %5484 = vmatpush1.bf16.msra.mxu0 0
        %5485 = vmatprep.subr.bf16.mxu0 0
        %5486 = vmatpush1.bf16.msra.mxu0 0
        %5487 = vmatprep.subr.bf16.mxu0 0
        %5488 = vmatpush1.bf16.msra.mxu0 0
        %5489 = vmatprep.subr.bf16.mxu0 0
        %5490 = vmatpush1.bf16.msra.mxu0 0
        %5491 = vmatprep.subr.bf16.mxu0 0
        %5492 = vmatpush1.bf16.msra.mxu0 0
        %5493 = vmatprep.subr.bf16.mxu0 0
        %5494 = vmatpush1.bf16.msra.mxu0 0
        %5495 = vmatprep.subr.bf16.mxu0 0
        %5496 = vmatpush1.bf16.msra.mxu0 0
        %5497 = vmatprep.subr.bf16.mxu0 0
        %5498 = vmatpush1.bf16.msra.mxu0 0
        %5499 = vmatprep.subr.bf16.mxu0 0
        %5500 = vmatpush1.bf16.msra.mxu0 0
        %5501 = vmatprep.subr.bf16.mxu0 0
        %5502 = vmatpush1.bf16.msra.mxu0 0
        %5503 = vmatprep.subr.bf16.mxu0 0
        %5504 = vmatpush1.bf16.msra.mxu0 0
        %5505 = vmatprep.mubr.bf16.mxu0 0
        %5506 = vmatmul.mubr.bf16.gmra.mrb[0].mxu0 %v5468
        %v5507 = vpop.f32.mrb[0].mxu0
        %v5508 = vadd.f32 0.0, %v5507
        %v5509 = vpop.f32.mrb[0].mxu0
        %v5510 = vpop.f32.mrb[0].mxu0
        %v5511 = vadd.f32 0.0, %v5510
        %v5512 = vpop.f32.mrb[0].mxu0
        %5513 = vmatprep.mubr.bf16.mxu0 0
        %5514 = vmatmul.mubr.bf16.gmra.mrb[0].mxu0 %v5471
        %v5515 = vpop.f32.mrb[0].mxu0
        %v5516 = vadd.f32 0.0, %v5515
        %v5517 = vpop.f32.mrb[0].mxu0
        %v5518 = vpop.f32.mrb[0].mxu0
        %v5519 = vpop.f32.mrb[0].mxu0
        %5520 = vdwg.mxu0
        %v5521 = vadd.f32 %v5426, %v5508
        %v5522 = vadd.f32 %v5427, %v5511
        %v5523 = vadd.f32 %v5428, %v5516
        %s5524 = scalar_lea.vmem [#allocation2], 944
        %v5525 = vld [vmem:[%s5524] sm:$0xf]
        %v5526 = vld [vmem:[%s5524 + $0x4] sm:$0xf]
        %v5527 = vld [vmem:[%s5524 + $0x8] sm:$0xf]
        %v5528 = vld [vmem:[%s5524 + $0xc] sm:$0xf]
        %v5529 = vpack.c.b16 %v5175, %v5174
        %v5530 = vpack.c.b16 %v5436, %v5436
        %v5535 = vunpack.c.l.b16 %v5525
        %v5536 = vunpack.c.l.b16 %v5526
        %v5537 = vunpack.c.l.b16 %v5527
        %v5538 = vunpack.c.l.b16 %v5528
        %v5539 = vpack.c.b16 %v5536, %v5535
        %v5540 = vpack.c.b16 %v5538, %v5537
        %v5544 = vsel %vm361, %v5529, 0
        %v5547 = vsel %vm361, %v5530, 0
        %5549 = vmatprep.subr.bf16.mxu0 0
        %5550 = vmatpush1.bf16.msra.mxu0 %v5539
        %5551 = vmatprep.subr.bf16.mxu0 0
        %5552 = vmatpush1.bf16.msra.mxu0 %v5540
        %5553 = vmatprep.subr.bf16.mxu0 0
        %5554 = vmatpush1.bf16.msra.mxu0 0
        %5555 = vmatprep.subr.bf16.mxu0 0
        %5556 = vmatpush1.bf16.msra.mxu0 0
        %5557 = vmatprep.subr.bf16.mxu0 0
        %5558 = vmatpush1.bf16.msra.mxu0 0
        %5559 = vmatprep.subr.bf16.mxu0 0
        %5560 = vmatpush1.bf16.msra.mxu0 0
        %5561 = vmatprep.subr.bf16.mxu0 0
        %5562 = vmatpush1.bf16.msra.mxu0 0
        %5563 = vmatprep.subr.bf16.mxu0 0
        %5564 = vmatpush1.bf16.msra.mxu0 0
        %5565 = vmatprep.subr.bf16.mxu0 0
        %5566 = vmatpush1.bf16.msra.mxu0 0
        %5567 = vmatprep.subr.bf16.mxu0 0
        %5568 = vmatpush1.bf16.msra.mxu0 0
        %5569 = vmatprep.subr.bf16.mxu0 0
        %5570 = vmatpush1.bf16.msra.mxu0 0
        %5571 = vmatprep.subr.bf16.mxu0 0
        %5572 = vmatpush1.bf16.msra.mxu0 0
        %5573 = vmatprep.subr.bf16.mxu0 0
        %5574 = vmatpush1.bf16.msra.mxu0 0
        %5575 = vmatprep.subr.bf16.mxu0 0
        %5576 = vmatpush1.bf16.msra.mxu0 0
        %5577 = vmatprep.subr.bf16.mxu0 0
        %5578 = vmatpush1.bf16.msra.mxu0 0
        %5579 = vmatprep.subr.bf16.mxu0 0
        %5580 = vmatpush1.bf16.msra.mxu0 0
        %5581 = vmatprep.mubr.bf16.mxu0 0
        %5582 = vmatmul.mubr.bf16.gmra.mrb[0].mxu0 %v5544
        %v5583 = vpop.f32.mrb[0].mxu0
        %v5584 = vadd.f32 0.0, %v5583
        %v5585 = vpop.f32.mrb[0].mxu0
        %v5586 = vpop.f32.mrb[0].mxu0
        %v5587 = vadd.f32 0.0, %v5586
        %v5588 = vpop.f32.mrb[0].mxu0
        %5589 = vmatprep.mubr.bf16.mxu0 0
        %5590 = vmatmul.mubr.bf16.gmra.mrb[0].mxu0 %v5547
        %v5591 = vpop.f32.mrb[0].mxu0
        %v5592 = vadd.f32 0.0, %v5591
        %v5593 = vpop.f32.mrb[0].mxu0
        %v5594 = vpop.f32.mrb[0].mxu0
        %v5595 = vpop.f32.mrb[0].mxu0
        %5596 = vdwg.mxu0
        %v5597 = vadd.f32 %v5521, %v5584
        %v5598 = vadd.f32 %v5522, %v5587
        %v5599 = vadd.f32 %v5523, %v5592
        %v5600 = vld [vmem:[%s5074 + $0x4] sm:$0xc]
        %v5601 = vld [vmem:[%s5074 + $0x8] sm:$0xf]
        %v5602 = vld [vmem:[%s5074 + $0xc] sm:$0xf]
        %v5603 = vld [vmem:[%s5074 + $0x10] sm:$0x3]
        %s5604 = scalar_lea.vmem [#allocation2], 960
        %v5605 = vld [vmem:[%s5604] sm:$0xf]
        %v5606 = vld [vmem:[%s5604 + $0x4] sm:$0xf]
        %v5607 = vld [vmem:[%s5604 + $0x8] sm:$0xf]
        %v5608 = vld [vmem:[%s5604 + $0xc] sm:$0xf]
        %v5613 = vunpack.c.l.b16 %v5600
        %v5614 = vunpack.c.l.b16 %v5601
        %v5615 = vunpack.c.l.b16 %v5602
        %v5616 = vunpack.c.l.b16 %v5603
        %v5617 = vpack.c.b16 %v5614, %v5613
        %v5618 = vpack.c.b16 %v5616, %v5615
        %v5619 = vrot.slane %v5617, 2
        %v5620 = vrot.slane %v5618, 2
        %v5621 = vsel %vm841, %v5619, %v5620
        %v5626 = vunpack.c.l.b16 %v5605
        %v5627 = vunpack.c.l.b16 %v5606
        %v5628 = vunpack.c.l.b16 %v5607
        %v5629 = vunpack.c.l.b16 %v5608
        %v5630 = vpack.c.b16 %v5627, %v5626
        %v5631 = vpack.c.b16 %v5629, %v5628
        %v5635 = vsel %vm361, %v5621, 0
        %v5638 = vsel %vm361, %v5620, 0
        %5640 = vmatprep.subr.bf16.mxu0 0
        %5641 = vmatpush1.bf16.msra.mxu0 %v5630
        %5642 = vmatprep.subr.bf16.mxu0 0
        %5643 = vmatpush1.bf16.msra.mxu0 %v5631
        %5644 = vmatprep.subr.bf16.mxu0 0
        %5645 = vmatpush1.bf16.msra.mxu0 0
        %5646 = vmatprep.subr.bf16.mxu0 0
        %5647 = vmatpush1.bf16.msra.mxu0 0
        %5648 = vmatprep.subr.bf16.mxu0 0
        %5649 = vmatpush1.bf16.msra.mxu0 0
        %5650 = vmatprep.subr.bf16.mxu0 0
        %5651 = vmatpush1.bf16.msra.mxu0 0
        %5652 = vmatprep.subr.bf16.mxu0 0
        %5653 = vmatpush1.bf16.msra.mxu0 0
        %5654 = vmatprep.subr.bf16.mxu0 0
        %5655 = vmatpush1.bf16.msra.mxu0 0
        %5656 = vmatprep.subr.bf16.mxu0 0
        %5657 = vmatpush1.bf16.msra.mxu0 0
        %5658 = vmatprep.subr.bf16.mxu0 0
        %5659 = vmatpush1.bf16.msra.mxu0 0
        %5660 = vmatprep.subr.bf16.mxu0 0
        %5661 = vmatpush1.bf16.msra.mxu0 0
        %5662 = vmatprep.subr.bf16.mxu0 0
        %5663 = vmatpush1.bf16.msra.mxu0 0
        %5664 = vmatprep.subr.bf16.mxu0 0
        %5665 = vmatpush1.bf16.msra.mxu0 0
        %5666 = vmatprep.subr.bf16.mxu0 0
        %5667 = vmatpush1.bf16.msra.mxu0 0
        %5668 = vmatprep.subr.bf16.mxu0 0
        %5669 = vmatpush1.bf16.msra.mxu0 0
        %5670 = vmatprep.subr.bf16.mxu0 0
        %5671 = vmatpush1.bf16.msra.mxu0 0
        %5672 = vmatprep.mubr.bf16.mxu0 0
        %5673 = vmatmul.mubr.bf16.gmra.mrb[0].mxu0 %v5635
        %v5674 = vpop.f32.mrb[0].mxu0
        %v5675 = vadd.f32 0.0, %v5674
        %v5676 = vpop.f32.mrb[0].mxu0
        %v5677 = vpop.f32.mrb[0].mxu0
        %v5678 = vadd.f32 0.0, %v5677
        %v5679 = vpop.f32.mrb[0].mxu0
        %5680 = vmatprep.mubr.bf16.mxu0 0
        %5681 = vmatmul.mubr.bf16.gmra.mrb[0].mxu0 %v5638
        %v5682 = vpop.f32.mrb[0].mxu0
        %v5683 = vadd.f32 0.0, %v5682
        %v5684 = vpop.f32.mrb[0].mxu0
        %v5685 = vpop.f32.mrb[0].mxu0
        %v5686 = vpop.f32.mrb[0].mxu0
        %5687 = vdwg.mxu0
        %v5688 = vadd.f32 %v5597, %v5675
        %v5689 = vadd.f32 %v5598, %v5678
        %v5690 = vadd.f32 %v5599, %v5683
        %v5691 = vld [vmem:[%s5074 + $0x10] sm:$0x7]
        %s5692 = scalar_lea.vmem [#allocation2], 976
        %v5693 = vld [vmem:[%s5692] sm:$0xf]
        %v5694 = vld [vmem:[%s5692 + $0x4] sm:$0xf]
        %v5695 = vld [vmem:[%s5692 + $0x8] sm:$0xf]
        %v5696 = vld [vmem:[%s5692 + $0xc] sm:$0xf]
        %v5698 = vunpack.c.l.b16 %v5691
        %v5699 = vpack.c.b16 %v5698, %v5615
        %v5701 = vshrl.u32 %v5617, 16
        %v5703 = vrot.slane %v5701, 2
        %v5704 = vshll.u32 %v5617, 16
        %v5706 = vrot.slane %v5704, 3
        %v5707 = vor.u32 %v5703, %v5706
        %v5709 = vshrl.u32 %v5699, 16
        %v5711 = vrot.slane %v5709, 2
        %v5712 = vshll.u32 %v5699, 16
        %v5714 = vrot.slane %v5712, 3
        %v5715 = vor.u32 %v5711, %v5714
        %v5716 = vsel %vm923, %v5707, %v5715
        %v5721 = vunpack.c.l.b16 %v5693
        %v5722 = vunpack.c.l.b16 %v5694
        %v5723 = vunpack.c.l.b16 %v5695
        %v5724 = vunpack.c.l.b16 %v5696
        %v5725 = vpack.c.b16 %v5722, %v5721
        %v5726 = vpack.c.b16 %v5724, %v5723
        %v5730 = vsel %vm361, %v5716, 0
        %v5733 = vsel %vm361, %v5715, 0
        %5735 = vmatprep.subr.bf16.mxu0 0
        %5736 = vmatpush1.bf16.msra.mxu0 %v5725
        %5737 = vmatprep.subr.bf16.mxu0 0
        %5738 = vmatpush1.bf16.msra.mxu0 %v5726
        %5739 = vmatprep.subr.bf16.mxu0 0
        %5740 = vmatpush1.bf16.msra.mxu0 0
        %5741 = vmatprep.subr.bf16.mxu0 0
        %5742 = vmatpush1.bf16.msra.mxu0 0
        %5743 = vmatprep.subr.bf16.mxu0 0
        %5744 = vmatpush1.bf16.msra.mxu0 0
        %5745 = vmatprep.subr.bf16.mxu0 0
        %5746 = vmatpush1.bf16.msra.mxu0 0
        %5747 = vmatprep.subr.bf16.mxu0 0
        %5748 = vmatpush1.bf16.msra.mxu0 0
        %5749 = vmatprep.subr.bf16.mxu0 0
        %5750 = vmatpush1.bf16.msra.mxu0 0
        %5751 = vmatprep.subr.bf16.mxu0 0
        %5752 = vmatpush1.bf16.msra.mxu0 0
        %5753 = vmatprep.subr.bf16.mxu0 0
        %5754 = vmatpush1.bf16.msra.mxu0 0
        %5755 = vmatprep.subr.bf16.mxu0 0
        %5756 = vmatpush1.bf16.msra.mxu0 0
        %5757 = vmatprep.subr.bf16.mxu0 0
        %5758 = vmatpush1.bf16.msra.mxu0 0
        %5759 = vmatprep.subr.bf16.mxu0 0
        %5760 = vmatpush1.bf16.msra.mxu0 0
        %5761 = vmatprep.subr.bf16.mxu0 0
        %5762 = vmatpush1.bf16.msra.mxu0 0
        %5763 = vmatprep.subr.bf16.mxu0 0
        %5764 = vmatpush1.bf16.msra.mxu0 0
        %5765 = vmatprep.subr.bf16.mxu0 0
        %5766 = vmatpush1.bf16.msra.mxu0 0
        %5767 = vmatprep.mubr.bf16.mxu0 0
        %5768 = vmatmul.mubr.bf16.gmra.mrb[0].mxu0 %v5730
        %v5769 = vpop.f32.mrb[0].mxu0
        %v5770 = vadd.f32 0.0, %v5769
        %v5771 = vpop.f32.mrb[0].mxu0
        %v5772 = vpop.f32.mrb[0].mxu0
        %v5773 = vadd.f32 0.0, %v5772
        %v5774 = vpop.f32.mrb[0].mxu0
        %5775 = vmatprep.mubr.bf16.mxu0 0
        %5776 = vmatmul.mubr.bf16.gmra.mrb[0].mxu0 %v5733
        %v5777 = vpop.f32.mrb[0].mxu0
        %v5778 = vadd.f32 0.0, %v5777
        %v5779 = vpop.f32.mrb[0].mxu0
        %v5780 = vpop.f32.mrb[0].mxu0
        %v5781 = vpop.f32.mrb[0].mxu0
        %5782 = vdwg.mxu0
        %v5783 = vadd.f32 %v5688, %v5770
        %v5784 = vadd.f32 %v5689, %v5773
        %v5785 = vadd.f32 %v5690, %v5778
        %v5786 = vld [vmem:[%s5074 + $0x4] sm:$0x8]
        %s5787 = scalar_lea.vmem [#allocation2], 992
        %v5788 = vld [vmem:[%s5787] sm:$0xf]
        %v5789 = vld [vmem:[%s5787 + $0x4] sm:$0xf]
        %v5790 = vld [vmem:[%s5787 + $0x8] sm:$0xf]
        %v5791 = vld [vmem:[%s5787 + $0xc] sm:$0xf]
        %v5793 = vunpack.c.l.b16 %v5786
        %v5794 = vpack.c.b16 %v5614, %v5793
        %v5795 = vrot.slane %v5794, 3
        %v5796 = vrot.slane %v5699, 3
        %v5797 = vsel %vm577, %v5795, %v5796
        %v5802 = vunpack.c.l.b16 %v5788
        %v5803 = vunpack.c.l.b16 %v5789
        %v5804 = vunpack.c.l.b16 %v5790
        %v5805 = vunpack.c.l.b16 %v5791
        %v5806 = vpack.c.b16 %v5803, %v5802
        %v5807 = vpack.c.b16 %v5805, %v5804
        %v5811 = vsel %vm361, %v5797, 0
        %v5814 = vsel %vm361, %v5796, 0
        %5816 = vmatprep.subr.bf16.mxu0 0
        %5817 = vmatpush1.bf16.msra.mxu0 %v5806
        %5818 = vmatprep.subr.bf16.mxu0 0
        %5819 = vmatpush1.bf16.msra.mxu0 %v5807
        %5820 = vmatprep.subr.bf16.mxu0 0
        %5821 = vmatpush1.bf16.msra.mxu0 0
        %5822 = vmatprep.subr.bf16.mxu0 0
        %5823 = vmatpush1.bf16.msra.mxu0 0
        %5824 = vmatprep.subr.bf16.mxu0 0
        %5825 = vmatpush1.bf16.msra.mxu0 0
        %5826 = vmatprep.subr.bf16.mxu0 0
        %5827 = vmatpush1.bf16.msra.mxu0 0
        %5828 = vmatprep.subr.bf16.mxu0 0
        %5829 = vmatpush1.bf16.msra.mxu0 0
        %5830 = vmatprep.subr.bf16.mxu0 0
        %5831 = vmatpush1.bf16.msra.mxu0 0
        %5832 = vmatprep.subr.bf16.mxu0 0
        %5833 = vmatpush1.bf16.msra.mxu0 0
        %5834 = vmatprep.subr.bf16.mxu0 0
        %5835 = vmatpush1.bf16.msra.mxu0 0
        %5836 = vmatprep.subr.bf16.mxu0 0
        %5837 = vmatpush1.bf16.msra.mxu0 0
        %5838 = vmatprep.subr.bf16.mxu0 0
        %5839 = vmatpush1.bf16.msra.mxu0 0
        %5840 = vmatprep.subr.bf16.mxu0 0
        %5841 = vmatpush1.bf16.msra.mxu0 0
        %5842 = vmatprep.subr.bf16.mxu0 0
        %5843 = vmatpush1.bf16.msra.mxu0 0
        %5844 = vmatprep.subr.bf16.mxu0 0
        %5845 = vmatpush1.bf16.msra.mxu0 0
        %5846 = vmatprep.subr.bf16.mxu0 0
        %5847 = vmatpush1.bf16.msra.mxu0 0
        %5848 = vmatprep.mubr.bf16.mxu0 0
        %5849 = vmatmul.mubr.bf16.gmra.mrb[0].mxu0 %v5811
        %v5850 = vpop.f32.mrb[0].mxu0
        %v5851 = vadd.f32 0.0, %v5850
        %v5852 = vpop.f32.mrb[0].mxu0
        %v5853 = vpop.f32.mrb[0].mxu0
        %v5854 = vadd.f32 0.0, %v5853
        %v5855 = vpop.f32.mrb[0].mxu0
        %5856 = vmatprep.mubr.bf16.mxu0 0
        %5857 = vmatmul.mubr.bf16.gmra.mrb[0].mxu0 %v5814
        %v5858 = vpop.f32.mrb[0].mxu0
        %v5859 = vadd.f32 0.0, %v5858
        %v5860 = vpop.f32.mrb[0].mxu0
        %v5861 = vpop.f32.mrb[0].mxu0
        %v5862 = vpop.f32.mrb[0].mxu0
        %5863 = vdwg.mxu0
        %v5864 = vadd.f32 %v5783, %v5851
        %v5865 = vadd.f32 %v5784, %v5854
        %v5866 = vadd.f32 %v5785, %v5859
        %s5867 = sadd.s32 %s27, 7
        %s5868 = smul.u32 %s5867, 5
        %s5869 = smul.addr %s5868, 4
        %s5870 = scalar_lea.vmem %s305, %s5869
        %v5871 = vld [vmem:[%s5870] sm:$0xf]
        %v5872 = vld [vmem:[%s5870 + $0x4] sm:$0xf]
        %v5873 = vld [vmem:[%s5870 + $0x8] sm:$0xf]
        %s5874 = scalar_lea.vmem [#allocation2], 1008
        %v5875 = vld [vmem:[%s5874] sm:$0xf]
        %v5876 = vld [vmem:[%s5874 + $0x4] sm:$0xf]
        %v5877 = vld [vmem:[%s5874 + $0x8] sm:$0xf]
        %v5878 = vld [vmem:[%s5874 + $0xc] sm:$0xf]
        %v5882 = vunpack.c.l.b16 %v5871
        %v5883 = vunpack.c.l.b16 %v5872
        %v5884 = vunpack.c.l.b16 %v5873
        %v5885 = vpack.c.b16 %v5883, %v5882
        %v5886 = vpack.c.b16 %v5884, %v5884
        %v5891 = vunpack.c.l.b16 %v5875
        %v5892 = vunpack.c.l.b16 %v5876
        %v5893 = vunpack.c.l.b16 %v5877
        %v5894 = vunpack.c.l.b16 %v5878
        %v5895 = vpack.c.b16 %v5892, %v5891
        %v5896 = vpack.c.b16 %v5894, %v5893
        %v5900 = vsel %vm361, %v5885, 0
        %v5903 = vsel %vm361, %v5886, 0
        %5905 = vmatprep.subr.bf16.mxu0 0
        %5906 = vmatpush1.bf16.msra.mxu0 %v5895
        %5907 = vmatprep.subr.bf16.mxu0 0
        %5908 = vmatpush1.bf16.msra.mxu0 %v5896
        %5909 = vmatprep.subr.bf16.mxu0 0
        %5910 = vmatpush1.bf16.msra.mxu0 0
        %5911 = vmatprep.subr.bf16.mxu0 0
        %5912 = vmatpush1.bf16.msra.mxu0 0
        %5913 = vmatprep.subr.bf16.mxu0 0
        %5914 = vmatpush1.bf16.msra.mxu0 0
        %5915 = vmatprep.subr.bf16.mxu0 0
        %5916 = vmatpush1.bf16.msra.mxu0 0
        %5917 = vmatprep.subr.bf16.mxu0 0
        %5918 = vmatpush1.bf16.msra.mxu0 0
        %5919 = vmatprep.subr.bf16.mxu0 0
        %5920 = vmatpush1.bf16.msra.mxu0 0
        %5921 = vmatprep.subr.bf16.mxu0 0
        %5922 = vmatpush1.bf16.msra.mxu0 0
        %5923 = vmatprep.subr.bf16.mxu0 0
        %5924 = vmatpush1.bf16.msra.mxu0 0
        %5925 = vmatprep.subr.bf16.mxu0 0
        %5926 = vmatpush1.bf16.msra.mxu0 0
        %5927 = vmatprep.subr.bf16.mxu0 0
        %5928 = vmatpush1.bf16.msra.mxu0 0
        %5929 = vmatprep.subr.bf16.mxu0 0
        %5930 = vmatpush1.bf16.msra.mxu0 0
        %5931 = vmatprep.subr.bf16.mxu0 0
        %5932 = vmatpush1.bf16.msra.mxu0 0
        %5933 = vmatprep.subr.bf16.mxu0 0
        %5934 = vmatpush1.bf16.msra.mxu0 0
        %5935 = vmatprep.subr.bf16.mxu0 0
        %5936 = vmatpush1.bf16.msra.mxu0 0
        %5937 = vmatprep.mubr.bf16.mxu0 0
        %5938 = vmatmul.mubr.bf16.gmra.mrb[0].mxu0 %v5900
        %v5939 = vpop.f32.mrb[0].mxu0
        %v5940 = vadd.f32 0.0, %v5939
        %v5941 = vpop.f32.mrb[0].mxu0
        %v5942 = vpop.f32.mrb[0].mxu0
        %v5943 = vadd.f32 0.0, %v5942
        %v5944 = vpop.f32.mrb[0].mxu0
        %5945 = vmatprep.mubr.bf16.mxu0 0
        %5946 = vmatmul.mubr.bf16.gmra.mrb[0].mxu0 %v5903
        %v5947 = vpop.f32.mrb[0].mxu0
        %v5948 = vadd.f32 0.0, %v5947
        %v5949 = vpop.f32.mrb[0].mxu0
        %v5950 = vpop.f32.mrb[0].mxu0
        %v5951 = vpop.f32.mrb[0].mxu0
        %5952 = vdwg.mxu0
        %v5953 = vadd.f32 %v5864, %v5940
        %v5954 = vadd.f32 %v5865, %v5943
        %v5955 = vadd.f32 %v5866, %v5948
        %v5956 = vld [vmem:[%s5870] sm:$0xf]
        %v5957 = vld [vmem:[%s5870 + $0x4] sm:$0xf]
        %v5958 = vld [vmem:[%s5870 + $0x8] sm:$0xf]
        %v5959 = vld [vmem:[%s5870 + $0xc] sm:$0x1]
        %s5960 = scalar_lea.vmem [#allocation2], 1024
        %v5961 = vld [vmem:[%s5960] sm:$0xf]
        %v5962 = vld [vmem:[%s5960 + $0x4] sm:$0xf]
        %v5963 = vld [vmem:[%s5960 + $0x8] sm:$0xf]
        %v5964 = vld [vmem:[%s5960 + $0xc] sm:$0xf]
        %v5969 = vunpack.c.l.b16 %v5956
        %v5970 = vunpack.c.l.b16 %v5957
        %v5971 = vunpack.c.l.b16 %v5958
        %v5972 = vunpack.c.l.b16 %v5959
        %v5973 = vpack.c.b16 %v5970, %v5969
        %v5974 = vpack.c.b16 %v5972, %v5971
        %v5976 = vshrl.u32 %v5973, 16
        %v5978 = vshll.u32 %v5973, 16
        %v5980 = vrot.slane %v5978, 1
        %v5981 = vor.u32 %v5976, %v5980
        %v5983 = vshll.u32 %v5974, 16
        %v5985 = vrot.slane %v5983, 1
        %v5986 = vsel %vm333, %v5981, %v5985
        %v5987 = vshrl.u32 %v5974, 16
        %v5989 = vor.u32 %v5987, %v5985
        %v5994 = vunpack.c.l.b16 %v5961
        %v5995 = vunpack.c.l.b16 %v5962
        %v5996 = vunpack.c.l.b16 %v5963
        %v5997 = vunpack.c.l.b16 %v5964
        %v5998 = vpack.c.b16 %v5995, %v5994
        %v5999 = vpack.c.b16 %v5997, %v5996
        %v6003 = vsel %vm361, %v5986, 0
        %v6006 = vsel %vm361, %v5989, 0
        %6008 = vmatprep.subr.bf16.mxu0 0
        %6009 = vmatpush1.bf16.msra.mxu0 %v5998
        %6010 = vmatprep.subr.bf16.mxu0 0
        %6011 = vmatpush1.bf16.msra.mxu0 %v5999
        %6012 = vmatprep.subr.bf16.mxu0 0
        %6013 = vmatpush1.bf16.msra.mxu0 0
        %6014 = vmatprep.subr.bf16.mxu0 0
        %6015 = vmatpush1.bf16.msra.mxu0 0
        %6016 = vmatprep.subr.bf16.mxu0 0
        %6017 = vmatpush1.bf16.msra.mxu0 0
        %6018 = vmatprep.subr.bf16.mxu0 0
        %6019 = vmatpush1.bf16.msra.mxu0 0
        %6020 = vmatprep.subr.bf16.mxu0 0
        %6021 = vmatpush1.bf16.msra.mxu0 0
        %6022 = vmatprep.subr.bf16.mxu0 0
        %6023 = vmatpush1.bf16.msra.mxu0 0
        %6024 = vmatprep.subr.bf16.mxu0 0
        %6025 = vmatpush1.bf16.msra.mxu0 0
        %6026 = vmatprep.subr.bf16.mxu0 0
        %6027 = vmatpush1.bf16.msra.mxu0 0
        %6028 = vmatprep.subr.bf16.mxu0 0
        %6029 = vmatpush1.bf16.msra.mxu0 0
        %6030 = vmatprep.subr.bf16.mxu0 0
        %6031 = vmatpush1.bf16.msra.mxu0 0
        %6032 = vmatprep.subr.bf16.mxu0 0
        %6033 = vmatpush1.bf16.msra.mxu0 0
        %6034 = vmatprep.subr.bf16.mxu0 0
        %6035 = vmatpush1.bf16.msra.mxu0 0
        %6036 = vmatprep.subr.bf16.mxu0 0
        %6037 = vmatpush1.bf16.msra.mxu0 0
        %6038 = vmatprep.subr.bf16.mxu0 0
        %6039 = vmatpush1.bf16.msra.mxu0 0
        %6040 = vmatprep.mubr.bf16.mxu0 0
        %6041 = vmatmul.mubr.bf16.gmra.mrb[0].mxu0 %v6003
        %v6042 = vpop.f32.mrb[0].mxu0
        %v6043 = vadd.f32 0.0, %v6042
        %v6044 = vpop.f32.mrb[0].mxu0
        %v6045 = vpop.f32.mrb[0].mxu0
        %v6046 = vadd.f32 0.0, %v6045
        %v6047 = vpop.f32.mrb[0].mxu0
        %6048 = vmatprep.mubr.bf16.mxu0 0
        %6049 = vmatmul.mubr.bf16.gmra.mrb[0].mxu0 %v6006
        %v6050 = vpop.f32.mrb[0].mxu0
        %v6051 = vadd.f32 0.0, %v6050
        %v6052 = vpop.f32.mrb[0].mxu0
        %v6053 = vpop.f32.mrb[0].mxu0
        %v6054 = vpop.f32.mrb[0].mxu0
        %6055 = vdwg.mxu0
        %v6056 = vadd.f32 %v5953, %v6043
        %v6057 = vadd.f32 %v5954, %v6046
        %v6058 = vadd.f32 %v5955, %v6051
        %v6059 = vld [vmem:[%s5870] sm:$0xe]
        %s6060 = scalar_lea.vmem [#allocation2], 1040
        %v6061 = vld [vmem:[%s6060] sm:$0xf]
        %v6062 = vld [vmem:[%s6060 + $0x4] sm:$0xf]
        %v6063 = vld [vmem:[%s6060 + $0x8] sm:$0xf]
        %v6064 = vld [vmem:[%s6060 + $0xc] sm:$0xf]
        %v6066 = vunpack.c.l.b16 %v6059
        %v6067 = vpack.c.b16 %v5970, %v6066
        %v6068 = vrot.slane %v6067, 1
        %v6069 = vrot.slane %v5974, 1
        %v6070 = vsel %vm491, %v6068, %v6069
        %v6075 = vunpack.c.l.b16 %v6061
        %v6076 = vunpack.c.l.b16 %v6062
        %v6077 = vunpack.c.l.b16 %v6063
        %v6078 = vunpack.c.l.b16 %v6064
        %v6079 = vpack.c.b16 %v6076, %v6075
        %v6080 = vpack.c.b16 %v6078, %v6077
        %v6084 = vsel %vm361, %v6070, 0
        %v6087 = vsel %vm361, %v6069, 0
        %6089 = vmatprep.subr.bf16.mxu0 0
        %6090 = vmatpush1.bf16.msra.mxu0 %v6079
        %6091 = vmatprep.subr.bf16.mxu0 0
        %6092 = vmatpush1.bf16.msra.mxu0 %v6080
        %6093 = vmatprep.subr.bf16.mxu0 0
        %6094 = vmatpush1.bf16.msra.mxu0 0
        %6095 = vmatprep.subr.bf16.mxu0 0
        %6096 = vmatpush1.bf16.msra.mxu0 0
        %6097 = vmatprep.subr.bf16.mxu0 0
        %6098 = vmatpush1.bf16.msra.mxu0 0
        %6099 = vmatprep.subr.bf16.mxu0 0
        %6100 = vmatpush1.bf16.msra.mxu0 0
        %6101 = vmatprep.subr.bf16.mxu0 0
        %6102 = vmatpush1.bf16.msra.mxu0 0
        %6103 = vmatprep.subr.bf16.mxu0 0
        %6104 = vmatpush1.bf16.msra.mxu0 0
        %6105 = vmatprep.subr.bf16.mxu0 0
        %6106 = vmatpush1.bf16.msra.mxu0 0
        %6107 = vmatprep.subr.bf16.mxu0 0
        %6108 = vmatpush1.bf16.msra.mxu0 0
        %6109 = vmatprep.subr.bf16.mxu0 0
        %6110 = vmatpush1.bf16.msra.mxu0 0
        %6111 = vmatprep.subr.bf16.mxu0 0
        %6112 = vmatpush1.bf16.msra.mxu0 0
        %6113 = vmatprep.subr.bf16.mxu0 0
        %6114 = vmatpush1.bf16.msra.mxu0 0
        %6115 = vmatprep.subr.bf16.mxu0 0
        %6116 = vmatpush1.bf16.msra.mxu0 0
        %6117 = vmatprep.subr.bf16.mxu0 0
        %6118 = vmatpush1.bf16.msra.mxu0 0
        %6119 = vmatprep.subr.bf16.mxu0 0
        %6120 = vmatpush1.bf16.msra.mxu0 0
        %6121 = vmatprep.mubr.bf16.mxu0 0
        %6122 = vmatmul.mubr.bf16.gmra.mrb[0].mxu0 %v6084
        %v6123 = vpop.f32.mrb[0].mxu0
        %v6124 = vadd.f32 0.0, %v6123
        %v6125 = vpop.f32.mrb[0].mxu0
        %v6126 = vpop.f32.mrb[0].mxu0
        %v6127 = vadd.f32 0.0, %v6126
        %v6128 = vpop.f32.mrb[0].mxu0
        %6129 = vmatprep.mubr.bf16.mxu0 0
        %6130 = vmatmul.mubr.bf16.gmra.mrb[0].mxu0 %v6087
        %v6131 = vpop.f32.mrb[0].mxu0
        %v6132 = vadd.f32 0.0, %v6131
        %v6133 = vpop.f32.mrb[0].mxu0
        %v6134 = vpop.f32.mrb[0].mxu0
        %v6135 = vpop.f32.mrb[0].mxu0
        %6136 = vdwg.mxu0
        %v6137 = vadd.f32 %v6056, %v6124
        %v6138 = vadd.f32 %v6057, %v6127
        %v6139 = vadd.f32 %v6058, %v6132
        %v6140 = vld [vmem:[%s5870] sm:$0x8]
        %v6141 = vld [vmem:[%s5870 + $0xc] sm:$0x7]
        %s6142 = scalar_lea.vmem [#allocation2], 1056
        %v6143 = vld [vmem:[%s6142] sm:$0xf]
        %v6144 = vld [vmem:[%s6142 + $0x4] sm:$0xf]
        %v6145 = vld [vmem:[%s6142 + $0x8] sm:$0xf]
        %v6146 = vld [vmem:[%s6142 + $0xc] sm:$0xf]
        %v6149 = vunpack.c.l.b16 %v6140
        %v6150 = vunpack.c.l.b16 %v6141
        %v6151 = vpack.c.b16 %v5970, %v6149
        %v6152 = vpack.c.b16 %v6150, %v5971
        %v6153 = vrot.slane %v6151, 3
        %v6154 = vrot.slane %v6152, 3
        %v6155 = vsel %vm577, %v6153, %v6154
        %v6160 = vunpack.c.l.b16 %v6143
        %v6161 = vunpack.c.l.b16 %v6144
        %v6162 = vunpack.c.l.b16 %v6145
        %v6163 = vunpack.c.l.b16 %v6146
        %v6164 = vpack.c.b16 %v6161, %v6160
        %v6165 = vpack.c.b16 %v6163, %v6162
        %v6169 = vsel %vm361, %v6155, 0
        %v6172 = vsel %vm361, %v6154, 0
        %6174 = vmatprep.subr.bf16.mxu0 0
        %6175 = vmatpush1.bf16.msra.mxu0 %v6164
        %6176 = vmatprep.subr.bf16.mxu0 0
        %6177 = vmatpush1.bf16.msra.mxu0 %v6165
        %6178 = vmatprep.subr.bf16.mxu0 0
        %6179 = vmatpush1.bf16.msra.mxu0 0
        %6180 = vmatprep.subr.bf16.mxu0 0
        %6181 = vmatpush1.bf16.msra.mxu0 0
        %6182 = vmatprep.subr.bf16.mxu0 0
        %6183 = vmatpush1.bf16.msra.mxu0 0
        %6184 = vmatprep.subr.bf16.mxu0 0
        %6185 = vmatpush1.bf16.msra.mxu0 0
        %6186 = vmatprep.subr.bf16.mxu0 0
        %6187 = vmatpush1.bf16.msra.mxu0 0
        %6188 = vmatprep.subr.bf16.mxu0 0
        %6189 = vmatpush1.bf16.msra.mxu0 0
        %6190 = vmatprep.subr.bf16.mxu0 0
        %6191 = vmatpush1.bf16.msra.mxu0 0
        %6192 = vmatprep.subr.bf16.mxu0 0
        %6193 = vmatpush1.bf16.msra.mxu0 0
        %6194 = vmatprep.subr.bf16.mxu0 0
        %6195 = vmatpush1.bf16.msra.mxu0 0
        %6196 = vmatprep.subr.bf16.mxu0 0
        %6197 = vmatpush1.bf16.msra.mxu0 0
        %6198 = vmatprep.subr.bf16.mxu0 0
        %6199 = vmatpush1.bf16.msra.mxu0 0
        %6200 = vmatprep.subr.bf16.mxu0 0
        %6201 = vmatpush1.bf16.msra.mxu0 0
        %6202 = vmatprep.subr.bf16.mxu0 0
        %6203 = vmatpush1.bf16.msra.mxu0 0
        %6204 = vmatprep.subr.bf16.mxu0 0
        %6205 = vmatpush1.bf16.msra.mxu0 0
        %6206 = vmatprep.mubr.bf16.mxu0 0
        %6207 = vmatmul.mubr.bf16.gmra.mrb[0].mxu0 %v6169
        %v6208 = vpop.f32.mrb[0].mxu0
        %v6209 = vadd.f32 0.0, %v6208
        %v6210 = vpop.f32.mrb[0].mxu0
        %v6211 = vpop.f32.mrb[0].mxu0
        %v6212 = vadd.f32 0.0, %v6211
        %v6213 = vpop.f32.mrb[0].mxu0
        %6214 = vmatprep.mubr.bf16.mxu0 0
        %6215 = vmatmul.mubr.bf16.gmra.mrb[0].mxu0 %v6172
        %v6216 = vpop.f32.mrb[0].mxu0
        %v6217 = vadd.f32 0.0, %v6216
        %v6218 = vpop.f32.mrb[0].mxu0
        %v6219 = vpop.f32.mrb[0].mxu0
        %v6220 = vpop.f32.mrb[0].mxu0
        %6221 = vdwg.mxu0
        %v6222 = vadd.f32 %v6137, %v6209
        %v6223 = vadd.f32 %v6138, %v6212
        %v6224 = vadd.f32 %v6139, %v6217
        %v6225 = vld [vmem:[%s5870 + $0xc] sm:$0xf]
        %s6226 = scalar_lea.vmem [#allocation2], 1072
        %v6227 = vld [vmem:[%s6226] sm:$0xf]
        %v6228 = vld [vmem:[%s6226 + $0x4] sm:$0xf]
        %v6229 = vld [vmem:[%s6226 + $0x8] sm:$0xf]
        %v6230 = vld [vmem:[%s6226 + $0xc] sm:$0xf]
        %v6232 = vunpack.c.l.b16 %v6225
        %v6233 = vpack.c.b16 %v6232, %v5971
        %v6235 = vshrl.u32 %v6151, 16
        %v6237 = vrot.slane %v6235, 3
        %v6238 = vshll.u32 %v6151, 16
        %v6240 = vrot.slane %v6238, 4
        %v6241 = vor.u32 %v6237, %v6240
        %v6243 = vshrl.u32 %v6233, 16
        %v6245 = vrot.slane %v6243, 3
        %v6246 = vshll.u32 %v6233, 16
        %v6248 = vrot.slane %v6246, 4
        %v6249 = vor.u32 %v6245, %v6248
        %v6250 = vsel %vm659, %v6241, %v6249
        %v6255 = vunpack.c.l.b16 %v6227
        %v6256 = vunpack.c.l.b16 %v6228
        %v6257 = vunpack.c.l.b16 %v6229
        %v6258 = vunpack.c.l.b16 %v6230
        %v6259 = vpack.c.b16 %v6256, %v6255
        %v6260 = vpack.c.b16 %v6258, %v6257
        %v6264 = vsel %vm361, %v6250, 0
        %v6267 = vsel %vm361, %v6249, 0
        %6269 = vmatprep.subr.bf16.mxu0 0
        %6270 = vmatpush1.bf16.msra.mxu0 %v6259
        %6271 = vmatprep.subr.bf16.mxu0 0
        %6272 = vmatpush1.bf16.msra.mxu0 %v6260
        %6273 = vmatprep.subr.bf16.mxu0 0
        %6274 = vmatpush1.bf16.msra.mxu0 0
        %6275 = vmatprep.subr.bf16.mxu0 0
        %6276 = vmatpush1.bf16.msra.mxu0 0
        %6277 = vmatprep.subr.bf16.mxu0 0
        %6278 = vmatpush1.bf16.msra.mxu0 0
        %6279 = vmatprep.subr.bf16.mxu0 0
        %6280 = vmatpush1.bf16.msra.mxu0 0
        %6281 = vmatprep.subr.bf16.mxu0 0
        %6282 = vmatpush1.bf16.msra.mxu0 0
        %6283 = vmatprep.subr.bf16.mxu0 0
        %6284 = vmatpush1.bf16.msra.mxu0 0
        %6285 = vmatprep.subr.bf16.mxu0 0
        %6286 = vmatpush1.bf16.msra.mxu0 0
        %6287 = vmatprep.subr.bf16.mxu0 0
        %6288 = vmatpush1.bf16.msra.mxu0 0
        %6289 = vmatprep.subr.bf16.mxu0 0
        %6290 = vmatpush1.bf16.msra.mxu0 0
        %6291 = vmatprep.subr.bf16.mxu0 0
        %6292 = vmatpush1.bf16.msra.mxu0 0
        %6293 = vmatprep.subr.bf16.mxu0 0
        %6294 = vmatpush1.bf16.msra.mxu0 0
        %6295 = vmatprep.subr.bf16.mxu0 0
        %6296 = vmatpush1.bf16.msra.mxu0 0
        %6297 = vmatprep.subr.bf16.mxu0 0
        %6298 = vmatpush1.bf16.msra.mxu0 0
        %6299 = vmatprep.subr.bf16.mxu0 0
        %6300 = vmatpush1.bf16.msra.mxu0 0
        %6301 = vmatprep.mubr.bf16.mxu0 0
        %6302 = vmatmul.mubr.bf16.gmra.mrb[0].mxu0 %v6264
        %v6303 = vpop.f32.mrb[0].mxu0
        %v6304 = vadd.f32 0.0, %v6303
        %v6305 = vpop.f32.mrb[0].mxu0
        %v6306 = vpop.f32.mrb[0].mxu0
        %v6307 = vadd.f32 0.0, %v6306
        %v6308 = vpop.f32.mrb[0].mxu0
        %6309 = vmatprep.mubr.bf16.mxu0 0
        %6310 = vmatmul.mubr.bf16.gmra.mrb[0].mxu0 %v6267
        %v6311 = vpop.f32.mrb[0].mxu0
        %v6312 = vadd.f32 0.0, %v6311
        %v6313 = vpop.f32.mrb[0].mxu0
        %v6314 = vpop.f32.mrb[0].mxu0
        %v6315 = vpop.f32.mrb[0].mxu0
        %6316 = vdwg.mxu0
        %v6317 = vadd.f32 %v6222, %v6304
        %v6318 = vadd.f32 %v6223, %v6307
        %v6319 = vadd.f32 %v6224, %v6312
        %s6320 = scalar_lea.vmem [#allocation2], 1088
        %v6321 = vld [vmem:[%s6320] sm:$0xf]
        %v6322 = vld [vmem:[%s6320 + $0x4] sm:$0xf]
        %v6323 = vld [vmem:[%s6320 + $0x8] sm:$0xf]
        %v6324 = vld [vmem:[%s6320 + $0xc] sm:$0xf]
        %v6325 = vpack.c.b16 %v5971, %v5970
        %v6326 = vpack.c.b16 %v6232, %v6232
        %v6331 = vunpack.c.l.b16 %v6321
        %v6332 = vunpack.c.l.b16 %v6322
        %v6333 = vunpack.c.l.b16 %v6323
        %v6334 = vunpack.c.l.b16 %v6324
        %v6335 = vpack.c.b16 %v6332, %v6331
        %v6336 = vpack.c.b16 %v6334, %v6333
        %v6340 = vsel %vm361, %v6325, 0
        %v6343 = vsel %vm361, %v6326, 0
        %6345 = vmatprep.subr.bf16.mxu0 0
        %6346 = vmatpush1.bf16.msra.mxu0 %v6335
        %6347 = vmatprep.subr.bf16.mxu0 0
        %6348 = vmatpush1.bf16.msra.mxu0 %v6336
        %6349 = vmatprep.subr.bf16.mxu0 0
        %6350 = vmatpush1.bf16.msra.mxu0 0
        %6351 = vmatprep.subr.bf16.mxu0 0
        %6352 = vmatpush1.bf16.msra.mxu0 0
        %6353 = vmatprep.subr.bf16.mxu0 0
        %6354 = vmatpush1.bf16.msra.mxu0 0
        %6355 = vmatprep.subr.bf16.mxu0 0
        %6356 = vmatpush1.bf16.msra.mxu0 0
        %6357 = vmatprep.subr.bf16.mxu0 0
        %6358 = vmatpush1.bf16.msra.mxu0 0
        %6359 = vmatprep.subr.bf16.mxu0 0
        %6360 = vmatpush1.bf16.msra.mxu0 0
        %6361 = vmatprep.subr.bf16.mxu0 0
        %6362 = vmatpush1.bf16.msra.mxu0 0
        %6363 = vmatprep.subr.bf16.mxu0 0
        %6364 = vmatpush1.bf16.msra.mxu0 0
        %6365 = vmatprep.subr.bf16.mxu0 0
        %6366 = vmatpush1.bf16.msra.mxu0 0
        %6367 = vmatprep.subr.bf16.mxu0 0
        %6368 = vmatpush1.bf16.msra.mxu0 0
        %6369 = vmatprep.subr.bf16.mxu0 0
        %6370 = vmatpush1.bf16.msra.mxu0 0
        %6371 = vmatprep.subr.bf16.mxu0 0
        %6372 = vmatpush1.bf16.msra.mxu0 0
        %6373 = vmatprep.subr.bf16.mxu0 0
        %6374 = vmatpush1.bf16.msra.mxu0 0
        %6375 = vmatprep.subr.bf16.mxu0 0
        %6376 = vmatpush1.bf16.msra.mxu0 0
        %6377 = vmatprep.mubr.bf16.mxu0 0
        %6378 = vmatmul.mubr.bf16.gmra.mrb[0].mxu0 %v6340
        %v6379 = vpop.f32.mrb[0].mxu0
        %v6380 = vadd.f32 0.0, %v6379
        %v6381 = vpop.f32.mrb[0].mxu0
        %v6382 = vpop.f32.mrb[0].mxu0
        %v6383 = vadd.f32 0.0, %v6382
        %v6384 = vpop.f32.mrb[0].mxu0
        %6385 = vmatprep.mubr.bf16.mxu0 0
        %6386 = vmatmul.mubr.bf16.gmra.mrb[0].mxu0 %v6343
        %v6387 = vpop.f32.mrb[0].mxu0
        %v6388 = vadd.f32 0.0, %v6387
        %v6389 = vpop.f32.mrb[0].mxu0
        %v6390 = vpop.f32.mrb[0].mxu0
        %v6391 = vpop.f32.mrb[0].mxu0
        %6392 = vdwg.mxu0
        %v6393 = vadd.f32 %v6317, %v6380
        %v6394 = vadd.f32 %v6318, %v6383
        %v6395 = vadd.f32 %v6319, %v6388
        %v6396 = vld [vmem:[%s5870 + $0x4] sm:$0xc]
        %v6397 = vld [vmem:[%s5870 + $0x8] sm:$0xf]
        %v6398 = vld [vmem:[%s5870 + $0xc] sm:$0xf]
        %v6399 = vld [vmem:[%s5870 + $0x10] sm:$0x3]
        %s6400 = scalar_lea.vmem [#allocation2], 1104
        %v6401 = vld [vmem:[%s6400] sm:$0xf]
        %v6402 = vld [vmem:[%s6400 + $0x4] sm:$0xf]
        %v6403 = vld [vmem:[%s6400 + $0x8] sm:$0xf]
        %v6404 = vld [vmem:[%s6400 + $0xc] sm:$0xf]
        %v6409 = vunpack.c.l.b16 %v6396
        %v6410 = vunpack.c.l.b16 %v6397
        %v6411 = vunpack.c.l.b16 %v6398
        %v6412 = vunpack.c.l.b16 %v6399
        %v6413 = vpack.c.b16 %v6410, %v6409
        %v6414 = vpack.c.b16 %v6412, %v6411
        %v6415 = vrot.slane %v6413, 2
        %v6416 = vrot.slane %v6414, 2
        %v6417 = vsel %vm841, %v6415, %v6416
        %v6422 = vunpack.c.l.b16 %v6401
        %v6423 = vunpack.c.l.b16 %v6402
        %v6424 = vunpack.c.l.b16 %v6403
        %v6425 = vunpack.c.l.b16 %v6404
        %v6426 = vpack.c.b16 %v6423, %v6422
        %v6427 = vpack.c.b16 %v6425, %v6424
        %v6431 = vsel %vm361, %v6417, 0
        %v6434 = vsel %vm361, %v6416, 0
        %6436 = vmatprep.subr.bf16.mxu0 0
        %6437 = vmatpush1.bf16.msra.mxu0 %v6426
        %6438 = vmatprep.subr.bf16.mxu0 0
        %6439 = vmatpush1.bf16.msra.mxu0 %v6427
        %6440 = vmatprep.subr.bf16.mxu0 0
        %6441 = vmatpush1.bf16.msra.mxu0 0
        %6442 = vmatprep.subr.bf16.mxu0 0
        %6443 = vmatpush1.bf16.msra.mxu0 0
        %6444 = vmatprep.subr.bf16.mxu0 0
        %6445 = vmatpush1.bf16.msra.mxu0 0
        %6446 = vmatprep.subr.bf16.mxu0 0
        %6447 = vmatpush1.bf16.msra.mxu0 0
        %6448 = vmatprep.subr.bf16.mxu0 0
        %6449 = vmatpush1.bf16.msra.mxu0 0
        %6450 = vmatprep.subr.bf16.mxu0 0
        %6451 = vmatpush1.bf16.msra.mxu0 0
        %6452 = vmatprep.subr.bf16.mxu0 0
        %6453 = vmatpush1.bf16.msra.mxu0 0
        %6454 = vmatprep.subr.bf16.mxu0 0
        %6455 = vmatpush1.bf16.msra.mxu0 0
        %6456 = vmatprep.subr.bf16.mxu0 0
        %6457 = vmatpush1.bf16.msra.mxu0 0
        %6458 = vmatprep.subr.bf16.mxu0 0
        %6459 = vmatpush1.bf16.msra.mxu0 0
        %6460 = vmatprep.subr.bf16.mxu0 0
        %6461 = vmatpush1.bf16.msra.mxu0 0
        %6462 = vmatprep.subr.bf16.mxu0 0
        %6463 = vmatpush1.bf16.msra.mxu0 0
        %6464 = vmatprep.subr.bf16.mxu0 0
        %6465 = vmatpush1.bf16.msra.mxu0 0
        %6466 = vmatprep.subr.bf16.mxu0 0
        %6467 = vmatpush1.bf16.msra.mxu0 0
        %6468 = vmatprep.mubr.bf16.mxu0 0
        %6469 = vmatmul.mubr.bf16.gmra.mrb[0].mxu0 %v6431
        %v6470 = vpop.f32.mrb[0].mxu0
        %v6471 = vadd.f32 0.0, %v6470
        %v6472 = vpop.f32.mrb[0].mxu0
        %v6473 = vpop.f32.mrb[0].mxu0
        %v6474 = vadd.f32 0.0, %v6473
        %v6475 = vpop.f32.mrb[0].mxu0
        %6476 = vmatprep.mubr.bf16.mxu0 0
        %6477 = vmatmul.mubr.bf16.gmra.mrb[0].mxu0 %v6434
        %v6478 = vpop.f32.mrb[0].mxu0
        %v6479 = vadd.f32 0.0, %v6478
        %v6480 = vpop.f32.mrb[0].mxu0
        %v6481 = vpop.f32.mrb[0].mxu0
        %v6482 = vpop.f32.mrb[0].mxu0
        %6483 = vdwg.mxu0
        %v6484 = vadd.f32 %v6393, %v6471
        %v6485 = vadd.f32 %v6394, %v6474
        %v6486 = vadd.f32 %v6395, %v6479
        %v6487 = vld [vmem:[%s5870 + $0x10] sm:$0x7]
        %s6488 = scalar_lea.vmem [#allocation2], 1120
        %v6489 = vld [vmem:[%s6488] sm:$0xf]
        %v6490 = vld [vmem:[%s6488 + $0x4] sm:$0xf]
        %v6491 = vld [vmem:[%s6488 + $0x8] sm:$0xf]
        %v6492 = vld [vmem:[%s6488 + $0xc] sm:$0xf]
        %v6494 = vunpack.c.l.b16 %v6487
        %v6495 = vpack.c.b16 %v6494, %v6411
        %v6497 = vshrl.u32 %v6413, 16
        %v6499 = vrot.slane %v6497, 2
        %v6500 = vshll.u32 %v6413, 16
        %v6502 = vrot.slane %v6500, 3
        %v6503 = vor.u32 %v6499, %v6502
        %v6505 = vshrl.u32 %v6495, 16
        %v6507 = vrot.slane %v6505, 2
        %v6508 = vshll.u32 %v6495, 16
        %v6510 = vrot.slane %v6508, 3
        %v6511 = vor.u32 %v6507, %v6510
        %v6512 = vsel %vm923, %v6503, %v6511
        %v6517 = vunpack.c.l.b16 %v6489
        %v6518 = vunpack.c.l.b16 %v6490
        %v6519 = vunpack.c.l.b16 %v6491
        %v6520 = vunpack.c.l.b16 %v6492
        %v6521 = vpack.c.b16 %v6518, %v6517
        %v6522 = vpack.c.b16 %v6520, %v6519
        %v6526 = vsel %vm361, %v6512, 0
        %v6529 = vsel %vm361, %v6511, 0
        %6531 = vmatprep.subr.bf16.mxu0 0
        %6532 = vmatpush1.bf16.msra.mxu0 %v6521
        %6533 = vmatprep.subr.bf16.mxu0 0
        %6534 = vmatpush1.bf16.msra.mxu0 %v6522
        %6535 = vmatprep.subr.bf16.mxu0 0
        %6536 = vmatpush1.bf16.msra.mxu0 0
        %6537 = vmatprep.subr.bf16.mxu0 0
        %6538 = vmatpush1.bf16.msra.mxu0 0
        %6539 = vmatprep.subr.bf16.mxu0 0
        %6540 = vmatpush1.bf16.msra.mxu0 0
        %6541 = vmatprep.subr.bf16.mxu0 0
        %6542 = vmatpush1.bf16.msra.mxu0 0
        %6543 = vmatprep.subr.bf16.mxu0 0
        %6544 = vmatpush1.bf16.msra.mxu0 0
        %6545 = vmatprep.subr.bf16.mxu0 0
        %6546 = vmatpush1.bf16.msra.mxu0 0
        %6547 = vmatprep.subr.bf16.mxu0 0
        %6548 = vmatpush1.bf16.msra.mxu0 0
        %6549 = vmatprep.subr.bf16.mxu0 0
        %6550 = vmatpush1.bf16.msra.mxu0 0
        %6551 = vmatprep.subr.bf16.mxu0 0
        %6552 = vmatpush1.bf16.msra.mxu0 0
        %6553 = vmatprep.subr.bf16.mxu0 0
        %6554 = vmatpush1.bf16.msra.mxu0 0
        %6555 = vmatprep.subr.bf16.mxu0 0
        %6556 = vmatpush1.bf16.msra.mxu0 0
        %6557 = vmatprep.subr.bf16.mxu0 0
        %6558 = vmatpush1.bf16.msra.mxu0 0
        %6559 = vmatprep.subr.bf16.mxu0 0
        %6560 = vmatpush1.bf16.msra.mxu0 0
        %6561 = vmatprep.subr.bf16.mxu0 0
        %6562 = vmatpush1.bf16.msra.mxu0 0
        %6563 = vmatprep.mubr.bf16.mxu0 0
        %6564 = vmatmul.mubr.bf16.gmra.mrb[0].mxu0 %v6526
        %v6565 = vpop.f32.mrb[0].mxu0
        %v6566 = vadd.f32 0.0, %v6565
        %v6567 = vpop.f32.mrb[0].mxu0
        %v6568 = vpop.f32.mrb[0].mxu0
        %v6569 = vadd.f32 0.0, %v6568
        %v6570 = vpop.f32.mrb[0].mxu0
        %6571 = vmatprep.mubr.bf16.mxu0 0
        %6572 = vmatmul.mubr.bf16.gmra.mrb[0].mxu0 %v6529
        %v6573 = vpop.f32.mrb[0].mxu0
        %v6574 = vadd.f32 0.0, %v6573
        %v6575 = vpop.f32.mrb[0].mxu0
        %v6576 = vpop.f32.mrb[0].mxu0
        %v6577 = vpop.f32.mrb[0].mxu0
        %6578 = vdwg.mxu0
        %v6579 = vadd.f32 %v6484, %v6566
        %v6580 = vadd.f32 %v6485, %v6569
        %v6581 = vadd.f32 %v6486, %v6574
        %v6582 = vld [vmem:[%s5870 + $0x4] sm:$0x8]
        %s6583 = scalar_lea.vmem [#allocation2], 1136
        %v6584 = vld [vmem:[%s6583] sm:$0xf]
        %v6585 = vld [vmem:[%s6583 + $0x4] sm:$0xf]
        %v6586 = vld [vmem:[%s6583 + $0x8] sm:$0xf]
        %v6587 = vld [vmem:[%s6583 + $0xc] sm:$0xf]
        %v6589 = vunpack.c.l.b16 %v6582
        %v6590 = vpack.c.b16 %v6410, %v6589
        %v6591 = vrot.slane %v6590, 3
        %v6592 = vrot.slane %v6495, 3
        %v6593 = vsel %vm577, %v6591, %v6592
        %v6598 = vunpack.c.l.b16 %v6584
        %v6599 = vunpack.c.l.b16 %v6585
        %v6600 = vunpack.c.l.b16 %v6586
        %v6601 = vunpack.c.l.b16 %v6587
        %v6602 = vpack.c.b16 %v6599, %v6598
        %v6603 = vpack.c.b16 %v6601, %v6600
        %v6607 = vsel %vm361, %v6593, 0
        %v6610 = vsel %vm361, %v6592, 0
        %6612 = vmatprep.subr.bf16.mxu0 0
        %6613 = vmatpush1.bf16.msra.mxu0 %v6602
        %6614 = vmatprep.subr.bf16.mxu0 0
        %6615 = vmatpush1.bf16.msra.mxu0 %v6603
        %6616 = vmatprep.subr.bf16.mxu0 0
        %6617 = vmatpush1.bf16.msra.mxu0 0
        %6618 = vmatprep.subr.bf16.mxu0 0
        %6619 = vmatpush1.bf16.msra.mxu0 0
        %6620 = vmatprep.subr.bf16.mxu0 0
        %6621 = vmatpush1.bf16.msra.mxu0 0
        %6622 = vmatprep.subr.bf16.mxu0 0
        %6623 = vmatpush1.bf16.msra.mxu0 0
        %6624 = vmatprep.subr.bf16.mxu0 0
        %6625 = vmatpush1.bf16.msra.mxu0 0
        %6626 = vmatprep.subr.bf16.mxu0 0
        %6627 = vmatpush1.bf16.msra.mxu0 0
        %6628 = vmatprep.subr.bf16.mxu0 0
        %6629 = vmatpush1.bf16.msra.mxu0 0
        %6630 = vmatprep.subr.bf16.mxu0 0
        %6631 = vmatpush1.bf16.msra.mxu0 0
        %6632 = vmatprep.subr.bf16.mxu0 0
        %6633 = vmatpush1.bf16.msra.mxu0 0
        %6634 = vmatprep.subr.bf16.mxu0 0
        %6635 = vmatpush1.bf16.msra.mxu0 0
        %6636 = vmatprep.subr.bf16.mxu0 0
        %6637 = vmatpush1.bf16.msra.mxu0 0
        %6638 = vmatprep.subr.bf16.mxu0 0
        %6639 = vmatpush1.bf16.msra.mxu0 0
        %6640 = vmatprep.subr.bf16.mxu0 0
        %6641 = vmatpush1.bf16.msra.mxu0 0
        %6642 = vmatprep.subr.bf16.mxu0 0
        %6643 = vmatpush1.bf16.msra.mxu0 0
        %6644 = vmatprep.mubr.bf16.mxu0 0
        %6645 = vmatmul.mubr.bf16.gmra.mrb[0].mxu0 %v6607
        %v6646 = vpop.f32.mrb[0].mxu0
        %v6647 = vadd.f32 0.0, %v6646
        %v6648 = vpop.f32.mrb[0].mxu0
        %v6649 = vpop.f32.mrb[0].mxu0
        %v6650 = vadd.f32 0.0, %v6649
        %v6651 = vpop.f32.mrb[0].mxu0
        %6652 = vmatprep.mubr.bf16.mxu0 0
        %6653 = vmatmul.mubr.bf16.gmra.mrb[0].mxu0 %v6610
        %v6654 = vpop.f32.mrb[0].mxu0
        %v6655 = vadd.f32 0.0, %v6654
        %v6656 = vpop.f32.mrb[0].mxu0
        %v6657 = vpop.f32.mrb[0].mxu0
        %v6658 = vpop.f32.mrb[0].mxu0
        %6659 = vdwg.mxu0
        %v6660 = vadd.f32 %v6579, %v6647
        %v6661 = vadd.f32 %v6580, %v6650
        %v6662 = vadd.f32 %v6581, %v6655
        %s6663 = sadd.s32 %s27, 8
        %s6664 = smul.u32 %s6663, 5
        %s6665 = smul.addr %s6664, 4
        %s6666 = scalar_lea.vmem %s305, %s6665
        %v6667 = vld [vmem:[%s6666] sm:$0xf]
        %v6668 = vld [vmem:[%s6666 + $0x4] sm:$0xf]
        %v6669 = vld [vmem:[%s6666 + $0x8] sm:$0xf]
        %s6670 = scalar_lea.vmem [#allocation2], 1152
        %v6671 = vld [vmem:[%s6670] sm:$0xf]
        %v6672 = vld [vmem:[%s6670 + $0x4] sm:$0xf]
        %v6673 = vld [vmem:[%s6670 + $0x8] sm:$0xf]
        %v6674 = vld [vmem:[%s6670 + $0xc] sm:$0xf]
        %v6678 = vunpack.c.l.b16 %v6667
        %v6679 = vunpack.c.l.b16 %v6668
        %v6680 = vunpack.c.l.b16 %v6669
        %v6681 = vpack.c.b16 %v6679, %v6678
        %v6682 = vpack.c.b16 %v6680, %v6680
        %v6687 = vunpack.c.l.b16 %v6671
        %v6688 = vunpack.c.l.b16 %v6672
        %v6689 = vunpack.c.l.b16 %v6673
        %v6690 = vunpack.c.l.b16 %v6674
        %v6691 = vpack.c.b16 %v6688, %v6687
        %v6692 = vpack.c.b16 %v6690, %v6689
        %v6696 = vsel %vm361, %v6681, 0
        %v6699 = vsel %vm361, %v6682, 0
        %6701 = vmatprep.subr.bf16.mxu0 0
        %6702 = vmatpush1.bf16.msra.mxu0 %v6691
        %6703 = vmatprep.subr.bf16.mxu0 0
        %6704 = vmatpush1.bf16.msra.mxu0 %v6692
        %6705 = vmatprep.subr.bf16.mxu0 0
        %6706 = vmatpush1.bf16.msra.mxu0 0
        %6707 = vmatprep.subr.bf16.mxu0 0
        %6708 = vmatpush1.bf16.msra.mxu0 0
        %6709 = vmatprep.subr.bf16.mxu0 0
        %6710 = vmatpush1.bf16.msra.mxu0 0
        %6711 = vmatprep.subr.bf16.mxu0 0
        %6712 = vmatpush1.bf16.msra.mxu0 0
        %6713 = vmatprep.subr.bf16.mxu0 0
        %6714 = vmatpush1.bf16.msra.mxu0 0
        %6715 = vmatprep.subr.bf16.mxu0 0
        %6716 = vmatpush1.bf16.msra.mxu0 0
        %6717 = vmatprep.subr.bf16.mxu0 0
        %6718 = vmatpush1.bf16.msra.mxu0 0
        %6719 = vmatprep.subr.bf16.mxu0 0
        %6720 = vmatpush1.bf16.msra.mxu0 0
        %6721 = vmatprep.subr.bf16.mxu0 0
        %6722 = vmatpush1.bf16.msra.mxu0 0
        %6723 = vmatprep.subr.bf16.mxu0 0
        %6724 = vmatpush1.bf16.msra.mxu0 0
        %6725 = vmatprep.subr.bf16.mxu0 0
        %6726 = vmatpush1.bf16.msra.mxu0 0
        %6727 = vmatprep.subr.bf16.mxu0 0
        %6728 = vmatpush1.bf16.msra.mxu0 0
        %6729 = vmatprep.subr.bf16.mxu0 0
        %6730 = vmatpush1.bf16.msra.mxu0 0
        %6731 = vmatprep.subr.bf16.mxu0 0
        %6732 = vmatpush1.bf16.msra.mxu0 0
        %6733 = vmatprep.mubr.bf16.mxu0 0
        %6734 = vmatmul.mubr.bf16.gmra.mrb[0].mxu0 %v6696
        %v6735 = vpop.f32.mrb[0].mxu0
        %v6736 = vadd.f32 0.0, %v6735
        %v6737 = vpop.f32.mrb[0].mxu0
        %v6738 = vpop.f32.mrb[0].mxu0
        %v6739 = vadd.f32 0.0, %v6738
        %v6740 = vpop.f32.mrb[0].mxu0
        %6741 = vmatprep.mubr.bf16.mxu0 0
        %6742 = vmatmul.mubr.bf16.gmra.mrb[0].mxu0 %v6699
        %v6743 = vpop.f32.mrb[0].mxu0
        %v6744 = vadd.f32 0.0, %v6743
        %v6745 = vpop.f32.mrb[0].mxu0
        %v6746 = vpop.f32.mrb[0].mxu0
        %v6747 = vpop.f32.mrb[0].mxu0
        %6748 = vdwg.mxu0
        %v6749 = vadd.f32 %v6660, %v6736
        %v6750 = vadd.f32 %v6661, %v6739
        %v6751 = vadd.f32 %v6662, %v6744
        %v6752 = vld [vmem:[%s6666] sm:$0xf]
        %v6753 = vld [vmem:[%s6666 + $0x4] sm:$0xf]
        %v6754 = vld [vmem:[%s6666 + $0x8] sm:$0xf]
        %v6755 = vld [vmem:[%s6666 + $0xc] sm:$0x1]
        %s6756 = scalar_lea.vmem [#allocation2], 1168
        %v6757 = vld [vmem:[%s6756] sm:$0xf]
        %v6758 = vld [vmem:[%s6756 + $0x4] sm:$0xf]
        %v6759 = vld [vmem:[%s6756 + $0x8] sm:$0xf]
        %v6760 = vld [vmem:[%s6756 + $0xc] sm:$0xf]
        %v6765 = vunpack.c.l.b16 %v6752
        %v6766 = vunpack.c.l.b16 %v6753
        %v6767 = vunpack.c.l.b16 %v6754
        %v6768 = vunpack.c.l.b16 %v6755
        %v6769 = vpack.c.b16 %v6766, %v6765
        %v6770 = vpack.c.b16 %v6768, %v6767
        %v6772 = vshrl.u32 %v6769, 16
        %v6774 = vshll.u32 %v6769, 16
        %v6776 = vrot.slane %v6774, 1
        %v6777 = vor.u32 %v6772, %v6776
        %v6779 = vshll.u32 %v6770, 16
        %v6781 = vrot.slane %v6779, 1
        %v6782 = vsel %vm333, %v6777, %v6781
        %v6783 = vshrl.u32 %v6770, 16
        %v6785 = vor.u32 %v6783, %v6781
        %v6790 = vunpack.c.l.b16 %v6757
        %v6791 = vunpack.c.l.b16 %v6758
        %v6792 = vunpack.c.l.b16 %v6759
        %v6793 = vunpack.c.l.b16 %v6760
        %v6794 = vpack.c.b16 %v6791, %v6790
        %v6795 = vpack.c.b16 %v6793, %v6792
        %v6799 = vsel %vm361, %v6782, 0
        %v6802 = vsel %vm361, %v6785, 0
        %6804 = vmatprep.subr.bf16.mxu0 0
        %6805 = vmatpush1.bf16.msra.mxu0 %v6794
        %6806 = vmatprep.subr.bf16.mxu0 0
        %6807 = vmatpush1.bf16.msra.mxu0 %v6795
        %6808 = vmatprep.subr.bf16.mxu0 0
        %6809 = vmatpush1.bf16.msra.mxu0 0
        %6810 = vmatprep.subr.bf16.mxu0 0
        %6811 = vmatpush1.bf16.msra.mxu0 0
        %6812 = vmatprep.subr.bf16.mxu0 0
        %6813 = vmatpush1.bf16.msra.mxu0 0
        %6814 = vmatprep.subr.bf16.mxu0 0
        %6815 = vmatpush1.bf16.msra.mxu0 0
        %6816 = vmatprep.subr.bf16.mxu0 0
        %6817 = vmatpush1.bf16.msra.mxu0 0
        %6818 = vmatprep.subr.bf16.mxu0 0
        %6819 = vmatpush1.bf16.msra.mxu0 0
        %6820 = vmatprep.subr.bf16.mxu0 0
        %6821 = vmatpush1.bf16.msra.mxu0 0
        %6822 = vmatprep.subr.bf16.mxu0 0
        %6823 = vmatpush1.bf16.msra.mxu0 0
        %6824 = vmatprep.subr.bf16.mxu0 0
        %6825 = vmatpush1.bf16.msra.mxu0 0
        %6826 = vmatprep.subr.bf16.mxu0 0
        %6827 = vmatpush1.bf16.msra.mxu0 0
        %6828 = vmatprep.subr.bf16.mxu0 0
        %6829 = vmatpush1.bf16.msra.mxu0 0
        %6830 = vmatprep.subr.bf16.mxu0 0
        %6831 = vmatpush1.bf16.msra.mxu0 0
        %6832 = vmatprep.subr.bf16.mxu0 0
        %6833 = vmatpush1.bf16.msra.mxu0 0
        %6834 = vmatprep.subr.bf16.mxu0 0
        %6835 = vmatpush1.bf16.msra.mxu0 0
        %6836 = vmatprep.mubr.bf16.mxu0 0
        %6837 = vmatmul.mubr.bf16.gmra.mrb[0].mxu0 %v6799
        %v6838 = vpop.f32.mrb[0].mxu0
        %v6839 = vadd.f32 0.0, %v6838
        %v6840 = vpop.f32.mrb[0].mxu0
        %v6841 = vpop.f32.mrb[0].mxu0
        %v6842 = vadd.f32 0.0, %v6841
        %v6843 = vpop.f32.mrb[0].mxu0
        %6844 = vmatprep.mubr.bf16.mxu0 0
        %6845 = vmatmul.mubr.bf16.gmra.mrb[0].mxu0 %v6802
        %v6846 = vpop.f32.mrb[0].mxu0
        %v6847 = vadd.f32 0.0, %v6846
        %v6848 = vpop.f32.mrb[0].mxu0
        %v6849 = vpop.f32.mrb[0].mxu0
        %v6850 = vpop.f32.mrb[0].mxu0
        %6851 = vdwg.mxu0
        %v6852 = vadd.f32 %v6749, %v6839
        %v6853 = vadd.f32 %v6750, %v6842
        %v6854 = vadd.f32 %v6751, %v6847
        %v6855 = vld [vmem:[%s6666] sm:$0xe]
        %s6856 = scalar_lea.vmem [#allocation2], 1184
        %v6857 = vld [vmem:[%s6856] sm:$0xf]
        %v6858 = vld [vmem:[%s6856 + $0x4] sm:$0xf]
        %v6859 = vld [vmem:[%s6856 + $0x8] sm:$0xf]
        %v6860 = vld [vmem:[%s6856 + $0xc] sm:$0xf]
        %v6862 = vunpack.c.l.b16 %v6855
        %v6863 = vpack.c.b16 %v6766, %v6862
        %v6864 = vrot.slane %v6863, 1
        %v6865 = vrot.slane %v6770, 1
        %v6866 = vsel %vm491, %v6864, %v6865
        %v6871 = vunpack.c.l.b16 %v6857
        %v6872 = vunpack.c.l.b16 %v6858
        %v6873 = vunpack.c.l.b16 %v6859
        %v6874 = vunpack.c.l.b16 %v6860
        %v6875 = vpack.c.b16 %v6872, %v6871
        %v6876 = vpack.c.b16 %v6874, %v6873
        %v6880 = vsel %vm361, %v6866, 0
        %v6883 = vsel %vm361, %v6865, 0
        %6885 = vmatprep.subr.bf16.mxu0 0
        %6886 = vmatpush1.bf16.msra.mxu0 %v6875
        %6887 = vmatprep.subr.bf16.mxu0 0
        %6888 = vmatpush1.bf16.msra.mxu0 %v6876
        %6889 = vmatprep.subr.bf16.mxu0 0
        %6890 = vmatpush1.bf16.msra.mxu0 0
        %6891 = vmatprep.subr.bf16.mxu0 0
        %6892 = vmatpush1.bf16.msra.mxu0 0
        %6893 = vmatprep.subr.bf16.mxu0 0
        %6894 = vmatpush1.bf16.msra.mxu0 0
        %6895 = vmatprep.subr.bf16.mxu0 0
        %6896 = vmatpush1.bf16.msra.mxu0 0
        %6897 = vmatprep.subr.bf16.mxu0 0
        %6898 = vmatpush1.bf16.msra.mxu0 0
        %6899 = vmatprep.subr.bf16.mxu0 0
        %6900 = vmatpush1.bf16.msra.mxu0 0
        %6901 = vmatprep.subr.bf16.mxu0 0
        %6902 = vmatpush1.bf16.msra.mxu0 0
        %6903 = vmatprep.subr.bf16.mxu0 0
        %6904 = vmatpush1.bf16.msra.mxu0 0
        %6905 = vmatprep.subr.bf16.mxu0 0
        %6906 = vmatpush1.bf16.msra.mxu0 0
        %6907 = vmatprep.subr.bf16.mxu0 0
        %6908 = vmatpush1.bf16.msra.mxu0 0
        %6909 = vmatprep.subr.bf16.mxu0 0
        %6910 = vmatpush1.bf16.msra.mxu0 0
        %6911 = vmatprep.subr.bf16.mxu0 0
        %6912 = vmatpush1.bf16.msra.mxu0 0
        %6913 = vmatprep.subr.bf16.mxu0 0
        %6914 = vmatpush1.bf16.msra.mxu0 0
        %6915 = vmatprep.subr.bf16.mxu0 0
        %6916 = vmatpush1.bf16.msra.mxu0 0
        %6917 = vmatprep.mubr.bf16.mxu0 0
        %6918 = vmatmul.mubr.bf16.gmra.mrb[0].mxu0 %v6880
        %v6919 = vpop.f32.mrb[0].mxu0
        %v6920 = vadd.f32 0.0, %v6919
        %v6921 = vpop.f32.mrb[0].mxu0
        %v6922 = vpop.f32.mrb[0].mxu0
        %v6923 = vadd.f32 0.0, %v6922
        %v6924 = vpop.f32.mrb[0].mxu0
        %6925 = vmatprep.mubr.bf16.mxu0 0
        %6926 = vmatmul.mubr.bf16.gmra.mrb[0].mxu0 %v6883
        %v6927 = vpop.f32.mrb[0].mxu0
        %v6928 = vadd.f32 0.0, %v6927
        %v6929 = vpop.f32.mrb[0].mxu0
        %v6930 = vpop.f32.mrb[0].mxu0
        %v6931 = vpop.f32.mrb[0].mxu0
        %6932 = vdwg.mxu0
        %v6933 = vadd.f32 %v6852, %v6920
        %v6934 = vadd.f32 %v6853, %v6923
        %v6935 = vadd.f32 %v6854, %v6928
        %v6936 = vld [vmem:[%s6666] sm:$0x8]
        %v6937 = vld [vmem:[%s6666 + $0xc] sm:$0x7]
        %s6938 = scalar_lea.vmem [#allocation2], 1200
        %v6939 = vld [vmem:[%s6938] sm:$0xf]
        %v6940 = vld [vmem:[%s6938 + $0x4] sm:$0xf]
        %v6941 = vld [vmem:[%s6938 + $0x8] sm:$0xf]
        %v6942 = vld [vmem:[%s6938 + $0xc] sm:$0xf]
        %v6945 = vunpack.c.l.b16 %v6936
        %v6946 = vunpack.c.l.b16 %v6937
        %v6947 = vpack.c.b16 %v6766, %v6945
        %v6948 = vpack.c.b16 %v6946, %v6767
        %v6949 = vrot.slane %v6947, 3
        %v6950 = vrot.slane %v6948, 3
        %v6951 = vsel %vm577, %v6949, %v6950
        %v6956 = vunpack.c.l.b16 %v6939
        %v6957 = vunpack.c.l.b16 %v6940
        %v6958 = vunpack.c.l.b16 %v6941
        %v6959 = vunpack.c.l.b16 %v6942
        %v6960 = vpack.c.b16 %v6957, %v6956
        %v6961 = vpack.c.b16 %v6959, %v6958
        %v6965 = vsel %vm361, %v6951, 0
        %v6968 = vsel %vm361, %v6950, 0
        %6970 = vmatprep.subr.bf16.mxu0 0
        %6971 = vmatpush1.bf16.msra.mxu0 %v6960
        %6972 = vmatprep.subr.bf16.mxu0 0
        %6973 = vmatpush1.bf16.msra.mxu0 %v6961
        %6974 = vmatprep.subr.bf16.mxu0 0
        %6975 = vmatpush1.bf16.msra.mxu0 0
        %6976 = vmatprep.subr.bf16.mxu0 0
        %6977 = vmatpush1.bf16.msra.mxu0 0
        %6978 = vmatprep.subr.bf16.mxu0 0
        %6979 = vmatpush1.bf16.msra.mxu0 0
        %6980 = vmatprep.subr.bf16.mxu0 0
        %6981 = vmatpush1.bf16.msra.mxu0 0
        %6982 = vmatprep.subr.bf16.mxu0 0
        %6983 = vmatpush1.bf16.msra.mxu0 0
        %6984 = vmatprep.subr.bf16.mxu0 0
        %6985 = vmatpush1.bf16.msra.mxu0 0
        %6986 = vmatprep.subr.bf16.mxu0 0
        %6987 = vmatpush1.bf16.msra.mxu0 0
        %6988 = vmatprep.subr.bf16.mxu0 0
        %6989 = vmatpush1.bf16.msra.mxu0 0
        %6990 = vmatprep.subr.bf16.mxu0 0
        %6991 = vmatpush1.bf16.msra.mxu0 0
        %6992 = vmatprep.subr.bf16.mxu0 0
        %6993 = vmatpush1.bf16.msra.mxu0 0
        %6994 = vmatprep.subr.bf16.mxu0 0
        %6995 = vmatpush1.bf16.msra.mxu0 0
        %6996 = vmatprep.subr.bf16.mxu0 0
        %6997 = vmatpush1.bf16.msra.mxu0 0
        %6998 = vmatprep.subr.bf16.mxu0 0
        %6999 = vmatpush1.bf16.msra.mxu0 0
        %7000 = vmatprep.subr.bf16.mxu0 0
        %7001 = vmatpush1.bf16.msra.mxu0 0
        %7002 = vmatprep.mubr.bf16.mxu0 0
        %7003 = vmatmul.mubr.bf16.gmra.mrb[0].mxu0 %v6965
        %v7004 = vpop.f32.mrb[0].mxu0
        %v7005 = vadd.f32 0.0, %v7004
        %v7006 = vpop.f32.mrb[0].mxu0
        %v7007 = vpop.f32.mrb[0].mxu0
        %v7008 = vadd.f32 0.0, %v7007
        %v7009 = vpop.f32.mrb[0].mxu0
        %7010 = vmatprep.mubr.bf16.mxu0 0
        %7011 = vmatmul.mubr.bf16.gmra.mrb[0].mxu0 %v6968
        %v7012 = vpop.f32.mrb[0].mxu0
        %v7013 = vadd.f32 0.0, %v7012
        %v7014 = vpop.f32.mrb[0].mxu0
        %v7015 = vpop.f32.mrb[0].mxu0
        %v7016 = vpop.f32.mrb[0].mxu0
        %7017 = vdwg.mxu0
        %v7018 = vadd.f32 %v6933, %v7005
        %v7019 = vadd.f32 %v6934, %v7008
        %v7020 = vadd.f32 %v6935, %v7013
        %v7021 = vld [vmem:[%s6666 + $0xc] sm:$0xf]
        %s7022 = scalar_lea.vmem [#allocation2], 1216
        %v7023 = vld [vmem:[%s7022] sm:$0xf]
        %v7024 = vld [vmem:[%s7022 + $0x4] sm:$0xf]
        %v7025 = vld [vmem:[%s7022 + $0x8] sm:$0xf]
        %v7026 = vld [vmem:[%s7022 + $0xc] sm:$0xf]
        %v7028 = vunpack.c.l.b16 %v7021
        %v7029 = vpack.c.b16 %v7028, %v6767
        %v7031 = vshrl.u32 %v6947, 16
        %v7033 = vrot.slane %v7031, 3
        %v7034 = vshll.u32 %v6947, 16
        %v7036 = vrot.slane %v7034, 4
        %v7037 = vor.u32 %v7033, %v7036
        %v7039 = vshrl.u32 %v7029, 16
        %v7041 = vrot.slane %v7039, 3
        %v7042 = vshll.u32 %v7029, 16
        %v7044 = vrot.slane %v7042, 4
        %v7045 = vor.u32 %v7041, %v7044
        %v7046 = vsel %vm659, %v7037, %v7045
        %v7051 = vunpack.c.l.b16 %v7023
        %v7052 = vunpack.c.l.b16 %v7024
        %v7053 = vunpack.c.l.b16 %v7025
        %v7054 = vunpack.c.l.b16 %v7026
        %v7055 = vpack.c.b16 %v7052, %v7051
        %v7056 = vpack.c.b16 %v7054, %v7053
        %v7060 = vsel %vm361, %v7046, 0
        %v7063 = vsel %vm361, %v7045, 0
        %7065 = vmatprep.subr.bf16.mxu0 0
        %7066 = vmatpush1.bf16.msra.mxu0 %v7055
        %7067 = vmatprep.subr.bf16.mxu0 0
        %7068 = vmatpush1.bf16.msra.mxu0 %v7056
        %7069 = vmatprep.subr.bf16.mxu0 0
        %7070 = vmatpush1.bf16.msra.mxu0 0
        %7071 = vmatprep.subr.bf16.mxu0 0
        %7072 = vmatpush1.bf16.msra.mxu0 0
        %7073 = vmatprep.subr.bf16.mxu0 0
        %7074 = vmatpush1.bf16.msra.mxu0 0
        %7075 = vmatprep.subr.bf16.mxu0 0
        %7076 = vmatpush1.bf16.msra.mxu0 0
        %7077 = vmatprep.subr.bf16.mxu0 0
        %7078 = vmatpush1.bf16.msra.mxu0 0
        %7079 = vmatprep.subr.bf16.mxu0 0
        %7080 = vmatpush1.bf16.msra.mxu0 0
        %7081 = vmatprep.subr.bf16.mxu0 0
        %7082 = vmatpush1.bf16.msra.mxu0 0
        %7083 = vmatprep.subr.bf16.mxu0 0
        %7084 = vmatpush1.bf16.msra.mxu0 0
        %7085 = vmatprep.subr.bf16.mxu0 0
        %7086 = vmatpush1.bf16.msra.mxu0 0
        %7087 = vmatprep.subr.bf16.mxu0 0
        %7088 = vmatpush1.bf16.msra.mxu0 0
        %7089 = vmatprep.subr.bf16.mxu0 0
        %7090 = vmatpush1.bf16.msra.mxu0 0
        %7091 = vmatprep.subr.bf16.mxu0 0
        %7092 = vmatpush1.bf16.msra.mxu0 0
        %7093 = vmatprep.subr.bf16.mxu0 0
        %7094 = vmatpush1.bf16.msra.mxu0 0
        %7095 = vmatprep.subr.bf16.mxu0 0
        %7096 = vmatpush1.bf16.msra.mxu0 0
        %7097 = vmatprep.mubr.bf16.mxu0 0
        %7098 = vmatmul.mubr.bf16.gmra.mrb[0].mxu0 %v7060
        %v7099 = vpop.f32.mrb[0].mxu0
        %v7100 = vadd.f32 0.0, %v7099
        %v7101 = vpop.f32.mrb[0].mxu0
        %v7102 = vpop.f32.mrb[0].mxu0
        %v7103 = vadd.f32 0.0, %v7102
        %v7104 = vpop.f32.mrb[0].mxu0
        %7105 = vmatprep.mubr.bf16.mxu0 0
        %7106 = vmatmul.mubr.bf16.gmra.mrb[0].mxu0 %v7063
        %v7107 = vpop.f32.mrb[0].mxu0
        %v7108 = vadd.f32 0.0, %v7107
        %v7109 = vpop.f32.mrb[0].mxu0
        %v7110 = vpop.f32.mrb[0].mxu0
        %v7111 = vpop.f32.mrb[0].mxu0
        %7112 = vdwg.mxu0
        %v7113 = vadd.f32 %v7018, %v7100
        %v7114 = vadd.f32 %v7019, %v7103
        %v7115 = vadd.f32 %v7020, %v7108
        %s7116 = scalar_lea.vmem [#allocation2], 1232
        %v7117 = vld [vmem:[%s7116] sm:$0xf]
        %v7118 = vld [vmem:[%s7116 + $0x4] sm:$0xf]
        %v7119 = vld [vmem:[%s7116 + $0x8] sm:$0xf]
        %v7120 = vld [vmem:[%s7116 + $0xc] sm:$0xf]
        %v7121 = vpack.c.b16 %v6767, %v6766
        %v7122 = vpack.c.b16 %v7028, %v7028
        %v7127 = vunpack.c.l.b16 %v7117
        %v7128 = vunpack.c.l.b16 %v7118
        %v7129 = vunpack.c.l.b16 %v7119
        %v7130 = vunpack.c.l.b16 %v7120
        %v7131 = vpack.c.b16 %v7128, %v7127
        %v7132 = vpack.c.b16 %v7130, %v7129
        %v7136 = vsel %vm361, %v7121, 0
        %v7139 = vsel %vm361, %v7122, 0
        %7141 = vmatprep.subr.bf16.mxu0 0
        %7142 = vmatpush1.bf16.msra.mxu0 %v7131
        %7143 = vmatprep.subr.bf16.mxu0 0
        %7144 = vmatpush1.bf16.msra.mxu0 %v7132
        %7145 = vmatprep.subr.bf16.mxu0 0
        %7146 = vmatpush1.bf16.msra.mxu0 0
        %7147 = vmatprep.subr.bf16.mxu0 0
        %7148 = vmatpush1.bf16.msra.mxu0 0
        %7149 = vmatprep.subr.bf16.mxu0 0
        %7150 = vmatpush1.bf16.msra.mxu0 0
        %7151 = vmatprep.subr.bf16.mxu0 0
        %7152 = vmatpush1.bf16.msra.mxu0 0
        %7153 = vmatprep.subr.bf16.mxu0 0
        %7154 = vmatpush1.bf16.msra.mxu0 0
        %7155 = vmatprep.subr.bf16.mxu0 0
        %7156 = vmatpush1.bf16.msra.mxu0 0
        %7157 = vmatprep.subr.bf16.mxu0 0
        %7158 = vmatpush1.bf16.msra.mxu0 0
        %7159 = vmatprep.subr.bf16.mxu0 0
        %7160 = vmatpush1.bf16.msra.mxu0 0
        %7161 = vmatprep.subr.bf16.mxu0 0
        %7162 = vmatpush1.bf16.msra.mxu0 0
        %7163 = vmatprep.subr.bf16.mxu0 0
        %7164 = vmatpush1.bf16.msra.mxu0 0
        %7165 = vmatprep.subr.bf16.mxu0 0
        %7166 = vmatpush1.bf16.msra.mxu0 0
        %7167 = vmatprep.subr.bf16.mxu0 0
        %7168 = vmatpush1.bf16.msra.mxu0 0
        %7169 = vmatprep.subr.bf16.mxu0 0
        %7170 = vmatpush1.bf16.msra.mxu0 0
        %7171 = vmatprep.subr.bf16.mxu0 0
        %7172 = vmatpush1.bf16.msra.mxu0 0
        %7173 = vmatprep.mubr.bf16.mxu0 0
        %7174 = vmatmul.mubr.bf16.gmra.mrb[0].mxu0 %v7136
        %v7175 = vpop.f32.mrb[0].mxu0
        %v7176 = vadd.f32 0.0, %v7175
        %v7177 = vpop.f32.mrb[0].mxu0
        %v7178 = vpop.f32.mrb[0].mxu0
        %v7179 = vadd.f32 0.0, %v7178
        %v7180 = vpop.f32.mrb[0].mxu0
        %7181 = vmatprep.mubr.bf16.mxu0 0
        %7182 = vmatmul.mubr.bf16.gmra.mrb[0].mxu0 %v7139
        %v7183 = vpop.f32.mrb[0].mxu0
        %v7184 = vadd.f32 0.0, %v7183
        %v7185 = vpop.f32.mrb[0].mxu0
        %v7186 = vpop.f32.mrb[0].mxu0
        %v7187 = vpop.f32.mrb[0].mxu0
        %7188 = vdwg.mxu0
        %v7189 = vadd.f32 %v7113, %v7176
        %v7190 = vadd.f32 %v7114, %v7179
        %v7191 = vadd.f32 %v7115, %v7184
        %v7192 = vld [vmem:[%s6666 + $0x4] sm:$0xc]
        %v7193 = vld [vmem:[%s6666 + $0x8] sm:$0xf]
        %v7194 = vld [vmem:[%s6666 + $0xc] sm:$0xf]
        %v7195 = vld [vmem:[%s6666 + $0x10] sm:$0x3]
        %s7196 = scalar_lea.vmem [#allocation2], 1248
        %v7197 = vld [vmem:[%s7196] sm:$0xf]
        %v7198 = vld [vmem:[%s7196 + $0x4] sm:$0xf]
        %v7199 = vld [vmem:[%s7196 + $0x8] sm:$0xf]
        %v7200 = vld [vmem:[%s7196 + $0xc] sm:$0xf]
        %v7205 = vunpack.c.l.b16 %v7192
        %v7206 = vunpack.c.l.b16 %v7193
        %v7207 = vunpack.c.l.b16 %v7194
        %v7208 = vunpack.c.l.b16 %v7195
        %v7209 = vpack.c.b16 %v7206, %v7205
        %v7210 = vpack.c.b16 %v7208, %v7207
        %v7211 = vrot.slane %v7209, 2
        %v7212 = vrot.slane %v7210, 2
        %v7213 = vsel %vm841, %v7211, %v7212
        %v7218 = vunpack.c.l.b16 %v7197
        %v7219 = vunpack.c.l.b16 %v7198
        %v7220 = vunpack.c.l.b16 %v7199
        %v7221 = vunpack.c.l.b16 %v7200
        %v7222 = vpack.c.b16 %v7219, %v7218
        %v7223 = vpack.c.b16 %v7221, %v7220
        %v7227 = vsel %vm361, %v7213, 0
        %v7230 = vsel %vm361, %v7212, 0
        %7232 = vmatprep.subr.bf16.mxu0 0
        %7233 = vmatpush1.bf16.msra.mxu0 %v7222
        %7234 = vmatprep.subr.bf16.mxu0 0
        %7235 = vmatpush1.bf16.msra.mxu0 %v7223
        %7236 = vmatprep.subr.bf16.mxu0 0
        %7237 = vmatpush1.bf16.msra.mxu0 0
        %7238 = vmatprep.subr.bf16.mxu0 0
        %7239 = vmatpush1.bf16.msra.mxu0 0
        %7240 = vmatprep.subr.bf16.mxu0 0
        %7241 = vmatpush1.bf16.msra.mxu0 0
        %7242 = vmatprep.subr.bf16.mxu0 0
        %7243 = vmatpush1.bf16.msra.mxu0 0
        %7244 = vmatprep.subr.bf16.mxu0 0
        %7245 = vmatpush1.bf16.msra.mxu0 0
        %7246 = vmatprep.subr.bf16.mxu0 0
        %7247 = vmatpush1.bf16.msra.mxu0 0
        %7248 = vmatprep.subr.bf16.mxu0 0
        %7249 = vmatpush1.bf16.msra.mxu0 0
        %7250 = vmatprep.subr.bf16.mxu0 0
        %7251 = vmatpush1.bf16.msra.mxu0 0
        %7252 = vmatprep.subr.bf16.mxu0 0
        %7253 = vmatpush1.bf16.msra.mxu0 0
        %7254 = vmatprep.subr.bf16.mxu0 0
        %7255 = vmatpush1.bf16.msra.mxu0 0
        %7256 = vmatprep.subr.bf16.mxu0 0
        %7257 = vmatpush1.bf16.msra.mxu0 0
        %7258 = vmatprep.subr.bf16.mxu0 0
        %7259 = vmatpush1.bf16.msra.mxu0 0
        %7260 = vmatprep.subr.bf16.mxu0 0
        %7261 = vmatpush1.bf16.msra.mxu0 0
        %7262 = vmatprep.subr.bf16.mxu0 0
        %7263 = vmatpush1.bf16.msra.mxu0 0
        %7264 = vmatprep.mubr.bf16.mxu0 0
        %7265 = vmatmul.mubr.bf16.gmra.mrb[0].mxu0 %v7227
        %v7266 = vpop.f32.mrb[0].mxu0
        %v7267 = vadd.f32 0.0, %v7266
        %v7268 = vpop.f32.mrb[0].mxu0
        %v7269 = vpop.f32.mrb[0].mxu0
        %v7270 = vadd.f32 0.0, %v7269
        %v7271 = vpop.f32.mrb[0].mxu0
        %7272 = vmatprep.mubr.bf16.mxu0 0
        %7273 = vmatmul.mubr.bf16.gmra.mrb[0].mxu0 %v7230
        %v7274 = vpop.f32.mrb[0].mxu0
        %v7275 = vadd.f32 0.0, %v7274
        %v7276 = vpop.f32.mrb[0].mxu0
        %v7277 = vpop.f32.mrb[0].mxu0
        %v7278 = vpop.f32.mrb[0].mxu0
        %7279 = vdwg.mxu0
        %v7280 = vadd.f32 %v7189, %v7267
        %v7281 = vadd.f32 %v7190, %v7270
        %v7282 = vadd.f32 %v7191, %v7275
        %v7283 = vld [vmem:[%s6666 + $0x10] sm:$0x7]
        %s7284 = scalar_lea.vmem [#allocation2], 1264
        %v7285 = vld [vmem:[%s7284] sm:$0xf]
        %v7286 = vld [vmem:[%s7284 + $0x4] sm:$0xf]
        %v7287 = vld [vmem:[%s7284 + $0x8] sm:$0xf]
        %v7288 = vld [vmem:[%s7284 + $0xc] sm:$0xf]
        %v7290 = vunpack.c.l.b16 %v7283
        %v7291 = vpack.c.b16 %v7290, %v7207
        %v7293 = vshrl.u32 %v7209, 16
        %v7295 = vrot.slane %v7293, 2
        %v7296 = vshll.u32 %v7209, 16
        %v7298 = vrot.slane %v7296, 3
        %v7299 = vor.u32 %v7295, %v7298
        %v7301 = vshrl.u32 %v7291, 16
        %v7303 = vrot.slane %v7301, 2
        %v7304 = vshll.u32 %v7291, 16
        %v7306 = vrot.slane %v7304, 3
        %v7307 = vor.u32 %v7303, %v7306
        %v7308 = vsel %vm923, %v7299, %v7307
        %v7313 = vunpack.c.l.b16 %v7285
        %v7314 = vunpack.c.l.b16 %v7286
        %v7315 = vunpack.c.l.b16 %v7287
        %v7316 = vunpack.c.l.b16 %v7288
        %v7317 = vpack.c.b16 %v7314, %v7313
        %v7318 = vpack.c.b16 %v7316, %v7315
        %v7322 = vsel %vm361, %v7308, 0
        %v7325 = vsel %vm361, %v7307, 0
        %7327 = vmatprep.subr.bf16.mxu0 0
        %7328 = vmatpush1.bf16.msra.mxu0 %v7317
        %7329 = vmatprep.subr.bf16.mxu0 0
        %7330 = vmatpush1.bf16.msra.mxu0 %v7318
        %7331 = vmatprep.subr.bf16.mxu0 0
        %7332 = vmatpush1.bf16.msra.mxu0 0
        %7333 = vmatprep.subr.bf16.mxu0 0
        %7334 = vmatpush1.bf16.msra.mxu0 0
        %7335 = vmatprep.subr.bf16.mxu0 0
        %7336 = vmatpush1.bf16.msra.mxu0 0
        %7337 = vmatprep.subr.bf16.mxu0 0
        %7338 = vmatpush1.bf16.msra.mxu0 0
        %7339 = vmatprep.subr.bf16.mxu0 0
        %7340 = vmatpush1.bf16.msra.mxu0 0
        %7341 = vmatprep.subr.bf16.mxu0 0
        %7342 = vmatpush1.bf16.msra.mxu0 0
        %7343 = vmatprep.subr.bf16.mxu0 0
        %7344 = vmatpush1.bf16.msra.mxu0 0
        %7345 = vmatprep.subr.bf16.mxu0 0
        %7346 = vmatpush1.bf16.msra.mxu0 0
        %7347 = vmatprep.subr.bf16.mxu0 0
        %7348 = vmatpush1.bf16.msra.mxu0 0
        %7349 = vmatprep.subr.bf16.mxu0 0
        %7350 = vmatpush1.bf16.msra.mxu0 0
        %7351 = vmatprep.subr.bf16.mxu0 0
        %7352 = vmatpush1.bf16.msra.mxu0 0
        %7353 = vmatprep.subr.bf16.mxu0 0
        %7354 = vmatpush1.bf16.msra.mxu0 0
        %7355 = vmatprep.subr.bf16.mxu0 0
        %7356 = vmatpush1.bf16.msra.mxu0 0
        %7357 = vmatprep.subr.bf16.mxu0 0
        %7358 = vmatpush1.bf16.msra.mxu0 0
        %7359 = vmatprep.mubr.bf16.mxu0 0
        %7360 = vmatmul.mubr.bf16.gmra.mrb[0].mxu0 %v7322
        %v7361 = vpop.f32.mrb[0].mxu0
        %v7362 = vadd.f32 0.0, %v7361
        %v7363 = vpop.f32.mrb[0].mxu0
        %v7364 = vpop.f32.mrb[0].mxu0
        %v7365 = vadd.f32 0.0, %v7364
        %v7366 = vpop.f32.mrb[0].mxu0
        %7367 = vmatprep.mubr.bf16.mxu0 0
        %7368 = vmatmul.mubr.bf16.gmra.mrb[0].mxu0 %v7325
        %v7369 = vpop.f32.mrb[0].mxu0
        %v7370 = vadd.f32 0.0, %v7369
        %v7371 = vpop.f32.mrb[0].mxu0
        %v7372 = vpop.f32.mrb[0].mxu0
        %v7373 = vpop.f32.mrb[0].mxu0
        %7374 = vdwg.mxu0
        %v7375 = vadd.f32 %v7280, %v7362
        %v7376 = vadd.f32 %v7281, %v7365
        %v7377 = vadd.f32 %v7282, %v7370
        %v7378 = vld [vmem:[%s6666 + $0x4] sm:$0x8]
        %s7379 = scalar_lea.vmem [#allocation2], 1280
        %v7380 = vld [vmem:[%s7379] sm:$0xf]
        %v7381 = vld [vmem:[%s7379 + $0x4] sm:$0xf]
        %v7382 = vld [vmem:[%s7379 + $0x8] sm:$0xf]
        %v7383 = vld [vmem:[%s7379 + $0xc] sm:$0xf]
        %v7385 = vunpack.c.l.b16 %v7378
        %v7386 = vpack.c.b16 %v7206, %v7385
        %v7387 = vrot.slane %v7386, 3
        %v7388 = vrot.slane %v7291, 3
        %v7389 = vsel %vm577, %v7387, %v7388
        %v7394 = vunpack.c.l.b16 %v7380
        %v7395 = vunpack.c.l.b16 %v7381
        %v7396 = vunpack.c.l.b16 %v7382
        %v7397 = vunpack.c.l.b16 %v7383
        %v7398 = vpack.c.b16 %v7395, %v7394
        %v7399 = vpack.c.b16 %v7397, %v7396
        %v7403 = vsel %vm361, %v7389, 0
        %v7406 = vsel %vm361, %v7388, 0
        %7408 = vmatprep.subr.bf16.mxu0 0
        %7409 = vmatpush1.bf16.msra.mxu0 %v7398
        %7410 = vmatprep.subr.bf16.mxu0 0
        %7411 = vmatpush1.bf16.msra.mxu0 %v7399
        %7412 = vmatprep.subr.bf16.mxu0 0
        %7413 = vmatpush1.bf16.msra.mxu0 0
        %7414 = vmatprep.subr.bf16.mxu0 0
        %7415 = vmatpush1.bf16.msra.mxu0 0
        %7416 = vmatprep.subr.bf16.mxu0 0
        %7417 = vmatpush1.bf16.msra.mxu0 0
        %7418 = vmatprep.subr.bf16.mxu0 0
        %7419 = vmatpush1.bf16.msra.mxu0 0
        %7420 = vmatprep.subr.bf16.mxu0 0
        %7421 = vmatpush1.bf16.msra.mxu0 0
        %7422 = vmatprep.subr.bf16.mxu0 0
        %7423 = vmatpush1.bf16.msra.mxu0 0
        %7424 = vmatprep.subr.bf16.mxu0 0
        %7425 = vmatpush1.bf16.msra.mxu0 0
        %7426 = vmatprep.subr.bf16.mxu0 0
        %7427 = vmatpush1.bf16.msra.mxu0 0
        %7428 = vmatprep.subr.bf16.mxu0 0
        %7429 = vmatpush1.bf16.msra.mxu0 0
        %7430 = vmatprep.subr.bf16.mxu0 0
        %7431 = vmatpush1.bf16.msra.mxu0 0
        %7432 = vmatprep.subr.bf16.mxu0 0
        %7433 = vmatpush1.bf16.msra.mxu0 0
        %7434 = vmatprep.subr.bf16.mxu0 0
        %7435 = vmatpush1.bf16.msra.mxu0 0
        %7436 = vmatprep.subr.bf16.mxu0 0
        %7437 = vmatpush1.bf16.msra.mxu0 0
        %7438 = vmatprep.subr.bf16.mxu0 0
        %7439 = vmatpush1.bf16.msra.mxu0 0
        %7440 = vmatprep.mubr.bf16.mxu0 0
        %7441 = vmatmul.mubr.bf16.gmra.mrb[0].mxu0 %v7403
        %v7442 = vpop.f32.mrb[0].mxu0
        %v7443 = vadd.f32 0.0, %v7442
        %v7444 = vpop.f32.mrb[0].mxu0
        %v7445 = vpop.f32.mrb[0].mxu0
        %v7446 = vadd.f32 0.0, %v7445
        %v7447 = vpop.f32.mrb[0].mxu0
        %7448 = vmatprep.mubr.bf16.mxu0 0
        %7449 = vmatmul.mubr.bf16.gmra.mrb[0].mxu0 %v7406
        %v7450 = vpop.f32.mrb[0].mxu0
        %v7451 = vadd.f32 0.0, %v7450
        %v7452 = vpop.f32.mrb[0].mxu0
        %v7453 = vpop.f32.mrb[0].mxu0
        %v7454 = vpop.f32.mrb[0].mxu0
        %7455 = vdwg.mxu0
        %v7456 = vadd.f32 %v7375, %v7443
        %v7457 = vadd.f32 %v7376, %v7446
        %v7458 = vadd.f32 %v7377, %v7451
        %s7459 = sadd.s32 %s27, 9
        %s7460 = smul.u32 %s7459, 5
        %s7461 = smul.addr %s7460, 4
        %s7462 = scalar_lea.vmem %s305, %s7461
        %v7463 = vld [vmem:[%s7462] sm:$0xf]
        %v7464 = vld [vmem:[%s7462 + $0x4] sm:$0xf]
        %v7465 = vld [vmem:[%s7462 + $0x8] sm:$0xf]
        %s7466 = scalar_lea.vmem [#allocation2], 1296
        %v7467 = vld [vmem:[%s7466] sm:$0xf]
        %v7468 = vld [vmem:[%s7466 + $0x4] sm:$0xf]
        %v7469 = vld [vmem:[%s7466 + $0x8] sm:$0xf]
        %v7470 = vld [vmem:[%s7466 + $0xc] sm:$0xf]
        %v7474 = vunpack.c.l.b16 %v7463
        %v7475 = vunpack.c.l.b16 %v7464
        %v7476 = vunpack.c.l.b16 %v7465
        %v7477 = vpack.c.b16 %v7475, %v7474
        %v7478 = vpack.c.b16 %v7476, %v7476
        %v7483 = vunpack.c.l.b16 %v7467
        %v7484 = vunpack.c.l.b16 %v7468
        %v7485 = vunpack.c.l.b16 %v7469
        %v7486 = vunpack.c.l.b16 %v7470
        %v7487 = vpack.c.b16 %v7484, %v7483
        %v7488 = vpack.c.b16 %v7486, %v7485
        %v7492 = vsel %vm361, %v7477, 0
        %v7495 = vsel %vm361, %v7478, 0
        %7497 = vmatprep.subr.bf16.mxu0 0
        %7498 = vmatpush1.bf16.msra.mxu0 %v7487
        %7499 = vmatprep.subr.bf16.mxu0 0
        %7500 = vmatpush1.bf16.msra.mxu0 %v7488
        %7501 = vmatprep.subr.bf16.mxu0 0
        %7502 = vmatpush1.bf16.msra.mxu0 0
        %7503 = vmatprep.subr.bf16.mxu0 0
        %7504 = vmatpush1.bf16.msra.mxu0 0
        %7505 = vmatprep.subr.bf16.mxu0 0
        %7506 = vmatpush1.bf16.msra.mxu0 0
        %7507 = vmatprep.subr.bf16.mxu0 0
        %7508 = vmatpush1.bf16.msra.mxu0 0
        %7509 = vmatprep.subr.bf16.mxu0 0
        %7510 = vmatpush1.bf16.msra.mxu0 0
        %7511 = vmatprep.subr.bf16.mxu0 0
        %7512 = vmatpush1.bf16.msra.mxu0 0
        %7513 = vmatprep.subr.bf16.mxu0 0
        %7514 = vmatpush1.bf16.msra.mxu0 0
        %7515 = vmatprep.subr.bf16.mxu0 0
        %7516 = vmatpush1.bf16.msra.mxu0 0
        %7517 = vmatprep.subr.bf16.mxu0 0
        %7518 = vmatpush1.bf16.msra.mxu0 0
        %7519 = vmatprep.subr.bf16.mxu0 0
        %7520 = vmatpush1.bf16.msra.mxu0 0
        %7521 = vmatprep.subr.bf16.mxu0 0
        %7522 = vmatpush1.bf16.msra.mxu0 0
        %7523 = vmatprep.subr.bf16.mxu0 0
        %7524 = vmatpush1.bf16.msra.mxu0 0
        %7525 = vmatprep.subr.bf16.mxu0 0
        %7526 = vmatpush1.bf16.msra.mxu0 0
        %7527 = vmatprep.subr.bf16.mxu0 0
        %7528 = vmatpush1.bf16.msra.mxu0 0
        %7529 = vmatprep.mubr.bf16.mxu0 0
        %7530 = vmatmul.mubr.bf16.gmra.mrb[0].mxu0 %v7492
        %v7531 = vpop.f32.mrb[0].mxu0
        %v7532 = vadd.f32 0.0, %v7531
        %v7533 = vpop.f32.mrb[0].mxu0
        %v7534 = vpop.f32.mrb[0].mxu0
        %v7535 = vadd.f32 0.0, %v7534
        %v7536 = vpop.f32.mrb[0].mxu0
        %7537 = vmatprep.mubr.bf16.mxu0 0
        %7538 = vmatmul.mubr.bf16.gmra.mrb[0].mxu0 %v7495
        %v7539 = vpop.f32.mrb[0].mxu0
        %v7540 = vadd.f32 0.0, %v7539
        %v7541 = vpop.f32.mrb[0].mxu0
        %v7542 = vpop.f32.mrb[0].mxu0
        %v7543 = vpop.f32.mrb[0].mxu0
        %7544 = vdwg.mxu0
        %v7545 = vadd.f32 %v7456, %v7532
        %v7546 = vadd.f32 %v7457, %v7535
        %v7547 = vadd.f32 %v7458, %v7540
        %v7548 = vld [vmem:[%s7462] sm:$0xf]
        %v7549 = vld [vmem:[%s7462 + $0x4] sm:$0xf]
        %v7550 = vld [vmem:[%s7462 + $0x8] sm:$0xf]
        %v7551 = vld [vmem:[%s7462 + $0xc] sm:$0x1]
        %s7552 = scalar_lea.vmem [#allocation2], 1312
        %v7553 = vld [vmem:[%s7552] sm:$0xf]
        %v7554 = vld [vmem:[%s7552 + $0x4] sm:$0xf]
        %v7555 = vld [vmem:[%s7552 + $0x8] sm:$0xf]
        %v7556 = vld [vmem:[%s7552 + $0xc] sm:$0xf]
        %v7561 = vunpack.c.l.b16 %v7548
        %v7562 = vunpack.c.l.b16 %v7549
        %v7563 = vunpack.c.l.b16 %v7550
        %v7564 = vunpack.c.l.b16 %v7551
        %v7565 = vpack.c.b16 %v7562, %v7561
        %v7566 = vpack.c.b16 %v7564, %v7563
        %v7568 = vshrl.u32 %v7565, 16
        %v7570 = vshll.u32 %v7565, 16
        %v7572 = vrot.slane %v7570, 1
        %v7573 = vor.u32 %v7568, %v7572
        %v7575 = vshll.u32 %v7566, 16
        %v7577 = vrot.slane %v7575, 1
        %v7578 = vsel %vm333, %v7573, %v7577
        %v7579 = vshrl.u32 %v7566, 16
        %v7581 = vor.u32 %v7579, %v7577
        %v7586 = vunpack.c.l.b16 %v7553
        %v7587 = vunpack.c.l.b16 %v7554
        %v7588 = vunpack.c.l.b16 %v7555
        %v7589 = vunpack.c.l.b16 %v7556
        %v7590 = vpack.c.b16 %v7587, %v7586
        %v7591 = vpack.c.b16 %v7589, %v7588
        %v7595 = vsel %vm361, %v7578, 0
        %v7598 = vsel %vm361, %v7581, 0
        %7600 = vmatprep.subr.bf16.mxu0 0
        %7601 = vmatpush1.bf16.msra.mxu0 %v7590
        %7602 = vmatprep.subr.bf16.mxu0 0
        %7603 = vmatpush1.bf16.msra.mxu0 %v7591
        %7604 = vmatprep.subr.bf16.mxu0 0
        %7605 = vmatpush1.bf16.msra.mxu0 0
        %7606 = vmatprep.subr.bf16.mxu0 0
        %7607 = vmatpush1.bf16.msra.mxu0 0
        %7608 = vmatprep.subr.bf16.mxu0 0
        %7609 = vmatpush1.bf16.msra.mxu0 0
        %7610 = vmatprep.subr.bf16.mxu0 0
        %7611 = vmatpush1.bf16.msra.mxu0 0
        %7612 = vmatprep.subr.bf16.mxu0 0
        %7613 = vmatpush1.bf16.msra.mxu0 0
        %7614 = vmatprep.subr.bf16.mxu0 0
        %7615 = vmatpush1.bf16.msra.mxu0 0
        %7616 = vmatprep.subr.bf16.mxu0 0
        %7617 = vmatpush1.bf16.msra.mxu0 0
        %7618 = vmatprep.subr.bf16.mxu0 0
        %7619 = vmatpush1.bf16.msra.mxu0 0
        %7620 = vmatprep.subr.bf16.mxu0 0
        %7621 = vmatpush1.bf16.msra.mxu0 0
        %7622 = vmatprep.subr.bf16.mxu0 0
        %7623 = vmatpush1.bf16.msra.mxu0 0
        %7624 = vmatprep.subr.bf16.mxu0 0
        %7625 = vmatpush1.bf16.msra.mxu0 0
        %7626 = vmatprep.subr.bf16.mxu0 0
        %7627 = vmatpush1.bf16.msra.mxu0 0
        %7628 = vmatprep.subr.bf16.mxu0 0
        %7629 = vmatpush1.bf16.msra.mxu0 0
        %7630 = vmatprep.subr.bf16.mxu0 0
        %7631 = vmatpush1.bf16.msra.mxu0 0
        %7632 = vmatprep.mubr.bf16.mxu0 0
        %7633 = vmatmul.mubr.bf16.gmra.mrb[0].mxu0 %v7595
        %v7634 = vpop.f32.mrb[0].mxu0
        %v7635 = vadd.f32 0.0, %v7634
        %v7636 = vpop.f32.mrb[0].mxu0
        %v7637 = vpop.f32.mrb[0].mxu0
        %v7638 = vadd.f32 0.0, %v7637
        %v7639 = vpop.f32.mrb[0].mxu0
        %7640 = vmatprep.mubr.bf16.mxu0 0
        %7641 = vmatmul.mubr.bf16.gmra.mrb[0].mxu0 %v7598
        %v7642 = vpop.f32.mrb[0].mxu0
        %v7643 = vadd.f32 0.0, %v7642
        %v7644 = vpop.f32.mrb[0].mxu0
        %v7645 = vpop.f32.mrb[0].mxu0
        %v7646 = vpop.f32.mrb[0].mxu0
        %7647 = vdwg.mxu0
        %v7648 = vadd.f32 %v7545, %v7635
        %v7649 = vadd.f32 %v7546, %v7638
        %v7650 = vadd.f32 %v7547, %v7643
        %v7651 = vld [vmem:[%s7462] sm:$0xe]
        %s7652 = scalar_lea.vmem [#allocation2], 1328
        %v7653 = vld [vmem:[%s7652] sm:$0xf]
        %v7654 = vld [vmem:[%s7652 + $0x4] sm:$0xf]
        %v7655 = vld [vmem:[%s7652 + $0x8] sm:$0xf]
        %v7656 = vld [vmem:[%s7652 + $0xc] sm:$0xf]
        %v7658 = vunpack.c.l.b16 %v7651
        %v7659 = vpack.c.b16 %v7562, %v7658
        %v7660 = vrot.slane %v7659, 1
        %v7661 = vrot.slane %v7566, 1
        %v7662 = vsel %vm491, %v7660, %v7661
        %v7667 = vunpack.c.l.b16 %v7653
        %v7668 = vunpack.c.l.b16 %v7654
        %v7669 = vunpack.c.l.b16 %v7655
        %v7670 = vunpack.c.l.b16 %v7656
        %v7671 = vpack.c.b16 %v7668, %v7667
        %v7672 = vpack.c.b16 %v7670, %v7669
        %v7676 = vsel %vm361, %v7662, 0
        %v7679 = vsel %vm361, %v7661, 0
        %7681 = vmatprep.subr.bf16.mxu0 0
        %7682 = vmatpush1.bf16.msra.mxu0 %v7671
        %7683 = vmatprep.subr.bf16.mxu0 0
        %7684 = vmatpush1.bf16.msra.mxu0 %v7672
        %7685 = vmatprep.subr.bf16.mxu0 0
        %7686 = vmatpush1.bf16.msra.mxu0 0
        %7687 = vmatprep.subr.bf16.mxu0 0
        %7688 = vmatpush1.bf16.msra.mxu0 0
        %7689 = vmatprep.subr.bf16.mxu0 0
        %7690 = vmatpush1.bf16.msra.mxu0 0
        %7691 = vmatprep.subr.bf16.mxu0 0
        %7692 = vmatpush1.bf16.msra.mxu0 0
        %7693 = vmatprep.subr.bf16.mxu0 0
        %7694 = vmatpush1.bf16.msra.mxu0 0
        %7695 = vmatprep.subr.bf16.mxu0 0
        %7696 = vmatpush1.bf16.msra.mxu0 0
        %7697 = vmatprep.subr.bf16.mxu0 0
        %7698 = vmatpush1.bf16.msra.mxu0 0
        %7699 = vmatprep.subr.bf16.mxu0 0
        %7700 = vmatpush1.bf16.msra.mxu0 0
        %7701 = vmatprep.subr.bf16.mxu0 0
        %7702 = vmatpush1.bf16.msra.mxu0 0
        %7703 = vmatprep.subr.bf16.mxu0 0
        %7704 = vmatpush1.bf16.msra.mxu0 0
        %7705 = vmatprep.subr.bf16.mxu0 0
        %7706 = vmatpush1.bf16.msra.mxu0 0
        %7707 = vmatprep.subr.bf16.mxu0 0
        %7708 = vmatpush1.bf16.msra.mxu0 0
        %7709 = vmatprep.subr.bf16.mxu0 0
        %7710 = vmatpush1.bf16.msra.mxu0 0
        %7711 = vmatprep.subr.bf16.mxu0 0
        %7712 = vmatpush1.bf16.msra.mxu0 0
        %7713 = vmatprep.mubr.bf16.mxu0 0
        %7714 = vmatmul.mubr.bf16.gmra.mrb[0].mxu0 %v7676
        %v7715 = vpop.f32.mrb[0].mxu0
        %v7716 = vadd.f32 0.0, %v7715
        %v7717 = vpop.f32.mrb[0].mxu0
        %v7718 = vpop.f32.mrb[0].mxu0
        %v7719 = vadd.f32 0.0, %v7718
        %v7720 = vpop.f32.mrb[0].mxu0
        %7721 = vmatprep.mubr.bf16.mxu0 0
        %7722 = vmatmul.mubr.bf16.gmra.mrb[0].mxu0 %v7679
        %v7723 = vpop.f32.mrb[0].mxu0
        %v7724 = vadd.f32 0.0, %v7723
        %v7725 = vpop.f32.mrb[0].mxu0
        %v7726 = vpop.f32.mrb[0].mxu0
        %v7727 = vpop.f32.mrb[0].mxu0
        %7728 = vdwg.mxu0
        %v7729 = vadd.f32 %v7648, %v7716
        %v7730 = vadd.f32 %v7649, %v7719
        %v7731 = vadd.f32 %v7650, %v7724
        %v7732 = vld [vmem:[%s7462] sm:$0x8]
        %v7733 = vld [vmem:[%s7462 + $0xc] sm:$0x7]
        %s7734 = scalar_lea.vmem [#allocation2], 1344
        %v7735 = vld [vmem:[%s7734] sm:$0xf]
        %v7736 = vld [vmem:[%s7734 + $0x4] sm:$0xf]
        %v7737 = vld [vmem:[%s7734 + $0x8] sm:$0xf]
        %v7738 = vld [vmem:[%s7734 + $0xc] sm:$0xf]
        %v7741 = vunpack.c.l.b16 %v7732
        %v7742 = vunpack.c.l.b16 %v7733
        %v7743 = vpack.c.b16 %v7562, %v7741
        %v7744 = vpack.c.b16 %v7742, %v7563
        %v7745 = vrot.slane %v7743, 3
        %v7746 = vrot.slane %v7744, 3
        %v7747 = vsel %vm577, %v7745, %v7746
        %v7752 = vunpack.c.l.b16 %v7735
        %v7753 = vunpack.c.l.b16 %v7736
        %v7754 = vunpack.c.l.b16 %v7737
        %v7755 = vunpack.c.l.b16 %v7738
        %v7756 = vpack.c.b16 %v7753, %v7752
        %v7757 = vpack.c.b16 %v7755, %v7754
        %v7761 = vsel %vm361, %v7747, 0
        %v7764 = vsel %vm361, %v7746, 0
        %7766 = vmatprep.subr.bf16.mxu0 0
        %7767 = vmatpush1.bf16.msra.mxu0 %v7756
        %7768 = vmatprep.subr.bf16.mxu0 0
        %7769 = vmatpush1.bf16.msra.mxu0 %v7757
        %7770 = vmatprep.subr.bf16.mxu0 0
        %7771 = vmatpush1.bf16.msra.mxu0 0
        %7772 = vmatprep.subr.bf16.mxu0 0
        %7773 = vmatpush1.bf16.msra.mxu0 0
        %7774 = vmatprep.subr.bf16.mxu0 0
        %7775 = vmatpush1.bf16.msra.mxu0 0
        %7776 = vmatprep.subr.bf16.mxu0 0
        %7777 = vmatpush1.bf16.msra.mxu0 0
        %7778 = vmatprep.subr.bf16.mxu0 0
        %7779 = vmatpush1.bf16.msra.mxu0 0
        %7780 = vmatprep.subr.bf16.mxu0 0
        %7781 = vmatpush1.bf16.msra.mxu0 0
        %7782 = vmatprep.subr.bf16.mxu0 0
        %7783 = vmatpush1.bf16.msra.mxu0 0
        %7784 = vmatprep.subr.bf16.mxu0 0
        %7785 = vmatpush1.bf16.msra.mxu0 0
        %7786 = vmatprep.subr.bf16.mxu0 0
        %7787 = vmatpush1.bf16.msra.mxu0 0
        %7788 = vmatprep.subr.bf16.mxu0 0
        %7789 = vmatpush1.bf16.msra.mxu0 0
        %7790 = vmatprep.subr.bf16.mxu0 0
        %7791 = vmatpush1.bf16.msra.mxu0 0
        %7792 = vmatprep.subr.bf16.mxu0 0
        %7793 = vmatpush1.bf16.msra.mxu0 0
        %7794 = vmatprep.subr.bf16.mxu0 0
        %7795 = vmatpush1.bf16.msra.mxu0 0
        %7796 = vmatprep.subr.bf16.mxu0 0
        %7797 = vmatpush1.bf16.msra.mxu0 0
        %7798 = vmatprep.mubr.bf16.mxu0 0
        %7799 = vmatmul.mubr.bf16.gmra.mrb[0].mxu0 %v7761
        %v7800 = vpop.f32.mrb[0].mxu0
        %v7801 = vadd.f32 0.0, %v7800
        %v7802 = vpop.f32.mrb[0].mxu0
        %v7803 = vpop.f32.mrb[0].mxu0
        %v7804 = vadd.f32 0.0, %v7803
        %v7805 = vpop.f32.mrb[0].mxu0
        %7806 = vmatprep.mubr.bf16.mxu0 0
        %7807 = vmatmul.mubr.bf16.gmra.mrb[0].mxu0 %v7764
        %v7808 = vpop.f32.mrb[0].mxu0
        %v7809 = vadd.f32 0.0, %v7808
        %v7810 = vpop.f32.mrb[0].mxu0
        %v7811 = vpop.f32.mrb[0].mxu0
        %v7812 = vpop.f32.mrb[0].mxu0
        %7813 = vdwg.mxu0
        %v7814 = vadd.f32 %v7729, %v7801
        %v7815 = vadd.f32 %v7730, %v7804
        %v7816 = vadd.f32 %v7731, %v7809
        %v7817 = vld [vmem:[%s7462 + $0xc] sm:$0xf]
        %s7818 = scalar_lea.vmem [#allocation2], 1360
        %v7819 = vld [vmem:[%s7818] sm:$0xf]
        %v7820 = vld [vmem:[%s7818 + $0x4] sm:$0xf]
        %v7821 = vld [vmem:[%s7818 + $0x8] sm:$0xf]
        %v7822 = vld [vmem:[%s7818 + $0xc] sm:$0xf]
        %v7824 = vunpack.c.l.b16 %v7817
        %v7825 = vpack.c.b16 %v7824, %v7563
        %v7827 = vshrl.u32 %v7743, 16
        %v7829 = vrot.slane %v7827, 3
        %v7830 = vshll.u32 %v7743, 16
        %v7832 = vrot.slane %v7830, 4
        %v7833 = vor.u32 %v7829, %v7832
        %v7835 = vshrl.u32 %v7825, 16
        %v7837 = vrot.slane %v7835, 3
        %v7838 = vshll.u32 %v7825, 16
        %v7840 = vrot.slane %v7838, 4
        %v7841 = vor.u32 %v7837, %v7840
        %v7842 = vsel %vm659, %v7833, %v7841
        %v7847 = vunpack.c.l.b16 %v7819
        %v7848 = vunpack.c.l.b16 %v7820
        %v7849 = vunpack.c.l.b16 %v7821
        %v7850 = vunpack.c.l.b16 %v7822
        %v7851 = vpack.c.b16 %v7848, %v7847
        %v7852 = vpack.c.b16 %v7850, %v7849
        %v7856 = vsel %vm361, %v7842, 0
        %v7859 = vsel %vm361, %v7841, 0
        %7861 = vmatprep.subr.bf16.mxu0 0
        %7862 = vmatpush1.bf16.msra.mxu0 %v7851
        %7863 = vmatprep.subr.bf16.mxu0 0
        %7864 = vmatpush1.bf16.msra.mxu0 %v7852
        %7865 = vmatprep.subr.bf16.mxu0 0
        %7866 = vmatpush1.bf16.msra.mxu0 0
        %7867 = vmatprep.subr.bf16.mxu0 0
        %7868 = vmatpush1.bf16.msra.mxu0 0
        %7869 = vmatprep.subr.bf16.mxu0 0
        %7870 = vmatpush1.bf16.msra.mxu0 0
        %7871 = vmatprep.subr.bf16.mxu0 0
        %7872 = vmatpush1.bf16.msra.mxu0 0
        %7873 = vmatprep.subr.bf16.mxu0 0
        %7874 = vmatpush1.bf16.msra.mxu0 0
        %7875 = vmatprep.subr.bf16.mxu0 0
        %7876 = vmatpush1.bf16.msra.mxu0 0
        %7877 = vmatprep.subr.bf16.mxu0 0
        %7878 = vmatpush1.bf16.msra.mxu0 0
        %7879 = vmatprep.subr.bf16.mxu0 0
        %7880 = vmatpush1.bf16.msra.mxu0 0
        %7881 = vmatprep.subr.bf16.mxu0 0
        %7882 = vmatpush1.bf16.msra.mxu0 0
        %7883 = vmatprep.subr.bf16.mxu0 0
        %7884 = vmatpush1.bf16.msra.mxu0 0
        %7885 = vmatprep.subr.bf16.mxu0 0
        %7886 = vmatpush1.bf16.msra.mxu0 0
        %7887 = vmatprep.subr.bf16.mxu0 0
        %7888 = vmatpush1.bf16.msra.mxu0 0
        %7889 = vmatprep.subr.bf16.mxu0 0
        %7890 = vmatpush1.bf16.msra.mxu0 0
        %7891 = vmatprep.subr.bf16.mxu0 0
        %7892 = vmatpush1.bf16.msra.mxu0 0
        %7893 = vmatprep.mubr.bf16.mxu0 0
        %7894 = vmatmul.mubr.bf16.gmra.mrb[0].mxu0 %v7856
        %v7895 = vpop.f32.mrb[0].mxu0
        %v7896 = vadd.f32 0.0, %v7895
        %v7897 = vpop.f32.mrb[0].mxu0
        %v7898 = vpop.f32.mrb[0].mxu0
        %v7899 = vadd.f32 0.0, %v7898
        %v7900 = vpop.f32.mrb[0].mxu0
        %7901 = vmatprep.mubr.bf16.mxu0 0
        %7902 = vmatmul.mubr.bf16.gmra.mrb[0].mxu0 %v7859
        %v7903 = vpop.f32.mrb[0].mxu0
        %v7904 = vadd.f32 0.0, %v7903
        %v7905 = vpop.f32.mrb[0].mxu0
        %v7906 = vpop.f32.mrb[0].mxu0
        %v7907 = vpop.f32.mrb[0].mxu0
        %7908 = vdwg.mxu0
        %v7909 = vadd.f32 %v7814, %v7896
        %v7910 = vadd.f32 %v7815, %v7899
        %v7911 = vadd.f32 %v7816, %v7904
        %s7912 = scalar_lea.vmem [#allocation2], 1376
        %v7913 = vld [vmem:[%s7912] sm:$0xf]
        %v7914 = vld [vmem:[%s7912 + $0x4] sm:$0xf]
        %v7915 = vld [vmem:[%s7912 + $0x8] sm:$0xf]
        %v7916 = vld [vmem:[%s7912 + $0xc] sm:$0xf]
        %v7917 = vpack.c.b16 %v7563, %v7562
        %v7918 = vpack.c.b16 %v7824, %v7824
        %v7923 = vunpack.c.l.b16 %v7913
        %v7924 = vunpack.c.l.b16 %v7914
        %v7925 = vunpack.c.l.b16 %v7915
        %v7926 = vunpack.c.l.b16 %v7916
        %v7927 = vpack.c.b16 %v7924, %v7923
        %v7928 = vpack.c.b16 %v7926, %v7925
        %v7932 = vsel %vm361, %v7917, 0
        %v7935 = vsel %vm361, %v7918, 0
        %7937 = vmatprep.subr.bf16.mxu0 0
        %7938 = vmatpush1.bf16.msra.mxu0 %v7927
        %7939 = vmatprep.subr.bf16.mxu0 0
        %7940 = vmatpush1.bf16.msra.mxu0 %v7928
        %7941 = vmatprep.subr.bf16.mxu0 0
        %7942 = vmatpush1.bf16.msra.mxu0 0
        %7943 = vmatprep.subr.bf16.mxu0 0
        %7944 = vmatpush1.bf16.msra.mxu0 0
        %7945 = vmatprep.subr.bf16.mxu0 0
        %7946 = vmatpush1.bf16.msra.mxu0 0
        %7947 = vmatprep.subr.bf16.mxu0 0
        %7948 = vmatpush1.bf16.msra.mxu0 0
        %7949 = vmatprep.subr.bf16.mxu0 0
        %7950 = vmatpush1.bf16.msra.mxu0 0
        %7951 = vmatprep.subr.bf16.mxu0 0
        %7952 = vmatpush1.bf16.msra.mxu0 0
        %7953 = vmatprep.subr.bf16.mxu0 0
        %7954 = vmatpush1.bf16.msra.mxu0 0
        %7955 = vmatprep.subr.bf16.mxu0 0
        %7956 = vmatpush1.bf16.msra.mxu0 0
        %7957 = vmatprep.subr.bf16.mxu0 0
        %7958 = vmatpush1.bf16.msra.mxu0 0
        %7959 = vmatprep.subr.bf16.mxu0 0
        %7960 = vmatpush1.bf16.msra.mxu0 0
        %7961 = vmatprep.subr.bf16.mxu0 0
        %7962 = vmatpush1.bf16.msra.mxu0 0
        %7963 = vmatprep.subr.bf16.mxu0 0
        %7964 = vmatpush1.bf16.msra.mxu0 0
        %7965 = vmatprep.subr.bf16.mxu0 0
        %7966 = vmatpush1.bf16.msra.mxu0 0
        %7967 = vmatprep.subr.bf16.mxu0 0
        %7968 = vmatpush1.bf16.msra.mxu0 0
        %7969 = vmatprep.mubr.bf16.mxu0 0
        %7970 = vmatmul.mubr.bf16.gmra.mrb[0].mxu0 %v7932
        %v7971 = vpop.f32.mrb[0].mxu0
        %v7972 = vadd.f32 0.0, %v7971
        %v7973 = vpop.f32.mrb[0].mxu0
        %v7974 = vpop.f32.mrb[0].mxu0
        %v7975 = vadd.f32 0.0, %v7974
        %v7976 = vpop.f32.mrb[0].mxu0
        %7977 = vmatprep.mubr.bf16.mxu0 0
        %7978 = vmatmul.mubr.bf16.gmra.mrb[0].mxu0 %v7935
        %v7979 = vpop.f32.mrb[0].mxu0
        %v7980 = vadd.f32 0.0, %v7979
        %v7981 = vpop.f32.mrb[0].mxu0
        %v7982 = vpop.f32.mrb[0].mxu0
        %v7983 = vpop.f32.mrb[0].mxu0
        %7984 = vdwg.mxu0
        %v7985 = vadd.f32 %v7909, %v7972
        %v7986 = vadd.f32 %v7910, %v7975
        %v7987 = vadd.f32 %v7911, %v7980
        %v7988 = vld [vmem:[%s7462 + $0x4] sm:$0xc]
        %v7989 = vld [vmem:[%s7462 + $0x8] sm:$0xf]
        %v7990 = vld [vmem:[%s7462 + $0xc] sm:$0xf]
        %v7991 = vld [vmem:[%s7462 + $0x10] sm:$0x3]
        %s7992 = scalar_lea.vmem [#allocation2], 1392
        %v7993 = vld [vmem:[%s7992] sm:$0xf]
        %v7994 = vld [vmem:[%s7992 + $0x4] sm:$0xf]
        %v7995 = vld [vmem:[%s7992 + $0x8] sm:$0xf]
        %v7996 = vld [vmem:[%s7992 + $0xc] sm:$0xf]
        %v8001 = vunpack.c.l.b16 %v7988
        %v8002 = vunpack.c.l.b16 %v7989
        %v8003 = vunpack.c.l.b16 %v7990
        %v8004 = vunpack.c.l.b16 %v7991
        %v8005 = vpack.c.b16 %v8002, %v8001
        %v8006 = vpack.c.b16 %v8004, %v8003
        %v8007 = vrot.slane %v8005, 2
        %v8008 = vrot.slane %v8006, 2
        %v8009 = vsel %vm841, %v8007, %v8008
        %v8014 = vunpack.c.l.b16 %v7993
        %v8015 = vunpack.c.l.b16 %v7994
        %v8016 = vunpack.c.l.b16 %v7995
        %v8017 = vunpack.c.l.b16 %v7996
        %v8018 = vpack.c.b16 %v8015, %v8014
        %v8019 = vpack.c.b16 %v8017, %v8016
        %v8023 = vsel %vm361, %v8009, 0
        %v8026 = vsel %vm361, %v8008, 0
        %8028 = vmatprep.subr.bf16.mxu0 0
        %8029 = vmatpush1.bf16.msra.mxu0 %v8018
        %8030 = vmatprep.subr.bf16.mxu0 0
        %8031 = vmatpush1.bf16.msra.mxu0 %v8019
        %8032 = vmatprep.subr.bf16.mxu0 0
        %8033 = vmatpush1.bf16.msra.mxu0 0
        %8034 = vmatprep.subr.bf16.mxu0 0
        %8035 = vmatpush1.bf16.msra.mxu0 0
        %8036 = vmatprep.subr.bf16.mxu0 0
        %8037 = vmatpush1.bf16.msra.mxu0 0
        %8038 = vmatprep.subr.bf16.mxu0 0
        %8039 = vmatpush1.bf16.msra.mxu0 0
        %8040 = vmatprep.subr.bf16.mxu0 0
        %8041 = vmatpush1.bf16.msra.mxu0 0
        %8042 = vmatprep.subr.bf16.mxu0 0
        %8043 = vmatpush1.bf16.msra.mxu0 0
        %8044 = vmatprep.subr.bf16.mxu0 0
        %8045 = vmatpush1.bf16.msra.mxu0 0
        %8046 = vmatprep.subr.bf16.mxu0 0
        %8047 = vmatpush1.bf16.msra.mxu0 0
        %8048 = vmatprep.subr.bf16.mxu0 0
        %8049 = vmatpush1.bf16.msra.mxu0 0
        %8050 = vmatprep.subr.bf16.mxu0 0
        %8051 = vmatpush1.bf16.msra.mxu0 0
        %8052 = vmatprep.subr.bf16.mxu0 0
        %8053 = vmatpush1.bf16.msra.mxu0 0
        %8054 = vmatprep.subr.bf16.mxu0 0
        %8055 = vmatpush1.bf16.msra.mxu0 0
        %8056 = vmatprep.subr.bf16.mxu0 0
        %8057 = vmatpush1.bf16.msra.mxu0 0
        %8058 = vmatprep.subr.bf16.mxu0 0
        %8059 = vmatpush1.bf16.msra.mxu0 0
        %8060 = vmatprep.mubr.bf16.mxu0 0
        %8061 = vmatmul.mubr.bf16.gmra.mrb[0].mxu0 %v8023
        %v8062 = vpop.f32.mrb[0].mxu0
        %v8063 = vadd.f32 0.0, %v8062
        %v8064 = vpop.f32.mrb[0].mxu0
        %v8065 = vpop.f32.mrb[0].mxu0
        %v8066 = vadd.f32 0.0, %v8065
        %v8067 = vpop.f32.mrb[0].mxu0
        %8068 = vmatprep.mubr.bf16.mxu0 0
        %8069 = vmatmul.mubr.bf16.gmra.mrb[0].mxu0 %v8026
        %v8070 = vpop.f32.mrb[0].mxu0
        %v8071 = vadd.f32 0.0, %v8070
        %v8072 = vpop.f32.mrb[0].mxu0
        %v8073 = vpop.f32.mrb[0].mxu0
        %v8074 = vpop.f32.mrb[0].mxu0
        %8075 = vdwg.mxu0
        %v8076 = vadd.f32 %v7985, %v8063
        %v8077 = vadd.f32 %v7986, %v8066
        %v8078 = vadd.f32 %v7987, %v8071
        %v8079 = vld [vmem:[%s7462 + $0x10] sm:$0x7]
        %s8080 = scalar_lea.vmem [#allocation2], 1408
        %v8081 = vld [vmem:[%s8080] sm:$0xf]
        %v8082 = vld [vmem:[%s8080 + $0x4] sm:$0xf]
        %v8083 = vld [vmem:[%s8080 + $0x8] sm:$0xf]
        %v8084 = vld [vmem:[%s8080 + $0xc] sm:$0xf]
        %v8086 = vunpack.c.l.b16 %v8079
        %v8087 = vpack.c.b16 %v8086, %v8003
        %v8089 = vshrl.u32 %v8005, 16
        %v8091 = vrot.slane %v8089, 2
        %v8092 = vshll.u32 %v8005, 16
        %v8094 = vrot.slane %v8092, 3
        %v8095 = vor.u32 %v8091, %v8094
        %v8097 = vshrl.u32 %v8087, 16
        %v8099 = vrot.slane %v8097, 2
        %v8100 = vshll.u32 %v8087, 16
        %v8102 = vrot.slane %v8100, 3
        %v8103 = vor.u32 %v8099, %v8102
        %v8104 = vsel %vm923, %v8095, %v8103
        %v8109 = vunpack.c.l.b16 %v8081
        %v8110 = vunpack.c.l.b16 %v8082
        %v8111 = vunpack.c.l.b16 %v8083
        %v8112 = vunpack.c.l.b16 %v8084
        %v8113 = vpack.c.b16 %v8110, %v8109
        %v8114 = vpack.c.b16 %v8112, %v8111
        %v8118 = vsel %vm361, %v8104, 0
        %v8121 = vsel %vm361, %v8103, 0
        %8123 = vmatprep.subr.bf16.mxu0 0
        %8124 = vmatpush1.bf16.msra.mxu0 %v8113
        %8125 = vmatprep.subr.bf16.mxu0 0
        %8126 = vmatpush1.bf16.msra.mxu0 %v8114
        %8127 = vmatprep.subr.bf16.mxu0 0
        %8128 = vmatpush1.bf16.msra.mxu0 0
        %8129 = vmatprep.subr.bf16.mxu0 0
        %8130 = vmatpush1.bf16.msra.mxu0 0
        %8131 = vmatprep.subr.bf16.mxu0 0
        %8132 = vmatpush1.bf16.msra.mxu0 0
        %8133 = vmatprep.subr.bf16.mxu0 0
        %8134 = vmatpush1.bf16.msra.mxu0 0
        %8135 = vmatprep.subr.bf16.mxu0 0
        %8136 = vmatpush1.bf16.msra.mxu0 0
        %8137 = vmatprep.subr.bf16.mxu0 0
        %8138 = vmatpush1.bf16.msra.mxu0 0
        %8139 = vmatprep.subr.bf16.mxu0 0
        %8140 = vmatpush1.bf16.msra.mxu0 0
        %8141 = vmatprep.subr.bf16.mxu0 0
        %8142 = vmatpush1.bf16.msra.mxu0 0
        %8143 = vmatprep.subr.bf16.mxu0 0
        %8144 = vmatpush1.bf16.msra.mxu0 0
        %8145 = vmatprep.subr.bf16.mxu0 0
        %8146 = vmatpush1.bf16.msra.mxu0 0
        %8147 = vmatprep.subr.bf16.mxu0 0
        %8148 = vmatpush1.bf16.msra.mxu0 0
        %8149 = vmatprep.subr.bf16.mxu0 0
        %8150 = vmatpush1.bf16.msra.mxu0 0
        %8151 = vmatprep.subr.bf16.mxu0 0
        %8152 = vmatpush1.bf16.msra.mxu0 0
        %8153 = vmatprep.subr.bf16.mxu0 0
        %8154 = vmatpush1.bf16.msra.mxu0 0
        %8155 = vmatprep.mubr.bf16.mxu0 0
        %8156 = vmatmul.mubr.bf16.gmra.mrb[0].mxu0 %v8118
        %v8157 = vpop.f32.mrb[0].mxu0
        %v8158 = vadd.f32 0.0, %v8157
        %v8159 = vpop.f32.mrb[0].mxu0
        %v8160 = vpop.f32.mrb[0].mxu0
        %v8161 = vadd.f32 0.0, %v8160
        %v8162 = vpop.f32.mrb[0].mxu0
        %8163 = vmatprep.mubr.bf16.mxu0 0
        %8164 = vmatmul.mubr.bf16.gmra.mrb[0].mxu0 %v8121
        %v8165 = vpop.f32.mrb[0].mxu0
        %v8166 = vadd.f32 0.0, %v8165
        %v8167 = vpop.f32.mrb[0].mxu0
        %v8168 = vpop.f32.mrb[0].mxu0
        %v8169 = vpop.f32.mrb[0].mxu0
        %8170 = vdwg.mxu0
        %v8171 = vadd.f32 %v8076, %v8158
        %v8172 = vadd.f32 %v8077, %v8161
        %v8173 = vadd.f32 %v8078, %v8166
        %v8174 = vld [vmem:[%s7462 + $0x4] sm:$0x8]
        %s8175 = scalar_lea.vmem [#allocation2], 1424
        %v8176 = vld [vmem:[%s8175] sm:$0xf]
        %v8177 = vld [vmem:[%s8175 + $0x4] sm:$0xf]
        %v8178 = vld [vmem:[%s8175 + $0x8] sm:$0xf]
        %v8179 = vld [vmem:[%s8175 + $0xc] sm:$0xf]
        %v8181 = vunpack.c.l.b16 %v8174
        %v8182 = vpack.c.b16 %v8002, %v8181
        %v8183 = vrot.slane %v8182, 3
        %v8184 = vrot.slane %v8087, 3
        %v8185 = vsel %vm577, %v8183, %v8184
        %v8190 = vunpack.c.l.b16 %v8176
        %v8191 = vunpack.c.l.b16 %v8177
        %v8192 = vunpack.c.l.b16 %v8178
        %v8193 = vunpack.c.l.b16 %v8179
        %v8194 = vpack.c.b16 %v8191, %v8190
        %v8195 = vpack.c.b16 %v8193, %v8192
        %v8199 = vsel %vm361, %v8185, 0
        %v8202 = vsel %vm361, %v8184, 0
        %8204 = vmatprep.subr.bf16.mxu0 0
        %8205 = vmatpush1.bf16.msra.mxu0 %v8194
        %8206 = vmatprep.subr.bf16.mxu0 0
        %8207 = vmatpush1.bf16.msra.mxu0 %v8195
        %8208 = vmatprep.subr.bf16.mxu0 0
        %8209 = vmatpush1.bf16.msra.mxu0 0
        %8210 = vmatprep.subr.bf16.mxu0 0
        %8211 = vmatpush1.bf16.msra.mxu0 0
        %8212 = vmatprep.subr.bf16.mxu0 0
        %8213 = vmatpush1.bf16.msra.mxu0 0
        %8214 = vmatprep.subr.bf16.mxu0 0
        %8215 = vmatpush1.bf16.msra.mxu0 0
        %8216 = vmatprep.subr.bf16.mxu0 0
        %8217 = vmatpush1.bf16.msra.mxu0 0
        %8218 = vmatprep.subr.bf16.mxu0 0
        %8219 = vmatpush1.bf16.msra.mxu0 0
        %8220 = vmatprep.subr.bf16.mxu0 0
        %8221 = vmatpush1.bf16.msra.mxu0 0
        %8222 = vmatprep.subr.bf16.mxu0 0
        %8223 = vmatpush1.bf16.msra.mxu0 0
        %8224 = vmatprep.subr.bf16.mxu0 0
        %8225 = vmatpush1.bf16.msra.mxu0 0
        %8226 = vmatprep.subr.bf16.mxu0 0
        %8227 = vmatpush1.bf16.msra.mxu0 0
        %8228 = vmatprep.subr.bf16.mxu0 0
        %8229 = vmatpush1.bf16.msra.mxu0 0
        %8230 = vmatprep.subr.bf16.mxu0 0
        %8231 = vmatpush1.bf16.msra.mxu0 0
        %8232 = vmatprep.subr.bf16.mxu0 0
        %8233 = vmatpush1.bf16.msra.mxu0 0
        %8234 = vmatprep.subr.bf16.mxu0 0
        %8235 = vmatpush1.bf16.msra.mxu0 0
        %8236 = vmatprep.mubr.bf16.mxu0 0
        %8237 = vmatmul.mubr.bf16.gmra.mrb[0].mxu0 %v8199
        %v8238 = vpop.f32.mrb[0].mxu0
        %v8239 = vadd.f32 0.0, %v8238
        %v8240 = vpop.f32.mrb[0].mxu0
        %v8241 = vpop.f32.mrb[0].mxu0
        %v8242 = vadd.f32 0.0, %v8241
        %v8243 = vpop.f32.mrb[0].mxu0
        %8244 = vmatprep.mubr.bf16.mxu0 0
        %8245 = vmatmul.mubr.bf16.gmra.mrb[0].mxu0 %v8202
        %v8246 = vpop.f32.mrb[0].mxu0
        %v8247 = vadd.f32 0.0, %v8246
        %v8248 = vpop.f32.mrb[0].mxu0
        %v8249 = vpop.f32.mrb[0].mxu0
        %v8250 = vpop.f32.mrb[0].mxu0
        %8251 = vdwg.mxu0
        %v8252 = vadd.f32 %v8171, %v8239
        %v8253 = vadd.f32 %v8172, %v8242
        %v8254 = vadd.f32 %v8173, %v8247
        %s8255 = sadd.s32 %s27, 10
        %s8256 = smul.u32 %s8255, 5
        %s8257 = smul.addr %s8256, 4
        %s8258 = scalar_lea.vmem %s305, %s8257
        %v8259 = vld [vmem:[%s8258] sm:$0xf]
        %v8260 = vld [vmem:[%s8258 + $0x4] sm:$0xf]
        %v8261 = vld [vmem:[%s8258 + $0x8] sm:$0xf]
        %s8262 = scalar_lea.vmem [#allocation2], 1440
        %v8263 = vld [vmem:[%s8262] sm:$0xf]
        %v8264 = vld [vmem:[%s8262 + $0x4] sm:$0xf]
        %v8265 = vld [vmem:[%s8262 + $0x8] sm:$0xf]
        %v8266 = vld [vmem:[%s8262 + $0xc] sm:$0xf]
        %v8270 = vunpack.c.l.b16 %v8259
        %v8271 = vunpack.c.l.b16 %v8260
        %v8272 = vunpack.c.l.b16 %v8261
        %v8273 = vpack.c.b16 %v8271, %v8270
        %v8274 = vpack.c.b16 %v8272, %v8272
        %v8279 = vunpack.c.l.b16 %v8263
        %v8280 = vunpack.c.l.b16 %v8264
        %v8281 = vunpack.c.l.b16 %v8265
        %v8282 = vunpack.c.l.b16 %v8266
        %v8283 = vpack.c.b16 %v8280, %v8279
        %v8284 = vpack.c.b16 %v8282, %v8281
        %v8288 = vsel %vm361, %v8273, 0
        %v8291 = vsel %vm361, %v8274, 0
        %8293 = vmatprep.subr.bf16.mxu0 0
        %8294 = vmatpush1.bf16.msra.mxu0 %v8283
        %8295 = vmatprep.subr.bf16.mxu0 0
        %8296 = vmatpush1.bf16.msra.mxu0 %v8284
        %8297 = vmatprep.subr.bf16.mxu0 0
        %8298 = vmatpush1.bf16.msra.mxu0 0
        %8299 = vmatprep.subr.bf16.mxu0 0
        %8300 = vmatpush1.bf16.msra.mxu0 0
        %8301 = vmatprep.subr.bf16.mxu0 0
        %8302 = vmatpush1.bf16.msra.mxu0 0
        %8303 = vmatprep.subr.bf16.mxu0 0
        %8304 = vmatpush1.bf16.msra.mxu0 0
        %8305 = vmatprep.subr.bf16.mxu0 0
        %8306 = vmatpush1.bf16.msra.mxu0 0
        %8307 = vmatprep.subr.bf16.mxu0 0
        %8308 = vmatpush1.bf16.msra.mxu0 0
        %8309 = vmatprep.subr.bf16.mxu0 0
        %8310 = vmatpush1.bf16.msra.mxu0 0
        %8311 = vmatprep.subr.bf16.mxu0 0
        %8312 = vmatpush1.bf16.msra.mxu0 0
        %8313 = vmatprep.subr.bf16.mxu0 0
        %8314 = vmatpush1.bf16.msra.mxu0 0
        %8315 = vmatprep.subr.bf16.mxu0 0
        %8316 = vmatpush1.bf16.msra.mxu0 0
        %8317 = vmatprep.subr.bf16.mxu0 0
        %8318 = vmatpush1.bf16.msra.mxu0 0
        %8319 = vmatprep.subr.bf16.mxu0 0
        %8320 = vmatpush1.bf16.msra.mxu0 0
        %8321 = vmatprep.subr.bf16.mxu0 0
        %8322 = vmatpush1.bf16.msra.mxu0 0
        %8323 = vmatprep.subr.bf16.mxu0 0
        %8324 = vmatpush1.bf16.msra.mxu0 0
        %8325 = vmatprep.mubr.bf16.mxu0 0
        %8326 = vmatmul.mubr.bf16.gmra.mrb[0].mxu0 %v8288
        %v8327 = vpop.f32.mrb[0].mxu0
        %v8328 = vadd.f32 0.0, %v8327
        %v8329 = vpop.f32.mrb[0].mxu0
        %v8330 = vpop.f32.mrb[0].mxu0
        %v8331 = vadd.f32 0.0, %v8330
        %v8332 = vpop.f32.mrb[0].mxu0
        %8333 = vmatprep.mubr.bf16.mxu0 0
        %8334 = vmatmul.mubr.bf16.gmra.mrb[0].mxu0 %v8291
        %v8335 = vpop.f32.mrb[0].mxu0
        %v8336 = vadd.f32 0.0, %v8335
        %v8337 = vpop.f32.mrb[0].mxu0
        %v8338 = vpop.f32.mrb[0].mxu0
        %v8339 = vpop.f32.mrb[0].mxu0
        %8340 = vdwg.mxu0
        %v8341 = vadd.f32 %v8252, %v8328
        %v8342 = vadd.f32 %v8253, %v8331
        %v8343 = vadd.f32 %v8254, %v8336
        %v8344 = vunpack.c.l.bf16 %v8259
        %v8345 = vunpack.c.l.bf16 %v8260
        %v8346 = vunpack.c.l.bf16 %v8261
        %v8347 = vadd.f32 %v8344, 0.0
        %v8348 = vadd.f32 %v8345, 0.0
        %v8349 = vadd.f32 %v8346, 0.0
        %v8350 = vld [vmem:[%s8258] sm:$0xf]
        %v8351 = vld [vmem:[%s8258 + $0x4] sm:$0xf]
        %v8352 = vld [vmem:[%s8258 + $0x8] sm:$0xf]
        %v8353 = vld [vmem:[%s8258 + $0xc] sm:$0x1]
        %s8354 = scalar_lea.vmem [#allocation2], 1456
        %v8355 = vld [vmem:[%s8354] sm:$0xf]
        %v8356 = vld [vmem:[%s8354 + $0x4] sm:$0xf]
        %v8357 = vld [vmem:[%s8354 + $0x8] sm:$0xf]
        %v8358 = vld [vmem:[%s8354 + $0xc] sm:$0xf]
        %v8363 = vunpack.c.l.b16 %v8350
        %v8364 = vunpack.c.l.b16 %v8351
        %v8365 = vunpack.c.l.b16 %v8352
        %v8366 = vunpack.c.l.b16 %v8353
        %v8367 = vpack.c.b16 %v8364, %v8363
        %v8368 = vpack.c.b16 %v8366, %v8365
        %v8370 = vshrl.u32 %v8367, 16
        %v8372 = vshll.u32 %v8367, 16
        %v8374 = vrot.slane %v8372, 1
        %v8375 = vor.u32 %v8370, %v8374
        %v8377 = vshll.u32 %v8368, 16
        %v8379 = vrot.slane %v8377, 1
        %v8380 = vsel %vm333, %v8375, %v8379
        %v8381 = vshrl.u32 %v8368, 16
        %v8383 = vor.u32 %v8381, %v8379
        %v8388 = vunpack.c.l.b16 %v8355
        %v8389 = vunpack.c.l.b16 %v8356
        %v8390 = vunpack.c.l.b16 %v8357
        %v8391 = vunpack.c.l.b16 %v8358
        %v8392 = vpack.c.b16 %v8389, %v8388
        %v8393 = vpack.c.b16 %v8391, %v8390
        %v8397 = vsel %vm361, %v8380, 0
        %v8400 = vsel %vm361, %v8383, 0
        %8402 = vmatprep.subr.bf16.mxu0 0
        %8403 = vmatpush1.bf16.msra.mxu0 %v8392
        %8404 = vmatprep.subr.bf16.mxu0 0
        %8405 = vmatpush1.bf16.msra.mxu0 %v8393
        %8406 = vmatprep.subr.bf16.mxu0 0
        %8407 = vmatpush1.bf16.msra.mxu0 0
        %8408 = vmatprep.subr.bf16.mxu0 0
        %8409 = vmatpush1.bf16.msra.mxu0 0
        %8410 = vmatprep.subr.bf16.mxu0 0
        %8411 = vmatpush1.bf16.msra.mxu0 0
        %8412 = vmatprep.subr.bf16.mxu0 0
        %8413 = vmatpush1.bf16.msra.mxu0 0
        %8414 = vmatprep.subr.bf16.mxu0 0
        %8415 = vmatpush1.bf16.msra.mxu0 0
        %8416 = vmatprep.subr.bf16.mxu0 0
        %8417 = vmatpush1.bf16.msra.mxu0 0
        %8418 = vmatprep.subr.bf16.mxu0 0
        %8419 = vmatpush1.bf16.msra.mxu0 0
        %8420 = vmatprep.subr.bf16.mxu0 0
        %8421 = vmatpush1.bf16.msra.mxu0 0
        %8422 = vmatprep.subr.bf16.mxu0 0
        %8423 = vmatpush1.bf16.msra.mxu0 0
        %8424 = vmatprep.subr.bf16.mxu0 0
        %8425 = vmatpush1.bf16.msra.mxu0 0
        %8426 = vmatprep.subr.bf16.mxu0 0
        %8427 = vmatpush1.bf16.msra.mxu0 0
        %8428 = vmatprep.subr.bf16.mxu0 0
        %8429 = vmatpush1.bf16.msra.mxu0 0
        %8430 = vmatprep.subr.bf16.mxu0 0
        %8431 = vmatpush1.bf16.msra.mxu0 0
        %8432 = vmatprep.subr.bf16.mxu0 0
        %8433 = vmatpush1.bf16.msra.mxu0 0
        %8434 = vmatprep.mubr.bf16.mxu0 0
        %8435 = vmatmul.mubr.bf16.gmra.mrb[0].mxu0 %v8397
        %v8436 = vpop.f32.mrb[0].mxu0
        %v8437 = vadd.f32 0.0, %v8436
        %v8438 = vpop.f32.mrb[0].mxu0
        %v8439 = vpop.f32.mrb[0].mxu0
        %v8440 = vadd.f32 0.0, %v8439
        %v8441 = vpop.f32.mrb[0].mxu0
        %8442 = vmatprep.mubr.bf16.mxu0 0
        %8443 = vmatmul.mubr.bf16.gmra.mrb[0].mxu0 %v8400
        %v8444 = vpop.f32.mrb[0].mxu0
        %v8445 = vadd.f32 0.0, %v8444
        %v8446 = vpop.f32.mrb[0].mxu0
        %v8447 = vpop.f32.mrb[0].mxu0
        %v8448 = vpop.f32.mrb[0].mxu0
        %8449 = vdwg.mxu0
        %v8450 = vadd.f32 %v8341, %v8437
        %v8451 = vadd.f32 %v8342, %v8440
        %v8452 = vadd.f32 %v8343, %v8445
        %v8453 = vunpack.c.l.bf16 %v8350
        %v8454 = vunpack.c.l.bf16 %v8351
        %v8455 = vunpack.c.l.bf16 %v8352
        %v8456 = vunpack.c.l.bf16 %v8353
        %vm8461 = vcmask 1046528
        %v8462 = vrot.slane %v8453, 1
        %v8463 = vrot.slane %v8454, 1
        %v8464 = vsel %vm8461, %v8462, %v8463
        %v8465 = vrot.slane %v8455, 1
        %v8466 = vsel %vm8461, %v8463, %v8465
        %v8467 = vrot.slane %v8456, 1
        %v8468 = vsel %vm8461, %v8465, %v8467
        %v8472 = vadd.f32 %v8347, %v8464
        %v8473 = vadd.f32 %v8348, %v8466
        %v8474 = vadd.f32 %v8349, %v8468
        %v8475 = vld [vmem:[%s8258] sm:$0xe]
        %s8476 = scalar_lea.vmem [#allocation2], 1472
        %v8477 = vld [vmem:[%s8476] sm:$0xf]
        %v8478 = vld [vmem:[%s8476 + $0x4] sm:$0xf]
        %v8479 = vld [vmem:[%s8476 + $0x8] sm:$0xf]
        %v8480 = vld [vmem:[%s8476 + $0xc] sm:$0xf]
        %v8482 = vunpack.c.l.b16 %v8475
        %v8483 = vpack.c.b16 %v8364, %v8482
        %v8484 = vrot.slane %v8483, 1
        %v8485 = vrot.slane %v8368, 1
        %v8486 = vsel %vm491, %v8484, %v8485
        %v8491 = vunpack.c.l.b16 %v8477
        %v8492 = vunpack.c.l.b16 %v8478
        %v8493 = vunpack.c.l.b16 %v8479
        %v8494 = vunpack.c.l.b16 %v8480
        %v8495 = vpack.c.b16 %v8492, %v8491
        %v8496 = vpack.c.b16 %v8494, %v8493
        %v8500 = vsel %vm361, %v8486, 0
        %v8503 = vsel %vm361, %v8485, 0
        %8505 = vmatprep.subr.bf16.mxu0 0
        %8506 = vmatpush1.bf16.msra.mxu0 %v8495
        %8507 = vmatprep.subr.bf16.mxu0 0
        %8508 = vmatpush1.bf16.msra.mxu0 %v8496
        %8509 = vmatprep.subr.bf16.mxu0 0
        %8510 = vmatpush1.bf16.msra.mxu0 0
        %8511 = vmatprep.subr.bf16.mxu0 0
        %8512 = vmatpush1.bf16.msra.mxu0 0
        %8513 = vmatprep.subr.bf16.mxu0 0
        %8514 = vmatpush1.bf16.msra.mxu0 0
        %8515 = vmatprep.subr.bf16.mxu0 0
        %8516 = vmatpush1.bf16.msra.mxu0 0
        %8517 = vmatprep.subr.bf16.mxu0 0
        %8518 = vmatpush1.bf16.msra.mxu0 0
        %8519 = vmatprep.subr.bf16.mxu0 0
        %8520 = vmatpush1.bf16.msra.mxu0 0
        %8521 = vmatprep.subr.bf16.mxu0 0
        %8522 = vmatpush1.bf16.msra.mxu0 0
        %8523 = vmatprep.subr.bf16.mxu0 0
        %8524 = vmatpush1.bf16.msra.mxu0 0
        %8525 = vmatprep.subr.bf16.mxu0 0
        %8526 = vmatpush1.bf16.msra.mxu0 0
        %8527 = vmatprep.subr.bf16.mxu0 0
        %8528 = vmatpush1.bf16.msra.mxu0 0
        %8529 = vmatprep.subr.bf16.mxu0 0
        %8530 = vmatpush1.bf16.msra.mxu0 0
        %8531 = vmatprep.subr.bf16.mxu0 0
        %8532 = vmatpush1.bf16.msra.mxu0 0
        %8533 = vmatprep.subr.bf16.mxu0 0
        %8534 = vmatpush1.bf16.msra.mxu0 0
        %8535 = vmatprep.subr.bf16.mxu0 0
        %8536 = vmatpush1.bf16.msra.mxu0 0
        %8537 = vmatprep.mubr.bf16.mxu0 0
        %8538 = vmatmul.mubr.bf16.gmra.mrb[0].mxu0 %v8500
        %v8539 = vpop.f32.mrb[0].mxu0
        %v8540 = vadd.f32 0.0, %v8539
        %v8541 = vpop.f32.mrb[0].mxu0
        %v8542 = vpop.f32.mrb[0].mxu0
        %v8543 = vadd.f32 0.0, %v8542
        %v8544 = vpop.f32.mrb[0].mxu0
        %8545 = vmatprep.mubr.bf16.mxu0 0
        %8546 = vmatmul.mubr.bf16.gmra.mrb[0].mxu0 %v8503
        %v8547 = vpop.f32.mrb[0].mxu0
        %v8548 = vadd.f32 0.0, %v8547
        %v8549 = vpop.f32.mrb[0].mxu0
        %v8550 = vpop.f32.mrb[0].mxu0
        %v8551 = vpop.f32.mrb[0].mxu0
        %8552 = vdwg.mxu0
        %v8553 = vadd.f32 %v8450, %v8540
        %v8554 = vadd.f32 %v8451, %v8543
        %v8555 = vadd.f32 %v8452, %v8548
        %v8556 = vunpack.c.l.bf16 %v8475
        %vm8558 = vcmask 1045504
        %v8559 = vrot.slane %v8556, 2
        %v8560 = vrot.slane %v8454, 2
        %v8561 = vsel %vm8558, %v8559, %v8560
        %v8562 = vrot.slane %v8455, 2
        %v8563 = vsel %vm8558, %v8560, %v8562
        %v8564 = vrot.slane %v8456, 2
        %v8565 = vsel %vm8558, %v8562, %v8564
        %v8569 = vadd.f32 %v8472, %v8561
        %v8570 = vadd.f32 %v8473, %v8563
        %v8571 = vadd.f32 %v8474, %v8565
        %v8572 = vld [vmem:[%s8258] sm:$0x8]
        %v8573 = vld [vmem:[%s8258 + $0xc] sm:$0x7]
        %s8574 = scalar_lea.vmem [#allocation2], 1488
        %v8575 = vld [vmem:[%s8574] sm:$0xf]
        %v8576 = vld [vmem:[%s8574 + $0x4] sm:$0xf]
        %v8577 = vld [vmem:[%s8574 + $0x8] sm:$0xf]
        %v8578 = vld [vmem:[%s8574 + $0xc] sm:$0xf]
        %v8581 = vunpack.c.l.b16 %v8572
        %v8582 = vunpack.c.l.b16 %v8573
        %v8583 = vpack.c.b16 %v8364, %v8581
        %v8584 = vpack.c.b16 %v8582, %v8365
        %v8585 = vrot.slane %v8583, 3
        %v8586 = vrot.slane %v8584, 3
        %v8587 = vsel %vm577, %v8585, %v8586
        %v8592 = vunpack.c.l.b16 %v8575
        %v8593 = vunpack.c.l.b16 %v8576
        %v8594 = vunpack.c.l.b16 %v8577
        %v8595 = vunpack.c.l.b16 %v8578
        %v8596 = vpack.c.b16 %v8593, %v8592
        %v8597 = vpack.c.b16 %v8595, %v8594
        %v8601 = vsel %vm361, %v8587, 0
        %v8604 = vsel %vm361, %v8586, 0
        %8606 = vmatprep.subr.bf16.mxu0 0
        %8607 = vmatpush1.bf16.msra.mxu0 %v8596
        %8608 = vmatprep.subr.bf16.mxu0 0
        %8609 = vmatpush1.bf16.msra.mxu0 %v8597
        %8610 = vmatprep.subr.bf16.mxu0 0
        %8611 = vmatpush1.bf16.msra.mxu0 0
        %8612 = vmatprep.subr.bf16.mxu0 0
        %8613 = vmatpush1.bf16.msra.mxu0 0
        %8614 = vmatprep.subr.bf16.mxu0 0
        %8615 = vmatpush1.bf16.msra.mxu0 0
        %8616 = vmatprep.subr.bf16.mxu0 0
        %8617 = vmatpush1.bf16.msra.mxu0 0
        %8618 = vmatprep.subr.bf16.mxu0 0
        %8619 = vmatpush1.bf16.msra.mxu0 0
        %8620 = vmatprep.subr.bf16.mxu0 0
        %8621 = vmatpush1.bf16.msra.mxu0 0
        %8622 = vmatprep.subr.bf16.mxu0 0
        %8623 = vmatpush1.bf16.msra.mxu0 0
        %8624 = vmatprep.subr.bf16.mxu0 0
        %8625 = vmatpush1.bf16.msra.mxu0 0
        %8626 = vmatprep.subr.bf16.mxu0 0
        %8627 = vmatpush1.bf16.msra.mxu0 0
        %8628 = vmatprep.subr.bf16.mxu0 0
        %8629 = vmatpush1.bf16.msra.mxu0 0
        %8630 = vmatprep.subr.bf16.mxu0 0
        %8631 = vmatpush1.bf16.msra.mxu0 0
        %8632 = vmatprep.subr.bf16.mxu0 0
        %8633 = vmatpush1.bf16.msra.mxu0 0
        %8634 = vmatprep.subr.bf16.mxu0 0
        %8635 = vmatpush1.bf16.msra.mxu0 0
        %8636 = vmatprep.subr.bf16.mxu0 0
        %8637 = vmatpush1.bf16.msra.mxu0 0
        %8638 = vmatprep.mubr.bf16.mxu0 0
        %8639 = vmatmul.mubr.bf16.gmra.mrb[0].mxu0 %v8601
        %v8640 = vpop.f32.mrb[0].mxu0
        %v8641 = vadd.f32 0.0, %v8640
        %v8642 = vpop.f32.mrb[0].mxu0
        %v8643 = vpop.f32.mrb[0].mxu0
        %v8644 = vadd.f32 0.0, %v8643
        %v8645 = vpop.f32.mrb[0].mxu0
        %8646 = vmatprep.mubr.bf16.mxu0 0
        %8647 = vmatmul.mubr.bf16.gmra.mrb[0].mxu0 %v8604
        %v8648 = vpop.f32.mrb[0].mxu0
        %v8649 = vadd.f32 0.0, %v8648
        %v8650 = vpop.f32.mrb[0].mxu0
        %v8651 = vpop.f32.mrb[0].mxu0
        %v8652 = vpop.f32.mrb[0].mxu0
        %8653 = vdwg.mxu0
        %v8654 = vadd.f32 %v8553, %v8641
        %v8655 = vadd.f32 %v8554, %v8644
        %v8656 = vadd.f32 %v8555, %v8649
        %v8657 = vunpack.c.l.bf16 %v8572
        %v8658 = vunpack.c.l.bf16 %v8573
        %vm8661 = vcmask 1041408
        %v8662 = vrot.slane %v8657, 6
        %v8663 = vrot.slane %v8454, 6
        %v8664 = vsel %vm8661, %v8662, %v8663
        %v8665 = vrot.slane %v8455, 6
        %v8666 = vsel %vm8661, %v8663, %v8665
        %v8667 = vrot.slane %v8658, 6
        %v8668 = vsel %vm8661, %v8665, %v8667
        %v8672 = vadd.f32 %v8569, %v8664
        %v8673 = vadd.f32 %v8570, %v8666
        %v8674 = vadd.f32 %v8571, %v8668
        %v8675 = vld [vmem:[%s8258 + $0xc] sm:$0xf]
        %s8676 = scalar_lea.vmem [#allocation2], 1504
        %v8677 = vld [vmem:[%s8676] sm:$0xf]
        %v8678 = vld [vmem:[%s8676 + $0x4] sm:$0xf]
        %v8679 = vld [vmem:[%s8676 + $0x8] sm:$0xf]
        %v8680 = vld [vmem:[%s8676 + $0xc] sm:$0xf]
        %v8682 = vunpack.c.l.b16 %v8675
        %v8683 = vpack.c.b16 %v8682, %v8365
        %v8685 = vshrl.u32 %v8583, 16
        %v8687 = vrot.slane %v8685, 3
        %v8688 = vshll.u32 %v8583, 16
        %v8690 = vrot.slane %v8688, 4
        %v8691 = vor.u32 %v8687, %v8690
        %v8693 = vshrl.u32 %v8683, 16
        %v8695 = vrot.slane %v8693, 3
        %v8696 = vshll.u32 %v8683, 16
        %v8698 = vrot.slane %v8696, 4
        %v8699 = vor.u32 %v8695, %v8698
        %v8700 = vsel %vm659, %v8691, %v8699
        %v8705 = vunpack.c.l.b16 %v8677
        %v8706 = vunpack.c.l.b16 %v8678
        %v8707 = vunpack.c.l.b16 %v8679
        %v8708 = vunpack.c.l.b16 %v8680
        %v8709 = vpack.c.b16 %v8706, %v8705
        %v8710 = vpack.c.b16 %v8708, %v8707
        %v8714 = vsel %vm361, %v8700, 0
        %v8717 = vsel %vm361, %v8699, 0
        %8719 = vmatprep.subr.bf16.mxu0 0
        %8720 = vmatpush1.bf16.msra.mxu0 %v8709
        %8721 = vmatprep.subr.bf16.mxu0 0
        %8722 = vmatpush1.bf16.msra.mxu0 %v8710
        %8723 = vmatprep.subr.bf16.mxu0 0
        %8724 = vmatpush1.bf16.msra.mxu0 0
        %8725 = vmatprep.subr.bf16.mxu0 0
        %8726 = vmatpush1.bf16.msra.mxu0 0
        %8727 = vmatprep.subr.bf16.mxu0 0
        %8728 = vmatpush1.bf16.msra.mxu0 0
        %8729 = vmatprep.subr.bf16.mxu0 0
        %8730 = vmatpush1.bf16.msra.mxu0 0
        %8731 = vmatprep.subr.bf16.mxu0 0
        %8732 = vmatpush1.bf16.msra.mxu0 0
        %8733 = vmatprep.subr.bf16.mxu0 0
        %8734 = vmatpush1.bf16.msra.mxu0 0
        %8735 = vmatprep.subr.bf16.mxu0 0
        %8736 = vmatpush1.bf16.msra.mxu0 0
        %8737 = vmatprep.subr.bf16.mxu0 0
        %8738 = vmatpush1.bf16.msra.mxu0 0
        %8739 = vmatprep.subr.bf16.mxu0 0
        %8740 = vmatpush1.bf16.msra.mxu0 0
        %8741 = vmatprep.subr.bf16.mxu0 0
        %8742 = vmatpush1.bf16.msra.mxu0 0
        %8743 = vmatprep.subr.bf16.mxu0 0
        %8744 = vmatpush1.bf16.msra.mxu0 0
        %8745 = vmatprep.subr.bf16.mxu0 0
        %8746 = vmatpush1.bf16.msra.mxu0 0
        %8747 = vmatprep.subr.bf16.mxu0 0
        %8748 = vmatpush1.bf16.msra.mxu0 0
        %8749 = vmatprep.subr.bf16.mxu0 0
        %8750 = vmatpush1.bf16.msra.mxu0 0
        %8751 = vmatprep.mubr.bf16.mxu0 0
        %8752 = vmatmul.mubr.bf16.gmra.mrb[0].mxu0 %v8714
        %v8753 = vpop.f32.mrb[0].mxu0
        %v8754 = vadd.f32 0.0, %v8753
        %v8755 = vpop.f32.mrb[0].mxu0
        %v8756 = vpop.f32.mrb[0].mxu0
        %v8757 = vadd.f32 0.0, %v8756
        %v8758 = vpop.f32.mrb[0].mxu0
        %8759 = vmatprep.mubr.bf16.mxu0 0
        %8760 = vmatmul.mubr.bf16.gmra.mrb[0].mxu0 %v8717
        %v8761 = vpop.f32.mrb[0].mxu0
        %v8762 = vadd.f32 0.0, %v8761
        %v8763 = vpop.f32.mrb[0].mxu0
        %v8764 = vpop.f32.mrb[0].mxu0
        %v8765 = vpop.f32.mrb[0].mxu0
        %8766 = vdwg.mxu0
        %v8767 = vadd.f32 %v8654, %v8754
        %v8768 = vadd.f32 %v8655, %v8757
        %v8769 = vadd.f32 %v8656, %v8762
        %v8770 = vunpack.c.l.bf16 %v8675
        %vm8772 = vcmask 1040384
        %v8773 = vrot.slane %v8657, 7
        %v8774 = vrot.slane %v8454, 7
        %v8775 = vsel %vm8772, %v8773, %v8774
        %v8776 = vrot.slane %v8455, 7
        %v8777 = vsel %vm8772, %v8774, %v8776
        %v8778 = vrot.slane %v8770, 7
        %v8779 = vsel %vm8772, %v8776, %v8778
        %v8783 = vadd.f32 %v8672, %v8775
        %v8784 = vadd.f32 %v8673, %v8777
        %v8785 = vadd.f32 %v8674, %v8779
        %s8786 = scalar_lea.vmem [#allocation2], 1520
        %v8787 = vld [vmem:[%s8786] sm:$0xf]
        %v8788 = vld [vmem:[%s8786 + $0x4] sm:$0xf]
        %v8789 = vld [vmem:[%s8786 + $0x8] sm:$0xf]
        %v8790 = vld [vmem:[%s8786 + $0xc] sm:$0xf]
        %v8791 = vpack.c.b16 %v8365, %v8364
        %v8792 = vpack.c.b16 %v8682, %v8682
        %v8797 = vunpack.c.l.b16 %v8787
        %v8798 = vunpack.c.l.b16 %v8788
        %v8799 = vunpack.c.l.b16 %v8789
        %v8800 = vunpack.c.l.b16 %v8790
        %v8801 = vpack.c.b16 %v8798, %v8797
        %v8802 = vpack.c.b16 %v8800, %v8799
        %v8806 = vsel %vm361, %v8791, 0
        %v8809 = vsel %vm361, %v8792, 0
        %8811 = vmatprep.subr.bf16.mxu0 0
        %8812 = vmatpush1.bf16.msra.mxu0 %v8801
        %8813 = vmatprep.subr.bf16.mxu0 0
        %8814 = vmatpush1.bf16.msra.mxu0 %v8802
        %8815 = vmatprep.subr.bf16.mxu0 0
        %8816 = vmatpush1.bf16.msra.mxu0 0
        %8817 = vmatprep.subr.bf16.mxu0 0
        %8818 = vmatpush1.bf16.msra.mxu0 0
        %8819 = vmatprep.subr.bf16.mxu0 0
        %8820 = vmatpush1.bf16.msra.mxu0 0
        %8821 = vmatprep.subr.bf16.mxu0 0
        %8822 = vmatpush1.bf16.msra.mxu0 0
        %8823 = vmatprep.subr.bf16.mxu0 0
        %8824 = vmatpush1.bf16.msra.mxu0 0
        %8825 = vmatprep.subr.bf16.mxu0 0
        %8826 = vmatpush1.bf16.msra.mxu0 0
        %8827 = vmatprep.subr.bf16.mxu0 0
        %8828 = vmatpush1.bf16.msra.mxu0 0
        %8829 = vmatprep.subr.bf16.mxu0 0
        %8830 = vmatpush1.bf16.msra.mxu0 0
        %8831 = vmatprep.subr.bf16.mxu0 0
        %8832 = vmatpush1.bf16.msra.mxu0 0
        %8833 = vmatprep.subr.bf16.mxu0 0
        %8834 = vmatpush1.bf16.msra.mxu0 0
        %8835 = vmatprep.subr.bf16.mxu0 0
        %8836 = vmatpush1.bf16.msra.mxu0 0
        %8837 = vmatprep.subr.bf16.mxu0 0
        %8838 = vmatpush1.bf16.msra.mxu0 0
        %8839 = vmatprep.subr.bf16.mxu0 0
        %8840 = vmatpush1.bf16.msra.mxu0 0
        %8841 = vmatprep.subr.bf16.mxu0 0
        %8842 = vmatpush1.bf16.msra.mxu0 0
        %8843 = vmatprep.mubr.bf16.mxu0 0
        %8844 = vmatmul.mubr.bf16.gmra.mrb[0].mxu0 %v8806
        %v8845 = vpop.f32.mrb[0].mxu0
        %v8846 = vadd.f32 0.0, %v8845
        %v8847 = vpop.f32.mrb[0].mxu0
        %v8848 = vpop.f32.mrb[0].mxu0
        %v8849 = vadd.f32 0.0, %v8848
        %v8850 = vpop.f32.mrb[0].mxu0
        %8851 = vmatprep.mubr.bf16.mxu0 0
        %8852 = vmatmul.mubr.bf16.gmra.mrb[0].mxu0 %v8809
        %v8853 = vpop.f32.mrb[0].mxu0
        %v8854 = vadd.f32 0.0, %v8853
        %v8855 = vpop.f32.mrb[0].mxu0
        %v8856 = vpop.f32.mrb[0].mxu0
        %v8857 = vpop.f32.mrb[0].mxu0
        %8858 = vdwg.mxu0
        %v8859 = vadd.f32 %v8767, %v8846
        %v8860 = vadd.f32 %v8768, %v8849
        %v8861 = vadd.f32 %v8769, %v8854
        %v8862 = vadd.f32 %v8783, %v8454
        %v8863 = vadd.f32 %v8784, %v8455
        %v8864 = vadd.f32 %v8785, %v8770
        %v8865 = vld [vmem:[%s8258 + $0x4] sm:$0xc]
        %v8866 = vld [vmem:[%s8258 + $0x8] sm:$0xf]
        %v8867 = vld [vmem:[%s8258 + $0xc] sm:$0xf]
        %v8868 = vld [vmem:[%s8258 + $0x10] sm:$0x3]
        %s8869 = scalar_lea.vmem [#allocation2], 1536
        %v8870 = vld [vmem:[%s8869] sm:$0xf]
        %v8871 = vld [vmem:[%s8869 + $0x4] sm:$0xf]
        %v8872 = vld [vmem:[%s8869 + $0x8] sm:$0xf]
        %v8873 = vld [vmem:[%s8869 + $0xc] sm:$0xf]
        %v8878 = vunpack.c.l.b16 %v8865
        %v8879 = vunpack.c.l.b16 %v8866
        %v8880 = vunpack.c.l.b16 %v8867
        %v8881 = vunpack.c.l.b16 %v8868
        %v8882 = vpack.c.b16 %v8879, %v8878
        %v8883 = vpack.c.b16 %v8881, %v8880
        %v8884 = vrot.slane %v8882, 2
        %v8885 = vrot.slane %v8883, 2
        %v8886 = vsel %vm841, %v8884, %v8885
        %v8891 = vunpack.c.l.b16 %v8870
        %v8892 = vunpack.c.l.b16 %v8871
        %v8893 = vunpack.c.l.b16 %v8872
        %v8894 = vunpack.c.l.b16 %v8873
        %v8895 = vpack.c.b16 %v8892, %v8891
        %v8896 = vpack.c.b16 %v8894, %v8893
        %v8900 = vsel %vm361, %v8886, 0
        %v8903 = vsel %vm361, %v8885, 0
        %8905 = vmatprep.subr.bf16.mxu0 0
        %8906 = vmatpush1.bf16.msra.mxu0 %v8895
        %8907 = vmatprep.subr.bf16.mxu0 0
        %8908 = vmatpush1.bf16.msra.mxu0 %v8896
        %8909 = vmatprep.subr.bf16.mxu0 0
        %8910 = vmatpush1.bf16.msra.mxu0 0
        %8911 = vmatprep.subr.bf16.mxu0 0
        %8912 = vmatpush1.bf16.msra.mxu0 0
        %8913 = vmatprep.subr.bf16.mxu0 0
        %8914 = vmatpush1.bf16.msra.mxu0 0
        %8915 = vmatprep.subr.bf16.mxu0 0
        %8916 = vmatpush1.bf16.msra.mxu0 0
        %8917 = vmatprep.subr.bf16.mxu0 0
        %8918 = vmatpush1.bf16.msra.mxu0 0
        %8919 = vmatprep.subr.bf16.mxu0 0
        %8920 = vmatpush1.bf16.msra.mxu0 0
        %8921 = vmatprep.subr.bf16.mxu0 0
        %8922 = vmatpush1.bf16.msra.mxu0 0
        %8923 = vmatprep.subr.bf16.mxu0 0
        %8924 = vmatpush1.bf16.msra.mxu0 0
        %8925 = vmatprep.subr.bf16.mxu0 0
        %8926 = vmatpush1.bf16.msra.mxu0 0
        %8927 = vmatprep.subr.bf16.mxu0 0
        %8928 = vmatpush1.bf16.msra.mxu0 0
        %8929 = vmatprep.subr.bf16.mxu0 0
        %8930 = vmatpush1.bf16.msra.mxu0 0
        %8931 = vmatprep.subr.bf16.mxu0 0
        %8932 = vmatpush1.bf16.msra.mxu0 0
        %8933 = vmatprep.subr.bf16.mxu0 0
        %8934 = vmatpush1.bf16.msra.mxu0 0
        %8935 = vmatprep.subr.bf16.mxu0 0
        %8936 = vmatpush1.bf16.msra.mxu0 0
        %8937 = vmatprep.mubr.bf16.mxu0 0
        %8938 = vmatmul.mubr.bf16.gmra.mrb[0].mxu0 %v8900
        %v8939 = vpop.f32.mrb[0].mxu0
        %v8940 = vadd.f32 0.0, %v8939
        %v8941 = vpop.f32.mrb[0].mxu0
        %v8942 = vpop.f32.mrb[0].mxu0
        %v8943 = vadd.f32 0.0, %v8942
        %v8944 = vpop.f32.mrb[0].mxu0
        %8945 = vmatprep.mubr.bf16.mxu0 0
        %8946 = vmatmul.mubr.bf16.gmra.mrb[0].mxu0 %v8903
        %v8947 = vpop.f32.mrb[0].mxu0
        %v8948 = vadd.f32 0.0, %v8947
        %v8949 = vpop.f32.mrb[0].mxu0
        %v8950 = vpop.f32.mrb[0].mxu0
        %v8951 = vpop.f32.mrb[0].mxu0
        %8952 = vdwg.mxu0
        %v8953 = vadd.f32 %v8859, %v8940
        %v8954 = vadd.f32 %v8860, %v8943
        %v8955 = vadd.f32 %v8861, %v8948
        %v8956 = vunpack.c.l.bf16 %v8865
        %v8957 = vunpack.c.l.bf16 %v8866
        %v8958 = vunpack.c.l.bf16 %v8867
        %v8959 = vunpack.c.l.bf16 %v8868
        %vm8964 = vcmask 1043456
        %v8965 = vrot.slane %v8956, 4
        %v8966 = vrot.slane %v8957, 4
        %v8967 = vsel %vm8964, %v8965, %v8966
        %v8968 = vrot.slane %v8958, 4
        %v8969 = vsel %vm8964, %v8966, %v8968
        %v8970 = vrot.slane %v8959, 4
        %v8971 = vsel %vm8964, %v8968, %v8970
        %v8975 = vadd.f32 %v8862, %v8967
        %v8976 = vadd.f32 %v8863, %v8969
        %v8977 = vadd.f32 %v8864, %v8971
        %v8978 = vld [vmem:[%s8258 + $0x10] sm:$0x7]
        %s8979 = scalar_lea.vmem [#allocation2], 1552
        %v8980 = vld [vmem:[%s8979] sm:$0xf]
        %v8981 = vld [vmem:[%s8979 + $0x4] sm:$0xf]
        %v8982 = vld [vmem:[%s8979 + $0x8] sm:$0xf]
        %v8983 = vld [vmem:[%s8979 + $0xc] sm:$0xf]
        %v8985 = vunpack.c.l.b16 %v8978
        %v8986 = vpack.c.b16 %v8985, %v8880
        %v8988 = vshrl.u32 %v8882, 16
        %v8990 = vrot.slane %v8988, 2
        %v8991 = vshll.u32 %v8882, 16
        %v8993 = vrot.slane %v8991, 3
        %v8994 = vor.u32 %v8990, %v8993
        %v8996 = vshrl.u32 %v8986, 16
        %v8998 = vrot.slane %v8996, 2
        %v8999 = vshll.u32 %v8986, 16
        %v9001 = vrot.slane %v8999, 3
        %v9002 = vor.u32 %v8998, %v9001
        %v9003 = vsel %vm923, %v8994, %v9002
        %v9008 = vunpack.c.l.b16 %v8980
        %v9009 = vunpack.c.l.b16 %v8981
        %v9010 = vunpack.c.l.b16 %v8982
        %v9011 = vunpack.c.l.b16 %v8983
        %v9012 = vpack.c.b16 %v9009, %v9008
        %v9013 = vpack.c.b16 %v9011, %v9010
        %v9017 = vsel %vm361, %v9003, 0
        %v9020 = vsel %vm361, %v9002, 0
        %9022 = vmatprep.subr.bf16.mxu0 0
        %9023 = vmatpush1.bf16.msra.mxu0 %v9012
        %9024 = vmatprep.subr.bf16.mxu0 0
        %9025 = vmatpush1.bf16.msra.mxu0 %v9013
        %9026 = vmatprep.subr.bf16.mxu0 0
        %9027 = vmatpush1.bf16.msra.mxu0 0
        %9028 = vmatprep.subr.bf16.mxu0 0
        %9029 = vmatpush1.bf16.msra.mxu0 0
        %9030 = vmatprep.subr.bf16.mxu0 0
        %9031 = vmatpush1.bf16.msra.mxu0 0
        %9032 = vmatprep.subr.bf16.mxu0 0
        %9033 = vmatpush1.bf16.msra.mxu0 0
        %9034 = vmatprep.subr.bf16.mxu0 0
        %9035 = vmatpush1.bf16.msra.mxu0 0
        %9036 = vmatprep.subr.bf16.mxu0 0
        %9037 = vmatpush1.bf16.msra.mxu0 0
        %9038 = vmatprep.subr.bf16.mxu0 0
        %9039 = vmatpush1.bf16.msra.mxu0 0
        %9040 = vmatprep.subr.bf16.mxu0 0
        %9041 = vmatpush1.bf16.msra.mxu0 0
        %9042 = vmatprep.subr.bf16.mxu0 0
        %9043 = vmatpush1.bf16.msra.mxu0 0
        %9044 = vmatprep.subr.bf16.mxu0 0
        %9045 = vmatpush1.bf16.msra.mxu0 0
        %9046 = vmatprep.subr.bf16.mxu0 0
        %9047 = vmatpush1.bf16.msra.mxu0 0
        %9048 = vmatprep.subr.bf16.mxu0 0
        %9049 = vmatpush1.bf16.msra.mxu0 0
        %9050 = vmatprep.subr.bf16.mxu0 0
        %9051 = vmatpush1.bf16.msra.mxu0 0
        %9052 = vmatprep.subr.bf16.mxu0 0
        %9053 = vmatpush1.bf16.msra.mxu0 0
        %9054 = vmatprep.mubr.bf16.mxu0 0
        %9055 = vmatmul.mubr.bf16.gmra.mrb[0].mxu0 %v9017
        %v9056 = vpop.f32.mrb[0].mxu0
        %v9057 = vadd.f32 0.0, %v9056
        %v9058 = vpop.f32.mrb[0].mxu0
        %v9059 = vpop.f32.mrb[0].mxu0
        %v9060 = vadd.f32 0.0, %v9059
        %v9061 = vpop.f32.mrb[0].mxu0
        %9062 = vmatprep.mubr.bf16.mxu0 0
        %9063 = vmatmul.mubr.bf16.gmra.mrb[0].mxu0 %v9020
        %v9064 = vpop.f32.mrb[0].mxu0
        %v9065 = vadd.f32 0.0, %v9064
        %v9066 = vpop.f32.mrb[0].mxu0
        %v9067 = vpop.f32.mrb[0].mxu0
        %v9068 = vpop.f32.mrb[0].mxu0
        %9069 = vdwg.mxu0
        %v9070 = vadd.f32 %v8953, %v9057
        %v9071 = vadd.f32 %v8954, %v9060
        %v9072 = vadd.f32 %v8955, %v9065
        %v9073 = vunpack.c.l.bf16 %v8978
        %vm9075 = vcmask 1042432
        %v9076 = vrot.slane %v8956, 5
        %v9077 = vrot.slane %v8957, 5
        %v9078 = vsel %vm9075, %v9076, %v9077
        %v9079 = vrot.slane %v8958, 5
        %v9080 = vsel %vm9075, %v9077, %v9079
        %v9081 = vrot.slane %v9073, 5
        %v9082 = vsel %vm9075, %v9079, %v9081
        %v9086 = vadd.f32 %v8975, %v9078
        %v9087 = vadd.f32 %v8976, %v9080
        %v9088 = vadd.f32 %v8977, %v9082
        %v9089 = vld [vmem:[%s8258 + $0x4] sm:$0x8]
        %s9090 = scalar_lea.vmem [#allocation2], 1568
        %v9091 = vld [vmem:[%s9090] sm:$0xf]
        %v9092 = vld [vmem:[%s9090 + $0x4] sm:$0xf]
        %v9093 = vld [vmem:[%s9090 + $0x8] sm:$0xf]
        %v9094 = vld [vmem:[%s9090 + $0xc] sm:$0xf]
        %v9096 = vunpack.c.l.b16 %v9089
        %v9097 = vpack.c.b16 %v8879, %v9096
        %v9098 = vrot.slane %v9097, 3
        %v9099 = vrot.slane %v8986, 3
        %v9100 = vsel %vm577, %v9098, %v9099
        %v9105 = vunpack.c.l.b16 %v9091
        %v9106 = vunpack.c.l.b16 %v9092
        %v9107 = vunpack.c.l.b16 %v9093
        %v9108 = vunpack.c.l.b16 %v9094
        %v9109 = vpack.c.b16 %v9106, %v9105
        %v9110 = vpack.c.b16 %v9108, %v9107
        %v9114 = vsel %vm361, %v9100, 0
        %v9117 = vsel %vm361, %v9099, 0
        %9119 = vmatprep.subr.bf16.mxu0 0
        %9120 = vmatpush1.bf16.msra.mxu0 %v9109
        %9121 = vmatprep.subr.bf16.mxu0 0
        %9122 = vmatpush1.bf16.msra.mxu0 %v9110
        %9123 = vmatprep.subr.bf16.mxu0 0
        %9124 = vmatpush1.bf16.msra.mxu0 0
        %9125 = vmatprep.subr.bf16.mxu0 0
        %9126 = vmatpush1.bf16.msra.mxu0 0
        %9127 = vmatprep.subr.bf16.mxu0 0
        %9128 = vmatpush1.bf16.msra.mxu0 0
        %9129 = vmatprep.subr.bf16.mxu0 0
        %9130 = vmatpush1.bf16.msra.mxu0 0
        %9131 = vmatprep.subr.bf16.mxu0 0
        %9132 = vmatpush1.bf16.msra.mxu0 0
        %9133 = vmatprep.subr.bf16.mxu0 0
        %9134 = vmatpush1.bf16.msra.mxu0 0
        %9135 = vmatprep.subr.bf16.mxu0 0
        %9136 = vmatpush1.bf16.msra.mxu0 0
        %9137 = vmatprep.subr.bf16.mxu0 0
        %9138 = vmatpush1.bf16.msra.mxu0 0
        %9139 = vmatprep.subr.bf16.mxu0 0
        %9140 = vmatpush1.bf16.msra.mxu0 0
        %9141 = vmatprep.subr.bf16.mxu0 0
        %9142 = vmatpush1.bf16.msra.mxu0 0
        %9143 = vmatprep.subr.bf16.mxu0 0
        %9144 = vmatpush1.bf16.msra.mxu0 0
        %9145 = vmatprep.subr.bf16.mxu0 0
        %9146 = vmatpush1.bf16.msra.mxu0 0
        %9147 = vmatprep.subr.bf16.mxu0 0
        %9148 = vmatpush1.bf16.msra.mxu0 0
        %9149 = vmatprep.subr.bf16.mxu0 0
        %9150 = vmatpush1.bf16.msra.mxu0 0
        %9151 = vmatprep.mubr.bf16.mxu0 0
        %9152 = vmatmul.mubr.bf16.gmra.mrb[0].mxu0 %v9114
        %v9153 = vpop.f32.mrb[0].mxu0
        %v9154 = vadd.f32 0.0, %v9153
        %v9155 = vpop.f32.mrb[0].mxu0
        %v9156 = vpop.f32.mrb[0].mxu0
        %v9157 = vadd.f32 0.0, %v9156
        %v9158 = vpop.f32.mrb[0].mxu0
        %9159 = vmatprep.mubr.bf16.mxu0 0
        %9160 = vmatmul.mubr.bf16.gmra.mrb[0].mxu0 %v9117
        %v9161 = vpop.f32.mrb[0].mxu0
        %v9162 = vadd.f32 0.0, %v9161
        %v9163 = vpop.f32.mrb[0].mxu0
        %v9164 = vpop.f32.mrb[0].mxu0
        %v9165 = vpop.f32.mrb[0].mxu0
        %9166 = vdwg.mxu0
        %v9167 = vadd.f32 %v9070, %v9154
        %v9168 = vadd.f32 %v9071, %v9157
        %v9169 = vadd.f32 %v9072, %v9162
        %v9170 = vunpack.c.l.bf16 %v9089
        %v9172 = vrot.slane %v9170, 6
        %v9173 = vrot.slane %v8957, 6
        %v9174 = vsel %vm8661, %v9172, %v9173
        %v9175 = vrot.slane %v8958, 6
        %v9176 = vsel %vm8661, %v9173, %v9175
        %v9177 = vrot.slane %v9073, 6
        %v9178 = vsel %vm8661, %v9175, %v9177
        %v9182 = vadd.f32 %v9086, %v9174
        %v9183 = vadd.f32 %v9087, %v9176
        %v9184 = vadd.f32 %v9088, %v9178
        %v9185 = vld [vmem:[%s2] sm:$0x1]
        %v9187 = vlaneseq
        %v9188 = vshrl.u32 %v9187, 7
        %v9189 = vsub.s32 0, %v9188
        %v9190 = vrot.slane %v9185, %v9189
        %v9192 = vadd.f32 %v9167, %v9190
        %v9193 = vadd.f32 %v9168, %v9190
        %v9194 = vadd.f32 %v9169, %v9190
        %vm9195 = vcmp.gt.f32.partialorder %v9192, 0.0
        %vm9196 = vcmp.gt.f32.partialorder %v9193, 0.0
        %vm9197 = vcmp.gt.f32.partialorder %v9194, 0.0
        %v9198 = vmul.f32 %v9192, 0.1
        %v9199 = vmul.f32 %v9193, 0.1
        %v9200 = vmul.f32 %v9194, 0.1
        %v9201 = vsel %vm9195, %v9192, %v9198
        %v9202 = vsel %vm9196, %v9193, %v9199
        %v9203 = vsel %vm9197, %v9194, %v9200
        %9207 = vrot.lane.b32.xlu0 %v9201, 96
        %v9208 = vpop.permute.xlu0 %9207
        %9209 = vrot.lane.b32.xlu0 %v9202, 96
        %v9210 = vpop.permute.xlu0 %9209
        %9211 = vrot.lane.b32.xlu0 %v9203, 96
        %v9212 = vpop.permute.xlu0 %9211
        %v9216 = vadd.f32 %v9201, %v9208
        %v9217 = vadd.f32 %v9202, %v9210
        %v9218 = vadd.f32 %v9203, %v9212
        %9219 = vrot.lane.b32.xlu0 %v9201, 64
        %v9220 = vpop.permute.xlu0 %9219
        %9221 = vrot.lane.b32.xlu0 %v9202, 64
        %v9222 = vpop.permute.xlu0 %9221
        %9223 = vrot.lane.b32.xlu0 %v9203, 64
        %v9224 = vpop.permute.xlu0 %9223
        %v9228 = vadd.f32 %v9216, %v9220
        %v9229 = vadd.f32 %v9217, %v9222
        %v9230 = vadd.f32 %v9218, %v9224
        %9231 = vrot.lane.b32.xlu0 %v9201, 32
        %v9232 = vpop.permute.xlu0 %9231
        %9233 = vrot.lane.b32.xlu0 %v9202, 32
        %v9234 = vpop.permute.xlu0 %9233
        %9235 = vrot.lane.b32.xlu0 %v9203, 32
        %v9236 = vpop.permute.xlu0 %9235
        %v9240 = vadd.f32 %v9228, %v9232
        %v9241 = vadd.f32 %v9229, %v9234
        %v9242 = vadd.f32 %v9230, %v9236
        %v9243 = vpack.c.bf16 %v9241, %v9240
        %v9244 = vpack.c.bf16 %v9242, %v9242
        %v9245 = vld [vmem:[%s3] sm:$0xf]
        %v9246 = vld [vmem:[%s3 + $0x4] sm:$0xf]
        %v9247 = vld [vmem:[%s3 + $0x8] sm:$0xf]
        %v9248 = vld [vmem:[%s3 + $0xc] sm:$0xf]
        %v9249 = vld [vmem:[%s4] sm:$0x1]
        %v9251 = vlaneseq
        %v9252 = vshrl.u32 %v9251, 7
        %v9253 = vsub.s32 0, %v9252
        %v9254 = vrot.slane %v9249, %v9253
        %v9260 = vunpack.c.l.b16 %v9245
        %v9261 = vunpack.c.l.b16 %v9246
        %v9262 = vunpack.c.l.b16 %v9247
        %v9263 = vunpack.c.l.b16 %v9248
        %v9264 = vpack.c.b16 %v9261, %v9260
        %v9265 = vpack.c.b16 %v9263, %v9262
        %v9269 = vsel %vm361, %v9243, 0
        %v9272 = vsel %vm361, %v9244, 0
        %9274 = vmatprep.subr.bf16.mxu0 0
        %9275 = vmatpush1.bf16.msra.mxu0 %v9264
        %9276 = vmatprep.subr.bf16.mxu0 0
        %9277 = vmatpush1.bf16.msra.mxu0 %v9265
        %9278 = vmatprep.subr.bf16.mxu0 0
        %9279 = vmatpush1.bf16.msra.mxu0 0
        %9280 = vmatprep.subr.bf16.mxu0 0
        %9281 = vmatpush1.bf16.msra.mxu0 0
        %9282 = vmatprep.subr.bf16.mxu0 0
        %9283 = vmatpush1.bf16.msra.mxu0 0
        %9284 = vmatprep.subr.bf16.mxu0 0
        %9285 = vmatpush1.bf16.msra.mxu0 0
        %9286 = vmatprep.subr.bf16.mxu0 0
        %9287 = vmatpush1.bf16.msra.mxu0 0
        %9288 = vmatprep.subr.bf16.mxu0 0
        %9289 = vmatpush1.bf16.msra.mxu0 0
        %9290 = vmatprep.subr.bf16.mxu0 0
        %9291 = vmatpush1.bf16.msra.mxu0 0
        %9292 = vmatprep.subr.bf16.mxu0 0
        %9293 = vmatpush1.bf16.msra.mxu0 0
        %9294 = vmatprep.subr.bf16.mxu0 0
        %9295 = vmatpush1.bf16.msra.mxu0 0
        %9296 = vmatprep.subr.bf16.mxu0 0
        %9297 = vmatpush1.bf16.msra.mxu0 0
        %9298 = vmatprep.subr.bf16.mxu0 0
        %9299 = vmatpush1.bf16.msra.mxu0 0
        %9300 = vmatprep.subr.bf16.mxu0 0
        %9301 = vmatpush1.bf16.msra.mxu0 0
        %9302 = vmatprep.subr.bf16.mxu0 0
        %9303 = vmatpush1.bf16.msra.mxu0 0
        %9304 = vmatprep.subr.bf16.mxu0 0
        %9305 = vmatpush1.bf16.msra.mxu0 0
        %9306 = vmatprep.mubr.bf16.mxu0 0
        %9307 = vmatmul.mubr.bf16.gmra.mrb[0].mxu0 %v9269
        %v9308 = vpop.f32.mrb[0].mxu0
        %v9309 = vadd.f32 %v9254, %v9308
        %v9310 = vpop.f32.mrb[0].mxu0
        %v9311 = vpop.f32.mrb[0].mxu0
        %v9312 = vadd.f32 %v9254, %v9311
        %v9313 = vpop.f32.mrb[0].mxu0
        %9314 = vmatprep.mubr.bf16.mxu0 0
        %9315 = vmatmul.mubr.bf16.gmra.mrb[0].mxu0 %v9272
        %v9316 = vpop.f32.mrb[0].mxu0
        %v9317 = vadd.f32 %v9254, %v9316
        %v9318 = vpop.f32.mrb[0].mxu0
        %v9319 = vpop.f32.mrb[0].mxu0
        %v9320 = vpop.f32.mrb[0].mxu0
        %9321 = vdwg.mxu0
        %v9322 = vmul.f32 %v9182, 0.11111111
        %v9323 = vmul.f32 %v9183, 0.11111111
        %v9324 = vmul.f32 %v9184, 0.11111111
        %v9325 = vpack.c.bf16 %v9323, %v9322
        %v9326 = vpack.c.bf16 %v9324, %v9324
        %v9327 = vld [vmem:[%s5] sm:$0xf]
        %v9328 = vld [vmem:[%s5 + $0x4] sm:$0xf]
        %v9329 = vld [vmem:[%s5 + $0x8] sm:$0xf]
        %v9330 = vld [vmem:[%s5 + $0xc] sm:$0xf]
        %v9331 = vld [vmem:[%s6] sm:$0x1]
        %v9333 = vlaneseq
        %v9334 = vshrl.u32 %v9333, 7
        %v9335 = vsub.s32 0, %v9334
        %v9336 = vrot.slane %v9331, %v9335
        %v9342 = vunpack.c.l.b16 %v9327
        %v9343 = vunpack.c.l.b16 %v9328
        %v9344 = vunpack.c.l.b16 %v9329
        %v9345 = vunpack.c.l.b16 %v9330
        %v9346 = vpack.c.b16 %v9343, %v9342
        %v9347 = vpack.c.b16 %v9345, %v9344
        %v9351 = vsel %vm361, %v9325, 0
        %v9354 = vsel %vm361, %v9326, 0
        %9356 = vmatprep.subr.bf16.mxu0 0
        %9357 = vmatpush1.bf16.msra.mxu0 %v9346
        %9358 = vmatprep.subr.bf16.mxu0 0
        %9359 = vmatpush1.bf16.msra.mxu0 %v9347
        %9360 = vmatprep.subr.bf16.mxu0 0
        %9361 = vmatpush1.bf16.msra.mxu0 0
        %9362 = vmatprep.subr.bf16.mxu0 0
        %9363 = vmatpush1.bf16.msra.mxu0 0
        %9364 = vmatprep.subr.bf16.mxu0 0
        %9365 = vmatpush1.bf16.msra.mxu0 0
        %9366 = vmatprep.subr.bf16.mxu0 0
        %9367 = vmatpush1.bf16.msra.mxu0 0
        %9368 = vmatprep.subr.bf16.mxu0 0
        %9369 = vmatpush1.bf16.msra.mxu0 0
        %9370 = vmatprep.subr.bf16.mxu0 0
        %9371 = vmatpush1.bf16.msra.mxu0 0
        %9372 = vmatprep.subr.bf16.mxu0 0
        %9373 = vmatpush1.bf16.msra.mxu0 0
        %9374 = vmatprep.subr.bf16.mxu0 0
        %9375 = vmatpush1.bf16.msra.mxu0 0
        %9376 = vmatprep.subr.bf16.mxu0 0
        %9377 = vmatpush1.bf16.msra.mxu0 0
        %9378 = vmatprep.subr.bf16.mxu0 0
        %9379 = vmatpush1.bf16.msra.mxu0 0
        %9380 = vmatprep.subr.bf16.mxu0 0
        %9381 = vmatpush1.bf16.msra.mxu0 0
        %9382 = vmatprep.subr.bf16.mxu0 0
        %9383 = vmatpush1.bf16.msra.mxu0 0
        %9384 = vmatprep.subr.bf16.mxu0 0
        %9385 = vmatpush1.bf16.msra.mxu0 0
        %9386 = vmatprep.subr.bf16.mxu0 0
        %9387 = vmatpush1.bf16.msra.mxu0 0
        %9388 = vmatprep.mubr.bf16.mxu0 0
        %9389 = vmatmul.mubr.bf16.gmra.mrb[0].mxu0 %v9351
        %v9390 = vpop.f32.mrb[0].mxu0
        %v9391 = vadd.f32 %v9336, %v9390
        %v9392 = vpop.f32.mrb[0].mxu0
        %v9393 = vpop.f32.mrb[0].mxu0
        %v9394 = vadd.f32 %v9336, %v9393
        %v9395 = vpop.f32.mrb[0].mxu0
        %9396 = vmatprep.mubr.bf16.mxu0 0
        %9397 = vmatmul.mubr.bf16.gmra.mrb[0].mxu0 %v9354
        %v9398 = vpop.f32.mrb[0].mxu0
        %v9399 = vadd.f32 %v9336, %v9398
        %v9400 = vpop.f32.mrb[0].mxu0
        %v9401 = vpop.f32.mrb[0].mxu0
        %v9402 = vpop.f32.mrb[0].mxu0
        %9403 = vdwg.mxu0
        %v9404 = vadd.f32 %v9309, %v9391
        %v9405 = vadd.f32 %v9312, %v9394
        %v9406 = vadd.f32 %v9317, %v9399
        %9407 = vst.msk [vmem:[%s300] sm:$0xff] %vm361, %v9404
        %9408 = vst.msk [vmem:[%s300 + $0x8] sm:$0xff] %vm361, %v9405
        %9409 = vst.msk [vmem:[%s300 + $0x10] sm:$0xff] %vm361, %v9406
        %s9410 = sand.u32 %s196, 1
        %s9411 = scalar_lea.sflag [#allocation4], %s9410
        %s9412 = sand.u32 %s196, 1
        %s9413 = smul.addr %s9412, 24
        %s9414 = scalar_lea.vmem [#allocation5], %s9413
        // Predicated region
        $region53: #{tpu_custom_call.1} parent=47 // pred_check
          %p9415 = pneg %p206
        $region54: #{tpu_custom_call.1} parent=47 // pred_check_branch
          %9417 = sbr.rel (%p9415) target = $region56
        $region55: #{tpu_custom_call.1} parent=47 // pred_region
          %s9419 = ssub.s32 384, 384
          %9420 = vsyncadd %s9411, %s9419
          %s9421 = smul.addr %s27, 3
          %s9422 = smul.addr %s26, 12
          %s9423 = sadd.s32 %s9421, %s9422
          %s9424 = smul.addr %s9423, 128
          %s9425 = scalar_lea.hbm %s7, %s9424
          %s9426 = sshll.u32 %s9414, 4
          %s9427 = int_to_ptr.vmem [resolvable:$true] %s9426
          %9432 = dma.vmem_to_hbm [thread:$0]  %s9427, 384, %s9425, %s9411, 128, 128, 8
        $region56: #{tpu_custom_call.1} parent=47 // pred_fallthru
          _
      $region48: #{tpu_custom_call.1} parent=5 // pred_fallthru
        _
      %p9433 = scmp.le.s32.totalorder 2, %s17
      // Predicated region
      $region57: #{tpu_custom_call.1} parent=5 // pred_check
        %p9434 = pneg %p9433
      $region58: #{tpu_custom_call.1} parent=5 // pred_check_branch
        %9436 = sbr.rel (%p9434) target = $region60
      $region59: #{tpu_custom_call.1} parent=5 // pred_region
        %s9437 = ssub.s32 %s17, 2
        // Predicated region
        $region61: #{tpu_custom_call.1} parent=59 // pred_check
          %p9438 = pneg %p212
        $region62: #{tpu_custom_call.1} parent=59 // pred_check_branch
          %9440 = sbr.rel (%p9438) target = $region64
        $region63: #{tpu_custom_call.1} parent=59 // pred_region
          %s9441 = sand.u32 %s197, 1
          %s9442 = scalar_lea.sflag [#allocation4], %s9441
          %s9443 = sand.u32 %s197, 1
          %s9444 = smul.addr %s9443, 24
          %s9445 = scalar_lea.vmem [#allocation5], %s9444
          %9446 = dma.done %s9442, 384
        $region64: #{tpu_custom_call.1} parent=59 // pred_fallthru
          _
      $region60: #{tpu_custom_call.1} parent=5 // pred_fallthru
        _
    $region6: #{tpu_custom_call.1} parent=1 // loop_footer
      %s21 = sadd.s32 1, %s17
    $region7: #{tpu_custom_call.1} parent=1 // loop_footer_branch
      %16 = sbr.rel target = $region3
    $region8: #{tpu_custom_call.1} parent=1 // loop_exit
      _
    %9447 = vsyncpa [#allocation3], 1
    %s9448 = scalar_lea.sflag [#allocation3], 1
    %9449 = vsyncpa %s9448, 1
    %9450 = vsyncpa [#allocation4], 1
    %s9451 = scalar_lea.sflag [#allocation4], 1
    %9452 = vsyncpa %s9451, 1

</llo_original>
